<compile_context>
chip_gen: v5e
topology: v5e:2x2
jax: 0.10.0
libtpu: 0.0.40
codegen_flags: <defaults>
</compile_context>

<pallas_src>
import functools

import jax
import jax.numpy as jnp
from jax.experimental import pallas as pl
from jax.experimental.pallas import tpu as pltpu


STEM_C = 32        # EfficientNet-B0 stem width
HEAD_C = 1280      # EfficientNet-B0 final feature width
FC_N = 18          # Linear(1280, 18)
FC_NP = 128        # lane-padded fc width
KSIZE = 3
STRIDE = 2
PAD = 1
K_RAW = KSIZE * KSIZE * 3   # 27
K_PAD = 32                  # sublane-friendly padded K


# ----------------------------------------------------------------------------
# Fused Pallas kernel: stem matmul -> SiLU -> head matmul -> SiLU -> GAP -> fc
# ----------------------------------------------------------------------------
def _fused_convnet_kernel(cols_ref, w_stem_ref, b_stem_ref,
                          w_head_ref, b_head_ref, w_fc_ref, b_fc_ref,
                          out_ref, pooled_acc, *, inv_hw):
    s = pl.program_id(1)
    ns = pl.num_programs(1)

    @pl.when(s == 0)
    def _init():
        pooled_acc[...] = jnp.zeros_like(pooled_acc)

    # Stem conv (im2col'd): [ts, Kp] bf16 @ [Kp, 32] bf16 -> f32, + bias, SiLU.
    x = cols_ref[0]                                              # (ts, K_PAD)
    stem = jnp.dot(x, w_stem_ref[...], preferred_element_type=jnp.float32)
    stem = stem + b_stem_ref[...]
    stem = stem * jax.nn.sigmoid(stem)                           # SiLU

    # Head 1x1 conv: [ts, 32] @ [32, 1280] -> f32, + bias, SiLU.
    head = jnp.dot(stem.astype(jnp.bfloat16), w_head_ref[...],
                   preferred_element_type=jnp.float32)           # (ts, 1280)
    head = head + b_head_ref[...]
    head = head * jax.nn.sigmoid(head)                           # SiLU

    # Global-average-pool accumulation (spatial sum, free under the MXU work).
    pooled_acc[...] += jnp.sum(head, axis=0, keepdims=True)      # (1, 1280)

    @pl.when(s == ns - 1)
    def _finalize():
        pooled = pooled_acc[...] * inv_hw                        # mean over HW
        logits = jnp.dot(pooled.astype(jnp.bfloat16), w_fc_ref[...],
                         preferred_element_type=jnp.float32)     # (1, FC_NP)
        logits = logits + b_fc_ref[...]
        out_ref[...] = logits.reshape(out_ref.shape)


# ----------------------------------------------------------------------------
# Conv lowering glue (im2col) — plain JAX, feeds the fused Pallas kernel.
# TODO(synk): move the im2col gather in-kernel (per-tap pl.ds loads from an
# NHWC VMEM tile) before scaling input resolution; the XLA-side 9-slice+concat
# costs ~9x input HBM traffic.
# ----------------------------------------------------------------------------
def im2col(x_nhwc, ksize=KSIZE, stride=STRIDE, pad=PAD):
    B, H, W, C = x_nhwc.shape
    xp = jnp.pad(x_nhwc, ((0, 0), (pad, pad), (pad, pad), (0, 0)))
    Ho = (H + 2 * pad - ksize) // stride + 1
    Wo = (W + 2 * pad - ksize) // stride + 1
    slabs = []
    for i in range(ksize):
        for j in range(ksize):
            slabs.append(
                xp[:, i:i + stride * Ho:stride, j:j + stride * Wo:stride, :]
            )
    cols = jnp.concatenate(slabs, axis=-1)   # [B, Ho, Wo, k*k*C], order (i,j,c)
    return cols, (B, Ho, Wo)


# ----------------------------------------------------------------------------
# Parameter construction (deterministic, synthetic — not a checkpoint load)
# ----------------------------------------------------------------------------
def init_params(key):
    k = jax.random.split(key, 6)
    # Stem conv: 3x3, stride 2, 3 -> 32 channels (EfficientNet-B0 stem).
    w_stem = 0.05 * jax.random.normal(k[0], (3, 3, 3, STEM_C), jnp.float32)
    b_stem = 0.01 * jax.random.normal(k[1], (STEM_C,), jnp.float32)
    # Head 1x1 conv: 32 -> 1280 features (EfficientNet-B0 final feature width).
    w_head = 0.05 * jax.random.normal(k[2], (STEM_C, HEAD_C), jnp.float32)
    b_head = 0.01 * jax.random.normal(k[3], (HEAD_C,), jnp.float32)
    # self.fc = nn.Linear(in_features=1280, out_features=18)
    w_fc = 0.05 * jax.random.normal(k[4], (HEAD_C, FC_N), jnp.float32)
    b_fc = 0.01 * jax.random.normal(k[5], (FC_N,), jnp.float32)
    return dict(w_stem=w_stem, b_stem=b_stem,
                w_head=w_head, b_head=b_head,
                w_fc=w_fc, b_fc=b_fc)


def _pick_spatial_tile(hw):
    # Largest candidate dividing HW keeps per-step overhead minimal; fallback
    # ts == HW is always legal (full-dim exemption from the (8,128) rule).
    for cand in (256, 128, 64, 32, 16, 8):
        if hw % cand == 0:
            return cand
    return hw


# ----------------------------------------------------------------------------
# Forward pass (mirrors ConvNet.forward: backbone -> fc -> split(9,2,7))
# ----------------------------------------------------------------------------
@jax.jit
def convnet_forward(params, x_nchw):
    # NCHW (PyTorch) -> NHWC for the TPU conv path.
    x = jnp.transpose(x_nchw, (0, 2, 3, 1)).astype(jnp.float32)

    cols, (B, Ho, Wo) = im2col(x)                     # [B, Ho, Wo, 27]
    HW = Ho * Wo
    cols = cols.reshape(B, HW, K_RAW)
    cols = jnp.pad(cols, ((0, 0), (0, 0), (0, K_PAD - K_RAW)))
    cols = cols.astype(jnp.bfloat16)                  # [B, HW, 32] bf16

    # Weights: bf16 for the MXU, biases stay f32 (added to f32 accumulators).
    w_stem = jnp.pad(params["w_stem"].reshape(K_RAW, STEM_C),
                     ((0, K_PAD - K_RAW), (0, 0))).astype(jnp.bfloat16)
    b_stem = params["b_stem"].reshape(1, STEM_C).astype(jnp.float32)
    w_head = params["w_head"].astype(jnp.bfloat16)                 # (32, 1280)
    b_head = params["b_head"].reshape(1, HEAD_C).astype(jnp.float32)
    w_fc = jnp.pad(params["w_fc"],
                   ((0, 0), (0, FC_NP - FC_N))).astype(jnp.bfloat16)
    b_fc = jnp.pad(params["b_fc"],
                   ((0, FC_NP - FC_N),)).reshape(1, FC_NP).astype(jnp.float32)

    ts = _pick_spatial_tile(HW)
    kernel = functools.partial(_fused_convnet_kernel, inv_hw=1.0 / HW)

    out = pl.pallas_call(
        kernel,
        out_shape=jax.ShapeDtypeStruct((B, 1, FC_NP), jnp.float32),
        grid_spec=pltpu.PrefetchScalarGridSpec(
            num_scalar_prefetch=0,
            grid=(B, HW // ts),
            in_specs=[
                pl.BlockSpec((1, ts, K_PAD), lambda b, s: (b, s, 0)),
                pl.BlockSpec((K_PAD, STEM_C), lambda b, s: (0, 0)),
                pl.BlockSpec((1, STEM_C), lambda b, s: (0, 0)),
                pl.BlockSpec((STEM_C, HEAD_C), lambda b, s: (0, 0)),
                pl.BlockSpec((1, HEAD_C), lambda b, s: (0, 0)),
                pl.BlockSpec((HEAD_C, FC_NP), lambda b, s: (0, 0)),
                pl.BlockSpec((1, FC_NP), lambda b, s: (0, 0)),
            ],
            out_specs=pl.BlockSpec((1, 1, FC_NP), lambda b, s: (b, 0, 0)),
            scratch_shapes=[pltpu.VMEM((1, HEAD_C), jnp.float32)],
        ),
        compiler_params=pltpu.CompilerParams(
            dimension_semantics=("parallel", "arbitrary"),
            vmem_limit_bytes=32 * 1024 * 1024,
        ),
    )(cols, w_stem, b_stem, w_head, b_head, w_fc, b_fc)

    logits = out.reshape(B, FC_NP)[:, :FC_N]          # drop lane padding

    # torch.split(x, [9, 2, 7], dim=1)
    age = logits[:, 0:9]
    gender = logits[:, 9:11]
    race = logits[:, 11:18]
    return age, gender, race


if __name__ == "__main__":
    key = jax.random.PRNGKey(0)
    pkey, xkey = jax.random.split(key)
    params = init_params(pkey)

    # Small image batch, PyTorch-style NCHW: [B=2, C=3, H=32, W=32].
    x = jax.random.normal(xkey, (2, 3, 32, 32), jnp.float32)

    age, gender, race = convnet_forward(params, x)
    jax.block_until_ready((age, gender, race))

    assert age.shape == (2, 9)
    assert gender.shape == (2, 2)
    assert race.shape == (2, 7)
    assert bool(jnp.all(jnp.isfinite(age)))
    assert bool(jnp.all(jnp.isfinite(gender)))
    assert bool(jnp.all(jnp.isfinite(race)))
    print("KERNEL_OK")
</pallas_src>

<mosaic_0001>
module attributes {stable_mosaic.version = 11 : i64} {
  func.func @_fused_convnet_kernel(%arg0: i32, %arg1: i32, %arg2: memref<1x256x32xbf16, #tpu.memory_space<vmem>>, %arg3: memref<32x32xbf16, #tpu.memory_space<vmem>>, %arg4: memref<1x32xf32, #tpu.memory_space<vmem>>, %arg5: memref<32x1280xbf16, #tpu.memory_space<vmem>>, %arg6: memref<1x1280xf32, #tpu.memory_space<vmem>>, %arg7: memref<1280x128xbf16, #tpu.memory_space<vmem>>, %arg8: memref<1x128xf32, #tpu.memory_space<vmem>>, %arg9: memref<1x1x128xf32, #tpu.memory_space<vmem>>, %arg10: memref<1x1280xf32, #tpu.memory_space<vmem>>) attributes {dimension_semantics = [#tpu.dimension_semantics<parallel>, #tpu.dimension_semantics<arbitrary>], iteration_bounds = array<i64: 2, 1>, scalar_prefetch = 0 : i64, scratch_operands = 1 : i64, tpu.core_type = #tpu.core_type<tc>, window_params = [{transform_indices = @transform_0, window_bounds = array<i64: 1, 256, 32>}, {pipeline_mode = #tpu.pipeline_mode<synchronous>, transform_indices = @transform_1, window_bounds = array<i64: 32, 32>}, {pipeline_mode = #tpu.pipeline_mode<synchronous>, transform_indices = @transform_2, window_bounds = array<i64: 1, 32>}, {pipeline_mode = #tpu.pipeline_mode<synchronous>, transform_indices = @transform_3, window_bounds = array<i64: 32, 1280>}, {pipeline_mode = #tpu.pipeline_mode<synchronous>, transform_indices = @transform_4, window_bounds = array<i64: 1, 1280>}, {pipeline_mode = #tpu.pipeline_mode<synchronous>, transform_indices = @transform_5, window_bounds = array<i64: 1280, 128>}, {pipeline_mode = #tpu.pipeline_mode<synchronous>, transform_indices = @transform_6, window_bounds = array<i64: 1, 128>}, {transform_indices = @transform_7, window_bounds = array<i64: 1, 1, 128>}]} {
    %c0_i32 = arith.constant 0 : i32
    %0 = arith.cmpi eq, %arg1, %c0_i32 : i32
    %1 = arith.extui %0 : i1 to i32
    %c0_i32_0 = arith.constant 0 : i32
    %2 = arith.cmpi ne, %1, %c0_i32_0 : i32
    scf.if %2 {
      %cst_21 = arith.constant 0.000000e+00 : f32
      %36 = vector.broadcast %cst_21 : f32 to vector<1x1280xf32>
      %c0_22 = arith.constant 0 : index
      %c0_23 = arith.constant 0 : index
      %37 = vector.load %arg10[%c0_22, %c0_23] : memref<1x1280xf32, #tpu.memory_space<vmem>>, vector<1x1280xf32>
      tpu.vector_store %arg10[%c0_22, %c0_23], %36 {strides = array<i32>} : memref<1x1280xf32, #tpu.memory_space<vmem>>, vector<1x1280xf32>,
    } else {
    }
    %c0 = arith.constant 0 : index
    %c0_1 = arith.constant 0 : index
    %c0_2 = arith.constant 0 : index
    %3 = vector.load %arg2[%c0, %c0_1, %c0_2] : memref<1x256x32xbf16, #tpu.memory_space<vmem>>, vector<1x256x32xbf16>
    %4 = vector.shape_cast %3 : vector<1x256x32xbf16> to vector<256x32xbf16>
    %c0_3 = arith.constant 0 : index
    %c0_4 = arith.constant 0 : index
    %5 = vector.load %arg3[%c0_3, %c0_4] : memref<32x32xbf16, #tpu.memory_space<vmem>>, vector<32x32xbf16>
    %cst = arith.constant dense<0.000000e+00> : vector<256x32xf32>
    %6 = tpu.matmul %4, %5, %cst {dimension_numbers = #tpu.dot_dimension_numbers<[1], [0], [0], [1], [0, 0, 1, 1], [], []>} : vector<256x32xbf16>, vector<32x32xbf16>, vector<256x32xf32> -> vector<256x32xf32>
    %c0_5 = arith.constant 0 : index
    %c0_6 = arith.constant 0 : index
    %7 = vector.load %arg4[%c0_5, %c0_6] : memref<1x32xf32, #tpu.memory_space<vmem>>, vector<1x32xf32>
    %8 = vector.broadcast %7 : vector<1x32xf32> to vector<256x32xf32>
    %9 = arith.addf %6, %8 : vector<256x32xf32>
    %10 = arith.negf %9 : vector<256x32xf32>
    %11 = math.exp %10 : vector<256x32xf32>
    %cst_7 = arith.constant 1.000000e+00 : f32
    %12 = vector.broadcast %cst_7 : f32 to vector<256x32xf32>
    %13 = arith.addf %12, %11 : vector<256x32xf32>
    %14 = arith.divf %12, %13 : vector<256x32xf32>
    %15 = arith.mulf %9, %14 : vector<256x32xf32>
    %16 = arith.truncf %15 : vector<256x32xf32> to vector<256x32xbf16>
    %c0_8 = arith.constant 0 : index
    %c0_9 = arith.constant 0 : index
    %17 = vector.load %arg5[%c0_8, %c0_9] : memref<32x1280xbf16, #tpu.memory_space<vmem>>, vector<32x1280xbf16>
    %cst_10 = arith.constant dense<0.000000e+00> : vector<256x1280xf32>
    %18 = tpu.matmul %16, %17, %cst_10 {dimension_numbers = #tpu.dot_dimension_numbers<[1], [0], [0], [1], [0, 0, 1, 1], [], []>} : vector<256x32xbf16>, vector<32x1280xbf16>, vector<256x1280xf32> -> vector<256x1280xf32>
    %c0_11 = arith.constant 0 : index
    %c0_12 = arith.constant 0 : index
    %19 = vector.load %arg6[%c0_11, %c0_12] : memref<1x1280xf32, #tpu.memory_space<vmem>>, vector<1x1280xf32>
    %20 = vector.broadcast %19 : vector<1x1280xf32> to vector<256x1280xf32>
    %21 = arith.addf %18, %20 : vector<256x1280xf32>
    %22 = arith.negf %21 : vector<256x1280xf32>
    %23 = math.exp %22 : vector<256x1280xf32>
    %cst_13 = arith.constant 1.000000e+00 : f32
    %24 = vector.broadcast %cst_13 : f32 to vector<256x1280xf32>
    %25 = arith.addf %24, %23 : vector<256x1280xf32>
    %26 = arith.divf %24, %25 : vector<256x1280xf32>
    %27 = arith.mulf %21, %26 : vector<256x1280xf32>
    %c0_14 = arith.constant 0 : index
    %c0_15 = arith.constant 0 : index
    %28 = vector.load %arg10[%c0_14, %c0_15] : memref<1x1280xf32, #tpu.memory_space<vmem>>, vector<1x1280xf32>
    %cst_16 = arith.constant dense<0.000000e+00> : vector<1280xf32>
    %29 = vector.multi_reduction <add>, %27, %cst_16 [0] : vector<256x1280xf32> to vector<1280xf32>
    %30 = vector.shape_cast %29 : vector<1280xf32> to vector<1x1280xf32>
    %31 = arith.addf %28, %30 : vector<1x1280xf32>
    %c0_17 = arith.constant 0 : index
    %c0_18 = arith.constant 0 : index
    %32 = vector.load %arg10[%c0_17, %c0_18] : memref<1x1280xf32, #tpu.memory_space<vmem>>, vector<1x1280xf32>
    tpu.vector_store %arg10[%c0_17, %c0_18], %31 {strides = array<i32>} : memref<1x1280xf32, #tpu.memory_space<vmem>>, vector<1x1280xf32>,
    %c0_i32_19 = arith.constant 0 : i32
    %33 = arith.cmpi eq, %arg1, %c0_i32_19 : i32
    %34 = arith.extui %33 : i1 to i32
    %c0_i32_20 = arith.constant 0 : i32
    %35 = arith.cmpi ne, %34, %c0_i32_20 : i32
    scf.if %35 {
      %c0_21 = arith.constant 0 : index
      %c0_22 = arith.constant 0 : index
      %36 = vector.load %arg10[%c0_21, %c0_22] : memref<1x1280xf32, #tpu.memory_space<vmem>>, vector<1x1280xf32>
      %cst_23 = arith.constant 3.906250e-03 : f32
      %37 = vector.broadcast %cst_23 : f32 to vector<1x1280xf32>
      %38 = arith.mulf %36, %37 : vector<1x1280xf32>
      %39 = arith.truncf %38 : vector<1x1280xf32> to vector<1x1280xbf16>
      %c0_24 = arith.constant 0 : index
      %c0_25 = arith.constant 0 : index
      %40 = vector.load %arg7[%c0_24, %c0_25] : memref<1280x128xbf16, #tpu.memory_space<vmem>>, vector<1280x128xbf16>
      %cst_26 = arith.constant dense<0.000000e+00> : vector<1x128xf32>
      %41 = tpu.matmul %39, %40, %cst_26 {dimension_numbers = #tpu.dot_dimension_numbers<[1], [0], [0], [1], [0, 0, 1, 1], [], []>} : vector<1x1280xbf16>, vector<1280x128xbf16>, vector<1x128xf32> -> vector<1x128xf32>
      %c0_27 = arith.constant 0 : index
      %c0_28 = arith.constant 0 : index
      %42 = vector.load %arg8[%c0_27, %c0_28] : memref<1x128xf32, #tpu.memory_space<vmem>>, vector<1x128xf32>
      %43 = arith.addf %41, %42 : vector<1x128xf32>
      %44 = vector.shape_cast %43 : vector<1x128xf32> to vector<1x1x128xf32>
      %c0_29 = arith.constant 0 : index
      %c0_30 = arith.constant 0 : index
      %c0_31 = arith.constant 0 : index
      %45 = vector.load %arg9[%c0_29, %c0_30, %c0_31] : memref<1x1x128xf32, #tpu.memory_space<vmem>>, vector<1x1x128xf32>
      tpu.vector_store %arg9[%c0_29, %c0_30, %c0_31], %44 {strides = array<i32>} : memref<1x1x128xf32, #tpu.memory_space<vmem>>, vector<1x1x128xf32>,
    } else {
    }
    return
  }
  func.func @transform_0(%arg0: i32, %arg1: i32) -> (i32, i32, i32) {
    %c0_i32 = arith.constant 0 : i32
    %c0_i32_0 = arith.constant 0 : i32
    return %arg0, %arg1, %c0_i32 : i32, i32, i32
  }
  func.func @transform_1(%arg0: i32, %arg1: i32) -> (i32, i32) {
    %c0_i32 = arith.constant 0 : i32
    %c0_i32_0 = arith.constant 0 : i32
    %c0_i32_1 = arith.constant 0 : i32
    return %c0_i32, %c0_i32_0 : i32, i32
  }
  func.func @transform_2(%arg0: i32, %arg1: i32) -> (i32, i32) {
    %c0_i32 = arith.constant 0 : i32
    %c0_i32_0 = arith.constant 0 : i32
    %c0_i32_1 = arith.constant 0 : i32
    return %c0_i32, %c0_i32_0 : i32, i32
  }
  func.func @transform_3(%arg0: i32, %arg1: i32) -> (i32, i32) {
    %c0_i32 = arith.constant 0 : i32
    %c0_i32_0 = arith.constant 0 : i32
    %c0_i32_1 = arith.constant 0 : i32
    return %c0_i32, %c0_i32_0 : i32, i32
  }
  func.func @transform_4(%arg0: i32, %arg1: i32) -> (i32, i32) {
    %c0_i32 = arith.constant 0 : i32
    %c0_i32_0 = arith.constant 0 : i32
    %c0_i32_1 = arith.constant 0 : i32
    return %c0_i32, %c0_i32_0 : i32, i32
  }
  func.func @transform_5(%arg0: i32, %arg1: i32) -> (i32, i32) {
    %c0_i32 = arith.constant 0 : i32
    %c0_i32_0 = arith.constant 0 : i32
    %c0_i32_1 = arith.constant 0 : i32
    return %c0_i32, %c0_i32_0 : i32, i32
  }
  func.func @transform_6(%arg0: i32, %arg1: i32) -> (i32, i32) {
    %c0_i32 = arith.constant 0 : i32
    %c0_i32_0 = arith.constant 0 : i32
    %c0_i32_1 = arith.constant 0 : i32
    return %c0_i32, %c0_i32_0 : i32, i32
  }
  func.func @transform_7(%arg0: i32, %arg1: i32) -> (i32, i32, i32) {
    %c0_i32 = arith.constant 0 : i32
    %c0_i32_0 = arith.constant 0 : i32
    %c0_i32_1 = arith.constant 0 : i32
    return %arg0, %c0_i32, %c0_i32_0 : i32, i32, i32
  }
}

</mosaic_0001>

<llo_original>
// kernel: convnet_forward.1
$region0: #{convnet_forward.1}
  #allocation0 [shape = 'u32[]', space=smem, size = 0x4, offset = 0x4, fixed_abs, tag = 'smem constant byte address 0x4 - core index']
  #allocation1 [shape = 'u32[72,128]{1,0:T(1,128)}', space=vmem, size = 0x9000, scoped, tag = 'internal scratch']
  #allocation2 [shape = 'f32[1,1280]{1,0:T(1,128)}', space=vmem, size = 0x1400, scoped, tag = 'scratch operand']
  %s0 = inlined_call_operand.vmem [shape: bf16[2,256,32], index: 0, kind: input, shape index: {}]
  %s1 = inlined_call_operand.vmem [shape: bf16[32,32], index: 1, kind: input, shape index: {}]
  %s2 = inlined_call_operand.vmem [shape: f32[1,32], index: 2, kind: input, shape index: {}]
  %s3 = inlined_call_operand.vmem [shape: bf16[32,1280], index: 3, kind: input, shape index: {}]
  %s4 = inlined_call_operand.vmem [shape: f32[1,1280], index: 4, kind: input, shape index: {}]
  %s5 = inlined_call_operand.vmem [shape: bf16[1280,128], index: 5, kind: input, shape index: {}]
  %s6 = inlined_call_operand.vmem [shape: f32[1,128], index: 6, kind: input, shape index: {}]
  %s7 = inlined_call_operand.vmem [shape: f32[2,1,128], index: 7, kind: output, shape index: {}]
  %s8 = sld [smem:[#allocation0]]
  $region69: #{convnet_forward.1} parent=0
    _
  %s10 = ssub.s32 1, %s8
  %s11 = scalar_select 0, %s10, %s8
  loop: start=0, step=1, limit=4
  $region2: #{convnet_forward.1} parent=0 // loop_pre_header
    _
  $region3: #{convnet_forward.1} parent=0 // loop_header
    %s13 = sphi 0, %s17
    %p14 = scmp.ge.s32.totalorder %s13, 4
    %s20 = sphi 0, %s32
    %s21 = sphi 0, %s28
    %s22 = sphi 0, %s20
    %s23 = sphi 0, %s21
    %s24 = sphi 0, %s22
    %s25 = sphi 0, %s23
    %s37 = sphi 0, %s39
    %s40 = sphi 0, %s37
    %s41 = sphi 0, %s40
    %s57 = sphi 0, %s41
    %s61 = sphi 0, %s61
    %s63 = sphi 0, %s61
    %s64 = sphi 0, %s63
    %s78 = sphi 0, %s64
    %s82 = sphi 0, %s82
    %s84 = sphi 0, %s82
    %s85 = sphi 0, %s84
    %s99 = sphi 0, %s85
    %s103 = sphi 0, %s103
    %s105 = sphi 0, %s103
    %s106 = sphi 0, %s105
    %s120 = sphi 0, %s106
    %s124 = sphi 0, %s124
    %s126 = sphi 0, %s124
    %s127 = sphi 0, %s126
    %s141 = sphi 0, %s127
    %s145 = sphi 0, %s145
    %s147 = sphi 0, %s145
    %s148 = sphi 0, %s147
    %s162 = sphi 0, %s148
    %s166 = sphi 0, %s166
    %s168 = sphi 0, %s166
    %s169 = sphi 0, %s168
    %s183 = sphi 0, %s169
    %s189 = sphi 0, %s191
    %s192 = sphi 0, %s189
    %s193 = sphi 0, %s192
    %s209 = sphi 0, %s193
  $region4: #{convnet_forward.1} parent=0 // loop_header_branch
    %16 = sbr.rel (%p14) target = $region8
  $region5: #{convnet_forward.1} parent=0 // loop_body
    %s18 = ssub.s32 %s13, 1
    %s19 = ssub.s32 %s13, 2
    %s26 = sadd.s32 1, %s21
    %p27 = scmp.ge.s32.totalorder %s26, 1
    %s28 = scalar_select %p27, 0, %s26
    %s29 = sadd.s32 1, %s20
    %s30 = scalar_select %p27, %s29, %s20
    %p31 = scmp.ge.s32.totalorder %s30, 2
    %s32 = scalar_select %p31, 0, %s30
    %s33 = ssub.s32 %s20, %s32
    %s34 = ssub.s32 %s21, %s28
    %s35 = sor.u32 %s33, %s34
    %p36 = scmp.eq.s32.totalorder %s35, 0
    %s38 = sadd.s32 %s37, 1
    %s39 = scalar_select %p36, %s37, %s38
    %p42 = pneg %p36
    %p43 = scmp.eq.s32.totalorder %s13, 1
    %p44 = por %p42, %p43
    %p45 = scmp.ne.s32.totalorder %s37, %s40
    %p46 = scmp.eq.s32.totalorder %s13, 0
    %p47 = por %p45, %p46
    %p48 = scmp.ne.s32.totalorder %s37, %s40
    %p49 = scmp.eq.s32.totalorder %s18, 1
    %p50 = por %p48, %p49
    %p51 = scmp.ne.s32.totalorder %s40, %s41
    %p52 = scmp.eq.s32.totalorder %s18, 0
    %p53 = por %p51, %p52
    %p54 = scmp.ne.s32.totalorder %s40, %s41
    %p55 = scmp.eq.s32.totalorder %s19, 1
    %p56 = por %p54, %p55
    %p58 = scmp.ne.s32.totalorder %s41, %s57
    %p59 = scmp.eq.s32.totalorder %s19, 0
    %p60 = por %p58, %p59
    %s62 = sadd.s32 %s61, 1
    %p65 = scmp.eq.s32.totalorder %s13, 1
    %p66 = scmp.ne.s32.totalorder %s61, %s63
    %p67 = scmp.eq.s32.totalorder %s13, 0
    %p68 = por %p66, %p67
    %p69 = scmp.ne.s32.totalorder %s61, %s63
    %p70 = scmp.eq.s32.totalorder %s18, 1
    %p71 = por %p69, %p70
    %p72 = scmp.ne.s32.totalorder %s63, %s64
    %p73 = scmp.eq.s32.totalorder %s18, 0
    %p74 = por %p72, %p73
    %p75 = scmp.ne.s32.totalorder %s63, %s64
    %p76 = scmp.eq.s32.totalorder %s19, 1
    %p77 = por %p75, %p76
    %p79 = scmp.ne.s32.totalorder %s64, %s78
    %p80 = scmp.eq.s32.totalorder %s19, 0
    %p81 = por %p79, %p80
    %s83 = sadd.s32 %s82, 1
    %p86 = scmp.eq.s32.totalorder %s13, 1
    %p87 = scmp.ne.s32.totalorder %s82, %s84
    %p88 = scmp.eq.s32.totalorder %s13, 0
    %p89 = por %p87, %p88
    %p90 = scmp.ne.s32.totalorder %s82, %s84
    %p91 = scmp.eq.s32.totalorder %s18, 1
    %p92 = por %p90, %p91
    %p93 = scmp.ne.s32.totalorder %s84, %s85
    %p94 = scmp.eq.s32.totalorder %s18, 0
    %p95 = por %p93, %p94
    %p96 = scmp.ne.s32.totalorder %s84, %s85
    %p97 = scmp.eq.s32.totalorder %s19, 1
    %p98 = por %p96, %p97
    %p100 = scmp.ne.s32.totalorder %s85, %s99
    %p101 = scmp.eq.s32.totalorder %s19, 0
    %p102 = por %p100, %p101
    %s104 = sadd.s32 %s103, 1
    %p107 = scmp.eq.s32.totalorder %s13, 1
    %p108 = scmp.ne.s32.totalorder %s103, %s105
    %p109 = scmp.eq.s32.totalorder %s13, 0
    %p110 = por %p108, %p109
    %p111 = scmp.ne.s32.totalorder %s103, %s105
    %p112 = scmp.eq.s32.totalorder %s18, 1
    %p113 = por %p111, %p112
    %p114 = scmp.ne.s32.totalorder %s105, %s106
    %p115 = scmp.eq.s32.totalorder %s18, 0
    %p116 = por %p114, %p115
    %p117 = scmp.ne.s32.totalorder %s105, %s106
    %p118 = scmp.eq.s32.totalorder %s19, 1
    %p119 = por %p117, %p118
    %p121 = scmp.ne.s32.totalorder %s106, %s120
    %p122 = scmp.eq.s32.totalorder %s19, 0
    %p123 = por %p121, %p122
    %s125 = sadd.s32 %s124, 1
    %p128 = scmp.eq.s32.totalorder %s13, 1
    %p129 = scmp.ne.s32.totalorder %s124, %s126
    %p130 = scmp.eq.s32.totalorder %s13, 0
    %p131 = por %p129, %p130
    %p132 = scmp.ne.s32.totalorder %s124, %s126
    %p133 = scmp.eq.s32.totalorder %s18, 1
    %p134 = por %p132, %p133
    %p135 = scmp.ne.s32.totalorder %s126, %s127
    %p136 = scmp.eq.s32.totalorder %s18, 0
    %p137 = por %p135, %p136
    %p138 = scmp.ne.s32.totalorder %s126, %s127
    %p139 = scmp.eq.s32.totalorder %s19, 1
    %p140 = por %p138, %p139
    %p142 = scmp.ne.s32.totalorder %s127, %s141
    %p143 = scmp.eq.s32.totalorder %s19, 0
    %p144 = por %p142, %p143
    %s146 = sadd.s32 %s145, 1
    %p149 = scmp.eq.s32.totalorder %s13, 1
    %p150 = scmp.ne.s32.totalorder %s145, %s147
    %p151 = scmp.eq.s32.totalorder %s13, 0
    %p152 = por %p150, %p151
    %p153 = scmp.ne.s32.totalorder %s145, %s147
    %p154 = scmp.eq.s32.totalorder %s18, 1
    %p155 = por %p153, %p154
    %p156 = scmp.ne.s32.totalorder %s147, %s148
    %p157 = scmp.eq.s32.totalorder %s18, 0
    %p158 = por %p156, %p157
    %p159 = scmp.ne.s32.totalorder %s147, %s148
    %p160 = scmp.eq.s32.totalorder %s19, 1
    %p161 = por %p159, %p160
    %p163 = scmp.ne.s32.totalorder %s148, %s162
    %p164 = scmp.eq.s32.totalorder %s19, 0
    %p165 = por %p163, %p164
    %s167 = sadd.s32 %s166, 1
    %p170 = scmp.eq.s32.totalorder %s13, 1
    %p171 = scmp.ne.s32.totalorder %s166, %s168
    %p172 = scmp.eq.s32.totalorder %s13, 0
    %p173 = por %p171, %p172
    %p174 = scmp.ne.s32.totalorder %s166, %s168
    %p175 = scmp.eq.s32.totalorder %s18, 1
    %p176 = por %p174, %p175
    %p177 = scmp.ne.s32.totalorder %s168, %s169
    %p178 = scmp.eq.s32.totalorder %s18, 0
    %p179 = por %p177, %p178
    %p180 = scmp.ne.s32.totalorder %s168, %s169
    %p181 = scmp.eq.s32.totalorder %s19, 1
    %p182 = por %p180, %p181
    %p184 = scmp.ne.s32.totalorder %s169, %s183
    %p185 = scmp.eq.s32.totalorder %s19, 0
    %p186 = por %p184, %p185
    %s187 = ssub.s32 %s20, %s32
    %p188 = scmp.eq.s32.totalorder %s187, 0
    %s190 = sadd.s32 %s189, 1
    %s191 = scalar_select %p188, %s189, %s190
    %p194 = pneg %p188
    %p195 = scmp.eq.s32.totalorder %s13, 1
    %p196 = por %p194, %p195
    %p197 = scmp.ne.s32.totalorder %s189, %s192
    %p198 = scmp.eq.s32.totalorder %s13, 0
    %p199 = por %p197, %p198
    %p200 = scmp.ne.s32.totalorder %s189, %s192
    %p201 = scmp.eq.s32.totalorder %s18, 1
    %p202 = por %p200, %p201
    %p203 = scmp.ne.s32.totalorder %s192, %s193
    %p204 = scmp.eq.s32.totalorder %s18, 0
    %p205 = por %p203, %p204
    %p206 = scmp.ne.s32.totalorder %s192, %s193
    %p207 = scmp.eq.s32.totalorder %s19, 1
    %p208 = por %p206, %p207
    %p210 = scmp.ne.s32.totalorder %s193, %s209
    %p211 = scmp.eq.s32.totalorder %s19, 0
    %p212 = por %p210, %p211
    %p213 = scmp.le.s32.totalorder 1, %s13
    %p214 = scmp.lt.s32.totalorder %s13, 3
    %p215 = pnand %p213, %p214
    %p216 = pneg %p215
    // Predicated region
    $region9: #{convnet_forward.1} parent=5 // pred_check
      _
    $region10: #{convnet_forward.1} parent=5 // pred_check_branch
      %218 = sbr.rel (%p215) target = $region12
    $region11: #{convnet_forward.1} parent=5 // pred_region
      %s219 = ssub.s32 %s13, 1
      // Predicated region
      $region13: #{convnet_forward.1} parent=11 // pred_check
        %p220 = pneg %p74
      $region14: #{convnet_forward.1} parent=11 // pred_check_branch
        %222 = sbr.rel (%p220) target = $region16
      $region15: #{convnet_forward.1} parent=11 // pred_region
        _
      $region16: #{convnet_forward.1} parent=11 // pred_fallthru
        _
      // Predicated region
      $region17: #{convnet_forward.1} parent=11 // pred_check
        %p223 = pneg %p95
      $region18: #{convnet_forward.1} parent=11 // pred_check_branch
        %225 = sbr.rel (%p223) target = $region20
      $region19: #{convnet_forward.1} parent=11 // pred_region
        _
      $region20: #{convnet_forward.1} parent=11 // pred_fallthru
        _
      // Predicated region
      $region21: #{convnet_forward.1} parent=11 // pred_check
        %p226 = pneg %p116
      $region22: #{convnet_forward.1} parent=11 // pred_check_branch
        %228 = sbr.rel (%p226) target = $region24
      $region23: #{convnet_forward.1} parent=11 // pred_region
        _
      $region24: #{convnet_forward.1} parent=11 // pred_fallthru
        _
      // Predicated region
      $region25: #{convnet_forward.1} parent=11 // pred_check
        %p229 = pneg %p137
      $region26: #{convnet_forward.1} parent=11 // pred_check_branch
        %231 = sbr.rel (%p229) target = $region28
      $region27: #{convnet_forward.1} parent=11 // pred_region
        _
      $region28: #{convnet_forward.1} parent=11 // pred_fallthru
        _
      // Predicated region
      $region29: #{convnet_forward.1} parent=11 // pred_check
        %p232 = pneg %p158
      $region30: #{convnet_forward.1} parent=11 // pred_check_branch
        %234 = sbr.rel (%p232) target = $region32
      $region31: #{convnet_forward.1} parent=11 // pred_region
        _
      $region32: #{convnet_forward.1} parent=11 // pred_fallthru
        _
      // Predicated region
      $region33: #{convnet_forward.1} parent=11 // pred_check
        %p235 = pneg %p179
      $region34: #{convnet_forward.1} parent=11 // pred_check_branch
        %237 = sbr.rel (%p235) target = $region36
      $region35: #{convnet_forward.1} parent=11 // pred_region
        _
      $region36: #{convnet_forward.1} parent=11 // pred_fallthru
        _
    $region12: #{convnet_forward.1} parent=5 // pred_fallthru
      _
    %p238 = scmp.lt.s32.totalorder %s13, 2
    // Predicated region
    $region37: #{convnet_forward.1} parent=5 // pred_check
      %p239 = pneg %p238
    $region38: #{convnet_forward.1} parent=5 // pred_check_branch
      %241 = sbr.rel (%p239) target = $region40
    $region39: #{convnet_forward.1} parent=5 // pred_region
      // Predicated region
      $region41: #{convnet_forward.1} parent=39 // pred_check
        %p242 = pneg %p47
      $region42: #{convnet_forward.1} parent=39 // pred_check_branch
        %244 = sbr.rel (%p242) target = $region44
      $region43: #{convnet_forward.1} parent=39 // pred_region
        %s245 = smul.u32 32, %s21
        %p246 = scmp.lt.s32.totalorder %s20, 1
        %s247 = scalar_select %p246, %s20, 1
        %p248 = scmp.lt.s32.totalorder %s245, 31
        %s249 = scalar_select %p248, %s245, 31
        %s250 = smul.addr %s247, 32
        %s251 = sadd.s32 %s249, %s250
        %s252 = smul.addr %s251, 4
        %s253 = scalar_lea.vmem %s0, %s252
        %s254 = smul.u32 32, %s21
      $region44: #{convnet_forward.1} parent=39 // pred_fallthru
        _
    $region40: #{convnet_forward.1} parent=5 // pred_fallthru
      _
    %p255 = scmp.le.s32.totalorder 1, %s13
    %p256 = scmp.lt.s32.totalorder %s13, 3
    %p257 = pnand %p255, %p256
    %p258 = pneg %p257
    // Predicated region
    $region45: #{convnet_forward.1} parent=5 // pred_check
      _
    $region46: #{convnet_forward.1} parent=5 // pred_check_branch
      %260 = sbr.rel (%p257) target = $region48
    $region47: #{convnet_forward.1} parent=5 // pred_region
      %s261 = ssub.s32 %s13, 1
      %s262 = smul.u32 32, %s23
      %p263 = scmp.lt.s32.totalorder %s22, 1
      %s264 = scalar_select %p263, %s22, 1
      %p265 = scmp.lt.s32.totalorder %s262, 31
      %s266 = scalar_select %p265, %s262, 31
      %s267 = smul.addr %s264, 32
      %s268 = sadd.s32 %s266, %s267
      %s269 = smul.addr %s268, 4
      %s270 = scalar_lea.vmem %s0, %s269
      %p271 = pneg %p53
      %p272 = pneg %p50
      %p273 = pneg %p74
      %p274 = pneg %p71
      %p275 = pneg %p95
      %p276 = pneg %p92
      %p277 = pneg %p116
      %p278 = pneg %p113
      %p279 = pneg %p137
      %p280 = pneg %p134
      %p281 = pneg %p158
      %p282 = pneg %p155
      %p283 = pneg %p179
      %p284 = pneg %p176
      %p285 = pneg %p205
      %p286 = pneg %p202
      %p287 = scmp.lt.s32.totalorder %s22, 1
      %s288 = scalar_select %p287, %s22, 1
      %s289 = scalar_lea.vmem %s7, %s288
      %s290 = smul.u32 32, %s23
      %p291 = scmp.lt.s32.totalorder %s22, 1
      %s292 = scalar_select %p291, %s22, 1
      %p293 = scmp.lt.s32.totalorder %s290, 31
      %s294 = scalar_select %p293, %s290, 31
      %s295 = smul.addr %s292, 32
      %s296 = sadd.s32 %s294, %s295
      %s297 = smul.addr %s296, 4
      %s298 = scalar_lea.vmem %s0, %s297
      %s299 = smul.u32 32, %s23
      %p300 = scmp.lt.s32.totalorder %s22, 1
      %s301 = scalar_select %p300, %s22, 1
      %s302 = scalar_lea.vmem %s7, %s301
      %p304 = scmp.eq.s32.totalorder %s23, 0
      // Predicated region
      $region49: #{convnet_forward.1} parent=47 // pred_check
        %p305 = pneg %p304
      $region50: #{convnet_forward.1} parent=47 // pred_check_branch
        %307 = sbr.rel (%p305) target = $region52
      $region51: #{convnet_forward.1} parent=47 // pred_region
        %308 = vst [vmem:[#allocation2] sm:$0xff] 0.0
        %v309 = vlaneseq
        %vm310 = vcmp.ge.s32.totalorder %v309, 0
        %vm311 = vcmp.lt.s32.totalorder %v309, 256
        %vm312 = vmand %vm310, %vm311
        %313 = vst.msk [vmem:[#allocation2 + $0x8] sm:$0x3] %vm312, 0.0
      $region52: #{convnet_forward.1} parent=47 // pred_fallthru
        _
      %v314 = vld [vmem:[%s298] sm:$0xf]
      %v315 = vld [vmem:[%s298 + $0x4] sm:$0xf]
      %v316 = vld [vmem:[%s298 + $0x8] sm:$0xf]
      %v317 = vld [vmem:[%s298 + $0xc] sm:$0xf]
      %v318 = vld [vmem:[%s298 + $0x10] sm:$0xf]
      %v319 = vld [vmem:[%s298 + $0x14] sm:$0xf]
      %v320 = vld [vmem:[%s298 + $0x18] sm:$0xf]
      %v321 = vld [vmem:[%s298 + $0x1c] sm:$0xf]
      %v322 = vld [vmem:[%s298 + $0x20] sm:$0xf]
      %v323 = vld [vmem:[%s298 + $0x24] sm:$0xf]
      %v324 = vld [vmem:[%s298 + $0x28] sm:$0xf]
      %v325 = vld [vmem:[%s298 + $0x2c] sm:$0xf]
      %v326 = vld [vmem:[%s298 + $0x30] sm:$0xf]
      %v327 = vld [vmem:[%s298 + $0x34] sm:$0xf]
      %v328 = vld [vmem:[%s298 + $0x38] sm:$0xf]
      %v329 = vld [vmem:[%s298 + $0x3c] sm:$0xf]
      %v330 = vld [vmem:[%s298 + $0x40] sm:$0xf]
      %v331 = vld [vmem:[%s298 + $0x44] sm:$0xf]
      %v332 = vld [vmem:[%s298 + $0x48] sm:$0xf]
      %v333 = vld [vmem:[%s298 + $0x4c] sm:$0xf]
      %v334 = vld [vmem:[%s298 + $0x50] sm:$0xf]
      %v335 = vld [vmem:[%s298 + $0x54] sm:$0xf]
      %v336 = vld [vmem:[%s298 + $0x58] sm:$0xf]
      %v337 = vld [vmem:[%s298 + $0x5c] sm:$0xf]
      %v338 = vld [vmem:[%s298 + $0x60] sm:$0xf]
      %v339 = vld [vmem:[%s298 + $0x64] sm:$0xf]
      %v340 = vld [vmem:[%s298 + $0x68] sm:$0xf]
      %v341 = vld [vmem:[%s298 + $0x6c] sm:$0xf]
      %v342 = vld [vmem:[%s298 + $0x70] sm:$0xf]
      %v343 = vld [vmem:[%s298 + $0x74] sm:$0xf]
      %v344 = vld [vmem:[%s298 + $0x78] sm:$0xf]
      %v345 = vld [vmem:[%s298 + $0x7c] sm:$0xf]
      %v346 = vld [vmem:[%s1] sm:$0xf]
      %v347 = vld [vmem:[%s1 + $0x4] sm:$0xf]
      %v348 = vld [vmem:[%s1 + $0x8] sm:$0xf]
      %v349 = vld [vmem:[%s1 + $0xc] sm:$0xf]
      %v350 = vld [vmem:[%s2] sm:$0x1]
      %v352 = vperm.slane %v350, 0
      %v386 = vunpack.c.l.b16 %v314
      %v387 = vunpack.c.l.b16 %v315
      %v388 = vunpack.c.l.b16 %v316
      %v389 = vunpack.c.l.b16 %v317
      %v390 = vunpack.c.l.b16 %v318
      %v391 = vunpack.c.l.b16 %v319
      %v392 = vunpack.c.l.b16 %v320
      %v393 = vunpack.c.l.b16 %v321
      %v394 = vunpack.c.l.b16 %v322
      %v395 = vunpack.c.l.b16 %v323
      %v396 = vunpack.c.l.b16 %v324
      %v397 = vunpack.c.l.b16 %v325
      %v398 = vunpack.c.l.b16 %v326
      %v399 = vunpack.c.l.b16 %v327
      %v400 = vunpack.c.l.b16 %v328
      %v401 = vunpack.c.l.b16 %v329
      %v402 = vunpack.c.l.b16 %v330
      %v403 = vunpack.c.l.b16 %v331
      %v404 = vunpack.c.l.b16 %v332
      %v405 = vunpack.c.l.b16 %v333
      %v406 = vunpack.c.l.b16 %v334
      %v407 = vunpack.c.l.b16 %v335
      %v408 = vunpack.c.l.b16 %v336
      %v409 = vunpack.c.l.b16 %v337
      %v410 = vunpack.c.l.b16 %v338
      %v411 = vunpack.c.l.b16 %v339
      %v412 = vunpack.c.l.b16 %v340
      %v413 = vunpack.c.l.b16 %v341
      %v414 = vunpack.c.l.b16 %v342
      %v415 = vunpack.c.l.b16 %v343
      %v416 = vunpack.c.l.b16 %v344
      %v417 = vunpack.c.l.b16 %v345
      %v418 = vpack.c.b16 %v387, %v386
      %v419 = vpack.c.b16 %v389, %v388
      %v420 = vpack.c.b16 %v391, %v390
      %v421 = vpack.c.b16 %v393, %v392
      %v422 = vpack.c.b16 %v395, %v394
      %v423 = vpack.c.b16 %v397, %v396
      %v424 = vpack.c.b16 %v399, %v398
      %v425 = vpack.c.b16 %v401, %v400
      %v426 = vpack.c.b16 %v403, %v402
      %v427 = vpack.c.b16 %v405, %v404
      %v428 = vpack.c.b16 %v407, %v406
      %v429 = vpack.c.b16 %v409, %v408
      %v430 = vpack.c.b16 %v411, %v410
      %v431 = vpack.c.b16 %v413, %v412
      %v432 = vpack.c.b16 %v415, %v414
      %v433 = vpack.c.b16 %v417, %v416
      %v438 = vunpack.c.l.b16 %v346
      %v439 = vunpack.c.l.b16 %v347
      %v440 = vunpack.c.l.b16 %v348
      %v441 = vunpack.c.l.b16 %v349
      %v442 = vpack.c.b16 %v439, %v438
      %v443 = vpack.c.b16 %v441, %v440
      %vm446 = vcmask 261120
      %v448 = vsel %vm446, %v418, 0
      %v451 = vsel %vm446, %v419, 0
      %v454 = vsel %vm446, %v420, 0
      %v457 = vsel %vm446, %v421, 0
      %v460 = vsel %vm446, %v422, 0
      %v463 = vsel %vm446, %v423, 0
      %v466 = vsel %vm446, %v424, 0
      %v469 = vsel %vm446, %v425, 0
      %v472 = vsel %vm446, %v426, 0
      %v475 = vsel %vm446, %v427, 0
      %v478 = vsel %vm446, %v428, 0
      %v481 = vsel %vm446, %v429, 0
      %v484 = vsel %vm446, %v430, 0
      %v487 = vsel %vm446, %v431, 0
      %v490 = vsel %vm446, %v432, 0
      %v493 = vsel %vm446, %v433, 0
      %495 = vmatpush.bf16.msra.mxu0 0
      %496 = vmatpush.bf16.msra.mxu0 0
      %497 = vmatpush.bf16.msra.mxu0 0
      %498 = vmatpush.bf16.msra.mxu0 0
      %499 = vmatpush.bf16.msra.mxu0 0
      %500 = vmatpush.bf16.msra.mxu0 0
      %501 = vmatpush.bf16.msra.mxu0 %v443
      %502 = vmatpush.bf16.msra.mxu0 %v442
      %503 = vmatmul.bf16.gmra.mxu0 %v448
      %v504 = vpop.f32.mrf.mxu0
      %v505 = vadd.f32 %v352, %v504
      %v506 = vpop.f32.mrf.mxu0
      %v507 = vadd.f32 %v352, %v506
      %508 = vmatmul.bf16.gmra.mxu0 %v451
      %v509 = vpop.f32.mrf.mxu0
      %v510 = vadd.f32 %v352, %v509
      %v511 = vpop.f32.mrf.mxu0
      %v512 = vadd.f32 %v352, %v511
      %513 = vmatmul.bf16.gmra.mxu0 %v454
      %v514 = vpop.f32.mrf.mxu0
      %v515 = vadd.f32 %v352, %v514
      %v516 = vpop.f32.mrf.mxu0
      %v517 = vadd.f32 %v352, %v516
      %518 = vmatmul.bf16.gmra.mxu0 %v457
      %v519 = vpop.f32.mrf.mxu0
      %v520 = vadd.f32 %v352, %v519
      %v521 = vpop.f32.mrf.mxu0
      %v522 = vadd.f32 %v352, %v521
      %523 = vmatmul.bf16.gmra.mxu0 %v460
      %v524 = vpop.f32.mrf.mxu0
      %v525 = vadd.f32 %v352, %v524
      %v526 = vpop.f32.mrf.mxu0
      %v527 = vadd.f32 %v352, %v526
      %528 = vmatmul.bf16.gmra.mxu0 %v463
      %v529 = vpop.f32.mrf.mxu0
      %v530 = vadd.f32 %v352, %v529
      %v531 = vpop.f32.mrf.mxu0
      %v532 = vadd.f32 %v352, %v531
      %533 = vmatmul.bf16.gmra.mxu0 %v466
      %v534 = vpop.f32.mrf.mxu0
      %v535 = vadd.f32 %v352, %v534
      %v536 = vpop.f32.mrf.mxu0
      %v537 = vadd.f32 %v352, %v536
      %538 = vmatmul.bf16.gmra.mxu0 %v469
      %v539 = vpop.f32.mrf.mxu0
      %v540 = vadd.f32 %v352, %v539
      %v541 = vpop.f32.mrf.mxu0
      %v542 = vadd.f32 %v352, %v541
      %543 = vmatmul.bf16.gmra.mxu0 %v472
      %v544 = vpop.f32.mrf.mxu0
      %v545 = vadd.f32 %v352, %v544
      %v546 = vpop.f32.mrf.mxu0
      %v547 = vadd.f32 %v352, %v546
      %548 = vmatmul.bf16.gmra.mxu0 %v475
      %v549 = vpop.f32.mrf.mxu0
      %v550 = vadd.f32 %v352, %v549
      %v551 = vpop.f32.mrf.mxu0
      %v552 = vadd.f32 %v352, %v551
      %553 = vmatmul.bf16.gmra.mxu0 %v478
      %v554 = vpop.f32.mrf.mxu0
      %v555 = vadd.f32 %v352, %v554
      %v556 = vpop.f32.mrf.mxu0
      %v557 = vadd.f32 %v352, %v556
      %558 = vmatmul.bf16.gmra.mxu0 %v481
      %v559 = vpop.f32.mrf.mxu0
      %v560 = vadd.f32 %v352, %v559
      %v561 = vpop.f32.mrf.mxu0
      %v562 = vadd.f32 %v352, %v561
      %563 = vmatmul.bf16.gmra.mxu0 %v484
      %v564 = vpop.f32.mrf.mxu0
      %v565 = vadd.f32 %v352, %v564
      %v566 = vpop.f32.mrf.mxu0
      %v567 = vadd.f32 %v352, %v566
      %568 = vmatmul.bf16.gmra.mxu0 %v487
      %v569 = vpop.f32.mrf.mxu0
      %v570 = vadd.f32 %v352, %v569
      %v571 = vpop.f32.mrf.mxu0
      %v572 = vadd.f32 %v352, %v571
      %573 = vmatmul.bf16.gmra.mxu0 %v490
      %v574 = vpop.f32.mrf.mxu0
      %v575 = vadd.f32 %v352, %v574
      %v576 = vpop.f32.mrf.mxu0
      %v577 = vadd.f32 %v352, %v576
      %578 = vmatmul.bf16.gmra.mxu0 %v493
      %v579 = vpop.f32.mrf.mxu0
      %v580 = vadd.f32 %v352, %v579
      %v581 = vpop.f32.mrf.mxu0
      %v582 = vadd.f32 %v352, %v581
      %583 = vdwg.mxu0
      %v584 = vxor.u32 %v505, 2147483648
      %v585 = vxor.u32 %v507, 2147483648
      %v586 = vxor.u32 %v510, 2147483648
      %v587 = vxor.u32 %v512, 2147483648
      %v588 = vxor.u32 %v515, 2147483648
      %v589 = vxor.u32 %v517, 2147483648
      %v590 = vxor.u32 %v520, 2147483648
      %v591 = vxor.u32 %v522, 2147483648
      %v592 = vxor.u32 %v525, 2147483648
      %v593 = vxor.u32 %v527, 2147483648
      %v594 = vxor.u32 %v530, 2147483648
      %v595 = vxor.u32 %v532, 2147483648
      %v596 = vxor.u32 %v535, 2147483648
      %v597 = vxor.u32 %v537, 2147483648
      %v598 = vxor.u32 %v540, 2147483648
      %v599 = vxor.u32 %v542, 2147483648
      %v600 = vxor.u32 %v545, 2147483648
      %v601 = vxor.u32 %v547, 2147483648
      %v602 = vxor.u32 %v550, 2147483648
      %v603 = vxor.u32 %v552, 2147483648
      %v604 = vxor.u32 %v555, 2147483648
      %v605 = vxor.u32 %v557, 2147483648
      %v606 = vxor.u32 %v560, 2147483648
      %v607 = vxor.u32 %v562, 2147483648
      %v608 = vxor.u32 %v565, 2147483648
      %v609 = vxor.u32 %v567, 2147483648
      %v610 = vxor.u32 %v570, 2147483648
      %v611 = vxor.u32 %v572, 2147483648
      %v612 = vxor.u32 %v575, 2147483648
      %v613 = vxor.u32 %v577, 2147483648
      %v614 = vxor.u32 %v580, 2147483648
      %v615 = vxor.u32 %v582, 2147483648
      %v616 = vmul.f32 %v584, 1.442695
      %v617 = vpow.pop %v616
      %v618 = vmul.f32 %v585, 1.442695
      %v619 = vpow.pop %v618
      %v620 = vmul.f32 %v586, 1.442695
      %v621 = vpow.pop %v620
      %v622 = vmul.f32 %v587, 1.442695
      %v623 = vpow.pop %v622
      %v624 = vmul.f32 %v588, 1.442695
      %v625 = vpow.pop %v624
      %v626 = vmul.f32 %v589, 1.442695
      %v627 = vpow.pop %v626
      %v628 = vmul.f32 %v590, 1.442695
      %v629 = vpow.pop %v628
      %v630 = vmul.f32 %v591, 1.442695
      %v631 = vpow.pop %v630
      %v632 = vmul.f32 %v592, 1.442695
      %v633 = vpow.pop %v632
      %v634 = vmul.f32 %v593, 1.442695
      %v635 = vpow.pop %v634
      %v636 = vmul.f32 %v594, 1.442695
      %v637 = vpow.pop %v636
      %v638 = vmul.f32 %v595, 1.442695
      %v639 = vpow.pop %v638
      %v640 = vmul.f32 %v596, 1.442695
      %v641 = vpow.pop %v640
      %v642 = vmul.f32 %v597, 1.442695
      %v643 = vpow.pop %v642
      %v644 = vmul.f32 %v598, 1.442695
      %v645 = vpow.pop %v644
      %v646 = vmul.f32 %v599, 1.442695
      %v647 = vpow.pop %v646
      %v648 = vmul.f32 %v600, 1.442695
      %v649 = vpow.pop %v648
      %v650 = vmul.f32 %v601, 1.442695
      %v651 = vpow.pop %v650
      %v652 = vmul.f32 %v602, 1.442695
      %v653 = vpow.pop %v652
      %v654 = vmul.f32 %v603, 1.442695
      %v655 = vpow.pop %v654
      %v656 = vmul.f32 %v604, 1.442695
      %v657 = vpow.pop %v656
      %v658 = vmul.f32 %v605, 1.442695
      %v659 = vpow.pop %v658
      %v660 = vmul.f32 %v606, 1.442695
      %v661 = vpow.pop %v660
      %v662 = vmul.f32 %v607, 1.442695
      %v663 = vpow.pop %v662
      %v664 = vmul.f32 %v608, 1.442695
      %v665 = vpow.pop %v664
      %v666 = vmul.f32 %v609, 1.442695
      %v667 = vpow.pop %v666
      %v668 = vmul.f32 %v610, 1.442695
      %v669 = vpow.pop %v668
      %v670 = vmul.f32 %v611, 1.442695
      %v671 = vpow.pop %v670
      %v672 = vmul.f32 %v612, 1.442695
      %v673 = vpow.pop %v672
      %v674 = vmul.f32 %v613, 1.442695
      %v675 = vpow.pop %v674
      %v676 = vmul.f32 %v614, 1.442695
      %v677 = vpow.pop %v676
      %v678 = vmul.f32 %v615, 1.442695
      %v679 = vpow.pop %v678
      %v680 = vadd.f32 %v617, 1.0
      %v681 = vadd.f32 %v619, 1.0
      %v682 = vadd.f32 %v621, 1.0
      %v683 = vadd.f32 %v623, 1.0
      %v684 = vadd.f32 %v625, 1.0
      %v685 = vadd.f32 %v627, 1.0
      %v686 = vadd.f32 %v629, 1.0
      %v687 = vadd.f32 %v631, 1.0
      %v688 = vadd.f32 %v633, 1.0
      %v689 = vadd.f32 %v635, 1.0
      %v690 = vadd.f32 %v637, 1.0
      %v691 = vadd.f32 %v639, 1.0
      %v692 = vadd.f32 %v641, 1.0
      %v693 = vadd.f32 %v643, 1.0
      %v694 = vadd.f32 %v645, 1.0
      %v695 = vadd.f32 %v647, 1.0
      %v696 = vadd.f32 %v649, 1.0
      %v697 = vadd.f32 %v651, 1.0
      %v698 = vadd.f32 %v653, 1.0
      %v699 = vadd.f32 %v655, 1.0
      %v700 = vadd.f32 %v657, 1.0
      %v701 = vadd.f32 %v659, 1.0
      %v702 = vadd.f32 %v661, 1.0
      %v703 = vadd.f32 %v663, 1.0
      %v704 = vadd.f32 %v665, 1.0
      %v705 = vadd.f32 %v667, 1.0
      %v706 = vadd.f32 %v669, 1.0
      %v707 = vadd.f32 %v671, 1.0
      %v708 = vadd.f32 %v673, 1.0
      %v709 = vadd.f32 %v675, 1.0
      %v710 = vadd.f32 %v677, 1.0
      %v711 = vadd.f32 %v679, 1.0
      %v712 = vrcp.pop %v680
      %v713 = vmul.f32 %v680, %v712
      %v714 = vsub.f32 1.0, %v713
      %v715 = vmul.f32 %v712, %v714
      %v716 = vadd.f32 %v712, %v715
      %vm717 = vweird.f32 %v680
      %vm718 = vweird.f32 %v712
      %vm719 = vmor %vm717, %vm718
      %v720 = vsel %vm719, %v712, %v716
      %v721 = vand.u32 2147483647, %v680
      %vm722 = vcmp.eq.f32.partialorder %v721, 8.507059e+37
      %v723 = vand.u32 %v680, 2147483648
      %v724 = vor.u32 1.1754944e-38, %v723
      %v725 = vsel %vm722, %v724, %v720
      %v726 = vmul.f32 1.0, %v725
      %v727 = vrcp.pop %v681
      %v728 = vmul.f32 %v681, %v727
      %v729 = vsub.f32 1.0, %v728
      %v730 = vmul.f32 %v727, %v729
      %v731 = vadd.f32 %v727, %v730
      %vm732 = vweird.f32 %v681
      %vm733 = vweird.f32 %v727
      %vm734 = vmor %vm732, %vm733
      %v735 = vsel %vm734, %v727, %v731
      %v736 = vand.u32 2147483647, %v681
      %vm737 = vcmp.eq.f32.partialorder %v736, 8.507059e+37
      %v738 = vand.u32 %v681, 2147483648
      %v739 = vor.u32 1.1754944e-38, %v738
      %v740 = vsel %vm737, %v739, %v735
      %v741 = vmul.f32 1.0, %v740
      %v742 = vrcp.pop %v682
      %v743 = vmul.f32 %v682, %v742
      %v744 = vsub.f32 1.0, %v743
      %v745 = vmul.f32 %v742, %v744
      %v746 = vadd.f32 %v742, %v745
      %vm747 = vweird.f32 %v682
      %vm748 = vweird.f32 %v742
      %vm749 = vmor %vm747, %vm748
      %v750 = vsel %vm749, %v742, %v746
      %v751 = vand.u32 2147483647, %v682
      %vm752 = vcmp.eq.f32.partialorder %v751, 8.507059e+37
      %v753 = vand.u32 %v682, 2147483648
      %v754 = vor.u32 1.1754944e-38, %v753
      %v755 = vsel %vm752, %v754, %v750
      %v756 = vmul.f32 1.0, %v755
      %v757 = vrcp.pop %v683
      %v758 = vmul.f32 %v683, %v757
      %v759 = vsub.f32 1.0, %v758
      %v760 = vmul.f32 %v757, %v759
      %v761 = vadd.f32 %v757, %v760
      %vm762 = vweird.f32 %v683
      %vm763 = vweird.f32 %v757
      %vm764 = vmor %vm762, %vm763
      %v765 = vsel %vm764, %v757, %v761
      %v766 = vand.u32 2147483647, %v683
      %vm767 = vcmp.eq.f32.partialorder %v766, 8.507059e+37
      %v768 = vand.u32 %v683, 2147483648
      %v769 = vor.u32 1.1754944e-38, %v768
      %v770 = vsel %vm767, %v769, %v765
      %v771 = vmul.f32 1.0, %v770
      %v772 = vrcp.pop %v684
      %v773 = vmul.f32 %v684, %v772
      %v774 = vsub.f32 1.0, %v773
      %v775 = vmul.f32 %v772, %v774
      %v776 = vadd.f32 %v772, %v775
      %vm777 = vweird.f32 %v684
      %vm778 = vweird.f32 %v772
      %vm779 = vmor %vm777, %vm778
      %v780 = vsel %vm779, %v772, %v776
      %v781 = vand.u32 2147483647, %v684
      %vm782 = vcmp.eq.f32.partialorder %v781, 8.507059e+37
      %v783 = vand.u32 %v684, 2147483648
      %v784 = vor.u32 1.1754944e-38, %v783
      %v785 = vsel %vm782, %v784, %v780
      %v786 = vmul.f32 1.0, %v785
      %v787 = vrcp.pop %v685
      %v788 = vmul.f32 %v685, %v787
      %v789 = vsub.f32 1.0, %v788
      %v790 = vmul.f32 %v787, %v789
      %v791 = vadd.f32 %v787, %v790
      %vm792 = vweird.f32 %v685
      %vm793 = vweird.f32 %v787
      %vm794 = vmor %vm792, %vm793
      %v795 = vsel %vm794, %v787, %v791
      %v796 = vand.u32 2147483647, %v685
      %vm797 = vcmp.eq.f32.partialorder %v796, 8.507059e+37
      %v798 = vand.u32 %v685, 2147483648
      %v799 = vor.u32 1.1754944e-38, %v798
      %v800 = vsel %vm797, %v799, %v795
      %v801 = vmul.f32 1.0, %v800
      %v802 = vrcp.pop %v686
      %v803 = vmul.f32 %v686, %v802
      %v804 = vsub.f32 1.0, %v803
      %v805 = vmul.f32 %v802, %v804
      %v806 = vadd.f32 %v802, %v805
      %vm807 = vweird.f32 %v686
      %vm808 = vweird.f32 %v802
      %vm809 = vmor %vm807, %vm808
      %v810 = vsel %vm809, %v802, %v806
      %v811 = vand.u32 2147483647, %v686
      %vm812 = vcmp.eq.f32.partialorder %v811, 8.507059e+37
      %v813 = vand.u32 %v686, 2147483648
      %v814 = vor.u32 1.1754944e-38, %v813
      %v815 = vsel %vm812, %v814, %v810
      %v816 = vmul.f32 1.0, %v815
      %v817 = vrcp.pop %v687
      %v818 = vmul.f32 %v687, %v817
      %v819 = vsub.f32 1.0, %v818
      %v820 = vmul.f32 %v817, %v819
      %v821 = vadd.f32 %v817, %v820
      %vm822 = vweird.f32 %v687
      %vm823 = vweird.f32 %v817
      %vm824 = vmor %vm822, %vm823
      %v825 = vsel %vm824, %v817, %v821
      %v826 = vand.u32 2147483647, %v687
      %vm827 = vcmp.eq.f32.partialorder %v826, 8.507059e+37
      %v828 = vand.u32 %v687, 2147483648
      %v829 = vor.u32 1.1754944e-38, %v828
      %v830 = vsel %vm827, %v829, %v825
      %v831 = vmul.f32 1.0, %v830
      %v832 = vrcp.pop %v688
      %v833 = vmul.f32 %v688, %v832
      %v834 = vsub.f32 1.0, %v833
      %v835 = vmul.f32 %v832, %v834
      %v836 = vadd.f32 %v832, %v835
      %vm837 = vweird.f32 %v688
      %vm838 = vweird.f32 %v832
      %vm839 = vmor %vm837, %vm838
      %v840 = vsel %vm839, %v832, %v836
      %v841 = vand.u32 2147483647, %v688
      %vm842 = vcmp.eq.f32.partialorder %v841, 8.507059e+37
      %v843 = vand.u32 %v688, 2147483648
      %v844 = vor.u32 1.1754944e-38, %v843
      %v845 = vsel %vm842, %v844, %v840
      %v846 = vmul.f32 1.0, %v845
      %v847 = vrcp.pop %v689
      %v848 = vmul.f32 %v689, %v847
      %v849 = vsub.f32 1.0, %v848
      %v850 = vmul.f32 %v847, %v849
      %v851 = vadd.f32 %v847, %v850
      %vm852 = vweird.f32 %v689
      %vm853 = vweird.f32 %v847
      %vm854 = vmor %vm852, %vm853
      %v855 = vsel %vm854, %v847, %v851
      %v856 = vand.u32 2147483647, %v689
      %vm857 = vcmp.eq.f32.partialorder %v856, 8.507059e+37
      %v858 = vand.u32 %v689, 2147483648
      %v859 = vor.u32 1.1754944e-38, %v858
      %v860 = vsel %vm857, %v859, %v855
      %v861 = vmul.f32 1.0, %v860
      %v862 = vrcp.pop %v690
      %v863 = vmul.f32 %v690, %v862
      %v864 = vsub.f32 1.0, %v863
      %v865 = vmul.f32 %v862, %v864
      %v866 = vadd.f32 %v862, %v865
      %vm867 = vweird.f32 %v690
      %vm868 = vweird.f32 %v862
      %vm869 = vmor %vm867, %vm868
      %v870 = vsel %vm869, %v862, %v866
      %v871 = vand.u32 2147483647, %v690
      %vm872 = vcmp.eq.f32.partialorder %v871, 8.507059e+37
      %v873 = vand.u32 %v690, 2147483648
      %v874 = vor.u32 1.1754944e-38, %v873
      %v875 = vsel %vm872, %v874, %v870
      %v876 = vmul.f32 1.0, %v875
      %v877 = vrcp.pop %v691
      %v878 = vmul.f32 %v691, %v877
      %v879 = vsub.f32 1.0, %v878
      %v880 = vmul.f32 %v877, %v879
      %v881 = vadd.f32 %v877, %v880
      %vm882 = vweird.f32 %v691
      %vm883 = vweird.f32 %v877
      %vm884 = vmor %vm882, %vm883
      %v885 = vsel %vm884, %v877, %v881
      %v886 = vand.u32 2147483647, %v691
      %vm887 = vcmp.eq.f32.partialorder %v886, 8.507059e+37
      %v888 = vand.u32 %v691, 2147483648
      %v889 = vor.u32 1.1754944e-38, %v888
      %v890 = vsel %vm887, %v889, %v885
      %v891 = vmul.f32 1.0, %v890
      %v892 = vrcp.pop %v692
      %v893 = vmul.f32 %v692, %v892
      %v894 = vsub.f32 1.0, %v893
      %v895 = vmul.f32 %v892, %v894
      %v896 = vadd.f32 %v892, %v895
      %vm897 = vweird.f32 %v692
      %vm898 = vweird.f32 %v892
      %vm899 = vmor %vm897, %vm898
      %v900 = vsel %vm899, %v892, %v896
      %v901 = vand.u32 2147483647, %v692
      %vm902 = vcmp.eq.f32.partialorder %v901, 8.507059e+37
      %v903 = vand.u32 %v692, 2147483648
      %v904 = vor.u32 1.1754944e-38, %v903
      %v905 = vsel %vm902, %v904, %v900
      %v906 = vmul.f32 1.0, %v905
      %v907 = vrcp.pop %v693
      %v908 = vmul.f32 %v693, %v907
      %v909 = vsub.f32 1.0, %v908
      %v910 = vmul.f32 %v907, %v909
      %v911 = vadd.f32 %v907, %v910
      %vm912 = vweird.f32 %v693
      %vm913 = vweird.f32 %v907
      %vm914 = vmor %vm912, %vm913
      %v915 = vsel %vm914, %v907, %v911
      %v916 = vand.u32 2147483647, %v693
      %vm917 = vcmp.eq.f32.partialorder %v916, 8.507059e+37
      %v918 = vand.u32 %v693, 2147483648
      %v919 = vor.u32 1.1754944e-38, %v918
      %v920 = vsel %vm917, %v919, %v915
      %v921 = vmul.f32 1.0, %v920
      %v922 = vrcp.pop %v694
      %v923 = vmul.f32 %v694, %v922
      %v924 = vsub.f32 1.0, %v923
      %v925 = vmul.f32 %v922, %v924
      %v926 = vadd.f32 %v922, %v925
      %vm927 = vweird.f32 %v694
      %vm928 = vweird.f32 %v922
      %vm929 = vmor %vm927, %vm928
      %v930 = vsel %vm929, %v922, %v926
      %v931 = vand.u32 2147483647, %v694
      %vm932 = vcmp.eq.f32.partialorder %v931, 8.507059e+37
      %v933 = vand.u32 %v694, 2147483648
      %v934 = vor.u32 1.1754944e-38, %v933
      %v935 = vsel %vm932, %v934, %v930
      %v936 = vmul.f32 1.0, %v935
      %v937 = vrcp.pop %v695
      %v938 = vmul.f32 %v695, %v937
      %v939 = vsub.f32 1.0, %v938
      %v940 = vmul.f32 %v937, %v939
      %v941 = vadd.f32 %v937, %v940
      %vm942 = vweird.f32 %v695
      %vm943 = vweird.f32 %v937
      %vm944 = vmor %vm942, %vm943
      %v945 = vsel %vm944, %v937, %v941
      %v946 = vand.u32 2147483647, %v695
      %vm947 = vcmp.eq.f32.partialorder %v946, 8.507059e+37
      %v948 = vand.u32 %v695, 2147483648
      %v949 = vor.u32 1.1754944e-38, %v948
      %v950 = vsel %vm947, %v949, %v945
      %v951 = vmul.f32 1.0, %v950
      %v952 = vrcp.pop %v696
      %v953 = vmul.f32 %v696, %v952
      %v954 = vsub.f32 1.0, %v953
      %v955 = vmul.f32 %v952, %v954
      %v956 = vadd.f32 %v952, %v955
      %vm957 = vweird.f32 %v696
      %vm958 = vweird.f32 %v952
      %vm959 = vmor %vm957, %vm958
      %v960 = vsel %vm959, %v952, %v956
      %v961 = vand.u32 2147483647, %v696
      %vm962 = vcmp.eq.f32.partialorder %v961, 8.507059e+37
      %v963 = vand.u32 %v696, 2147483648
      %v964 = vor.u32 1.1754944e-38, %v963
      %v965 = vsel %vm962, %v964, %v960
      %v966 = vmul.f32 1.0, %v965
      %v967 = vrcp.pop %v697
      %v968 = vmul.f32 %v697, %v967
      %v969 = vsub.f32 1.0, %v968
      %v970 = vmul.f32 %v967, %v969
      %v971 = vadd.f32 %v967, %v970
      %vm972 = vweird.f32 %v697
      %vm973 = vweird.f32 %v967
      %vm974 = vmor %vm972, %vm973
      %v975 = vsel %vm974, %v967, %v971
      %v976 = vand.u32 2147483647, %v697
      %vm977 = vcmp.eq.f32.partialorder %v976, 8.507059e+37
      %v978 = vand.u32 %v697, 2147483648
      %v979 = vor.u32 1.1754944e-38, %v978
      %v980 = vsel %vm977, %v979, %v975
      %v981 = vmul.f32 1.0, %v980
      %v982 = vrcp.pop %v698
      %v983 = vmul.f32 %v698, %v982
      %v984 = vsub.f32 1.0, %v983
      %v985 = vmul.f32 %v982, %v984
      %v986 = vadd.f32 %v982, %v985
      %vm987 = vweird.f32 %v698
      %vm988 = vweird.f32 %v982
      %vm989 = vmor %vm987, %vm988
      %v990 = vsel %vm989, %v982, %v986
      %v991 = vand.u32 2147483647, %v698
      %vm992 = vcmp.eq.f32.partialorder %v991, 8.507059e+37
      %v993 = vand.u32 %v698, 2147483648
      %v994 = vor.u32 1.1754944e-38, %v993
      %v995 = vsel %vm992, %v994, %v990
      %v996 = vmul.f32 1.0, %v995
      %v997 = vrcp.pop %v699
      %v998 = vmul.f32 %v699, %v997
      %v999 = vsub.f32 1.0, %v998
      %v1000 = vmul.f32 %v997, %v999
      %v1001 = vadd.f32 %v997, %v1000
      %vm1002 = vweird.f32 %v699
      %vm1003 = vweird.f32 %v997
      %vm1004 = vmor %vm1002, %vm1003
      %v1005 = vsel %vm1004, %v997, %v1001
      %v1006 = vand.u32 2147483647, %v699
      %vm1007 = vcmp.eq.f32.partialorder %v1006, 8.507059e+37
      %v1008 = vand.u32 %v699, 2147483648
      %v1009 = vor.u32 1.1754944e-38, %v1008
      %v1010 = vsel %vm1007, %v1009, %v1005
      %v1011 = vmul.f32 1.0, %v1010
      %v1012 = vrcp.pop %v700
      %v1013 = vmul.f32 %v700, %v1012
      %v1014 = vsub.f32 1.0, %v1013
      %v1015 = vmul.f32 %v1012, %v1014
      %v1016 = vadd.f32 %v1012, %v1015
      %vm1017 = vweird.f32 %v700
      %vm1018 = vweird.f32 %v1012
      %vm1019 = vmor %vm1017, %vm1018
      %v1020 = vsel %vm1019, %v1012, %v1016
      %v1021 = vand.u32 2147483647, %v700
      %vm1022 = vcmp.eq.f32.partialorder %v1021, 8.507059e+37
      %v1023 = vand.u32 %v700, 2147483648
      %v1024 = vor.u32 1.1754944e-38, %v1023
      %v1025 = vsel %vm1022, %v1024, %v1020
      %v1026 = vmul.f32 1.0, %v1025
      %v1027 = vrcp.pop %v701
      %v1028 = vmul.f32 %v701, %v1027
      %v1029 = vsub.f32 1.0, %v1028
      %v1030 = vmul.f32 %v1027, %v1029
      %v1031 = vadd.f32 %v1027, %v1030
      %vm1032 = vweird.f32 %v701
      %vm1033 = vweird.f32 %v1027
      %vm1034 = vmor %vm1032, %vm1033
      %v1035 = vsel %vm1034, %v1027, %v1031
      %v1036 = vand.u32 2147483647, %v701
      %vm1037 = vcmp.eq.f32.partialorder %v1036, 8.507059e+37
      %v1038 = vand.u32 %v701, 2147483648
      %v1039 = vor.u32 1.1754944e-38, %v1038
      %v1040 = vsel %vm1037, %v1039, %v1035
      %v1041 = vmul.f32 1.0, %v1040
      %v1042 = vrcp.pop %v702
      %v1043 = vmul.f32 %v702, %v1042
      %v1044 = vsub.f32 1.0, %v1043
      %v1045 = vmul.f32 %v1042, %v1044
      %v1046 = vadd.f32 %v1042, %v1045
      %vm1047 = vweird.f32 %v702
      %vm1048 = vweird.f32 %v1042
      %vm1049 = vmor %vm1047, %vm1048
      %v1050 = vsel %vm1049, %v1042, %v1046
      %v1051 = vand.u32 2147483647, %v702
      %vm1052 = vcmp.eq.f32.partialorder %v1051, 8.507059e+37
      %v1053 = vand.u32 %v702, 2147483648
      %v1054 = vor.u32 1.1754944e-38, %v1053
      %v1055 = vsel %vm1052, %v1054, %v1050
      %v1056 = vmul.f32 1.0, %v1055
      %v1057 = vrcp.pop %v703
      %v1058 = vmul.f32 %v703, %v1057
      %v1059 = vsub.f32 1.0, %v1058
      %v1060 = vmul.f32 %v1057, %v1059
      %v1061 = vadd.f32 %v1057, %v1060
      %vm1062 = vweird.f32 %v703
      %vm1063 = vweird.f32 %v1057
      %vm1064 = vmor %vm1062, %vm1063
      %v1065 = vsel %vm1064, %v1057, %v1061
      %v1066 = vand.u32 2147483647, %v703
      %vm1067 = vcmp.eq.f32.partialorder %v1066, 8.507059e+37
      %v1068 = vand.u32 %v703, 2147483648
      %v1069 = vor.u32 1.1754944e-38, %v1068
      %v1070 = vsel %vm1067, %v1069, %v1065
      %v1071 = vmul.f32 1.0, %v1070
      %v1072 = vrcp.pop %v704
      %v1073 = vmul.f32 %v704, %v1072
      %v1074 = vsub.f32 1.0, %v1073
      %v1075 = vmul.f32 %v1072, %v1074
      %v1076 = vadd.f32 %v1072, %v1075
      %vm1077 = vweird.f32 %v704
      %vm1078 = vweird.f32 %v1072
      %vm1079 = vmor %vm1077, %vm1078
      %v1080 = vsel %vm1079, %v1072, %v1076
      %v1081 = vand.u32 2147483647, %v704
      %vm1082 = vcmp.eq.f32.partialorder %v1081, 8.507059e+37
      %v1083 = vand.u32 %v704, 2147483648
      %v1084 = vor.u32 1.1754944e-38, %v1083
      %v1085 = vsel %vm1082, %v1084, %v1080
      %v1086 = vmul.f32 1.0, %v1085
      %v1087 = vrcp.pop %v705
      %v1088 = vmul.f32 %v705, %v1087
      %v1089 = vsub.f32 1.0, %v1088
      %v1090 = vmul.f32 %v1087, %v1089
      %v1091 = vadd.f32 %v1087, %v1090
      %vm1092 = vweird.f32 %v705
      %vm1093 = vweird.f32 %v1087
      %vm1094 = vmor %vm1092, %vm1093
      %v1095 = vsel %vm1094, %v1087, %v1091
      %v1096 = vand.u32 2147483647, %v705
      %vm1097 = vcmp.eq.f32.partialorder %v1096, 8.507059e+37
      %v1098 = vand.u32 %v705, 2147483648
      %v1099 = vor.u32 1.1754944e-38, %v1098
      %v1100 = vsel %vm1097, %v1099, %v1095
      %v1101 = vmul.f32 1.0, %v1100
      %v1102 = vrcp.pop %v706
      %v1103 = vmul.f32 %v706, %v1102
      %v1104 = vsub.f32 1.0, %v1103
      %v1105 = vmul.f32 %v1102, %v1104
      %v1106 = vadd.f32 %v1102, %v1105
      %vm1107 = vweird.f32 %v706
      %vm1108 = vweird.f32 %v1102
      %vm1109 = vmor %vm1107, %vm1108
      %v1110 = vsel %vm1109, %v1102, %v1106
      %v1111 = vand.u32 2147483647, %v706
      %vm1112 = vcmp.eq.f32.partialorder %v1111, 8.507059e+37
      %v1113 = vand.u32 %v706, 2147483648
      %v1114 = vor.u32 1.1754944e-38, %v1113
      %v1115 = vsel %vm1112, %v1114, %v1110
      %v1116 = vmul.f32 1.0, %v1115
      %v1117 = vrcp.pop %v707
      %v1118 = vmul.f32 %v707, %v1117
      %v1119 = vsub.f32 1.0, %v1118
      %v1120 = vmul.f32 %v1117, %v1119
      %v1121 = vadd.f32 %v1117, %v1120
      %vm1122 = vweird.f32 %v707
      %vm1123 = vweird.f32 %v1117
      %vm1124 = vmor %vm1122, %vm1123
      %v1125 = vsel %vm1124, %v1117, %v1121
      %v1126 = vand.u32 2147483647, %v707
      %vm1127 = vcmp.eq.f32.partialorder %v1126, 8.507059e+37
      %v1128 = vand.u32 %v707, 2147483648
      %v1129 = vor.u32 1.1754944e-38, %v1128
      %v1130 = vsel %vm1127, %v1129, %v1125
      %v1131 = vmul.f32 1.0, %v1130
      %v1132 = vrcp.pop %v708
      %v1133 = vmul.f32 %v708, %v1132
      %v1134 = vsub.f32 1.0, %v1133
      %v1135 = vmul.f32 %v1132, %v1134
      %v1136 = vadd.f32 %v1132, %v1135
      %vm1137 = vweird.f32 %v708
      %vm1138 = vweird.f32 %v1132
      %vm1139 = vmor %vm1137, %vm1138
      %v1140 = vsel %vm1139, %v1132, %v1136
      %v1141 = vand.u32 2147483647, %v708
      %vm1142 = vcmp.eq.f32.partialorder %v1141, 8.507059e+37
      %v1143 = vand.u32 %v708, 2147483648
      %v1144 = vor.u32 1.1754944e-38, %v1143
      %v1145 = vsel %vm1142, %v1144, %v1140
      %v1146 = vmul.f32 1.0, %v1145
      %v1147 = vrcp.pop %v709
      %v1148 = vmul.f32 %v709, %v1147
      %v1149 = vsub.f32 1.0, %v1148
      %v1150 = vmul.f32 %v1147, %v1149
      %v1151 = vadd.f32 %v1147, %v1150
      %vm1152 = vweird.f32 %v709
      %vm1153 = vweird.f32 %v1147
      %vm1154 = vmor %vm1152, %vm1153
      %v1155 = vsel %vm1154, %v1147, %v1151
      %v1156 = vand.u32 2147483647, %v709
      %vm1157 = vcmp.eq.f32.partialorder %v1156, 8.507059e+37
      %v1158 = vand.u32 %v709, 2147483648
      %v1159 = vor.u32 1.1754944e-38, %v1158
      %v1160 = vsel %vm1157, %v1159, %v1155
      %v1161 = vmul.f32 1.0, %v1160
      %v1162 = vrcp.pop %v710
      %v1163 = vmul.f32 %v710, %v1162
      %v1164 = vsub.f32 1.0, %v1163
      %v1165 = vmul.f32 %v1162, %v1164
      %v1166 = vadd.f32 %v1162, %v1165
      %vm1167 = vweird.f32 %v710
      %vm1168 = vweird.f32 %v1162
      %vm1169 = vmor %vm1167, %vm1168
      %v1170 = vsel %vm1169, %v1162, %v1166
      %v1171 = vand.u32 2147483647, %v710
      %vm1172 = vcmp.eq.f32.partialorder %v1171, 8.507059e+37
      %v1173 = vand.u32 %v710, 2147483648
      %v1174 = vor.u32 1.1754944e-38, %v1173
      %v1175 = vsel %vm1172, %v1174, %v1170
      %v1176 = vmul.f32 1.0, %v1175
      %v1177 = vrcp.pop %v711
      %v1178 = vmul.f32 %v711, %v1177
      %v1179 = vsub.f32 1.0, %v1178
      %v1180 = vmul.f32 %v1177, %v1179
      %v1181 = vadd.f32 %v1177, %v1180
      %vm1182 = vweird.f32 %v711
      %vm1183 = vweird.f32 %v1177
      %vm1184 = vmor %vm1182, %vm1183
      %v1185 = vsel %vm1184, %v1177, %v1181
      %v1186 = vand.u32 2147483647, %v711
      %vm1187 = vcmp.eq.f32.partialorder %v1186, 8.507059e+37
      %v1188 = vand.u32 %v711, 2147483648
      %v1189 = vor.u32 1.1754944e-38, %v1188
      %v1190 = vsel %vm1187, %v1189, %v1185
      %v1191 = vmul.f32 1.0, %v1190
      %v1192 = vmul.f32 %v505, %v726
      %v1193 = vmul.f32 %v507, %v741
      %v1194 = vmul.f32 %v510, %v756
      %v1195 = vmul.f32 %v512, %v771
      %v1196 = vmul.f32 %v515, %v786
      %v1197 = vmul.f32 %v517, %v801
      %v1198 = vmul.f32 %v520, %v816
      %v1199 = vmul.f32 %v522, %v831
      %v1200 = vmul.f32 %v525, %v846
      %v1201 = vmul.f32 %v527, %v861
      %v1202 = vmul.f32 %v530, %v876
      %v1203 = vmul.f32 %v532, %v891
      %v1204 = vmul.f32 %v535, %v906
      %v1205 = vmul.f32 %v537, %v921
      %v1206 = vmul.f32 %v540, %v936
      %v1207 = vmul.f32 %v542, %v951
      %v1208 = vmul.f32 %v545, %v966
      %v1209 = vmul.f32 %v547, %v981
      %v1210 = vmul.f32 %v550, %v996
      %v1211 = vmul.f32 %v552, %v1011
      %v1212 = vmul.f32 %v555, %v1026
      %v1213 = vmul.f32 %v557, %v1041
      %v1214 = vmul.f32 %v560, %v1056
      %v1215 = vmul.f32 %v562, %v1071
      %v1216 = vmul.f32 %v565, %v1086
      %v1217 = vmul.f32 %v567, %v1101
      %v1218 = vmul.f32 %v570, %v1116
      %v1219 = vmul.f32 %v572, %v1131
      %v1220 = vmul.f32 %v575, %v1146
      %v1221 = vmul.f32 %v577, %v1161
      %v1222 = vmul.f32 %v580, %v1176
      %v1223 = vmul.f32 %v582, %v1191
      %v1224 = vpack.c.bf16 %v1193, %v1192
      %v1225 = vpack.c.bf16 %v1195, %v1194
      %v1226 = vpack.c.bf16 %v1197, %v1196
      %v1227 = vpack.c.bf16 %v1199, %v1198
      %v1228 = vpack.c.bf16 %v1201, %v1200
      %v1229 = vpack.c.bf16 %v1203, %v1202
      %v1230 = vpack.c.bf16 %v1205, %v1204
      %v1231 = vpack.c.bf16 %v1207, %v1206
      %v1232 = vpack.c.bf16 %v1209, %v1208
      %v1233 = vpack.c.bf16 %v1211, %v1210
      %v1234 = vpack.c.bf16 %v1213, %v1212
      %v1235 = vpack.c.bf16 %v1215, %v1214
      %v1236 = vpack.c.bf16 %v1217, %v1216
      %v1237 = vpack.c.bf16 %v1219, %v1218
      %v1238 = vpack.c.bf16 %v1221, %v1220
      %v1239 = vpack.c.bf16 %v1223, %v1222
      %v1240 = vld [vmem:[%s3] sm:$0xff]
      %v1241 = vld [vmem:[%s3 + $0x8] sm:$0xff]
      %v1242 = vld [vmem:[%s3 + $0x10] sm:$0xff]
      %v1243 = vld [vmem:[%s3 + $0x18] sm:$0xff]
      %v1244 = vld [vmem:[%s3 + $0x20] sm:$0xff]
      %v1245 = vld [vmem:[%s3 + $0x28] sm:$0xff]
      %v1246 = vld [vmem:[%s3 + $0x30] sm:$0xff]
      %v1247 = vld [vmem:[%s3 + $0x38] sm:$0xff]
      %v1248 = vld [vmem:[%s3 + $0x40] sm:$0xff]
      %v1249 = vld [vmem:[%s3 + $0x48] sm:$0xff]
      %v1250 = vld [vmem:[%s3 + $0x50] sm:$0xff]
      %v1251 = vld [vmem:[%s3 + $0x58] sm:$0xff]
      %v1252 = vld [vmem:[%s3 + $0x60] sm:$0xff]
      %v1253 = vld [vmem:[%s3 + $0x68] sm:$0xff]
      %v1254 = vld [vmem:[%s3 + $0x70] sm:$0xff]
      %v1255 = vld [vmem:[%s3 + $0x78] sm:$0xff]
      %v1256 = vld [vmem:[%s3 + $0x80] sm:$0xff]
      %v1257 = vld [vmem:[%s3 + $0x88] sm:$0xff]
      %v1258 = vld [vmem:[%s3 + $0x90] sm:$0xff]
      %v1259 = vld [vmem:[%s3 + $0x98] sm:$0xff]
      %v1260 = vld [vmem:[%s4] sm:$0xff]
      %v1261 = vld [vmem:[%s4 + $0x8] sm:$0x3]
      %v1264 = vperm.slane %v1260, 0
      %v1265 = vperm.slane %v1260, 1
      %v1266 = vperm.slane %v1260, 2
      %v1267 = vperm.slane %v1260, 3
      %v1268 = vperm.slane %v1260, 4
      %v1269 = vperm.slane %v1260, 5
      %v1270 = vperm.slane %v1260, 6
      %v1271 = vperm.slane %v1260, 7
      %v1272 = vperm.slane %v1261, 0
      %v1273 = vperm.slane %v1261, 1
      %v1304 = vunpack.c.l.b16 %v1240
      %v1305 = vunpack.c.h.b16 %v1240
      %v1306 = vunpack.c.l.b16 %v1241
      %v1307 = vunpack.c.h.b16 %v1241
      %v1308 = vunpack.c.l.b16 %v1242
      %v1309 = vunpack.c.h.b16 %v1242
      %v1310 = vunpack.c.l.b16 %v1243
      %v1311 = vunpack.c.h.b16 %v1243
      %v1312 = vunpack.c.l.b16 %v1244
      %v1313 = vunpack.c.h.b16 %v1244
      %v1314 = vunpack.c.l.b16 %v1245
      %v1315 = vunpack.c.h.b16 %v1245
      %v1316 = vunpack.c.l.b16 %v1246
      %v1317 = vunpack.c.h.b16 %v1246
      %v1318 = vunpack.c.l.b16 %v1247
      %v1319 = vunpack.c.h.b16 %v1247
      %v1320 = vunpack.c.l.b16 %v1248
      %v1321 = vunpack.c.h.b16 %v1248
      %v1322 = vunpack.c.l.b16 %v1249
      %v1323 = vunpack.c.h.b16 %v1249
      %v1324 = vunpack.c.l.b16 %v1250
      %v1325 = vunpack.c.h.b16 %v1250
      %v1326 = vunpack.c.l.b16 %v1251
      %v1327 = vunpack.c.h.b16 %v1251
      %v1328 = vunpack.c.l.b16 %v1252
      %v1329 = vunpack.c.h.b16 %v1252
      %v1330 = vunpack.c.l.b16 %v1253
      %v1331 = vunpack.c.h.b16 %v1253
      %v1332 = vunpack.c.l.b16 %v1254
      %v1333 = vunpack.c.h.b16 %v1254
      %v1334 = vunpack.c.l.b16 %v1255
      %v1335 = vunpack.c.h.b16 %v1255
      %v1336 = vunpack.c.l.b16 %v1256
      %v1337 = vunpack.c.h.b16 %v1256
      %v1338 = vunpack.c.l.b16 %v1257
      %v1339 = vunpack.c.h.b16 %v1257
      %v1340 = vunpack.c.l.b16 %v1258
      %v1341 = vunpack.c.h.b16 %v1258
      %v1342 = vunpack.c.l.b16 %v1259
      %v1343 = vunpack.c.h.b16 %v1259
      %v1344 = vpack.c.b16 %v1314, %v1304
      %v1345 = vpack.c.b16 %v1315, %v1305
      %v1346 = vpack.c.b16 %v1316, %v1306
      %v1347 = vpack.c.b16 %v1317, %v1307
      %v1348 = vpack.c.b16 %v1318, %v1308
      %v1349 = vpack.c.b16 %v1319, %v1309
      %v1350 = vpack.c.b16 %v1320, %v1310
      %v1351 = vpack.c.b16 %v1321, %v1311
      %v1352 = vpack.c.b16 %v1322, %v1312
      %v1353 = vpack.c.b16 %v1323, %v1313
      %v1354 = vpack.c.b16 %v1334, %v1324
      %v1355 = vpack.c.b16 %v1335, %v1325
      %v1356 = vpack.c.b16 %v1336, %v1326
      %v1357 = vpack.c.b16 %v1337, %v1327
      %v1358 = vpack.c.b16 %v1338, %v1328
      %v1359 = vpack.c.b16 %v1339, %v1329
      %v1360 = vpack.c.b16 %v1340, %v1330
      %v1361 = vpack.c.b16 %v1341, %v1331
      %v1362 = vpack.c.b16 %v1342, %v1332
      %v1363 = vpack.c.b16 %v1343, %v1333
      %v1385 = vsel %vm446, %v1224, 0
      %v1388 = vsel %vm446, %v1225, 0
      %v1391 = vsel %vm446, %v1226, 0
      %v1394 = vsel %vm446, %v1227, 0
      %v1397 = vsel %vm446, %v1228, 0
      %v1400 = vsel %vm446, %v1229, 0
      %v1403 = vsel %vm446, %v1230, 0
      %v1406 = vsel %vm446, %v1231, 0
      %v1409 = vsel %vm446, %v1232, 0
      %v1412 = vsel %vm446, %v1233, 0
      %v1415 = vsel %vm446, %v1234, 0
      %v1418 = vsel %vm446, %v1235, 0
      %v1421 = vsel %vm446, %v1236, 0
      %v1424 = vsel %vm446, %v1237, 0
      %v1427 = vsel %vm446, %v1238, 0
      %v1430 = vsel %vm446, %v1239, 0
      %1432 = vmatpush.bf16.msra.mxu0 0
      %1433 = vmatpush.bf16.msra.mxu0 0
      %1434 = vmatpush.bf16.msra.mxu0 0
      %1435 = vmatpush.bf16.msra.mxu0 0
      %1436 = vmatpush.bf16.msra.mxu0 0
      %1437 = vmatpush.bf16.msra.mxu0 0
      %1438 = vmatpush.bf16.msra.mxu0 %v1354
      %1439 = vmatpush.bf16.msra.mxu0 %v1344
      %1440 = vmatmul.bf16.gmra.mxu0 %v1385
      %v1441 = vpop.f32.mrf.mxu0
      %v1442 = vadd.f32 %v1264, %v1441
      %v1443 = vpop.f32.mrf.mxu0
      %v1444 = vadd.f32 %v1264, %v1443
      %1445 = vmatmul.bf16.gmra.mxu0 %v1388
      %v1446 = vpop.f32.mrf.mxu0
      %v1447 = vadd.f32 %v1264, %v1446
      %v1448 = vpop.f32.mrf.mxu0
      %v1449 = vadd.f32 %v1264, %v1448
      %1450 = vmatmul.bf16.gmra.mxu0 %v1391
      %v1451 = vpop.f32.mrf.mxu0
      %v1452 = vadd.f32 %v1264, %v1451
      %v1453 = vpop.f32.mrf.mxu0
      %v1454 = vadd.f32 %v1264, %v1453
      %1455 = vmatmul.bf16.gmra.mxu0 %v1394
      %v1456 = vpop.f32.mrf.mxu0
      %v1457 = vadd.f32 %v1264, %v1456
      %v1458 = vpop.f32.mrf.mxu0
      %v1459 = vadd.f32 %v1264, %v1458
      %1460 = vmatmul.bf16.gmra.mxu0 %v1397
      %v1461 = vpop.f32.mrf.mxu0
      %v1462 = vadd.f32 %v1264, %v1461
      %v1463 = vpop.f32.mrf.mxu0
      %v1464 = vadd.f32 %v1264, %v1463
      %1465 = vmatmul.bf16.gmra.mxu0 %v1400
      %v1466 = vpop.f32.mrf.mxu0
      %v1467 = vadd.f32 %v1264, %v1466
      %v1468 = vpop.f32.mrf.mxu0
      %v1469 = vadd.f32 %v1264, %v1468
      %1470 = vmatmul.bf16.gmra.mxu0 %v1403
      %v1471 = vpop.f32.mrf.mxu0
      %v1472 = vadd.f32 %v1264, %v1471
      %v1473 = vpop.f32.mrf.mxu0
      %v1474 = vadd.f32 %v1264, %v1473
      %1475 = vmatmul.bf16.gmra.mxu0 %v1406
      %v1476 = vpop.f32.mrf.mxu0
      %v1477 = vadd.f32 %v1264, %v1476
      %v1478 = vpop.f32.mrf.mxu0
      %v1479 = vadd.f32 %v1264, %v1478
      %1480 = vmatmul.bf16.gmra.mxu0 %v1409
      %v1481 = vpop.f32.mrf.mxu0
      %v1482 = vadd.f32 %v1264, %v1481
      %v1483 = vpop.f32.mrf.mxu0
      %v1484 = vadd.f32 %v1264, %v1483
      %1485 = vmatmul.bf16.gmra.mxu0 %v1412
      %v1486 = vpop.f32.mrf.mxu0
      %v1487 = vadd.f32 %v1264, %v1486
      %v1488 = vpop.f32.mrf.mxu0
      %v1489 = vadd.f32 %v1264, %v1488
      %1490 = vmatmul.bf16.gmra.mxu0 %v1415
      %v1491 = vpop.f32.mrf.mxu0
      %v1492 = vadd.f32 %v1264, %v1491
      %v1493 = vpop.f32.mrf.mxu0
      %v1494 = vadd.f32 %v1264, %v1493
      %1495 = vmatmul.bf16.gmra.mxu0 %v1418
      %v1496 = vpop.f32.mrf.mxu0
      %v1497 = vadd.f32 %v1264, %v1496
      %v1498 = vpop.f32.mrf.mxu0
      %v1499 = vadd.f32 %v1264, %v1498
      %1500 = vmatmul.bf16.gmra.mxu0 %v1421
      %v1501 = vpop.f32.mrf.mxu0
      %v1502 = vadd.f32 %v1264, %v1501
      %v1503 = vpop.f32.mrf.mxu0
      %v1504 = vadd.f32 %v1264, %v1503
      %1505 = vmatmul.bf16.gmra.mxu0 %v1424
      %v1506 = vpop.f32.mrf.mxu0
      %v1507 = vadd.f32 %v1264, %v1506
      %v1508 = vpop.f32.mrf.mxu0
      %v1509 = vadd.f32 %v1264, %v1508
      %1510 = vmatmul.bf16.gmra.mxu0 %v1427
      %v1511 = vpop.f32.mrf.mxu0
      %v1512 = vadd.f32 %v1264, %v1511
      %v1513 = vpop.f32.mrf.mxu0
      %v1514 = vadd.f32 %v1264, %v1513
      %1515 = vmatmul.bf16.gmra.mxu0 %v1430
      %v1516 = vpop.f32.mrf.mxu0
      %v1517 = vadd.f32 %v1264, %v1516
      %v1518 = vpop.f32.mrf.mxu0
      %v1519 = vadd.f32 %v1264, %v1518
      %1520 = vdwg.mxu0
      %1521 = vmatpush.bf16.msra.mxu0 0
      %1522 = vmatpush.bf16.msra.mxu0 0
      %1523 = vmatpush.bf16.msra.mxu0 0
      %1524 = vmatpush.bf16.msra.mxu0 0
      %1525 = vmatpush.bf16.msra.mxu0 0
      %1526 = vmatpush.bf16.msra.mxu0 0
      %1527 = vmatpush.bf16.msra.mxu0 %v1355
      %1528 = vmatpush.bf16.msra.mxu0 %v1345
      %1529 = vmatmul.bf16.gmra.mxu0 %v1385
      %v1530 = vpop.f32.mrf.mxu0
      %v1531 = vadd.f32 %v1265, %v1530
      %v1532 = vpop.f32.mrf.mxu0
      %v1533 = vadd.f32 %v1265, %v1532
      %1534 = vmatmul.bf16.gmra.mxu0 %v1388
      %v1535 = vpop.f32.mrf.mxu0
      %v1536 = vadd.f32 %v1265, %v1535
      %v1537 = vpop.f32.mrf.mxu0
      %v1538 = vadd.f32 %v1265, %v1537
      %1539 = vmatmul.bf16.gmra.mxu0 %v1391
      %v1540 = vpop.f32.mrf.mxu0
      %v1541 = vadd.f32 %v1265, %v1540
      %v1542 = vpop.f32.mrf.mxu0
      %v1543 = vadd.f32 %v1265, %v1542
      %1544 = vmatmul.bf16.gmra.mxu0 %v1394
      %v1545 = vpop.f32.mrf.mxu0
      %v1546 = vadd.f32 %v1265, %v1545
      %v1547 = vpop.f32.mrf.mxu0
      %v1548 = vadd.f32 %v1265, %v1547
      %1549 = vmatmul.bf16.gmra.mxu0 %v1397
      %v1550 = vpop.f32.mrf.mxu0
      %v1551 = vadd.f32 %v1265, %v1550
      %v1552 = vpop.f32.mrf.mxu0
      %v1553 = vadd.f32 %v1265, %v1552
      %1554 = vmatmul.bf16.gmra.mxu0 %v1400
      %v1555 = vpop.f32.mrf.mxu0
      %v1556 = vadd.f32 %v1265, %v1555
      %v1557 = vpop.f32.mrf.mxu0
      %v1558 = vadd.f32 %v1265, %v1557
      %1559 = vmatmul.bf16.gmra.mxu0 %v1403
      %v1560 = vpop.f32.mrf.mxu0
      %v1561 = vadd.f32 %v1265, %v1560
      %v1562 = vpop.f32.mrf.mxu0
      %v1563 = vadd.f32 %v1265, %v1562
      %1564 = vmatmul.bf16.gmra.mxu0 %v1406
      %v1565 = vpop.f32.mrf.mxu0
      %v1566 = vadd.f32 %v1265, %v1565
      %v1567 = vpop.f32.mrf.mxu0
      %v1568 = vadd.f32 %v1265, %v1567
      %1569 = vmatmul.bf16.gmra.mxu0 %v1409
      %v1570 = vpop.f32.mrf.mxu0
      %v1571 = vadd.f32 %v1265, %v1570
      %v1572 = vpop.f32.mrf.mxu0
      %v1573 = vadd.f32 %v1265, %v1572
      %1574 = vmatmul.bf16.gmra.mxu0 %v1412
      %v1575 = vpop.f32.mrf.mxu0
      %v1576 = vadd.f32 %v1265, %v1575
      %v1577 = vpop.f32.mrf.mxu0
      %v1578 = vadd.f32 %v1265, %v1577
      %1579 = vmatmul.bf16.gmra.mxu0 %v1415
      %v1580 = vpop.f32.mrf.mxu0
      %v1581 = vadd.f32 %v1265, %v1580
      %v1582 = vpop.f32.mrf.mxu0
      %v1583 = vadd.f32 %v1265, %v1582
      %1584 = vmatmul.bf16.gmra.mxu0 %v1418
      %v1585 = vpop.f32.mrf.mxu0
      %v1586 = vadd.f32 %v1265, %v1585
      %v1587 = vpop.f32.mrf.mxu0
      %v1588 = vadd.f32 %v1265, %v1587
      %1589 = vmatmul.bf16.gmra.mxu0 %v1421
      %v1590 = vpop.f32.mrf.mxu0
      %v1591 = vadd.f32 %v1265, %v1590
      %v1592 = vpop.f32.mrf.mxu0
      %v1593 = vadd.f32 %v1265, %v1592
      %1594 = vmatmul.bf16.gmra.mxu0 %v1424
      %v1595 = vpop.f32.mrf.mxu0
      %v1596 = vadd.f32 %v1265, %v1595
      %v1597 = vpop.f32.mrf.mxu0
      %v1598 = vadd.f32 %v1265, %v1597
      %1599 = vmatmul.bf16.gmra.mxu0 %v1427
      %v1600 = vpop.f32.mrf.mxu0
      %v1601 = vadd.f32 %v1265, %v1600
      %v1602 = vpop.f32.mrf.mxu0
      %v1603 = vadd.f32 %v1265, %v1602
      %1604 = vmatmul.bf16.gmra.mxu0 %v1430
      %v1605 = vpop.f32.mrf.mxu0
      %v1606 = vadd.f32 %v1265, %v1605
      %v1607 = vpop.f32.mrf.mxu0
      %v1608 = vadd.f32 %v1265, %v1607
      %1609 = vdwg.mxu0
      %1610 = vmatpush.bf16.msra.mxu0 0
      %1611 = vmatpush.bf16.msra.mxu0 0
      %1612 = vmatpush.bf16.msra.mxu0 0
      %1613 = vmatpush.bf16.msra.mxu0 0
      %1614 = vmatpush.bf16.msra.mxu0 0
      %1615 = vmatpush.bf16.msra.mxu0 0
      %1616 = vmatpush.bf16.msra.mxu0 %v1356
      %1617 = vmatpush.bf16.msra.mxu0 %v1346
      %1618 = vmatmul.bf16.gmra.mxu0 %v1385
      %v1619 = vpop.f32.mrf.mxu0
      %v1620 = vadd.f32 %v1266, %v1619
      %v1621 = vpop.f32.mrf.mxu0
      %v1622 = vadd.f32 %v1266, %v1621
      %1623 = vmatmul.bf16.gmra.mxu0 %v1388
      %v1624 = vpop.f32.mrf.mxu0
      %v1625 = vadd.f32 %v1266, %v1624
      %v1626 = vpop.f32.mrf.mxu0
      %v1627 = vadd.f32 %v1266, %v1626
      %1628 = vmatmul.bf16.gmra.mxu0 %v1391
      %v1629 = vpop.f32.mrf.mxu0
      %v1630 = vadd.f32 %v1266, %v1629
      %v1631 = vpop.f32.mrf.mxu0
      %v1632 = vadd.f32 %v1266, %v1631
      %1633 = vmatmul.bf16.gmra.mxu0 %v1394
      %v1634 = vpop.f32.mrf.mxu0
      %v1635 = vadd.f32 %v1266, %v1634
      %v1636 = vpop.f32.mrf.mxu0
      %v1637 = vadd.f32 %v1266, %v1636
      %1638 = vmatmul.bf16.gmra.mxu0 %v1397
      %v1639 = vpop.f32.mrf.mxu0
      %v1640 = vadd.f32 %v1266, %v1639
      %v1641 = vpop.f32.mrf.mxu0
      %v1642 = vadd.f32 %v1266, %v1641
      %1643 = vmatmul.bf16.gmra.mxu0 %v1400
      %v1644 = vpop.f32.mrf.mxu0
      %v1645 = vadd.f32 %v1266, %v1644
      %v1646 = vpop.f32.mrf.mxu0
      %v1647 = vadd.f32 %v1266, %v1646
      %1648 = vmatmul.bf16.gmra.mxu0 %v1403
      %v1649 = vpop.f32.mrf.mxu0
      %v1650 = vadd.f32 %v1266, %v1649
      %v1651 = vpop.f32.mrf.mxu0
      %v1652 = vadd.f32 %v1266, %v1651
      %1653 = vmatmul.bf16.gmra.mxu0 %v1406
      %v1654 = vpop.f32.mrf.mxu0
      %v1655 = vadd.f32 %v1266, %v1654
      %v1656 = vpop.f32.mrf.mxu0
      %v1657 = vadd.f32 %v1266, %v1656
      %1658 = vmatmul.bf16.gmra.mxu0 %v1409
      %v1659 = vpop.f32.mrf.mxu0
      %v1660 = vadd.f32 %v1266, %v1659
      %v1661 = vpop.f32.mrf.mxu0
      %v1662 = vadd.f32 %v1266, %v1661
      %1663 = vmatmul.bf16.gmra.mxu0 %v1412
      %v1664 = vpop.f32.mrf.mxu0
      %v1665 = vadd.f32 %v1266, %v1664
      %v1666 = vpop.f32.mrf.mxu0
      %v1667 = vadd.f32 %v1266, %v1666
      %1668 = vmatmul.bf16.gmra.mxu0 %v1415
      %v1669 = vpop.f32.mrf.mxu0
      %v1670 = vadd.f32 %v1266, %v1669
      %v1671 = vpop.f32.mrf.mxu0
      %v1672 = vadd.f32 %v1266, %v1671
      %1673 = vmatmul.bf16.gmra.mxu0 %v1418
      %v1674 = vpop.f32.mrf.mxu0
      %v1675 = vadd.f32 %v1266, %v1674
      %v1676 = vpop.f32.mrf.mxu0
      %v1677 = vadd.f32 %v1266, %v1676
      %1678 = vmatmul.bf16.gmra.mxu0 %v1421
      %v1679 = vpop.f32.mrf.mxu0
      %v1680 = vadd.f32 %v1266, %v1679
      %v1681 = vpop.f32.mrf.mxu0
      %v1682 = vadd.f32 %v1266, %v1681
      %1683 = vmatmul.bf16.gmra.mxu0 %v1424
      %v1684 = vpop.f32.mrf.mxu0
      %v1685 = vadd.f32 %v1266, %v1684
      %v1686 = vpop.f32.mrf.mxu0
      %v1687 = vadd.f32 %v1266, %v1686
      %1688 = vmatmul.bf16.gmra.mxu0 %v1427
      %v1689 = vpop.f32.mrf.mxu0
      %v1690 = vadd.f32 %v1266, %v1689
      %v1691 = vpop.f32.mrf.mxu0
      %v1692 = vadd.f32 %v1266, %v1691
      %1693 = vmatmul.bf16.gmra.mxu0 %v1430
      %v1694 = vpop.f32.mrf.mxu0
      %v1695 = vadd.f32 %v1266, %v1694
      %v1696 = vpop.f32.mrf.mxu0
      %v1697 = vadd.f32 %v1266, %v1696
      %1698 = vdwg.mxu0
      %1699 = vmatpush.bf16.msra.mxu0 0
      %1700 = vmatpush.bf16.msra.mxu0 0
      %1701 = vmatpush.bf16.msra.mxu0 0
      %1702 = vmatpush.bf16.msra.mxu0 0
      %1703 = vmatpush.bf16.msra.mxu0 0
      %1704 = vmatpush.bf16.msra.mxu0 0
      %1705 = vmatpush.bf16.msra.mxu0 %v1357
      %1706 = vmatpush.bf16.msra.mxu0 %v1347
      %1707 = vmatmul.bf16.gmra.mxu0 %v1385
      %v1708 = vpop.f32.mrf.mxu0
      %v1709 = vadd.f32 %v1267, %v1708
      %v1710 = vpop.f32.mrf.mxu0
      %v1711 = vadd.f32 %v1267, %v1710
      %1712 = vmatmul.bf16.gmra.mxu0 %v1388
      %v1713 = vpop.f32.mrf.mxu0
      %v1714 = vadd.f32 %v1267, %v1713
      %v1715 = vpop.f32.mrf.mxu0
      %v1716 = vadd.f32 %v1267, %v1715
      %1717 = vmatmul.bf16.gmra.mxu0 %v1391
      %v1718 = vpop.f32.mrf.mxu0
      %v1719 = vadd.f32 %v1267, %v1718
      %v1720 = vpop.f32.mrf.mxu0
      %v1721 = vadd.f32 %v1267, %v1720
      %1722 = vmatmul.bf16.gmra.mxu0 %v1394
      %v1723 = vpop.f32.mrf.mxu0
      %v1724 = vadd.f32 %v1267, %v1723
      %v1725 = vpop.f32.mrf.mxu0
      %v1726 = vadd.f32 %v1267, %v1725
      %1727 = vmatmul.bf16.gmra.mxu0 %v1397
      %v1728 = vpop.f32.mrf.mxu0
      %v1729 = vadd.f32 %v1267, %v1728
      %v1730 = vpop.f32.mrf.mxu0
      %v1731 = vadd.f32 %v1267, %v1730
      %1732 = vmatmul.bf16.gmra.mxu0 %v1400
      %v1733 = vpop.f32.mrf.mxu0
      %v1734 = vadd.f32 %v1267, %v1733
      %v1735 = vpop.f32.mrf.mxu0
      %v1736 = vadd.f32 %v1267, %v1735
      %1737 = vmatmul.bf16.gmra.mxu0 %v1403
      %v1738 = vpop.f32.mrf.mxu0
      %v1739 = vadd.f32 %v1267, %v1738
      %v1740 = vpop.f32.mrf.mxu0
      %v1741 = vadd.f32 %v1267, %v1740
      %1742 = vmatmul.bf16.gmra.mxu0 %v1406
      %v1743 = vpop.f32.mrf.mxu0
      %v1744 = vadd.f32 %v1267, %v1743
      %v1745 = vpop.f32.mrf.mxu0
      %v1746 = vadd.f32 %v1267, %v1745
      %1747 = vmatmul.bf16.gmra.mxu0 %v1409
      %v1748 = vpop.f32.mrf.mxu0
      %v1749 = vadd.f32 %v1267, %v1748
      %v1750 = vpop.f32.mrf.mxu0
      %v1751 = vadd.f32 %v1267, %v1750
      %1752 = vmatmul.bf16.gmra.mxu0 %v1412
      %v1753 = vpop.f32.mrf.mxu0
      %v1754 = vadd.f32 %v1267, %v1753
      %v1755 = vpop.f32.mrf.mxu0
      %v1756 = vadd.f32 %v1267, %v1755
      %1757 = vmatmul.bf16.gmra.mxu0 %v1415
      %v1758 = vpop.f32.mrf.mxu0
      %v1759 = vadd.f32 %v1267, %v1758
      %v1760 = vpop.f32.mrf.mxu0
      %v1761 = vadd.f32 %v1267, %v1760
      %1762 = vmatmul.bf16.gmra.mxu0 %v1418
      %v1763 = vpop.f32.mrf.mxu0
      %v1764 = vadd.f32 %v1267, %v1763
      %v1765 = vpop.f32.mrf.mxu0
      %v1766 = vadd.f32 %v1267, %v1765
      %1767 = vmatmul.bf16.gmra.mxu0 %v1421
      %v1768 = vpop.f32.mrf.mxu0
      %v1769 = vadd.f32 %v1267, %v1768
      %v1770 = vpop.f32.mrf.mxu0
      %v1771 = vadd.f32 %v1267, %v1770
      %1772 = vmatmul.bf16.gmra.mxu0 %v1424
      %v1773 = vpop.f32.mrf.mxu0
      %v1774 = vadd.f32 %v1267, %v1773
      %v1775 = vpop.f32.mrf.mxu0
      %v1776 = vadd.f32 %v1267, %v1775
      %1777 = vmatmul.bf16.gmra.mxu0 %v1427
      %v1778 = vpop.f32.mrf.mxu0
      %v1779 = vadd.f32 %v1267, %v1778
      %v1780 = vpop.f32.mrf.mxu0
      %v1781 = vadd.f32 %v1267, %v1780
      %1782 = vmatmul.bf16.gmra.mxu0 %v1430
      %v1783 = vpop.f32.mrf.mxu0
      %v1784 = vadd.f32 %v1267, %v1783
      %v1785 = vpop.f32.mrf.mxu0
      %v1786 = vadd.f32 %v1267, %v1785
      %1787 = vdwg.mxu0
      %1788 = vmatpush.bf16.msra.mxu0 0
      %1789 = vmatpush.bf16.msra.mxu0 0
      %1790 = vmatpush.bf16.msra.mxu0 0
      %1791 = vmatpush.bf16.msra.mxu0 0
      %1792 = vmatpush.bf16.msra.mxu0 0
      %1793 = vmatpush.bf16.msra.mxu0 0
      %1794 = vmatpush.bf16.msra.mxu0 %v1358
      %1795 = vmatpush.bf16.msra.mxu0 %v1348
      %1796 = vmatmul.bf16.gmra.mxu0 %v1385
      %v1797 = vpop.f32.mrf.mxu0
      %v1798 = vadd.f32 %v1268, %v1797
      %v1799 = vpop.f32.mrf.mxu0
      %v1800 = vadd.f32 %v1268, %v1799
      %1801 = vmatmul.bf16.gmra.mxu0 %v1388
      %v1802 = vpop.f32.mrf.mxu0
      %v1803 = vadd.f32 %v1268, %v1802
      %v1804 = vpop.f32.mrf.mxu0
      %v1805 = vadd.f32 %v1268, %v1804
      %1806 = vmatmul.bf16.gmra.mxu0 %v1391
      %v1807 = vpop.f32.mrf.mxu0
      %v1808 = vadd.f32 %v1268, %v1807
      %v1809 = vpop.f32.mrf.mxu0
      %v1810 = vadd.f32 %v1268, %v1809
      %1811 = vmatmul.bf16.gmra.mxu0 %v1394
      %v1812 = vpop.f32.mrf.mxu0
      %v1813 = vadd.f32 %v1268, %v1812
      %v1814 = vpop.f32.mrf.mxu0
      %v1815 = vadd.f32 %v1268, %v1814
      %1816 = vmatmul.bf16.gmra.mxu0 %v1397
      %v1817 = vpop.f32.mrf.mxu0
      %v1818 = vadd.f32 %v1268, %v1817
      %v1819 = vpop.f32.mrf.mxu0
      %v1820 = vadd.f32 %v1268, %v1819
      %1821 = vmatmul.bf16.gmra.mxu0 %v1400
      %v1822 = vpop.f32.mrf.mxu0
      %v1823 = vadd.f32 %v1268, %v1822
      %v1824 = vpop.f32.mrf.mxu0
      %v1825 = vadd.f32 %v1268, %v1824
      %1826 = vmatmul.bf16.gmra.mxu0 %v1403
      %v1827 = vpop.f32.mrf.mxu0
      %v1828 = vadd.f32 %v1268, %v1827
      %v1829 = vpop.f32.mrf.mxu0
      %v1830 = vadd.f32 %v1268, %v1829
      %1831 = vmatmul.bf16.gmra.mxu0 %v1406
      %v1832 = vpop.f32.mrf.mxu0
      %v1833 = vadd.f32 %v1268, %v1832
      %v1834 = vpop.f32.mrf.mxu0
      %v1835 = vadd.f32 %v1268, %v1834
      %1836 = vmatmul.bf16.gmra.mxu0 %v1409
      %v1837 = vpop.f32.mrf.mxu0
      %v1838 = vadd.f32 %v1268, %v1837
      %v1839 = vpop.f32.mrf.mxu0
      %v1840 = vadd.f32 %v1268, %v1839
      %1841 = vmatmul.bf16.gmra.mxu0 %v1412
      %v1842 = vpop.f32.mrf.mxu0
      %v1843 = vadd.f32 %v1268, %v1842
      %v1844 = vpop.f32.mrf.mxu0
      %v1845 = vadd.f32 %v1268, %v1844
      %1846 = vmatmul.bf16.gmra.mxu0 %v1415
      %v1847 = vpop.f32.mrf.mxu0
      %v1848 = vadd.f32 %v1268, %v1847
      %v1849 = vpop.f32.mrf.mxu0
      %v1850 = vadd.f32 %v1268, %v1849
      %1851 = vmatmul.bf16.gmra.mxu0 %v1418
      %v1852 = vpop.f32.mrf.mxu0
      %v1853 = vadd.f32 %v1268, %v1852
      %v1854 = vpop.f32.mrf.mxu0
      %v1855 = vadd.f32 %v1268, %v1854
      %1856 = vmatmul.bf16.gmra.mxu0 %v1421
      %v1857 = vpop.f32.mrf.mxu0
      %v1858 = vadd.f32 %v1268, %v1857
      %v1859 = vpop.f32.mrf.mxu0
      %v1860 = vadd.f32 %v1268, %v1859
      %1861 = vmatmul.bf16.gmra.mxu0 %v1424
      %v1862 = vpop.f32.mrf.mxu0
      %v1863 = vadd.f32 %v1268, %v1862
      %v1864 = vpop.f32.mrf.mxu0
      %v1865 = vadd.f32 %v1268, %v1864
      %1866 = vmatmul.bf16.gmra.mxu0 %v1427
      %v1867 = vpop.f32.mrf.mxu0
      %v1868 = vadd.f32 %v1268, %v1867
      %v1869 = vpop.f32.mrf.mxu0
      %v1870 = vadd.f32 %v1268, %v1869
      %1871 = vmatmul.bf16.gmra.mxu0 %v1430
      %v1872 = vpop.f32.mrf.mxu0
      %v1873 = vadd.f32 %v1268, %v1872
      %v1874 = vpop.f32.mrf.mxu0
      %v1875 = vadd.f32 %v1268, %v1874
      %1876 = vdwg.mxu0
      %1877 = vmatpush.bf16.msra.mxu0 0
      %1878 = vmatpush.bf16.msra.mxu0 0
      %1879 = vmatpush.bf16.msra.mxu0 0
      %1880 = vmatpush.bf16.msra.mxu0 0
      %1881 = vmatpush.bf16.msra.mxu0 0
      %1882 = vmatpush.bf16.msra.mxu0 0
      %1883 = vmatpush.bf16.msra.mxu0 %v1359
      %1884 = vmatpush.bf16.msra.mxu0 %v1349
      %1885 = vmatmul.bf16.gmra.mxu0 %v1385
      %v1886 = vpop.f32.mrf.mxu0
      %v1887 = vadd.f32 %v1269, %v1886
      %v1888 = vpop.f32.mrf.mxu0
      %v1889 = vadd.f32 %v1269, %v1888
      %1890 = vmatmul.bf16.gmra.mxu0 %v1388
      %v1891 = vpop.f32.mrf.mxu0
      %v1892 = vadd.f32 %v1269, %v1891
      %v1893 = vpop.f32.mrf.mxu0
      %v1894 = vadd.f32 %v1269, %v1893
      %1895 = vmatmul.bf16.gmra.mxu0 %v1391
      %v1896 = vpop.f32.mrf.mxu0
      %v1897 = vadd.f32 %v1269, %v1896
      %v1898 = vpop.f32.mrf.mxu0
      %v1899 = vadd.f32 %v1269, %v1898
      %1900 = vmatmul.bf16.gmra.mxu0 %v1394
      %v1901 = vpop.f32.mrf.mxu0
      %v1902 = vadd.f32 %v1269, %v1901
      %v1903 = vpop.f32.mrf.mxu0
      %v1904 = vadd.f32 %v1269, %v1903
      %1905 = vmatmul.bf16.gmra.mxu0 %v1397
      %v1906 = vpop.f32.mrf.mxu0
      %v1907 = vadd.f32 %v1269, %v1906
      %v1908 = vpop.f32.mrf.mxu0
      %v1909 = vadd.f32 %v1269, %v1908
      %1910 = vmatmul.bf16.gmra.mxu0 %v1400
      %v1911 = vpop.f32.mrf.mxu0
      %v1912 = vadd.f32 %v1269, %v1911
      %v1913 = vpop.f32.mrf.mxu0
      %v1914 = vadd.f32 %v1269, %v1913
      %1915 = vmatmul.bf16.gmra.mxu0 %v1403
      %v1916 = vpop.f32.mrf.mxu0
      %v1917 = vadd.f32 %v1269, %v1916
      %v1918 = vpop.f32.mrf.mxu0
      %v1919 = vadd.f32 %v1269, %v1918
      %1920 = vmatmul.bf16.gmra.mxu0 %v1406
      %v1921 = vpop.f32.mrf.mxu0
      %v1922 = vadd.f32 %v1269, %v1921
      %v1923 = vpop.f32.mrf.mxu0
      %v1924 = vadd.f32 %v1269, %v1923
      %1925 = vmatmul.bf16.gmra.mxu0 %v1409
      %v1926 = vpop.f32.mrf.mxu0
      %v1927 = vadd.f32 %v1269, %v1926
      %v1928 = vpop.f32.mrf.mxu0
      %v1929 = vadd.f32 %v1269, %v1928
      %1930 = vmatmul.bf16.gmra.mxu0 %v1412
      %v1931 = vpop.f32.mrf.mxu0
      %v1932 = vadd.f32 %v1269, %v1931
      %v1933 = vpop.f32.mrf.mxu0
      %v1934 = vadd.f32 %v1269, %v1933
      %1935 = vmatmul.bf16.gmra.mxu0 %v1415
      %v1936 = vpop.f32.mrf.mxu0
      %v1937 = vadd.f32 %v1269, %v1936
      %v1938 = vpop.f32.mrf.mxu0
      %v1939 = vadd.f32 %v1269, %v1938
      %1940 = vmatmul.bf16.gmra.mxu0 %v1418
      %v1941 = vpop.f32.mrf.mxu0
      %v1942 = vadd.f32 %v1269, %v1941
      %v1943 = vpop.f32.mrf.mxu0
      %v1944 = vadd.f32 %v1269, %v1943
      %1945 = vmatmul.bf16.gmra.mxu0 %v1421
      %v1946 = vpop.f32.mrf.mxu0
      %v1947 = vadd.f32 %v1269, %v1946
      %v1948 = vpop.f32.mrf.mxu0
      %v1949 = vadd.f32 %v1269, %v1948
      %1950 = vmatmul.bf16.gmra.mxu0 %v1424
      %v1951 = vpop.f32.mrf.mxu0
      %v1952 = vadd.f32 %v1269, %v1951
      %v1953 = vpop.f32.mrf.mxu0
      %v1954 = vadd.f32 %v1269, %v1953
      %1955 = vmatmul.bf16.gmra.mxu0 %v1427
      %v1956 = vpop.f32.mrf.mxu0
      %v1957 = vadd.f32 %v1269, %v1956
      %v1958 = vpop.f32.mrf.mxu0
      %v1959 = vadd.f32 %v1269, %v1958
      %1960 = vmatmul.bf16.gmra.mxu0 %v1430
      %v1961 = vpop.f32.mrf.mxu0
      %v1962 = vadd.f32 %v1269, %v1961
      %v1963 = vpop.f32.mrf.mxu0
      %v1964 = vadd.f32 %v1269, %v1963
      %1965 = vdwg.mxu0
      %1966 = vmatpush.bf16.msra.mxu0 0
      %1967 = vmatpush.bf16.msra.mxu0 0
      %1968 = vmatpush.bf16.msra.mxu0 0
      %1969 = vmatpush.bf16.msra.mxu0 0
      %1970 = vmatpush.bf16.msra.mxu0 0
      %1971 = vmatpush.bf16.msra.mxu0 0
      %1972 = vmatpush.bf16.msra.mxu0 %v1360
      %1973 = vmatpush.bf16.msra.mxu0 %v1350
      %1974 = vmatmul.bf16.gmra.mxu0 %v1385
      %v1975 = vpop.f32.mrf.mxu0
      %v1976 = vadd.f32 %v1270, %v1975
      %v1977 = vpop.f32.mrf.mxu0
      %v1978 = vadd.f32 %v1270, %v1977
      %1979 = vmatmul.bf16.gmra.mxu0 %v1388
      %v1980 = vpop.f32.mrf.mxu0
      %v1981 = vadd.f32 %v1270, %v1980
      %v1982 = vpop.f32.mrf.mxu0
      %v1983 = vadd.f32 %v1270, %v1982
      %1984 = vmatmul.bf16.gmra.mxu0 %v1391
      %v1985 = vpop.f32.mrf.mxu0
      %v1986 = vadd.f32 %v1270, %v1985
      %v1987 = vpop.f32.mrf.mxu0
      %v1988 = vadd.f32 %v1270, %v1987
      %1989 = vmatmul.bf16.gmra.mxu0 %v1394
      %v1990 = vpop.f32.mrf.mxu0
      %v1991 = vadd.f32 %v1270, %v1990
      %v1992 = vpop.f32.mrf.mxu0
      %v1993 = vadd.f32 %v1270, %v1992
      %1994 = vmatmul.bf16.gmra.mxu0 %v1397
      %v1995 = vpop.f32.mrf.mxu0
      %v1996 = vadd.f32 %v1270, %v1995
      %v1997 = vpop.f32.mrf.mxu0
      %v1998 = vadd.f32 %v1270, %v1997
      %1999 = vmatmul.bf16.gmra.mxu0 %v1400
      %v2000 = vpop.f32.mrf.mxu0
      %v2001 = vadd.f32 %v1270, %v2000
      %v2002 = vpop.f32.mrf.mxu0
      %v2003 = vadd.f32 %v1270, %v2002
      %2004 = vmatmul.bf16.gmra.mxu0 %v1403
      %v2005 = vpop.f32.mrf.mxu0
      %v2006 = vadd.f32 %v1270, %v2005
      %v2007 = vpop.f32.mrf.mxu0
      %v2008 = vadd.f32 %v1270, %v2007
      %2009 = vmatmul.bf16.gmra.mxu0 %v1406
      %v2010 = vpop.f32.mrf.mxu0
      %v2011 = vadd.f32 %v1270, %v2010
      %v2012 = vpop.f32.mrf.mxu0
      %v2013 = vadd.f32 %v1270, %v2012
      %2014 = vmatmul.bf16.gmra.mxu0 %v1409
      %v2015 = vpop.f32.mrf.mxu0
      %v2016 = vadd.f32 %v1270, %v2015
      %v2017 = vpop.f32.mrf.mxu0
      %v2018 = vadd.f32 %v1270, %v2017
      %2019 = vmatmul.bf16.gmra.mxu0 %v1412
      %v2020 = vpop.f32.mrf.mxu0
      %v2021 = vadd.f32 %v1270, %v2020
      %v2022 = vpop.f32.mrf.mxu0
      %v2023 = vadd.f32 %v1270, %v2022
      %2024 = vmatmul.bf16.gmra.mxu0 %v1415
      %v2025 = vpop.f32.mrf.mxu0
      %v2026 = vadd.f32 %v1270, %v2025
      %v2027 = vpop.f32.mrf.mxu0
      %v2028 = vadd.f32 %v1270, %v2027
      %2029 = vmatmul.bf16.gmra.mxu0 %v1418
      %v2030 = vpop.f32.mrf.mxu0
      %v2031 = vadd.f32 %v1270, %v2030
      %v2032 = vpop.f32.mrf.mxu0
      %v2033 = vadd.f32 %v1270, %v2032
      %2034 = vmatmul.bf16.gmra.mxu0 %v1421
      %v2035 = vpop.f32.mrf.mxu0
      %v2036 = vadd.f32 %v1270, %v2035
      %v2037 = vpop.f32.mrf.mxu0
      %v2038 = vadd.f32 %v1270, %v2037
      %2039 = vmatmul.bf16.gmra.mxu0 %v1424
      %v2040 = vpop.f32.mrf.mxu0
      %v2041 = vadd.f32 %v1270, %v2040
      %v2042 = vpop.f32.mrf.mxu0
      %v2043 = vadd.f32 %v1270, %v2042
      %2044 = vmatmul.bf16.gmra.mxu0 %v1427
      %v2045 = vpop.f32.mrf.mxu0
      %v2046 = vadd.f32 %v1270, %v2045
      %v2047 = vpop.f32.mrf.mxu0
      %v2048 = vadd.f32 %v1270, %v2047
      %2049 = vmatmul.bf16.gmra.mxu0 %v1430
      %v2050 = vpop.f32.mrf.mxu0
      %v2051 = vadd.f32 %v1270, %v2050
      %v2052 = vpop.f32.mrf.mxu0
      %v2053 = vadd.f32 %v1270, %v2052
      %2054 = vdwg.mxu0
      %2055 = vmatpush.bf16.msra.mxu0 0
      %2056 = vmatpush.bf16.msra.mxu0 0
      %2057 = vmatpush.bf16.msra.mxu0 0
      %2058 = vmatpush.bf16.msra.mxu0 0
      %2059 = vmatpush.bf16.msra.mxu0 0
      %2060 = vmatpush.bf16.msra.mxu0 0
      %2061 = vmatpush.bf16.msra.mxu0 %v1361
      %2062 = vmatpush.bf16.msra.mxu0 %v1351
      %2063 = vmatmul.bf16.gmra.mxu0 %v1385
      %v2064 = vpop.f32.mrf.mxu0
      %v2065 = vadd.f32 %v1271, %v2064
      %v2066 = vpop.f32.mrf.mxu0
      %v2067 = vadd.f32 %v1271, %v2066
      %2068 = vmatmul.bf16.gmra.mxu0 %v1388
      %v2069 = vpop.f32.mrf.mxu0
      %v2070 = vadd.f32 %v1271, %v2069
      %v2071 = vpop.f32.mrf.mxu0
      %v2072 = vadd.f32 %v1271, %v2071
      %2073 = vmatmul.bf16.gmra.mxu0 %v1391
      %v2074 = vpop.f32.mrf.mxu0
      %v2075 = vadd.f32 %v1271, %v2074
      %v2076 = vpop.f32.mrf.mxu0
      %v2077 = vadd.f32 %v1271, %v2076
      %2078 = vmatmul.bf16.gmra.mxu0 %v1394
      %v2079 = vpop.f32.mrf.mxu0
      %v2080 = vadd.f32 %v1271, %v2079
      %v2081 = vpop.f32.mrf.mxu0
      %v2082 = vadd.f32 %v1271, %v2081
      %2083 = vmatmul.bf16.gmra.mxu0 %v1397
      %v2084 = vpop.f32.mrf.mxu0
      %v2085 = vadd.f32 %v1271, %v2084
      %v2086 = vpop.f32.mrf.mxu0
      %v2087 = vadd.f32 %v1271, %v2086
      %2088 = vmatmul.bf16.gmra.mxu0 %v1400
      %v2089 = vpop.f32.mrf.mxu0
      %v2090 = vadd.f32 %v1271, %v2089
      %v2091 = vpop.f32.mrf.mxu0
      %v2092 = vadd.f32 %v1271, %v2091
      %2093 = vmatmul.bf16.gmra.mxu0 %v1403
      %v2094 = vpop.f32.mrf.mxu0
      %v2095 = vadd.f32 %v1271, %v2094
      %v2096 = vpop.f32.mrf.mxu0
      %v2097 = vadd.f32 %v1271, %v2096
      %2098 = vmatmul.bf16.gmra.mxu0 %v1406
      %v2099 = vpop.f32.mrf.mxu0
      %v2100 = vadd.f32 %v1271, %v2099
      %v2101 = vpop.f32.mrf.mxu0
      %v2102 = vadd.f32 %v1271, %v2101
      %2103 = vmatmul.bf16.gmra.mxu0 %v1409
      %v2104 = vpop.f32.mrf.mxu0
      %v2105 = vadd.f32 %v1271, %v2104
      %v2106 = vpop.f32.mrf.mxu0
      %v2107 = vadd.f32 %v1271, %v2106
      %2108 = vmatmul.bf16.gmra.mxu0 %v1412
      %v2109 = vpop.f32.mrf.mxu0
      %v2110 = vadd.f32 %v1271, %v2109
      %v2111 = vpop.f32.mrf.mxu0
      %v2112 = vadd.f32 %v1271, %v2111
      %2113 = vmatmul.bf16.gmra.mxu0 %v1415
      %v2114 = vpop.f32.mrf.mxu0
      %v2115 = vadd.f32 %v1271, %v2114
      %v2116 = vpop.f32.mrf.mxu0
      %v2117 = vadd.f32 %v1271, %v2116
      %2118 = vmatmul.bf16.gmra.mxu0 %v1418
      %v2119 = vpop.f32.mrf.mxu0
      %v2120 = vadd.f32 %v1271, %v2119
      %v2121 = vpop.f32.mrf.mxu0
      %v2122 = vadd.f32 %v1271, %v2121
      %2123 = vmatmul.bf16.gmra.mxu0 %v1421
      %v2124 = vpop.f32.mrf.mxu0
      %v2125 = vadd.f32 %v1271, %v2124
      %v2126 = vpop.f32.mrf.mxu0
      %v2127 = vadd.f32 %v1271, %v2126
      %2128 = vmatmul.bf16.gmra.mxu0 %v1424
      %v2129 = vpop.f32.mrf.mxu0
      %v2130 = vadd.f32 %v1271, %v2129
      %v2131 = vpop.f32.mrf.mxu0
      %v2132 = vadd.f32 %v1271, %v2131
      %2133 = vmatmul.bf16.gmra.mxu0 %v1427
      %v2134 = vpop.f32.mrf.mxu0
      %v2135 = vadd.f32 %v1271, %v2134
      %v2136 = vpop.f32.mrf.mxu0
      %v2137 = vadd.f32 %v1271, %v2136
      %2138 = vmatmul.bf16.gmra.mxu0 %v1430
      %v2139 = vpop.f32.mrf.mxu0
      %v2140 = vadd.f32 %v1271, %v2139
      %v2141 = vpop.f32.mrf.mxu0
      %v2142 = vadd.f32 %v1271, %v2141
      %2143 = vdwg.mxu0
      %2144 = vmatpush.bf16.msra.mxu0 0
      %2145 = vmatpush.bf16.msra.mxu0 0
      %2146 = vmatpush.bf16.msra.mxu0 0
      %2147 = vmatpush.bf16.msra.mxu0 0
      %2148 = vmatpush.bf16.msra.mxu0 0
      %2149 = vmatpush.bf16.msra.mxu0 0
      %2150 = vmatpush.bf16.msra.mxu0 %v1362
      %2151 = vmatpush.bf16.msra.mxu0 %v1352
      %2152 = vmatmul.bf16.gmra.mxu0 %v1385
      %v2153 = vpop.f32.mrf.mxu0
      %v2154 = vadd.f32 %v1272, %v2153
      %v2155 = vpop.f32.mrf.mxu0
      %v2156 = vadd.f32 %v1272, %v2155
      %2157 = vmatmul.bf16.gmra.mxu0 %v1388
      %v2158 = vpop.f32.mrf.mxu0
      %v2159 = vadd.f32 %v1272, %v2158
      %v2160 = vpop.f32.mrf.mxu0
      %v2161 = vadd.f32 %v1272, %v2160
      %2162 = vmatmul.bf16.gmra.mxu0 %v1391
      %v2163 = vpop.f32.mrf.mxu0
      %v2164 = vadd.f32 %v1272, %v2163
      %v2165 = vpop.f32.mrf.mxu0
      %v2166 = vadd.f32 %v1272, %v2165
      %2167 = vmatmul.bf16.gmra.mxu0 %v1394
      %v2168 = vpop.f32.mrf.mxu0
      %v2169 = vadd.f32 %v1272, %v2168
      %v2170 = vpop.f32.mrf.mxu0
      %v2171 = vadd.f32 %v1272, %v2170
      %2172 = vmatmul.bf16.gmra.mxu0 %v1397
      %v2173 = vpop.f32.mrf.mxu0
      %v2174 = vadd.f32 %v1272, %v2173
      %v2175 = vpop.f32.mrf.mxu0
      %v2176 = vadd.f32 %v1272, %v2175
      %2177 = vmatmul.bf16.gmra.mxu0 %v1400
      %v2178 = vpop.f32.mrf.mxu0
      %v2179 = vadd.f32 %v1272, %v2178
      %v2180 = vpop.f32.mrf.mxu0
      %v2181 = vadd.f32 %v1272, %v2180
      %2182 = vmatmul.bf16.gmra.mxu0 %v1403
      %v2183 = vpop.f32.mrf.mxu0
      %v2184 = vadd.f32 %v1272, %v2183
      %v2185 = vpop.f32.mrf.mxu0
      %v2186 = vadd.f32 %v1272, %v2185
      %2187 = vmatmul.bf16.gmra.mxu0 %v1406
      %v2188 = vpop.f32.mrf.mxu0
      %v2189 = vadd.f32 %v1272, %v2188
      %v2190 = vpop.f32.mrf.mxu0
      %v2191 = vadd.f32 %v1272, %v2190
      %2192 = vmatmul.bf16.gmra.mxu0 %v1409
      %v2193 = vpop.f32.mrf.mxu0
      %v2194 = vadd.f32 %v1272, %v2193
      %v2195 = vpop.f32.mrf.mxu0
      %v2196 = vadd.f32 %v1272, %v2195
      %2197 = vmatmul.bf16.gmra.mxu0 %v1412
      %v2198 = vpop.f32.mrf.mxu0
      %v2199 = vadd.f32 %v1272, %v2198
      %v2200 = vpop.f32.mrf.mxu0
      %v2201 = vadd.f32 %v1272, %v2200
      %2202 = vmatmul.bf16.gmra.mxu0 %v1415
      %v2203 = vpop.f32.mrf.mxu0
      %v2204 = vadd.f32 %v1272, %v2203
      %v2205 = vpop.f32.mrf.mxu0
      %v2206 = vadd.f32 %v1272, %v2205
      %2207 = vmatmul.bf16.gmra.mxu0 %v1418
      %v2208 = vpop.f32.mrf.mxu0
      %v2209 = vadd.f32 %v1272, %v2208
      %v2210 = vpop.f32.mrf.mxu0
      %v2211 = vadd.f32 %v1272, %v2210
      %2212 = vmatmul.bf16.gmra.mxu0 %v1421
      %v2213 = vpop.f32.mrf.mxu0
      %v2214 = vadd.f32 %v1272, %v2213
      %v2215 = vpop.f32.mrf.mxu0
      %v2216 = vadd.f32 %v1272, %v2215
      %2217 = vmatmul.bf16.gmra.mxu0 %v1424
      %v2218 = vpop.f32.mrf.mxu0
      %v2219 = vadd.f32 %v1272, %v2218
      %v2220 = vpop.f32.mrf.mxu0
      %v2221 = vadd.f32 %v1272, %v2220
      %2222 = vmatmul.bf16.gmra.mxu0 %v1427
      %v2223 = vpop.f32.mrf.mxu0
      %v2224 = vadd.f32 %v1272, %v2223
      %v2225 = vpop.f32.mrf.mxu0
      %v2226 = vadd.f32 %v1272, %v2225
      %2227 = vmatmul.bf16.gmra.mxu0 %v1430
      %v2228 = vpop.f32.mrf.mxu0
      %v2229 = vadd.f32 %v1272, %v2228
      %v2230 = vpop.f32.mrf.mxu0
      %v2231 = vadd.f32 %v1272, %v2230
      %2232 = vdwg.mxu0
      %2233 = vmatpush.bf16.msra.mxu0 0
      %2234 = vmatpush.bf16.msra.mxu0 0
      %2235 = vmatpush.bf16.msra.mxu0 0
      %2236 = vmatpush.bf16.msra.mxu0 0
      %2237 = vmatpush.bf16.msra.mxu0 0
      %2238 = vmatpush.bf16.msra.mxu0 0
      %2239 = vmatpush.bf16.msra.mxu0 %v1363
      %2240 = vmatpush.bf16.msra.mxu0 %v1353
      %2241 = vmatmul.bf16.gmra.mxu0 %v1385
      %v2242 = vpop.f32.mrf.mxu0
      %v2243 = vadd.f32 %v1273, %v2242
      %v2244 = vpop.f32.mrf.mxu0
      %v2245 = vadd.f32 %v1273, %v2244
      %2246 = vmatmul.bf16.gmra.mxu0 %v1388
      %v2247 = vpop.f32.mrf.mxu0
      %v2248 = vadd.f32 %v1273, %v2247
      %v2249 = vpop.f32.mrf.mxu0
      %v2250 = vadd.f32 %v1273, %v2249
      %2251 = vmatmul.bf16.gmra.mxu0 %v1391
      %v2252 = vpop.f32.mrf.mxu0
      %v2253 = vadd.f32 %v1273, %v2252
      %v2254 = vpop.f32.mrf.mxu0
      %v2255 = vadd.f32 %v1273, %v2254
      %2256 = vmatmul.bf16.gmra.mxu0 %v1394
      %v2257 = vpop.f32.mrf.mxu0
      %v2258 = vadd.f32 %v1273, %v2257
      %v2259 = vpop.f32.mrf.mxu0
      %v2260 = vadd.f32 %v1273, %v2259
      %2261 = vmatmul.bf16.gmra.mxu0 %v1397
      %v2262 = vpop.f32.mrf.mxu0
      %v2263 = vadd.f32 %v1273, %v2262
      %v2264 = vpop.f32.mrf.mxu0
      %v2265 = vadd.f32 %v1273, %v2264
      %2266 = vmatmul.bf16.gmra.mxu0 %v1400
      %v2267 = vpop.f32.mrf.mxu0
      %v2268 = vadd.f32 %v1273, %v2267
      %v2269 = vpop.f32.mrf.mxu0
      %v2270 = vadd.f32 %v1273, %v2269
      %2271 = vmatmul.bf16.gmra.mxu0 %v1403
      %v2272 = vpop.f32.mrf.mxu0
      %v2273 = vadd.f32 %v1273, %v2272
      %v2274 = vpop.f32.mrf.mxu0
      %v2275 = vadd.f32 %v1273, %v2274
      %2276 = vmatmul.bf16.gmra.mxu0 %v1406
      %v2277 = vpop.f32.mrf.mxu0
      %v2278 = vadd.f32 %v1273, %v2277
      %v2279 = vpop.f32.mrf.mxu0
      %v2280 = vadd.f32 %v1273, %v2279
      %2281 = vmatmul.bf16.gmra.mxu0 %v1409
      %v2282 = vpop.f32.mrf.mxu0
      %v2283 = vadd.f32 %v1273, %v2282
      %v2284 = vpop.f32.mrf.mxu0
      %v2285 = vadd.f32 %v1273, %v2284
      %2286 = vmatmul.bf16.gmra.mxu0 %v1412
      %v2287 = vpop.f32.mrf.mxu0
      %v2288 = vadd.f32 %v1273, %v2287
      %v2289 = vpop.f32.mrf.mxu0
      %v2290 = vadd.f32 %v1273, %v2289
      %2291 = vmatmul.bf16.gmra.mxu0 %v1415
      %v2292 = vpop.f32.mrf.mxu0
      %v2293 = vadd.f32 %v1273, %v2292
      %v2294 = vpop.f32.mrf.mxu0
      %v2295 = vadd.f32 %v1273, %v2294
      %2296 = vmatmul.bf16.gmra.mxu0 %v1418
      %v2297 = vpop.f32.mrf.mxu0
      %v2298 = vadd.f32 %v1273, %v2297
      %v2299 = vpop.f32.mrf.mxu0
      %v2300 = vadd.f32 %v1273, %v2299
      %2301 = vmatmul.bf16.gmra.mxu0 %v1421
      %v2302 = vpop.f32.mrf.mxu0
      %v2303 = vadd.f32 %v1273, %v2302
      %v2304 = vpop.f32.mrf.mxu0
      %v2305 = vadd.f32 %v1273, %v2304
      %2306 = vmatmul.bf16.gmra.mxu0 %v1424
      %v2307 = vpop.f32.mrf.mxu0
      %v2308 = vadd.f32 %v1273, %v2307
      %v2309 = vpop.f32.mrf.mxu0
      %v2310 = vadd.f32 %v1273, %v2309
      %2311 = vmatmul.bf16.gmra.mxu0 %v1427
      %v2312 = vpop.f32.mrf.mxu0
      %v2313 = vadd.f32 %v1273, %v2312
      %v2314 = vpop.f32.mrf.mxu0
      %v2315 = vadd.f32 %v1273, %v2314
      %2316 = vmatmul.bf16.gmra.mxu0 %v1430
      %v2317 = vpop.f32.mrf.mxu0
      %v2318 = vadd.f32 %v1273, %v2317
      %v2319 = vpop.f32.mrf.mxu0
      %v2320 = vadd.f32 %v1273, %v2319
      %2321 = vdwg.mxu0
      %v2322 = vxor.u32 %v1442, 2147483648
      %v2323 = vxor.u32 %v1531, 2147483648
      %v2324 = vxor.u32 %v1620, 2147483648
      %v2325 = vxor.u32 %v1709, 2147483648
      %v2326 = vxor.u32 %v1798, 2147483648
      %v2327 = vxor.u32 %v1887, 2147483648
      %v2328 = vxor.u32 %v1976, 2147483648
      %v2329 = vxor.u32 %v2065, 2147483648
      %v2330 = vxor.u32 %v2154, 2147483648
      %v2331 = vxor.u32 %v2243, 2147483648
      %v2332 = vxor.u32 %v1444, 2147483648
      %v2333 = vxor.u32 %v1533, 2147483648
      %v2334 = vxor.u32 %v1622, 2147483648
      %v2335 = vxor.u32 %v1711, 2147483648
      %v2336 = vxor.u32 %v1800, 2147483648
      %v2337 = vxor.u32 %v1889, 2147483648
      %v2338 = vxor.u32 %v1978, 2147483648
      %v2339 = vxor.u32 %v2067, 2147483648
      %v2340 = vxor.u32 %v2156, 2147483648
      %v2341 = vxor.u32 %v2245, 2147483648
      %v2342 = vxor.u32 %v1447, 2147483648
      %v2343 = vxor.u32 %v1536, 2147483648
      %v2344 = vxor.u32 %v1625, 2147483648
      %v2345 = vxor.u32 %v1714, 2147483648
      %v2346 = vxor.u32 %v1803, 2147483648
      %v2347 = vxor.u32 %v1892, 2147483648
      %v2348 = vxor.u32 %v1981, 2147483648
      %v2349 = vxor.u32 %v2070, 2147483648
      %v2350 = vxor.u32 %v2159, 2147483648
      %v2351 = vxor.u32 %v2248, 2147483648
      %v2352 = vxor.u32 %v1449, 2147483648
      %v2353 = vxor.u32 %v1538, 2147483648
      %v2354 = vxor.u32 %v1627, 2147483648
      %v2355 = vxor.u32 %v1716, 2147483648
      %v2356 = vxor.u32 %v1805, 2147483648
      %v2357 = vxor.u32 %v1894, 2147483648
      %v2358 = vxor.u32 %v1983, 2147483648
      %v2359 = vxor.u32 %v2072, 2147483648
      %v2360 = vxor.u32 %v2161, 2147483648
      %v2361 = vxor.u32 %v2250, 2147483648
      %v2362 = vxor.u32 %v1452, 2147483648
      %v2363 = vxor.u32 %v1541, 2147483648
      %v2364 = vxor.u32 %v1630, 2147483648
      %v2365 = vxor.u32 %v1719, 2147483648
      %v2366 = vxor.u32 %v1808, 2147483648
      %v2367 = vxor.u32 %v1897, 2147483648
      %v2368 = vxor.u32 %v1986, 2147483648
      %v2369 = vxor.u32 %v2075, 2147483648
      %v2370 = vxor.u32 %v2164, 2147483648
      %v2371 = vxor.u32 %v2253, 2147483648
      %v2372 = vxor.u32 %v1454, 2147483648
      %v2373 = vxor.u32 %v1543, 2147483648
      %v2374 = vxor.u32 %v1632, 2147483648
      %v2375 = vxor.u32 %v1721, 2147483648
      %v2376 = vxor.u32 %v1810, 2147483648
      %v2377 = vxor.u32 %v1899, 2147483648
      %v2378 = vxor.u32 %v1988, 2147483648
      %v2379 = vxor.u32 %v2077, 2147483648
      %v2380 = vxor.u32 %v2166, 2147483648
      %v2381 = vxor.u32 %v2255, 2147483648
      %v2382 = vxor.u32 %v1457, 2147483648
      %v2383 = vxor.u32 %v1546, 2147483648
      %v2384 = vxor.u32 %v1635, 2147483648
      %v2385 = vxor.u32 %v1724, 2147483648
      %v2386 = vxor.u32 %v1813, 2147483648
      %v2387 = vxor.u32 %v1902, 2147483648
      %v2388 = vxor.u32 %v1991, 2147483648
      %v2389 = vxor.u32 %v2080, 2147483648
      %v2390 = vxor.u32 %v2169, 2147483648
      %v2391 = vxor.u32 %v2258, 2147483648
      %v2392 = vxor.u32 %v1459, 2147483648
      %v2393 = vxor.u32 %v1548, 2147483648
      %v2394 = vxor.u32 %v1637, 2147483648
      %v2395 = vxor.u32 %v1726, 2147483648
      %v2396 = vxor.u32 %v1815, 2147483648
      %v2397 = vxor.u32 %v1904, 2147483648
      %v2398 = vxor.u32 %v1993, 2147483648
      %v2399 = vxor.u32 %v2082, 2147483648
      %v2400 = vxor.u32 %v2171, 2147483648
      %v2401 = vxor.u32 %v2260, 2147483648
      %v2402 = vxor.u32 %v1462, 2147483648
      %v2403 = vxor.u32 %v1551, 2147483648
      %v2404 = vxor.u32 %v1640, 2147483648
      %v2405 = vxor.u32 %v1729, 2147483648
      %v2406 = vxor.u32 %v1818, 2147483648
      %v2407 = vxor.u32 %v1907, 2147483648
      %v2408 = vxor.u32 %v1996, 2147483648
      %v2409 = vxor.u32 %v2085, 2147483648
      %v2410 = vxor.u32 %v2174, 2147483648
      %v2411 = vxor.u32 %v2263, 2147483648
      %v2412 = vxor.u32 %v1464, 2147483648
      %v2413 = vxor.u32 %v1553, 2147483648
      %v2414 = vxor.u32 %v1642, 2147483648
      %v2415 = vxor.u32 %v1731, 2147483648
      %v2416 = vxor.u32 %v1820, 2147483648
      %v2417 = vxor.u32 %v1909, 2147483648
      %v2418 = vxor.u32 %v1998, 2147483648
      %v2419 = vxor.u32 %v2087, 2147483648
      %v2420 = vxor.u32 %v2176, 2147483648
      %v2421 = vxor.u32 %v2265, 2147483648
      %v2422 = vxor.u32 %v1467, 2147483648
      %v2423 = vxor.u32 %v1556, 2147483648
      %v2424 = vxor.u32 %v1645, 2147483648
      %v2425 = vxor.u32 %v1734, 2147483648
      %v2426 = vxor.u32 %v1823, 2147483648
      %v2427 = vxor.u32 %v1912, 2147483648
      %v2428 = vxor.u32 %v2001, 2147483648
      %v2429 = vxor.u32 %v2090, 2147483648
      %v2430 = vxor.u32 %v2179, 2147483648
      %v2431 = vxor.u32 %v2268, 2147483648
      %v2432 = vxor.u32 %v1469, 2147483648
      %v2433 = vxor.u32 %v1558, 2147483648
      %v2434 = vxor.u32 %v1647, 2147483648
      %v2435 = vxor.u32 %v1736, 2147483648
      %v2436 = vxor.u32 %v1825, 2147483648
      %v2437 = vxor.u32 %v1914, 2147483648
      %v2438 = vxor.u32 %v2003, 2147483648
      %v2439 = vxor.u32 %v2092, 2147483648
      %v2440 = vxor.u32 %v2181, 2147483648
      %v2441 = vxor.u32 %v2270, 2147483648
      %v2442 = vxor.u32 %v1472, 2147483648
      %v2443 = vxor.u32 %v1561, 2147483648
      %v2444 = vxor.u32 %v1650, 2147483648
      %v2445 = vxor.u32 %v1739, 2147483648
      %v2446 = vxor.u32 %v1828, 2147483648
      %v2447 = vxor.u32 %v1917, 2147483648
      %v2448 = vxor.u32 %v2006, 2147483648
      %v2449 = vxor.u32 %v2095, 2147483648
      %v2450 = vxor.u32 %v2184, 2147483648
      %v2451 = vxor.u32 %v2273, 2147483648
      %v2452 = vxor.u32 %v1474, 2147483648
      %v2453 = vxor.u32 %v1563, 2147483648
      %v2454 = vxor.u32 %v1652, 2147483648
      %v2455 = vxor.u32 %v1741, 2147483648
      %v2456 = vxor.u32 %v1830, 2147483648
      %v2457 = vxor.u32 %v1919, 2147483648
      %v2458 = vxor.u32 %v2008, 2147483648
      %v2459 = vxor.u32 %v2097, 2147483648
      %v2460 = vxor.u32 %v2186, 2147483648
      %v2461 = vxor.u32 %v2275, 2147483648
      %v2462 = vxor.u32 %v1477, 2147483648
      %v2463 = vxor.u32 %v1566, 2147483648
      %v2464 = vxor.u32 %v1655, 2147483648
      %v2465 = vxor.u32 %v1744, 2147483648
      %v2466 = vxor.u32 %v1833, 2147483648
      %v2467 = vxor.u32 %v1922, 2147483648
      %v2468 = vxor.u32 %v2011, 2147483648
      %v2469 = vxor.u32 %v2100, 2147483648
      %v2470 = vxor.u32 %v2189, 2147483648
      %v2471 = vxor.u32 %v2278, 2147483648
      %v2472 = vxor.u32 %v1479, 2147483648
      %v2473 = vxor.u32 %v1568, 2147483648
      %v2474 = vxor.u32 %v1657, 2147483648
      %v2475 = vxor.u32 %v1746, 2147483648
      %v2476 = vxor.u32 %v1835, 2147483648
      %v2477 = vxor.u32 %v1924, 2147483648
      %v2478 = vxor.u32 %v2013, 2147483648
      %v2479 = vxor.u32 %v2102, 2147483648
      %v2480 = vxor.u32 %v2191, 2147483648
      %v2481 = vxor.u32 %v2280, 2147483648
      %v2482 = vxor.u32 %v1482, 2147483648
      %v2483 = vxor.u32 %v1571, 2147483648
      %v2484 = vxor.u32 %v1660, 2147483648
      %v2485 = vxor.u32 %v1749, 2147483648
      %v2486 = vxor.u32 %v1838, 2147483648
      %v2487 = vxor.u32 %v1927, 2147483648
      %v2488 = vxor.u32 %v2016, 2147483648
      %v2489 = vxor.u32 %v2105, 2147483648
      %v2490 = vxor.u32 %v2194, 2147483648
      %v2491 = vxor.u32 %v2283, 2147483648
      %v2492 = vxor.u32 %v1484, 2147483648
      %v2493 = vxor.u32 %v1573, 2147483648
      %v2494 = vxor.u32 %v1662, 2147483648
      %v2495 = vxor.u32 %v1751, 2147483648
      %v2496 = vxor.u32 %v1840, 2147483648
      %v2497 = vxor.u32 %v1929, 2147483648
      %v2498 = vxor.u32 %v2018, 2147483648
      %v2499 = vxor.u32 %v2107, 2147483648
      %v2500 = vxor.u32 %v2196, 2147483648
      %v2501 = vxor.u32 %v2285, 2147483648
      %v2502 = vxor.u32 %v1487, 2147483648
      %v2503 = vxor.u32 %v1576, 2147483648
      %v2504 = vxor.u32 %v1665, 2147483648
      %v2505 = vxor.u32 %v1754, 2147483648
      %v2506 = vxor.u32 %v1843, 2147483648
      %v2507 = vxor.u32 %v1932, 2147483648
      %v2508 = vxor.u32 %v2021, 2147483648
      %v2509 = vxor.u32 %v2110, 2147483648
      %v2510 = vxor.u32 %v2199, 2147483648
      %v2511 = vxor.u32 %v2288, 2147483648
      %v2512 = vxor.u32 %v1489, 2147483648
      %v2513 = vxor.u32 %v1578, 2147483648
      %v2514 = vxor.u32 %v1667, 2147483648
      %v2515 = vxor.u32 %v1756, 2147483648
      %v2516 = vxor.u32 %v1845, 2147483648
      %v2517 = vxor.u32 %v1934, 2147483648
      %v2518 = vxor.u32 %v2023, 2147483648
      %v2519 = vxor.u32 %v2112, 2147483648
      %v2520 = vxor.u32 %v2201, 2147483648
      %v2521 = vxor.u32 %v2290, 2147483648
      %v2522 = vxor.u32 %v1492, 2147483648
      %v2523 = vxor.u32 %v1581, 2147483648
      %v2524 = vxor.u32 %v1670, 2147483648
      %v2525 = vxor.u32 %v1759, 2147483648
      %v2526 = vxor.u32 %v1848, 2147483648
      %v2527 = vxor.u32 %v1937, 2147483648
      %v2528 = vxor.u32 %v2026, 2147483648
      %v2529 = vxor.u32 %v2115, 2147483648
      %v2530 = vxor.u32 %v2204, 2147483648
      %v2531 = vxor.u32 %v2293, 2147483648
      %v2532 = vxor.u32 %v1494, 2147483648
      %v2533 = vxor.u32 %v1583, 2147483648
      %v2534 = vxor.u32 %v1672, 2147483648
      %v2535 = vxor.u32 %v1761, 2147483648
      %v2536 = vxor.u32 %v1850, 2147483648
      %v2537 = vxor.u32 %v1939, 2147483648
      %v2538 = vxor.u32 %v2028, 2147483648
      %v2539 = vxor.u32 %v2117, 2147483648
      %v2540 = vxor.u32 %v2206, 2147483648
      %v2541 = vxor.u32 %v2295, 2147483648
      %v2542 = vxor.u32 %v1497, 2147483648
      %v2543 = vxor.u32 %v1586, 2147483648
      %v2544 = vxor.u32 %v1675, 2147483648
      %v2545 = vxor.u32 %v1764, 2147483648
      %v2546 = vxor.u32 %v1853, 2147483648
      %v2547 = vxor.u32 %v1942, 2147483648
      %v2548 = vxor.u32 %v2031, 2147483648
      %v2549 = vxor.u32 %v2120, 2147483648
      %v2550 = vxor.u32 %v2209, 2147483648
      %v2551 = vxor.u32 %v2298, 2147483648
      %v2552 = vxor.u32 %v1499, 2147483648
      %v2553 = vxor.u32 %v1588, 2147483648
      %v2554 = vxor.u32 %v1677, 2147483648
      %v2555 = vxor.u32 %v1766, 2147483648
      %v2556 = vxor.u32 %v1855, 2147483648
      %v2557 = vxor.u32 %v1944, 2147483648
      %v2558 = vxor.u32 %v2033, 2147483648
      %v2559 = vxor.u32 %v2122, 2147483648
      %v2560 = vxor.u32 %v2211, 2147483648
      %v2561 = vxor.u32 %v2300, 2147483648
      %v2562 = vxor.u32 %v1502, 2147483648
      %v2563 = vxor.u32 %v1591, 2147483648
      %v2564 = vxor.u32 %v1680, 2147483648
      %v2565 = vxor.u32 %v1769, 2147483648
      %v2566 = vxor.u32 %v1858, 2147483648
      %v2567 = vxor.u32 %v1947, 2147483648
      %v2568 = vxor.u32 %v2036, 2147483648
      %v2569 = vxor.u32 %v2125, 2147483648
      %v2570 = vxor.u32 %v2214, 2147483648
      %v2571 = vxor.u32 %v2303, 2147483648
      %v2572 = vxor.u32 %v1504, 2147483648
      %v2573 = vxor.u32 %v1593, 2147483648
      %v2574 = vxor.u32 %v1682, 2147483648
      %v2575 = vxor.u32 %v1771, 2147483648
      %v2576 = vxor.u32 %v1860, 2147483648
      %v2577 = vxor.u32 %v1949, 2147483648
      %v2578 = vxor.u32 %v2038, 2147483648
      %v2579 = vxor.u32 %v2127, 2147483648
      %v2580 = vxor.u32 %v2216, 2147483648
      %v2581 = vxor.u32 %v2305, 2147483648
      %v2582 = vxor.u32 %v1507, 2147483648
      %v2583 = vxor.u32 %v1596, 2147483648
      %v2584 = vxor.u32 %v1685, 2147483648
      %v2585 = vxor.u32 %v1774, 2147483648
      %v2586 = vxor.u32 %v1863, 2147483648
      %v2587 = vxor.u32 %v1952, 2147483648
      %v2588 = vxor.u32 %v2041, 2147483648
      %v2589 = vxor.u32 %v2130, 2147483648
      %v2590 = vxor.u32 %v2219, 2147483648
      %v2591 = vxor.u32 %v2308, 2147483648
      %v2592 = vxor.u32 %v1509, 2147483648
      %v2593 = vxor.u32 %v1598, 2147483648
      %v2594 = vxor.u32 %v1687, 2147483648
      %v2595 = vxor.u32 %v1776, 2147483648
      %v2596 = vxor.u32 %v1865, 2147483648
      %v2597 = vxor.u32 %v1954, 2147483648
      %v2598 = vxor.u32 %v2043, 2147483648
      %v2599 = vxor.u32 %v2132, 2147483648
      %v2600 = vxor.u32 %v2221, 2147483648
      %v2601 = vxor.u32 %v2310, 2147483648
      %v2602 = vxor.u32 %v1512, 2147483648
      %v2603 = vxor.u32 %v1601, 2147483648
      %v2604 = vxor.u32 %v1690, 2147483648
      %v2605 = vxor.u32 %v1779, 2147483648
      %v2606 = vxor.u32 %v1868, 2147483648
      %v2607 = vxor.u32 %v1957, 2147483648
      %v2608 = vxor.u32 %v2046, 2147483648
      %v2609 = vxor.u32 %v2135, 2147483648
      %v2610 = vxor.u32 %v2224, 2147483648
      %v2611 = vxor.u32 %v2313, 2147483648
      %v2612 = vxor.u32 %v1514, 2147483648
      %v2613 = vxor.u32 %v1603, 2147483648
      %v2614 = vxor.u32 %v1692, 2147483648
      %v2615 = vxor.u32 %v1781, 2147483648
      %v2616 = vxor.u32 %v1870, 2147483648
      %v2617 = vxor.u32 %v1959, 2147483648
      %v2618 = vxor.u32 %v2048, 2147483648
      %v2619 = vxor.u32 %v2137, 2147483648
      %v2620 = vxor.u32 %v2226, 2147483648
      %v2621 = vxor.u32 %v2315, 2147483648
      %v2622 = vxor.u32 %v1517, 2147483648
      %v2623 = vxor.u32 %v1606, 2147483648
      %v2624 = vxor.u32 %v1695, 2147483648
      %v2625 = vxor.u32 %v1784, 2147483648
      %v2626 = vxor.u32 %v1873, 2147483648
      %v2627 = vxor.u32 %v1962, 2147483648
      %v2628 = vxor.u32 %v2051, 2147483648
      %v2629 = vxor.u32 %v2140, 2147483648
      %v2630 = vxor.u32 %v2229, 2147483648
      %v2631 = vxor.u32 %v2318, 2147483648
      %v2632 = vxor.u32 %v1519, 2147483648
      %v2633 = vxor.u32 %v1608, 2147483648
      %v2634 = vxor.u32 %v1697, 2147483648
      %v2635 = vxor.u32 %v1786, 2147483648
      %v2636 = vxor.u32 %v1875, 2147483648
      %v2637 = vxor.u32 %v1964, 2147483648
      %v2638 = vxor.u32 %v2053, 2147483648
      %v2639 = vxor.u32 %v2142, 2147483648
      %v2640 = vxor.u32 %v2231, 2147483648
      %v2641 = vxor.u32 %v2320, 2147483648
      %v2642 = vmul.f32 %v2322, 1.442695
      %v2643 = vpow.pop %v2642
      %v2644 = vmul.f32 %v2323, 1.442695
      %v2645 = vpow.pop %v2644
      %v2646 = vmul.f32 %v2324, 1.442695
      %v2647 = vpow.pop %v2646
      %v2648 = vmul.f32 %v2325, 1.442695
      %v2649 = vpow.pop %v2648
      %v2650 = vmul.f32 %v2326, 1.442695
      %v2651 = vpow.pop %v2650
      %v2652 = vmul.f32 %v2327, 1.442695
      %v2653 = vpow.pop %v2652
      %v2654 = vmul.f32 %v2328, 1.442695
      %v2655 = vpow.pop %v2654
      %v2656 = vmul.f32 %v2329, 1.442695
      %v2657 = vpow.pop %v2656
      %v2658 = vmul.f32 %v2330, 1.442695
      %v2659 = vpow.pop %v2658
      %v2660 = vmul.f32 %v2331, 1.442695
      %v2661 = vpow.pop %v2660
      %v2662 = vmul.f32 %v2332, 1.442695
      %v2663 = vpow.pop %v2662
      %v2664 = vmul.f32 %v2333, 1.442695
      %v2665 = vpow.pop %v2664
      %v2666 = vmul.f32 %v2334, 1.442695
      %v2667 = vpow.pop %v2666
      %v2668 = vmul.f32 %v2335, 1.442695
      %v2669 = vpow.pop %v2668
      %v2670 = vmul.f32 %v2336, 1.442695
      %v2671 = vpow.pop %v2670
      %v2672 = vmul.f32 %v2337, 1.442695
      %v2673 = vpow.pop %v2672
      %v2674 = vmul.f32 %v2338, 1.442695
      %v2675 = vpow.pop %v2674
      %v2676 = vmul.f32 %v2339, 1.442695
      %v2677 = vpow.pop %v2676
      %v2678 = vmul.f32 %v2340, 1.442695
      %v2679 = vpow.pop %v2678
      %v2680 = vmul.f32 %v2341, 1.442695
      %v2681 = vpow.pop %v2680
      %v2682 = vmul.f32 %v2342, 1.442695
      %v2683 = vpow.pop %v2682
      %v2684 = vmul.f32 %v2343, 1.442695
      %v2685 = vpow.pop %v2684
      %v2686 = vmul.f32 %v2344, 1.442695
      %v2687 = vpow.pop %v2686
      %v2688 = vmul.f32 %v2345, 1.442695
      %v2689 = vpow.pop %v2688
      %v2690 = vmul.f32 %v2346, 1.442695
      %v2691 = vpow.pop %v2690
      %v2692 = vmul.f32 %v2347, 1.442695
      %v2693 = vpow.pop %v2692
      %v2694 = vmul.f32 %v2348, 1.442695
      %v2695 = vpow.pop %v2694
      %v2696 = vmul.f32 %v2349, 1.442695
      %v2697 = vpow.pop %v2696
      %v2698 = vmul.f32 %v2350, 1.442695
      %v2699 = vpow.pop %v2698
      %v2700 = vmul.f32 %v2351, 1.442695
      %v2701 = vpow.pop %v2700
      %v2702 = vmul.f32 %v2352, 1.442695
      %v2703 = vpow.pop %v2702
      %v2704 = vmul.f32 %v2353, 1.442695
      %v2705 = vpow.pop %v2704
      %v2706 = vmul.f32 %v2354, 1.442695
      %v2707 = vpow.pop %v2706
      %v2708 = vmul.f32 %v2355, 1.442695
      %v2709 = vpow.pop %v2708
      %v2710 = vmul.f32 %v2356, 1.442695
      %v2711 = vpow.pop %v2710
      %v2712 = vmul.f32 %v2357, 1.442695
      %v2713 = vpow.pop %v2712
      %v2714 = vmul.f32 %v2358, 1.442695
      %v2715 = vpow.pop %v2714
      %v2716 = vmul.f32 %v2359, 1.442695
      %v2717 = vpow.pop %v2716
      %v2718 = vmul.f32 %v2360, 1.442695
      %v2719 = vpow.pop %v2718
      %v2720 = vmul.f32 %v2361, 1.442695
      %v2721 = vpow.pop %v2720
      %v2722 = vmul.f32 %v2362, 1.442695
      %v2723 = vpow.pop %v2722
      %v2724 = vmul.f32 %v2363, 1.442695
      %v2725 = vpow.pop %v2724
      %v2726 = vmul.f32 %v2364, 1.442695
      %v2727 = vpow.pop %v2726
      %v2728 = vmul.f32 %v2365, 1.442695
      %v2729 = vpow.pop %v2728
      %v2730 = vmul.f32 %v2366, 1.442695
      %v2731 = vpow.pop %v2730
      %v2732 = vmul.f32 %v2367, 1.442695
      %v2733 = vpow.pop %v2732
      %v2734 = vmul.f32 %v2368, 1.442695
      %v2735 = vpow.pop %v2734
      %v2736 = vmul.f32 %v2369, 1.442695
      %v2737 = vpow.pop %v2736
      %v2738 = vmul.f32 %v2370, 1.442695
      %v2739 = vpow.pop %v2738
      %v2740 = vmul.f32 %v2371, 1.442695
      %v2741 = vpow.pop %v2740
      %v2742 = vmul.f32 %v2372, 1.442695
      %v2743 = vpow.pop %v2742
      %v2744 = vmul.f32 %v2373, 1.442695
      %v2745 = vpow.pop %v2744
      %v2746 = vmul.f32 %v2374, 1.442695
      %v2747 = vpow.pop %v2746
      %v2748 = vmul.f32 %v2375, 1.442695
      %v2749 = vpow.pop %v2748
      %v2750 = vmul.f32 %v2376, 1.442695
      %v2751 = vpow.pop %v2750
      %v2752 = vmul.f32 %v2377, 1.442695
      %v2753 = vpow.pop %v2752
      %v2754 = vmul.f32 %v2378, 1.442695
      %v2755 = vpow.pop %v2754
      %v2756 = vmul.f32 %v2379, 1.442695
      %v2757 = vpow.pop %v2756
      %v2758 = vmul.f32 %v2380, 1.442695
      %v2759 = vpow.pop %v2758
      %v2760 = vmul.f32 %v2381, 1.442695
      %v2761 = vpow.pop %v2760
      %v2762 = vmul.f32 %v2382, 1.442695
      %v2763 = vpow.pop %v2762
      %v2764 = vmul.f32 %v2383, 1.442695
      %v2765 = vpow.pop %v2764
      %v2766 = vmul.f32 %v2384, 1.442695
      %v2767 = vpow.pop %v2766
      %v2768 = vmul.f32 %v2385, 1.442695
      %v2769 = vpow.pop %v2768
      %v2770 = vmul.f32 %v2386, 1.442695
      %v2771 = vpow.pop %v2770
      %v2772 = vmul.f32 %v2387, 1.442695
      %v2773 = vpow.pop %v2772
      %v2774 = vmul.f32 %v2388, 1.442695
      %v2775 = vpow.pop %v2774
      %v2776 = vmul.f32 %v2389, 1.442695
      %v2777 = vpow.pop %v2776
      %v2778 = vmul.f32 %v2390, 1.442695
      %v2779 = vpow.pop %v2778
      %v2780 = vmul.f32 %v2391, 1.442695
      %v2781 = vpow.pop %v2780
      %v2782 = vmul.f32 %v2392, 1.442695
      %v2783 = vpow.pop %v2782
      %v2784 = vmul.f32 %v2393, 1.442695
      %v2785 = vpow.pop %v2784
      %v2786 = vmul.f32 %v2394, 1.442695
      %v2787 = vpow.pop %v2786
      %v2788 = vmul.f32 %v2395, 1.442695
      %v2789 = vpow.pop %v2788
      %v2790 = vmul.f32 %v2396, 1.442695
      %v2791 = vpow.pop %v2790
      %v2792 = vmul.f32 %v2397, 1.442695
      %v2793 = vpow.pop %v2792
      %v2794 = vmul.f32 %v2398, 1.442695
      %v2795 = vpow.pop %v2794
      %v2796 = vmul.f32 %v2399, 1.442695
      %v2797 = vpow.pop %v2796
      %v2798 = vmul.f32 %v2400, 1.442695
      %v2799 = vpow.pop %v2798
      %v2800 = vmul.f32 %v2401, 1.442695
      %v2801 = vpow.pop %v2800
      %v2802 = vmul.f32 %v2402, 1.442695
      %v2803 = vpow.pop %v2802
      %v2804 = vmul.f32 %v2403, 1.442695
      %v2805 = vpow.pop %v2804
      %v2806 = vmul.f32 %v2404, 1.442695
      %v2807 = vpow.pop %v2806
      %v2808 = vmul.f32 %v2405, 1.442695
      %v2809 = vpow.pop %v2808
      %v2810 = vmul.f32 %v2406, 1.442695
      %v2811 = vpow.pop %v2810
      %v2812 = vmul.f32 %v2407, 1.442695
      %v2813 = vpow.pop %v2812
      %v2814 = vmul.f32 %v2408, 1.442695
      %v2815 = vpow.pop %v2814
      %v2816 = vmul.f32 %v2409, 1.442695
      %v2817 = vpow.pop %v2816
      %v2818 = vmul.f32 %v2410, 1.442695
      %v2819 = vpow.pop %v2818
      %v2820 = vmul.f32 %v2411, 1.442695
      %v2821 = vpow.pop %v2820
      %v2822 = vmul.f32 %v2412, 1.442695
      %v2823 = vpow.pop %v2822
      %v2824 = vmul.f32 %v2413, 1.442695
      %v2825 = vpow.pop %v2824
      %v2826 = vmul.f32 %v2414, 1.442695
      %v2827 = vpow.pop %v2826
      %v2828 = vmul.f32 %v2415, 1.442695
      %v2829 = vpow.pop %v2828
      %v2830 = vmul.f32 %v2416, 1.442695
      %v2831 = vpow.pop %v2830
      %v2832 = vmul.f32 %v2417, 1.442695
      %v2833 = vpow.pop %v2832
      %v2834 = vmul.f32 %v2418, 1.442695
      %v2835 = vpow.pop %v2834
      %v2836 = vmul.f32 %v2419, 1.442695
      %v2837 = vpow.pop %v2836
      %v2838 = vmul.f32 %v2420, 1.442695
      %v2839 = vpow.pop %v2838
      %v2840 = vmul.f32 %v2421, 1.442695
      %v2841 = vpow.pop %v2840
      %v2842 = vmul.f32 %v2422, 1.442695
      %v2843 = vpow.pop %v2842
      %v2844 = vmul.f32 %v2423, 1.442695
      %v2845 = vpow.pop %v2844
      %v2846 = vmul.f32 %v2424, 1.442695
      %v2847 = vpow.pop %v2846
      %v2848 = vmul.f32 %v2425, 1.442695
      %v2849 = vpow.pop %v2848
      %v2850 = vmul.f32 %v2426, 1.442695
      %v2851 = vpow.pop %v2850
      %v2852 = vmul.f32 %v2427, 1.442695
      %v2853 = vpow.pop %v2852
      %v2854 = vmul.f32 %v2428, 1.442695
      %v2855 = vpow.pop %v2854
      %v2856 = vmul.f32 %v2429, 1.442695
      %v2857 = vpow.pop %v2856
      %v2858 = vmul.f32 %v2430, 1.442695
      %v2859 = vpow.pop %v2858
      %v2860 = vmul.f32 %v2431, 1.442695
      %v2861 = vpow.pop %v2860
      %v2862 = vmul.f32 %v2432, 1.442695
      %v2863 = vpow.pop %v2862
      %v2864 = vmul.f32 %v2433, 1.442695
      %v2865 = vpow.pop %v2864
      %v2866 = vmul.f32 %v2434, 1.442695
      %v2867 = vpow.pop %v2866
      %v2868 = vmul.f32 %v2435, 1.442695
      %v2869 = vpow.pop %v2868
      %v2870 = vmul.f32 %v2436, 1.442695
      %v2871 = vpow.pop %v2870
      %v2872 = vmul.f32 %v2437, 1.442695
      %v2873 = vpow.pop %v2872
      %v2874 = vmul.f32 %v2438, 1.442695
      %v2875 = vpow.pop %v2874
      %v2876 = vmul.f32 %v2439, 1.442695
      %v2877 = vpow.pop %v2876
      %v2878 = vmul.f32 %v2440, 1.442695
      %v2879 = vpow.pop %v2878
      %v2880 = vmul.f32 %v2441, 1.442695
      %v2881 = vpow.pop %v2880
      %v2882 = vmul.f32 %v2442, 1.442695
      %v2883 = vpow.pop %v2882
      %v2884 = vmul.f32 %v2443, 1.442695
      %v2885 = vpow.pop %v2884
      %v2886 = vmul.f32 %v2444, 1.442695
      %v2887 = vpow.pop %v2886
      %v2888 = vmul.f32 %v2445, 1.442695
      %v2889 = vpow.pop %v2888
      %v2890 = vmul.f32 %v2446, 1.442695
      %v2891 = vpow.pop %v2890
      %v2892 = vmul.f32 %v2447, 1.442695
      %v2893 = vpow.pop %v2892
      %v2894 = vmul.f32 %v2448, 1.442695
      %v2895 = vpow.pop %v2894
      %v2896 = vmul.f32 %v2449, 1.442695
      %v2897 = vpow.pop %v2896
      %v2898 = vmul.f32 %v2450, 1.442695
      %v2899 = vpow.pop %v2898
      %v2900 = vmul.f32 %v2451, 1.442695
      %v2901 = vpow.pop %v2900
      %v2902 = vmul.f32 %v2452, 1.442695
      %v2903 = vpow.pop %v2902
      %v2904 = vmul.f32 %v2453, 1.442695
      %v2905 = vpow.pop %v2904
      %v2906 = vmul.f32 %v2454, 1.442695
      %v2907 = vpow.pop %v2906
      %v2908 = vmul.f32 %v2455, 1.442695
      %v2909 = vpow.pop %v2908
      %v2910 = vmul.f32 %v2456, 1.442695
      %v2911 = vpow.pop %v2910
      %v2912 = vmul.f32 %v2457, 1.442695
      %v2913 = vpow.pop %v2912
      %v2914 = vmul.f32 %v2458, 1.442695
      %v2915 = vpow.pop %v2914
      %v2916 = vmul.f32 %v2459, 1.442695
      %v2917 = vpow.pop %v2916
      %v2918 = vmul.f32 %v2460, 1.442695
      %v2919 = vpow.pop %v2918
      %v2920 = vmul.f32 %v2461, 1.442695
      %v2921 = vpow.pop %v2920
      %v2922 = vmul.f32 %v2462, 1.442695
      %v2923 = vpow.pop %v2922
      %v2924 = vmul.f32 %v2463, 1.442695
      %v2925 = vpow.pop %v2924
      %v2926 = vmul.f32 %v2464, 1.442695
      %v2927 = vpow.pop %v2926
      %v2928 = vmul.f32 %v2465, 1.442695
      %v2929 = vpow.pop %v2928
      %v2930 = vmul.f32 %v2466, 1.442695
      %v2931 = vpow.pop %v2930
      %v2932 = vmul.f32 %v2467, 1.442695
      %v2933 = vpow.pop %v2932
      %v2934 = vmul.f32 %v2468, 1.442695
      %v2935 = vpow.pop %v2934
      %v2936 = vmul.f32 %v2469, 1.442695
      %v2937 = vpow.pop %v2936
      %v2938 = vmul.f32 %v2470, 1.442695
      %v2939 = vpow.pop %v2938
      %v2940 = vmul.f32 %v2471, 1.442695
      %v2941 = vpow.pop %v2940
      %v2942 = vmul.f32 %v2472, 1.442695
      %v2943 = vpow.pop %v2942
      %v2944 = vmul.f32 %v2473, 1.442695
      %v2945 = vpow.pop %v2944
      %v2946 = vmul.f32 %v2474, 1.442695
      %v2947 = vpow.pop %v2946
      %v2948 = vmul.f32 %v2475, 1.442695
      %v2949 = vpow.pop %v2948
      %v2950 = vmul.f32 %v2476, 1.442695
      %v2951 = vpow.pop %v2950
      %v2952 = vmul.f32 %v2477, 1.442695
      %v2953 = vpow.pop %v2952
      %v2954 = vmul.f32 %v2478, 1.442695
      %v2955 = vpow.pop %v2954
      %v2956 = vmul.f32 %v2479, 1.442695
      %v2957 = vpow.pop %v2956
      %v2958 = vmul.f32 %v2480, 1.442695
      %v2959 = vpow.pop %v2958
      %v2960 = vmul.f32 %v2481, 1.442695
      %v2961 = vpow.pop %v2960
      %v2962 = vmul.f32 %v2482, 1.442695
      %v2963 = vpow.pop %v2962
      %v2964 = vmul.f32 %v2483, 1.442695
      %v2965 = vpow.pop %v2964
      %v2966 = vmul.f32 %v2484, 1.442695
      %v2967 = vpow.pop %v2966
      %v2968 = vmul.f32 %v2485, 1.442695
      %v2969 = vpow.pop %v2968
      %v2970 = vmul.f32 %v2486, 1.442695
      %v2971 = vpow.pop %v2970
      %v2972 = vmul.f32 %v2487, 1.442695
      %v2973 = vpow.pop %v2972
      %v2974 = vmul.f32 %v2488, 1.442695
      %v2975 = vpow.pop %v2974
      %v2976 = vmul.f32 %v2489, 1.442695
      %v2977 = vpow.pop %v2976
      %v2978 = vmul.f32 %v2490, 1.442695
      %v2979 = vpow.pop %v2978
      %v2980 = vmul.f32 %v2491, 1.442695
      %v2981 = vpow.pop %v2980
      %v2982 = vmul.f32 %v2492, 1.442695
      %v2983 = vpow.pop %v2982
      %v2984 = vmul.f32 %v2493, 1.442695
      %v2985 = vpow.pop %v2984
      %v2986 = vmul.f32 %v2494, 1.442695
      %v2987 = vpow.pop %v2986
      %v2988 = vmul.f32 %v2495, 1.442695
      %v2989 = vpow.pop %v2988
      %v2990 = vmul.f32 %v2496, 1.442695
      %v2991 = vpow.pop %v2990
      %v2992 = vmul.f32 %v2497, 1.442695
      %v2993 = vpow.pop %v2992
      %v2994 = vmul.f32 %v2498, 1.442695
      %v2995 = vpow.pop %v2994
      %v2996 = vmul.f32 %v2499, 1.442695
      %v2997 = vpow.pop %v2996
      %v2998 = vmul.f32 %v2500, 1.442695
      %v2999 = vpow.pop %v2998
      %v3000 = vmul.f32 %v2501, 1.442695
      %v3001 = vpow.pop %v3000
      %v3002 = vmul.f32 %v2502, 1.442695
      %v3003 = vpow.pop %v3002
      %v3004 = vmul.f32 %v2503, 1.442695
      %v3005 = vpow.pop %v3004
      %v3006 = vmul.f32 %v2504, 1.442695
      %v3007 = vpow.pop %v3006
      %v3008 = vmul.f32 %v2505, 1.442695
      %v3009 = vpow.pop %v3008
      %v3010 = vmul.f32 %v2506, 1.442695
      %v3011 = vpow.pop %v3010
      %v3012 = vmul.f32 %v2507, 1.442695
      %v3013 = vpow.pop %v3012
      %v3014 = vmul.f32 %v2508, 1.442695
      %v3015 = vpow.pop %v3014
      %v3016 = vmul.f32 %v2509, 1.442695
      %v3017 = vpow.pop %v3016
      %v3018 = vmul.f32 %v2510, 1.442695
      %v3019 = vpow.pop %v3018
      %v3020 = vmul.f32 %v2511, 1.442695
      %v3021 = vpow.pop %v3020
      %v3022 = vmul.f32 %v2512, 1.442695
      %v3023 = vpow.pop %v3022
      %v3024 = vmul.f32 %v2513, 1.442695
      %v3025 = vpow.pop %v3024
      %v3026 = vmul.f32 %v2514, 1.442695
      %v3027 = vpow.pop %v3026
      %v3028 = vmul.f32 %v2515, 1.442695
      %v3029 = vpow.pop %v3028
      %v3030 = vmul.f32 %v2516, 1.442695
      %v3031 = vpow.pop %v3030
      %v3032 = vmul.f32 %v2517, 1.442695
      %v3033 = vpow.pop %v3032
      %v3034 = vmul.f32 %v2518, 1.442695
      %v3035 = vpow.pop %v3034
      %v3036 = vmul.f32 %v2519, 1.442695
      %v3037 = vpow.pop %v3036
      %v3038 = vmul.f32 %v2520, 1.442695
      %v3039 = vpow.pop %v3038
      %v3040 = vmul.f32 %v2521, 1.442695
      %v3041 = vpow.pop %v3040
      %v3042 = vmul.f32 %v2522, 1.442695
      %v3043 = vpow.pop %v3042
      %v3044 = vmul.f32 %v2523, 1.442695
      %v3045 = vpow.pop %v3044
      %v3046 = vmul.f32 %v2524, 1.442695
      %v3047 = vpow.pop %v3046
      %v3048 = vmul.f32 %v2525, 1.442695
      %v3049 = vpow.pop %v3048
      %v3050 = vmul.f32 %v2526, 1.442695
      %v3051 = vpow.pop %v3050
      %v3052 = vmul.f32 %v2527, 1.442695
      %v3053 = vpow.pop %v3052
      %v3054 = vmul.f32 %v2528, 1.442695
      %v3055 = vpow.pop %v3054
      %v3056 = vmul.f32 %v2529, 1.442695
      %v3057 = vpow.pop %v3056
      %v3058 = vmul.f32 %v2530, 1.442695
      %v3059 = vpow.pop %v3058
      %v3060 = vmul.f32 %v2531, 1.442695
      %v3061 = vpow.pop %v3060
      %v3062 = vmul.f32 %v2532, 1.442695
      %v3063 = vpow.pop %v3062
      %v3064 = vmul.f32 %v2533, 1.442695
      %v3065 = vpow.pop %v3064
      %v3066 = vmul.f32 %v2534, 1.442695
      %v3067 = vpow.pop %v3066
      %v3068 = vmul.f32 %v2535, 1.442695
      %v3069 = vpow.pop %v3068
      %v3070 = vmul.f32 %v2536, 1.442695
      %v3071 = vpow.pop %v3070
      %v3072 = vmul.f32 %v2537, 1.442695
      %v3073 = vpow.pop %v3072
      %v3074 = vmul.f32 %v2538, 1.442695
      %v3075 = vpow.pop %v3074
      %v3076 = vmul.f32 %v2539, 1.442695
      %v3077 = vpow.pop %v3076
      %v3078 = vmul.f32 %v2540, 1.442695
      %v3079 = vpow.pop %v3078
      %v3080 = vmul.f32 %v2541, 1.442695
      %v3081 = vpow.pop %v3080
      %v3082 = vmul.f32 %v2542, 1.442695
      %v3083 = vpow.pop %v3082
      %v3084 = vmul.f32 %v2543, 1.442695
      %v3085 = vpow.pop %v3084
      %v3086 = vmul.f32 %v2544, 1.442695
      %v3087 = vpow.pop %v3086
      %v3088 = vmul.f32 %v2545, 1.442695
      %v3089 = vpow.pop %v3088
      %v3090 = vmul.f32 %v2546, 1.442695
      %v3091 = vpow.pop %v3090
      %v3092 = vmul.f32 %v2547, 1.442695
      %v3093 = vpow.pop %v3092
      %v3094 = vmul.f32 %v2548, 1.442695
      %v3095 = vpow.pop %v3094
      %v3096 = vmul.f32 %v2549, 1.442695
      %v3097 = vpow.pop %v3096
      %v3098 = vmul.f32 %v2550, 1.442695
      %v3099 = vpow.pop %v3098
      %v3100 = vmul.f32 %v2551, 1.442695
      %v3101 = vpow.pop %v3100
      %v3102 = vmul.f32 %v2552, 1.442695
      %v3103 = vpow.pop %v3102
      %v3104 = vmul.f32 %v2553, 1.442695
      %v3105 = vpow.pop %v3104
      %v3106 = vmul.f32 %v2554, 1.442695
      %v3107 = vpow.pop %v3106
      %v3108 = vmul.f32 %v2555, 1.442695
      %v3109 = vpow.pop %v3108
      %v3110 = vmul.f32 %v2556, 1.442695
      %v3111 = vpow.pop %v3110
      %v3112 = vmul.f32 %v2557, 1.442695
      %v3113 = vpow.pop %v3112
      %v3114 = vmul.f32 %v2558, 1.442695
      %v3115 = vpow.pop %v3114
      %v3116 = vmul.f32 %v2559, 1.442695
      %v3117 = vpow.pop %v3116
      %v3118 = vmul.f32 %v2560, 1.442695
      %v3119 = vpow.pop %v3118
      %v3120 = vmul.f32 %v2561, 1.442695
      %v3121 = vpow.pop %v3120
      %v3122 = vmul.f32 %v2562, 1.442695
      %v3123 = vpow.pop %v3122
      %v3124 = vmul.f32 %v2563, 1.442695
      %v3125 = vpow.pop %v3124
      %v3126 = vmul.f32 %v2564, 1.442695
      %v3127 = vpow.pop %v3126
      %v3128 = vmul.f32 %v2565, 1.442695
      %v3129 = vpow.pop %v3128
      %v3130 = vmul.f32 %v2566, 1.442695
      %v3131 = vpow.pop %v3130
      %v3132 = vmul.f32 %v2567, 1.442695
      %v3133 = vpow.pop %v3132
      %v3134 = vmul.f32 %v2568, 1.442695
      %v3135 = vpow.pop %v3134
      %v3136 = vmul.f32 %v2569, 1.442695
      %v3137 = vpow.pop %v3136
      %v3138 = vmul.f32 %v2570, 1.442695
      %v3139 = vpow.pop %v3138
      %v3140 = vmul.f32 %v2571, 1.442695
      %v3141 = vpow.pop %v3140
      %v3142 = vmul.f32 %v2572, 1.442695
      %v3143 = vpow.pop %v3142
      %v3144 = vmul.f32 %v2573, 1.442695
      %v3145 = vpow.pop %v3144
      %v3146 = vmul.f32 %v2574, 1.442695
      %v3147 = vpow.pop %v3146
      %v3148 = vmul.f32 %v2575, 1.442695
      %v3149 = vpow.pop %v3148
      %v3150 = vmul.f32 %v2576, 1.442695
      %v3151 = vpow.pop %v3150
      %v3152 = vmul.f32 %v2577, 1.442695
      %v3153 = vpow.pop %v3152
      %v3154 = vmul.f32 %v2578, 1.442695
      %v3155 = vpow.pop %v3154
      %v3156 = vmul.f32 %v2579, 1.442695
      %v3157 = vpow.pop %v3156
      %v3158 = vmul.f32 %v2580, 1.442695
      %v3159 = vpow.pop %v3158
      %v3160 = vmul.f32 %v2581, 1.442695
      %v3161 = vpow.pop %v3160
      %v3162 = vmul.f32 %v2582, 1.442695
      %v3163 = vpow.pop %v3162
      %v3164 = vmul.f32 %v2583, 1.442695
      %v3165 = vpow.pop %v3164
      %v3166 = vmul.f32 %v2584, 1.442695
      %v3167 = vpow.pop %v3166
      %v3168 = vmul.f32 %v2585, 1.442695
      %v3169 = vpow.pop %v3168
      %v3170 = vmul.f32 %v2586, 1.442695
      %v3171 = vpow.pop %v3170
      %v3172 = vmul.f32 %v2587, 1.442695
      %v3173 = vpow.pop %v3172
      %v3174 = vmul.f32 %v2588, 1.442695
      %v3175 = vpow.pop %v3174
      %v3176 = vmul.f32 %v2589, 1.442695
      %v3177 = vpow.pop %v3176
      %v3178 = vmul.f32 %v2590, 1.442695
      %v3179 = vpow.pop %v3178
      %v3180 = vmul.f32 %v2591, 1.442695
      %v3181 = vpow.pop %v3180
      %v3182 = vmul.f32 %v2592, 1.442695
      %v3183 = vpow.pop %v3182
      %v3184 = vmul.f32 %v2593, 1.442695
      %v3185 = vpow.pop %v3184
      %v3186 = vmul.f32 %v2594, 1.442695
      %v3187 = vpow.pop %v3186
      %v3188 = vmul.f32 %v2595, 1.442695
      %v3189 = vpow.pop %v3188
      %v3190 = vmul.f32 %v2596, 1.442695
      %v3191 = vpow.pop %v3190
      %v3192 = vmul.f32 %v2597, 1.442695
      %v3193 = vpow.pop %v3192
      %v3194 = vmul.f32 %v2598, 1.442695
      %v3195 = vpow.pop %v3194
      %v3196 = vmul.f32 %v2599, 1.442695
      %v3197 = vpow.pop %v3196
      %v3198 = vmul.f32 %v2600, 1.442695
      %v3199 = vpow.pop %v3198
      %v3200 = vmul.f32 %v2601, 1.442695
      %v3201 = vpow.pop %v3200
      %v3202 = vmul.f32 %v2602, 1.442695
      %v3203 = vpow.pop %v3202
      %v3204 = vmul.f32 %v2603, 1.442695
      %v3205 = vpow.pop %v3204
      %v3206 = vmul.f32 %v2604, 1.442695
      %v3207 = vpow.pop %v3206
      %v3208 = vmul.f32 %v2605, 1.442695
      %v3209 = vpow.pop %v3208
      %v3210 = vmul.f32 %v2606, 1.442695
      %v3211 = vpow.pop %v3210
      %v3212 = vmul.f32 %v2607, 1.442695
      %v3213 = vpow.pop %v3212
      %v3214 = vmul.f32 %v2608, 1.442695
      %v3215 = vpow.pop %v3214
      %v3216 = vmul.f32 %v2609, 1.442695
      %v3217 = vpow.pop %v3216
      %v3218 = vmul.f32 %v2610, 1.442695
      %v3219 = vpow.pop %v3218
      %v3220 = vmul.f32 %v2611, 1.442695
      %v3221 = vpow.pop %v3220
      %v3222 = vmul.f32 %v2612, 1.442695
      %v3223 = vpow.pop %v3222
      %v3224 = vmul.f32 %v2613, 1.442695
      %v3225 = vpow.pop %v3224
      %v3226 = vmul.f32 %v2614, 1.442695
      %v3227 = vpow.pop %v3226
      %v3228 = vmul.f32 %v2615, 1.442695
      %v3229 = vpow.pop %v3228
      %v3230 = vmul.f32 %v2616, 1.442695
      %v3231 = vpow.pop %v3230
      %v3232 = vmul.f32 %v2617, 1.442695
      %v3233 = vpow.pop %v3232
      %v3234 = vmul.f32 %v2618, 1.442695
      %v3235 = vpow.pop %v3234
      %v3236 = vmul.f32 %v2619, 1.442695
      %v3237 = vpow.pop %v3236
      %v3238 = vmul.f32 %v2620, 1.442695
      %v3239 = vpow.pop %v3238
      %v3240 = vmul.f32 %v2621, 1.442695
      %v3241 = vpow.pop %v3240
      %v3242 = vmul.f32 %v2622, 1.442695
      %v3243 = vpow.pop %v3242
      %v3244 = vmul.f32 %v2623, 1.442695
      %v3245 = vpow.pop %v3244
      %v3246 = vmul.f32 %v2624, 1.442695
      %v3247 = vpow.pop %v3246
      %v3248 = vmul.f32 %v2625, 1.442695
      %v3249 = vpow.pop %v3248
      %v3250 = vmul.f32 %v2626, 1.442695
      %v3251 = vpow.pop %v3250
      %v3252 = vmul.f32 %v2627, 1.442695
      %v3253 = vpow.pop %v3252
      %v3254 = vmul.f32 %v2628, 1.442695
      %v3255 = vpow.pop %v3254
      %v3256 = vmul.f32 %v2629, 1.442695
      %v3257 = vpow.pop %v3256
      %v3258 = vmul.f32 %v2630, 1.442695
      %v3259 = vpow.pop %v3258
      %v3260 = vmul.f32 %v2631, 1.442695
      %v3261 = vpow.pop %v3260
      %v3262 = vmul.f32 %v2632, 1.442695
      %v3263 = vpow.pop %v3262
      %v3264 = vmul.f32 %v2633, 1.442695
      %v3265 = vpow.pop %v3264
      %v3266 = vmul.f32 %v2634, 1.442695
      %v3267 = vpow.pop %v3266
      %v3268 = vmul.f32 %v2635, 1.442695
      %v3269 = vpow.pop %v3268
      %v3270 = vmul.f32 %v2636, 1.442695
      %v3271 = vpow.pop %v3270
      %v3272 = vmul.f32 %v2637, 1.442695
      %v3273 = vpow.pop %v3272
      %v3274 = vmul.f32 %v2638, 1.442695
      %v3275 = vpow.pop %v3274
      %v3276 = vmul.f32 %v2639, 1.442695
      %v3277 = vpow.pop %v3276
      %v3278 = vmul.f32 %v2640, 1.442695
      %v3279 = vpow.pop %v3278
      %v3280 = vmul.f32 %v2641, 1.442695
      %v3281 = vpow.pop %v3280
      %v3282 = vadd.f32 %v2643, 1.0
      %v3283 = vadd.f32 %v2645, 1.0
      %v3284 = vadd.f32 %v2647, 1.0
      %v3285 = vadd.f32 %v2649, 1.0
      %v3286 = vadd.f32 %v2651, 1.0
      %v3287 = vadd.f32 %v2653, 1.0
      %v3288 = vadd.f32 %v2655, 1.0
      %v3289 = vadd.f32 %v2657, 1.0
      %v3290 = vadd.f32 %v2659, 1.0
      %v3291 = vadd.f32 %v2661, 1.0
      %v3292 = vadd.f32 %v2663, 1.0
      %v3293 = vadd.f32 %v2665, 1.0
      %v3294 = vadd.f32 %v2667, 1.0
      %v3295 = vadd.f32 %v2669, 1.0
      %v3296 = vadd.f32 %v2671, 1.0
      %v3297 = vadd.f32 %v2673, 1.0
      %v3298 = vadd.f32 %v2675, 1.0
      %v3299 = vadd.f32 %v2677, 1.0
      %v3300 = vadd.f32 %v2679, 1.0
      %v3301 = vadd.f32 %v2681, 1.0
      %v3302 = vadd.f32 %v2683, 1.0
      %v3303 = vadd.f32 %v2685, 1.0
      %v3304 = vadd.f32 %v2687, 1.0
      %v3305 = vadd.f32 %v2689, 1.0
      %v3306 = vadd.f32 %v2691, 1.0
      %v3307 = vadd.f32 %v2693, 1.0
      %v3308 = vadd.f32 %v2695, 1.0
      %v3309 = vadd.f32 %v2697, 1.0
      %v3310 = vadd.f32 %v2699, 1.0
      %v3311 = vadd.f32 %v2701, 1.0
      %v3312 = vadd.f32 %v2703, 1.0
      %v3313 = vadd.f32 %v2705, 1.0
      %v3314 = vadd.f32 %v2707, 1.0
      %v3315 = vadd.f32 %v2709, 1.0
      %v3316 = vadd.f32 %v2711, 1.0
      %v3317 = vadd.f32 %v2713, 1.0
      %v3318 = vadd.f32 %v2715, 1.0
      %v3319 = vadd.f32 %v2717, 1.0
      %v3320 = vadd.f32 %v2719, 1.0
      %v3321 = vadd.f32 %v2721, 1.0
      %v3322 = vadd.f32 %v2723, 1.0
      %v3323 = vadd.f32 %v2725, 1.0
      %v3324 = vadd.f32 %v2727, 1.0
      %v3325 = vadd.f32 %v2729, 1.0
      %v3326 = vadd.f32 %v2731, 1.0
      %v3327 = vadd.f32 %v2733, 1.0
      %v3328 = vadd.f32 %v2735, 1.0
      %v3329 = vadd.f32 %v2737, 1.0
      %v3330 = vadd.f32 %v2739, 1.0
      %v3331 = vadd.f32 %v2741, 1.0
      %v3332 = vadd.f32 %v2743, 1.0
      %v3333 = vadd.f32 %v2745, 1.0
      %v3334 = vadd.f32 %v2747, 1.0
      %v3335 = vadd.f32 %v2749, 1.0
      %v3336 = vadd.f32 %v2751, 1.0
      %v3337 = vadd.f32 %v2753, 1.0
      %v3338 = vadd.f32 %v2755, 1.0
      %v3339 = vadd.f32 %v2757, 1.0
      %v3340 = vadd.f32 %v2759, 1.0
      %v3341 = vadd.f32 %v2761, 1.0
      %v3342 = vadd.f32 %v2763, 1.0
      %v3343 = vadd.f32 %v2765, 1.0
      %v3344 = vadd.f32 %v2767, 1.0
      %v3345 = vadd.f32 %v2769, 1.0
      %v3346 = vadd.f32 %v2771, 1.0
      %v3347 = vadd.f32 %v2773, 1.0
      %v3348 = vadd.f32 %v2775, 1.0
      %v3349 = vadd.f32 %v2777, 1.0
      %v3350 = vadd.f32 %v2779, 1.0
      %v3351 = vadd.f32 %v2781, 1.0
      %v3352 = vadd.f32 %v2783, 1.0
      %v3353 = vadd.f32 %v2785, 1.0
      %v3354 = vadd.f32 %v2787, 1.0
      %v3355 = vadd.f32 %v2789, 1.0
      %v3356 = vadd.f32 %v2791, 1.0
      %v3357 = vadd.f32 %v2793, 1.0
      %v3358 = vadd.f32 %v2795, 1.0
      %v3359 = vadd.f32 %v2797, 1.0
      %v3360 = vadd.f32 %v2799, 1.0
      %v3361 = vadd.f32 %v2801, 1.0
      %v3362 = vadd.f32 %v2803, 1.0
      %v3363 = vadd.f32 %v2805, 1.0
      %v3364 = vadd.f32 %v2807, 1.0
      %v3365 = vadd.f32 %v2809, 1.0
      %v3366 = vadd.f32 %v2811, 1.0
      %v3367 = vadd.f32 %v2813, 1.0
      %v3368 = vadd.f32 %v2815, 1.0
      %v3369 = vadd.f32 %v2817, 1.0
      %v3370 = vadd.f32 %v2819, 1.0
      %v3371 = vadd.f32 %v2821, 1.0
      %v3372 = vadd.f32 %v2823, 1.0
      %v3373 = vadd.f32 %v2825, 1.0
      %v3374 = vadd.f32 %v2827, 1.0
      %v3375 = vadd.f32 %v2829, 1.0
      %v3376 = vadd.f32 %v2831, 1.0
      %v3377 = vadd.f32 %v2833, 1.0
      %v3378 = vadd.f32 %v2835, 1.0
      %v3379 = vadd.f32 %v2837, 1.0
      %v3380 = vadd.f32 %v2839, 1.0
      %v3381 = vadd.f32 %v2841, 1.0
      %v3382 = vadd.f32 %v2843, 1.0
      %v3383 = vadd.f32 %v2845, 1.0
      %v3384 = vadd.f32 %v2847, 1.0
      %v3385 = vadd.f32 %v2849, 1.0
      %v3386 = vadd.f32 %v2851, 1.0
      %v3387 = vadd.f32 %v2853, 1.0
      %v3388 = vadd.f32 %v2855, 1.0
      %v3389 = vadd.f32 %v2857, 1.0
      %v3390 = vadd.f32 %v2859, 1.0
      %v3391 = vadd.f32 %v2861, 1.0
      %v3392 = vadd.f32 %v2863, 1.0
      %v3393 = vadd.f32 %v2865, 1.0
      %v3394 = vadd.f32 %v2867, 1.0
      %v3395 = vadd.f32 %v2869, 1.0
      %v3396 = vadd.f32 %v2871, 1.0
      %v3397 = vadd.f32 %v2873, 1.0
      %v3398 = vadd.f32 %v2875, 1.0
      %v3399 = vadd.f32 %v2877, 1.0
      %v3400 = vadd.f32 %v2879, 1.0
      %v3401 = vadd.f32 %v2881, 1.0
      %v3402 = vadd.f32 %v2883, 1.0
      %v3403 = vadd.f32 %v2885, 1.0
      %v3404 = vadd.f32 %v2887, 1.0
      %v3405 = vadd.f32 %v2889, 1.0
      %v3406 = vadd.f32 %v2891, 1.0
      %v3407 = vadd.f32 %v2893, 1.0
      %v3408 = vadd.f32 %v2895, 1.0
      %v3409 = vadd.f32 %v2897, 1.0
      %v3410 = vadd.f32 %v2899, 1.0
      %v3411 = vadd.f32 %v2901, 1.0
      %v3412 = vadd.f32 %v2903, 1.0
      %v3413 = vadd.f32 %v2905, 1.0
      %v3414 = vadd.f32 %v2907, 1.0
      %v3415 = vadd.f32 %v2909, 1.0
      %v3416 = vadd.f32 %v2911, 1.0
      %v3417 = vadd.f32 %v2913, 1.0
      %v3418 = vadd.f32 %v2915, 1.0
      %v3419 = vadd.f32 %v2917, 1.0
      %v3420 = vadd.f32 %v2919, 1.0
      %v3421 = vadd.f32 %v2921, 1.0
      %v3422 = vadd.f32 %v2923, 1.0
      %v3423 = vadd.f32 %v2925, 1.0
      %v3424 = vadd.f32 %v2927, 1.0
      %v3425 = vadd.f32 %v2929, 1.0
      %v3426 = vadd.f32 %v2931, 1.0
      %v3427 = vadd.f32 %v2933, 1.0
      %v3428 = vadd.f32 %v2935, 1.0
      %v3429 = vadd.f32 %v2937, 1.0
      %v3430 = vadd.f32 %v2939, 1.0
      %v3431 = vadd.f32 %v2941, 1.0
      %v3432 = vadd.f32 %v2943, 1.0
      %v3433 = vadd.f32 %v2945, 1.0
      %v3434 = vadd.f32 %v2947, 1.0
      %v3435 = vadd.f32 %v2949, 1.0
      %v3436 = vadd.f32 %v2951, 1.0
      %v3437 = vadd.f32 %v2953, 1.0
      %v3438 = vadd.f32 %v2955, 1.0
      %v3439 = vadd.f32 %v2957, 1.0
      %v3440 = vadd.f32 %v2959, 1.0
      %v3441 = vadd.f32 %v2961, 1.0
      %v3442 = vadd.f32 %v2963, 1.0
      %v3443 = vadd.f32 %v2965, 1.0
      %v3444 = vadd.f32 %v2967, 1.0
      %v3445 = vadd.f32 %v2969, 1.0
      %v3446 = vadd.f32 %v2971, 1.0
      %v3447 = vadd.f32 %v2973, 1.0
      %v3448 = vadd.f32 %v2975, 1.0
      %v3449 = vadd.f32 %v2977, 1.0
      %v3450 = vadd.f32 %v2979, 1.0
      %v3451 = vadd.f32 %v2981, 1.0
      %v3452 = vadd.f32 %v2983, 1.0
      %v3453 = vadd.f32 %v2985, 1.0
      %v3454 = vadd.f32 %v2987, 1.0
      %v3455 = vadd.f32 %v2989, 1.0
      %v3456 = vadd.f32 %v2991, 1.0
      %v3457 = vadd.f32 %v2993, 1.0
      %v3458 = vadd.f32 %v2995, 1.0
      %v3459 = vadd.f32 %v2997, 1.0
      %v3460 = vadd.f32 %v2999, 1.0
      %v3461 = vadd.f32 %v3001, 1.0
      %v3462 = vadd.f32 %v3003, 1.0
      %v3463 = vadd.f32 %v3005, 1.0
      %v3464 = vadd.f32 %v3007, 1.0
      %v3465 = vadd.f32 %v3009, 1.0
      %v3466 = vadd.f32 %v3011, 1.0
      %v3467 = vadd.f32 %v3013, 1.0
      %v3468 = vadd.f32 %v3015, 1.0
      %v3469 = vadd.f32 %v3017, 1.0
      %v3470 = vadd.f32 %v3019, 1.0
      %v3471 = vadd.f32 %v3021, 1.0
      %v3472 = vadd.f32 %v3023, 1.0
      %v3473 = vadd.f32 %v3025, 1.0
      %v3474 = vadd.f32 %v3027, 1.0
      %v3475 = vadd.f32 %v3029, 1.0
      %v3476 = vadd.f32 %v3031, 1.0
      %v3477 = vadd.f32 %v3033, 1.0
      %v3478 = vadd.f32 %v3035, 1.0
      %v3479 = vadd.f32 %v3037, 1.0
      %v3480 = vadd.f32 %v3039, 1.0
      %v3481 = vadd.f32 %v3041, 1.0
      %v3482 = vadd.f32 %v3043, 1.0
      %v3483 = vadd.f32 %v3045, 1.0
      %v3484 = vadd.f32 %v3047, 1.0
      %v3485 = vadd.f32 %v3049, 1.0
      %v3486 = vadd.f32 %v3051, 1.0
      %v3487 = vadd.f32 %v3053, 1.0
      %v3488 = vadd.f32 %v3055, 1.0
      %v3489 = vadd.f32 %v3057, 1.0
      %v3490 = vadd.f32 %v3059, 1.0
      %v3491 = vadd.f32 %v3061, 1.0
      %v3492 = vadd.f32 %v3063, 1.0
      %v3493 = vadd.f32 %v3065, 1.0
      %v3494 = vadd.f32 %v3067, 1.0
      %v3495 = vadd.f32 %v3069, 1.0
      %v3496 = vadd.f32 %v3071, 1.0
      %v3497 = vadd.f32 %v3073, 1.0
      %v3498 = vadd.f32 %v3075, 1.0
      %v3499 = vadd.f32 %v3077, 1.0
      %v3500 = vadd.f32 %v3079, 1.0
      %v3501 = vadd.f32 %v3081, 1.0
      %v3502 = vadd.f32 %v3083, 1.0
      %v3503 = vadd.f32 %v3085, 1.0
      %v3504 = vadd.f32 %v3087, 1.0
      %v3505 = vadd.f32 %v3089, 1.0
      %v3506 = vadd.f32 %v3091, 1.0
      %v3507 = vadd.f32 %v3093, 1.0
      %v3508 = vadd.f32 %v3095, 1.0
      %v3509 = vadd.f32 %v3097, 1.0
      %v3510 = vadd.f32 %v3099, 1.0
      %v3511 = vadd.f32 %v3101, 1.0
      %v3512 = vadd.f32 %v3103, 1.0
      %v3513 = vadd.f32 %v3105, 1.0
      %v3514 = vadd.f32 %v3107, 1.0
      %v3515 = vadd.f32 %v3109, 1.0
      %v3516 = vadd.f32 %v3111, 1.0
      %v3517 = vadd.f32 %v3113, 1.0
      %v3518 = vadd.f32 %v3115, 1.0
      %v3519 = vadd.f32 %v3117, 1.0
      %v3520 = vadd.f32 %v3119, 1.0
      %v3521 = vadd.f32 %v3121, 1.0
      %v3522 = vadd.f32 %v3123, 1.0
      %v3523 = vadd.f32 %v3125, 1.0
      %v3524 = vadd.f32 %v3127, 1.0
      %v3525 = vadd.f32 %v3129, 1.0
      %v3526 = vadd.f32 %v3131, 1.0
      %v3527 = vadd.f32 %v3133, 1.0
      %v3528 = vadd.f32 %v3135, 1.0
      %v3529 = vadd.f32 %v3137, 1.0
      %v3530 = vadd.f32 %v3139, 1.0
      %v3531 = vadd.f32 %v3141, 1.0
      %v3532 = vadd.f32 %v3143, 1.0
      %v3533 = vadd.f32 %v3145, 1.0
      %v3534 = vadd.f32 %v3147, 1.0
      %v3535 = vadd.f32 %v3149, 1.0
      %v3536 = vadd.f32 %v3151, 1.0
      %v3537 = vadd.f32 %v3153, 1.0
      %v3538 = vadd.f32 %v3155, 1.0
      %v3539 = vadd.f32 %v3157, 1.0
      %v3540 = vadd.f32 %v3159, 1.0
      %v3541 = vadd.f32 %v3161, 1.0
      %v3542 = vadd.f32 %v3163, 1.0
      %v3543 = vadd.f32 %v3165, 1.0
      %v3544 = vadd.f32 %v3167, 1.0
      %v3545 = vadd.f32 %v3169, 1.0
      %v3546 = vadd.f32 %v3171, 1.0
      %v3547 = vadd.f32 %v3173, 1.0
      %v3548 = vadd.f32 %v3175, 1.0
      %v3549 = vadd.f32 %v3177, 1.0
      %v3550 = vadd.f32 %v3179, 1.0
      %v3551 = vadd.f32 %v3181, 1.0
      %v3552 = vadd.f32 %v3183, 1.0
      %v3553 = vadd.f32 %v3185, 1.0
      %v3554 = vadd.f32 %v3187, 1.0
      %v3555 = vadd.f32 %v3189, 1.0
      %v3556 = vadd.f32 %v3191, 1.0
      %v3557 = vadd.f32 %v3193, 1.0
      %v3558 = vadd.f32 %v3195, 1.0
      %v3559 = vadd.f32 %v3197, 1.0
      %v3560 = vadd.f32 %v3199, 1.0
      %v3561 = vadd.f32 %v3201, 1.0
      %v3562 = vadd.f32 %v3203, 1.0
      %v3563 = vadd.f32 %v3205, 1.0
      %v3564 = vadd.f32 %v3207, 1.0
      %v3565 = vadd.f32 %v3209, 1.0
      %v3566 = vadd.f32 %v3211, 1.0
      %v3567 = vadd.f32 %v3213, 1.0
      %v3568 = vadd.f32 %v3215, 1.0
      %v3569 = vadd.f32 %v3217, 1.0
      %v3570 = vadd.f32 %v3219, 1.0
      %v3571 = vadd.f32 %v3221, 1.0
      %v3572 = vadd.f32 %v3223, 1.0
      %v3573 = vadd.f32 %v3225, 1.0
      %v3574 = vadd.f32 %v3227, 1.0
      %v3575 = vadd.f32 %v3229, 1.0
      %v3576 = vadd.f32 %v3231, 1.0
      %v3577 = vadd.f32 %v3233, 1.0
      %v3578 = vadd.f32 %v3235, 1.0
      %v3579 = vadd.f32 %v3237, 1.0
      %v3580 = vadd.f32 %v3239, 1.0
      %v3581 = vadd.f32 %v3241, 1.0
      %v3582 = vadd.f32 %v3243, 1.0
      %v3583 = vadd.f32 %v3245, 1.0
      %v3584 = vadd.f32 %v3247, 1.0
      %v3585 = vadd.f32 %v3249, 1.0
      %v3586 = vadd.f32 %v3251, 1.0
      %v3587 = vadd.f32 %v3253, 1.0
      %v3588 = vadd.f32 %v3255, 1.0
      %v3589 = vadd.f32 %v3257, 1.0
      %v3590 = vadd.f32 %v3259, 1.0
      %v3591 = vadd.f32 %v3261, 1.0
      %v3592 = vadd.f32 %v3263, 1.0
      %v3593 = vadd.f32 %v3265, 1.0
      %v3594 = vadd.f32 %v3267, 1.0
      %v3595 = vadd.f32 %v3269, 1.0
      %v3596 = vadd.f32 %v3271, 1.0
      %v3597 = vadd.f32 %v3273, 1.0
      %v3598 = vadd.f32 %v3275, 1.0
      %v3599 = vadd.f32 %v3277, 1.0
      %v3600 = vadd.f32 %v3279, 1.0
      %v3601 = vadd.f32 %v3281, 1.0
      %v3602 = vrcp.pop %v3282
      %v3603 = vmul.f32 %v3282, %v3602
      %v3604 = vsub.f32 1.0, %v3603
      %v3605 = vmul.f32 %v3602, %v3604
      %v3606 = vadd.f32 %v3602, %v3605
      %vm3607 = vweird.f32 %v3282
      %vm3608 = vweird.f32 %v3602
      %vm3609 = vmor %vm3607, %vm3608
      %v3610 = vsel %vm3609, %v3602, %v3606
      %v3611 = vand.u32 2147483647, %v3282
      %vm3612 = vcmp.eq.f32.partialorder %v3611, 8.507059e+37
      %v3613 = vand.u32 %v3282, 2147483648
      %v3614 = vor.u32 1.1754944e-38, %v3613
      %v3615 = vsel %vm3612, %v3614, %v3610
      %v3616 = vmul.f32 1.0, %v3615
      %v3617 = vrcp.pop %v3283
      %v3618 = vmul.f32 %v3283, %v3617
      %v3619 = vsub.f32 1.0, %v3618
      %v3620 = vmul.f32 %v3617, %v3619
      %v3621 = vadd.f32 %v3617, %v3620
      %vm3622 = vweird.f32 %v3283
      %vm3623 = vweird.f32 %v3617
      %vm3624 = vmor %vm3622, %vm3623
      %v3625 = vsel %vm3624, %v3617, %v3621
      %v3626 = vand.u32 2147483647, %v3283
      %vm3627 = vcmp.eq.f32.partialorder %v3626, 8.507059e+37
      %v3628 = vand.u32 %v3283, 2147483648
      %v3629 = vor.u32 1.1754944e-38, %v3628
      %v3630 = vsel %vm3627, %v3629, %v3625
      %v3631 = vmul.f32 1.0, %v3630
      %v3632 = vrcp.pop %v3284
      %v3633 = vmul.f32 %v3284, %v3632
      %v3634 = vsub.f32 1.0, %v3633
      %v3635 = vmul.f32 %v3632, %v3634
      %v3636 = vadd.f32 %v3632, %v3635
      %vm3637 = vweird.f32 %v3284
      %vm3638 = vweird.f32 %v3632
      %vm3639 = vmor %vm3637, %vm3638
      %v3640 = vsel %vm3639, %v3632, %v3636
      %v3641 = vand.u32 2147483647, %v3284
      %vm3642 = vcmp.eq.f32.partialorder %v3641, 8.507059e+37
      %v3643 = vand.u32 %v3284, 2147483648
      %v3644 = vor.u32 1.1754944e-38, %v3643
      %v3645 = vsel %vm3642, %v3644, %v3640
      %v3646 = vmul.f32 1.0, %v3645
      %v3647 = vrcp.pop %v3285
      %v3648 = vmul.f32 %v3285, %v3647
      %v3649 = vsub.f32 1.0, %v3648
      %v3650 = vmul.f32 %v3647, %v3649
      %v3651 = vadd.f32 %v3647, %v3650
      %vm3652 = vweird.f32 %v3285
      %vm3653 = vweird.f32 %v3647
      %vm3654 = vmor %vm3652, %vm3653
      %v3655 = vsel %vm3654, %v3647, %v3651
      %v3656 = vand.u32 2147483647, %v3285
      %vm3657 = vcmp.eq.f32.partialorder %v3656, 8.507059e+37
      %v3658 = vand.u32 %v3285, 2147483648
      %v3659 = vor.u32 1.1754944e-38, %v3658
      %v3660 = vsel %vm3657, %v3659, %v3655
      %v3661 = vmul.f32 1.0, %v3660
      %v3662 = vrcp.pop %v3286
      %v3663 = vmul.f32 %v3286, %v3662
      %v3664 = vsub.f32 1.0, %v3663
      %v3665 = vmul.f32 %v3662, %v3664
      %v3666 = vadd.f32 %v3662, %v3665
      %vm3667 = vweird.f32 %v3286
      %vm3668 = vweird.f32 %v3662
      %vm3669 = vmor %vm3667, %vm3668
      %v3670 = vsel %vm3669, %v3662, %v3666
      %v3671 = vand.u32 2147483647, %v3286
      %vm3672 = vcmp.eq.f32.partialorder %v3671, 8.507059e+37
      %v3673 = vand.u32 %v3286, 2147483648
      %v3674 = vor.u32 1.1754944e-38, %v3673
      %v3675 = vsel %vm3672, %v3674, %v3670
      %v3676 = vmul.f32 1.0, %v3675
      %v3677 = vrcp.pop %v3287
      %v3678 = vmul.f32 %v3287, %v3677
      %v3679 = vsub.f32 1.0, %v3678
      %v3680 = vmul.f32 %v3677, %v3679
      %v3681 = vadd.f32 %v3677, %v3680
      %vm3682 = vweird.f32 %v3287
      %vm3683 = vweird.f32 %v3677
      %vm3684 = vmor %vm3682, %vm3683
      %v3685 = vsel %vm3684, %v3677, %v3681
      %v3686 = vand.u32 2147483647, %v3287
      %vm3687 = vcmp.eq.f32.partialorder %v3686, 8.507059e+37
      %v3688 = vand.u32 %v3287, 2147483648
      %v3689 = vor.u32 1.1754944e-38, %v3688
      %v3690 = vsel %vm3687, %v3689, %v3685
      %v3691 = vmul.f32 1.0, %v3690
      %v3692 = vrcp.pop %v3288
      %v3693 = vmul.f32 %v3288, %v3692
      %v3694 = vsub.f32 1.0, %v3693
      %v3695 = vmul.f32 %v3692, %v3694
      %v3696 = vadd.f32 %v3692, %v3695
      %vm3697 = vweird.f32 %v3288
      %vm3698 = vweird.f32 %v3692
      %vm3699 = vmor %vm3697, %vm3698
      %v3700 = vsel %vm3699, %v3692, %v3696
      %v3701 = vand.u32 2147483647, %v3288
      %vm3702 = vcmp.eq.f32.partialorder %v3701, 8.507059e+37
      %v3703 = vand.u32 %v3288, 2147483648
      %v3704 = vor.u32 1.1754944e-38, %v3703
      %v3705 = vsel %vm3702, %v3704, %v3700
      %v3706 = vmul.f32 1.0, %v3705
      %v3707 = vrcp.pop %v3289
      %v3708 = vmul.f32 %v3289, %v3707
      %v3709 = vsub.f32 1.0, %v3708
      %v3710 = vmul.f32 %v3707, %v3709
      %v3711 = vadd.f32 %v3707, %v3710
      %vm3712 = vweird.f32 %v3289
      %vm3713 = vweird.f32 %v3707
      %vm3714 = vmor %vm3712, %vm3713
      %v3715 = vsel %vm3714, %v3707, %v3711
      %v3716 = vand.u32 2147483647, %v3289
      %vm3717 = vcmp.eq.f32.partialorder %v3716, 8.507059e+37
      %v3718 = vand.u32 %v3289, 2147483648
      %v3719 = vor.u32 1.1754944e-38, %v3718
      %v3720 = vsel %vm3717, %v3719, %v3715
      %v3721 = vmul.f32 1.0, %v3720
      %v3722 = vrcp.pop %v3290
      %v3723 = vmul.f32 %v3290, %v3722
      %v3724 = vsub.f32 1.0, %v3723
      %v3725 = vmul.f32 %v3722, %v3724
      %v3726 = vadd.f32 %v3722, %v3725
      %vm3727 = vweird.f32 %v3290
      %vm3728 = vweird.f32 %v3722
      %vm3729 = vmor %vm3727, %vm3728
      %v3730 = vsel %vm3729, %v3722, %v3726
      %v3731 = vand.u32 2147483647, %v3290
      %vm3732 = vcmp.eq.f32.partialorder %v3731, 8.507059e+37
      %v3733 = vand.u32 %v3290, 2147483648
      %v3734 = vor.u32 1.1754944e-38, %v3733
      %v3735 = vsel %vm3732, %v3734, %v3730
      %v3736 = vmul.f32 1.0, %v3735
      %v3737 = vrcp.pop %v3291
      %v3738 = vmul.f32 %v3291, %v3737
      %v3739 = vsub.f32 1.0, %v3738
      %v3740 = vmul.f32 %v3737, %v3739
      %v3741 = vadd.f32 %v3737, %v3740
      %vm3742 = vweird.f32 %v3291
      %vm3743 = vweird.f32 %v3737
      %vm3744 = vmor %vm3742, %vm3743
      %v3745 = vsel %vm3744, %v3737, %v3741
      %v3746 = vand.u32 2147483647, %v3291
      %vm3747 = vcmp.eq.f32.partialorder %v3746, 8.507059e+37
      %v3748 = vand.u32 %v3291, 2147483648
      %v3749 = vor.u32 1.1754944e-38, %v3748
      %v3750 = vsel %vm3747, %v3749, %v3745
      %v3751 = vmul.f32 1.0, %v3750
      %v3752 = vrcp.pop %v3292
      %v3753 = vmul.f32 %v3292, %v3752
      %v3754 = vsub.f32 1.0, %v3753
      %v3755 = vmul.f32 %v3752, %v3754
      %v3756 = vadd.f32 %v3752, %v3755
      %vm3757 = vweird.f32 %v3292
      %vm3758 = vweird.f32 %v3752
      %vm3759 = vmor %vm3757, %vm3758
      %v3760 = vsel %vm3759, %v3752, %v3756
      %v3761 = vand.u32 2147483647, %v3292
      %vm3762 = vcmp.eq.f32.partialorder %v3761, 8.507059e+37
      %v3763 = vand.u32 %v3292, 2147483648
      %v3764 = vor.u32 1.1754944e-38, %v3763
      %v3765 = vsel %vm3762, %v3764, %v3760
      %v3766 = vmul.f32 1.0, %v3765
      %v3767 = vrcp.pop %v3293
      %v3768 = vmul.f32 %v3293, %v3767
      %v3769 = vsub.f32 1.0, %v3768
      %v3770 = vmul.f32 %v3767, %v3769
      %v3771 = vadd.f32 %v3767, %v3770
      %vm3772 = vweird.f32 %v3293
      %vm3773 = vweird.f32 %v3767
      %vm3774 = vmor %vm3772, %vm3773
      %v3775 = vsel %vm3774, %v3767, %v3771
      %v3776 = vand.u32 2147483647, %v3293
      %vm3777 = vcmp.eq.f32.partialorder %v3776, 8.507059e+37
      %v3778 = vand.u32 %v3293, 2147483648
      %v3779 = vor.u32 1.1754944e-38, %v3778
      %v3780 = vsel %vm3777, %v3779, %v3775
      %v3781 = vmul.f32 1.0, %v3780
      %v3782 = vrcp.pop %v3294
      %v3783 = vmul.f32 %v3294, %v3782
      %v3784 = vsub.f32 1.0, %v3783
      %v3785 = vmul.f32 %v3782, %v3784
      %v3786 = vadd.f32 %v3782, %v3785
      %vm3787 = vweird.f32 %v3294
      %vm3788 = vweird.f32 %v3782
      %vm3789 = vmor %vm3787, %vm3788
      %v3790 = vsel %vm3789, %v3782, %v3786
      %v3791 = vand.u32 2147483647, %v3294
      %vm3792 = vcmp.eq.f32.partialorder %v3791, 8.507059e+37
      %v3793 = vand.u32 %v3294, 2147483648
      %v3794 = vor.u32 1.1754944e-38, %v3793
      %v3795 = vsel %vm3792, %v3794, %v3790
      %v3796 = vmul.f32 1.0, %v3795
      %v3797 = vrcp.pop %v3295
      %v3798 = vmul.f32 %v3295, %v3797
      %v3799 = vsub.f32 1.0, %v3798
      %v3800 = vmul.f32 %v3797, %v3799
      %v3801 = vadd.f32 %v3797, %v3800
      %vm3802 = vweird.f32 %v3295
      %vm3803 = vweird.f32 %v3797
      %vm3804 = vmor %vm3802, %vm3803
      %v3805 = vsel %vm3804, %v3797, %v3801
      %v3806 = vand.u32 2147483647, %v3295
      %vm3807 = vcmp.eq.f32.partialorder %v3806, 8.507059e+37
      %v3808 = vand.u32 %v3295, 2147483648
      %v3809 = vor.u32 1.1754944e-38, %v3808
      %v3810 = vsel %vm3807, %v3809, %v3805
      %v3811 = vmul.f32 1.0, %v3810
      %v3812 = vrcp.pop %v3296
      %v3813 = vmul.f32 %v3296, %v3812
      %v3814 = vsub.f32 1.0, %v3813
      %v3815 = vmul.f32 %v3812, %v3814
      %v3816 = vadd.f32 %v3812, %v3815
      %vm3817 = vweird.f32 %v3296
      %vm3818 = vweird.f32 %v3812
      %vm3819 = vmor %vm3817, %vm3818
      %v3820 = vsel %vm3819, %v3812, %v3816
      %v3821 = vand.u32 2147483647, %v3296
      %vm3822 = vcmp.eq.f32.partialorder %v3821, 8.507059e+37
      %v3823 = vand.u32 %v3296, 2147483648
      %v3824 = vor.u32 1.1754944e-38, %v3823
      %v3825 = vsel %vm3822, %v3824, %v3820
      %v3826 = vmul.f32 1.0, %v3825
      %v3827 = vrcp.pop %v3297
      %v3828 = vmul.f32 %v3297, %v3827
      %v3829 = vsub.f32 1.0, %v3828
      %v3830 = vmul.f32 %v3827, %v3829
      %v3831 = vadd.f32 %v3827, %v3830
      %vm3832 = vweird.f32 %v3297
      %vm3833 = vweird.f32 %v3827
      %vm3834 = vmor %vm3832, %vm3833
      %v3835 = vsel %vm3834, %v3827, %v3831
      %v3836 = vand.u32 2147483647, %v3297
      %vm3837 = vcmp.eq.f32.partialorder %v3836, 8.507059e+37
      %v3838 = vand.u32 %v3297, 2147483648
      %v3839 = vor.u32 1.1754944e-38, %v3838
      %v3840 = vsel %vm3837, %v3839, %v3835
      %v3841 = vmul.f32 1.0, %v3840
      %v3842 = vrcp.pop %v3298
      %v3843 = vmul.f32 %v3298, %v3842
      %v3844 = vsub.f32 1.0, %v3843
      %v3845 = vmul.f32 %v3842, %v3844
      %v3846 = vadd.f32 %v3842, %v3845
      %vm3847 = vweird.f32 %v3298
      %vm3848 = vweird.f32 %v3842
      %vm3849 = vmor %vm3847, %vm3848
      %v3850 = vsel %vm3849, %v3842, %v3846
      %v3851 = vand.u32 2147483647, %v3298
      %vm3852 = vcmp.eq.f32.partialorder %v3851, 8.507059e+37
      %v3853 = vand.u32 %v3298, 2147483648
      %v3854 = vor.u32 1.1754944e-38, %v3853
      %v3855 = vsel %vm3852, %v3854, %v3850
      %v3856 = vmul.f32 1.0, %v3855
      %v3857 = vrcp.pop %v3299
      %v3858 = vmul.f32 %v3299, %v3857
      %v3859 = vsub.f32 1.0, %v3858
      %v3860 = vmul.f32 %v3857, %v3859
      %v3861 = vadd.f32 %v3857, %v3860
      %vm3862 = vweird.f32 %v3299
      %vm3863 = vweird.f32 %v3857
      %vm3864 = vmor %vm3862, %vm3863
      %v3865 = vsel %vm3864, %v3857, %v3861
      %v3866 = vand.u32 2147483647, %v3299
      %vm3867 = vcmp.eq.f32.partialorder %v3866, 8.507059e+37
      %v3868 = vand.u32 %v3299, 2147483648
      %v3869 = vor.u32 1.1754944e-38, %v3868
      %v3870 = vsel %vm3867, %v3869, %v3865
      %v3871 = vmul.f32 1.0, %v3870
      %v3872 = vrcp.pop %v3300
      %v3873 = vmul.f32 %v3300, %v3872
      %v3874 = vsub.f32 1.0, %v3873
      %v3875 = vmul.f32 %v3872, %v3874
      %v3876 = vadd.f32 %v3872, %v3875
      %vm3877 = vweird.f32 %v3300
      %vm3878 = vweird.f32 %v3872
      %vm3879 = vmor %vm3877, %vm3878
      %v3880 = vsel %vm3879, %v3872, %v3876
      %v3881 = vand.u32 2147483647, %v3300
      %vm3882 = vcmp.eq.f32.partialorder %v3881, 8.507059e+37
      %v3883 = vand.u32 %v3300, 2147483648
      %v3884 = vor.u32 1.1754944e-38, %v3883
      %v3885 = vsel %vm3882, %v3884, %v3880
      %v3886 = vmul.f32 1.0, %v3885
      %v3887 = vrcp.pop %v3301
      %v3888 = vmul.f32 %v3301, %v3887
      %v3889 = vsub.f32 1.0, %v3888
      %v3890 = vmul.f32 %v3887, %v3889
      %v3891 = vadd.f32 %v3887, %v3890
      %vm3892 = vweird.f32 %v3301
      %vm3893 = vweird.f32 %v3887
      %vm3894 = vmor %vm3892, %vm3893
      %v3895 = vsel %vm3894, %v3887, %v3891
      %v3896 = vand.u32 2147483647, %v3301
      %vm3897 = vcmp.eq.f32.partialorder %v3896, 8.507059e+37
      %v3898 = vand.u32 %v3301, 2147483648
      %v3899 = vor.u32 1.1754944e-38, %v3898
      %v3900 = vsel %vm3897, %v3899, %v3895
      %v3901 = vmul.f32 1.0, %v3900
      %v3902 = vrcp.pop %v3302
      %v3903 = vmul.f32 %v3302, %v3902
      %v3904 = vsub.f32 1.0, %v3903
      %v3905 = vmul.f32 %v3902, %v3904
      %v3906 = vadd.f32 %v3902, %v3905
      %vm3907 = vweird.f32 %v3302
      %vm3908 = vweird.f32 %v3902
      %vm3909 = vmor %vm3907, %vm3908
      %v3910 = vsel %vm3909, %v3902, %v3906
      %v3911 = vand.u32 2147483647, %v3302
      %vm3912 = vcmp.eq.f32.partialorder %v3911, 8.507059e+37
      %v3913 = vand.u32 %v3302, 2147483648
      %v3914 = vor.u32 1.1754944e-38, %v3913
      %v3915 = vsel %vm3912, %v3914, %v3910
      %v3916 = vmul.f32 1.0, %v3915
      %v3917 = vrcp.pop %v3303
      %v3918 = vmul.f32 %v3303, %v3917
      %v3919 = vsub.f32 1.0, %v3918
      %v3920 = vmul.f32 %v3917, %v3919
      %v3921 = vadd.f32 %v3917, %v3920
      %vm3922 = vweird.f32 %v3303
      %vm3923 = vweird.f32 %v3917
      %vm3924 = vmor %vm3922, %vm3923
      %v3925 = vsel %vm3924, %v3917, %v3921
      %v3926 = vand.u32 2147483647, %v3303
      %vm3927 = vcmp.eq.f32.partialorder %v3926, 8.507059e+37
      %v3928 = vand.u32 %v3303, 2147483648
      %v3929 = vor.u32 1.1754944e-38, %v3928
      %v3930 = vsel %vm3927, %v3929, %v3925
      %v3931 = vmul.f32 1.0, %v3930
      %v3932 = vrcp.pop %v3304
      %v3933 = vmul.f32 %v3304, %v3932
      %v3934 = vsub.f32 1.0, %v3933
      %v3935 = vmul.f32 %v3932, %v3934
      %v3936 = vadd.f32 %v3932, %v3935
      %vm3937 = vweird.f32 %v3304
      %vm3938 = vweird.f32 %v3932
      %vm3939 = vmor %vm3937, %vm3938
      %v3940 = vsel %vm3939, %v3932, %v3936
      %v3941 = vand.u32 2147483647, %v3304
      %vm3942 = vcmp.eq.f32.partialorder %v3941, 8.507059e+37
      %v3943 = vand.u32 %v3304, 2147483648
      %v3944 = vor.u32 1.1754944e-38, %v3943
      %v3945 = vsel %vm3942, %v3944, %v3940
      %v3946 = vmul.f32 1.0, %v3945
      %v3947 = vrcp.pop %v3305
      %v3948 = vmul.f32 %v3305, %v3947
      %v3949 = vsub.f32 1.0, %v3948
      %v3950 = vmul.f32 %v3947, %v3949
      %v3951 = vadd.f32 %v3947, %v3950
      %vm3952 = vweird.f32 %v3305
      %vm3953 = vweird.f32 %v3947
      %vm3954 = vmor %vm3952, %vm3953
      %v3955 = vsel %vm3954, %v3947, %v3951
      %v3956 = vand.u32 2147483647, %v3305
      %vm3957 = vcmp.eq.f32.partialorder %v3956, 8.507059e+37
      %v3958 = vand.u32 %v3305, 2147483648
      %v3959 = vor.u32 1.1754944e-38, %v3958
      %v3960 = vsel %vm3957, %v3959, %v3955
      %v3961 = vmul.f32 1.0, %v3960
      %v3962 = vrcp.pop %v3306
      %v3963 = vmul.f32 %v3306, %v3962
      %v3964 = vsub.f32 1.0, %v3963
      %v3965 = vmul.f32 %v3962, %v3964
      %v3966 = vadd.f32 %v3962, %v3965
      %vm3967 = vweird.f32 %v3306
      %vm3968 = vweird.f32 %v3962
      %vm3969 = vmor %vm3967, %vm3968
      %v3970 = vsel %vm3969, %v3962, %v3966
      %v3971 = vand.u32 2147483647, %v3306
      %vm3972 = vcmp.eq.f32.partialorder %v3971, 8.507059e+37
      %v3973 = vand.u32 %v3306, 2147483648
      %v3974 = vor.u32 1.1754944e-38, %v3973
      %v3975 = vsel %vm3972, %v3974, %v3970
      %v3976 = vmul.f32 1.0, %v3975
      %v3977 = vrcp.pop %v3307
      %v3978 = vmul.f32 %v3307, %v3977
      %v3979 = vsub.f32 1.0, %v3978
      %v3980 = vmul.f32 %v3977, %v3979
      %v3981 = vadd.f32 %v3977, %v3980
      %vm3982 = vweird.f32 %v3307
      %vm3983 = vweird.f32 %v3977
      %vm3984 = vmor %vm3982, %vm3983
      %v3985 = vsel %vm3984, %v3977, %v3981
      %v3986 = vand.u32 2147483647, %v3307
      %vm3987 = vcmp.eq.f32.partialorder %v3986, 8.507059e+37
      %v3988 = vand.u32 %v3307, 2147483648
      %v3989 = vor.u32 1.1754944e-38, %v3988
      %v3990 = vsel %vm3987, %v3989, %v3985
      %v3991 = vmul.f32 1.0, %v3990
      %v3992 = vrcp.pop %v3308
      %v3993 = vmul.f32 %v3308, %v3992
      %v3994 = vsub.f32 1.0, %v3993
      %v3995 = vmul.f32 %v3992, %v3994
      %v3996 = vadd.f32 %v3992, %v3995
      %vm3997 = vweird.f32 %v3308
      %vm3998 = vweird.f32 %v3992
      %vm3999 = vmor %vm3997, %vm3998
      %v4000 = vsel %vm3999, %v3992, %v3996
      %v4001 = vand.u32 2147483647, %v3308
      %vm4002 = vcmp.eq.f32.partialorder %v4001, 8.507059e+37
      %v4003 = vand.u32 %v3308, 2147483648
      %v4004 = vor.u32 1.1754944e-38, %v4003
      %v4005 = vsel %vm4002, %v4004, %v4000
      %v4006 = vmul.f32 1.0, %v4005
      %v4007 = vrcp.pop %v3309
      %v4008 = vmul.f32 %v3309, %v4007
      %v4009 = vsub.f32 1.0, %v4008
      %v4010 = vmul.f32 %v4007, %v4009
      %v4011 = vadd.f32 %v4007, %v4010
      %vm4012 = vweird.f32 %v3309
      %vm4013 = vweird.f32 %v4007
      %vm4014 = vmor %vm4012, %vm4013
      %v4015 = vsel %vm4014, %v4007, %v4011
      %v4016 = vand.u32 2147483647, %v3309
      %vm4017 = vcmp.eq.f32.partialorder %v4016, 8.507059e+37
      %v4018 = vand.u32 %v3309, 2147483648
      %v4019 = vor.u32 1.1754944e-38, %v4018
      %v4020 = vsel %vm4017, %v4019, %v4015
      %v4021 = vmul.f32 1.0, %v4020
      %v4022 = vrcp.pop %v3310
      %v4023 = vmul.f32 %v3310, %v4022
      %v4024 = vsub.f32 1.0, %v4023
      %v4025 = vmul.f32 %v4022, %v4024
      %v4026 = vadd.f32 %v4022, %v4025
      %vm4027 = vweird.f32 %v3310
      %vm4028 = vweird.f32 %v4022
      %vm4029 = vmor %vm4027, %vm4028
      %v4030 = vsel %vm4029, %v4022, %v4026
      %v4031 = vand.u32 2147483647, %v3310
      %vm4032 = vcmp.eq.f32.partialorder %v4031, 8.507059e+37
      %v4033 = vand.u32 %v3310, 2147483648
      %v4034 = vor.u32 1.1754944e-38, %v4033
      %v4035 = vsel %vm4032, %v4034, %v4030
      %v4036 = vmul.f32 1.0, %v4035
      %v4037 = vrcp.pop %v3311
      %v4038 = vmul.f32 %v3311, %v4037
      %v4039 = vsub.f32 1.0, %v4038
      %v4040 = vmul.f32 %v4037, %v4039
      %v4041 = vadd.f32 %v4037, %v4040
      %vm4042 = vweird.f32 %v3311
      %vm4043 = vweird.f32 %v4037
      %vm4044 = vmor %vm4042, %vm4043
      %v4045 = vsel %vm4044, %v4037, %v4041
      %v4046 = vand.u32 2147483647, %v3311
      %vm4047 = vcmp.eq.f32.partialorder %v4046, 8.507059e+37
      %v4048 = vand.u32 %v3311, 2147483648
      %v4049 = vor.u32 1.1754944e-38, %v4048
      %v4050 = vsel %vm4047, %v4049, %v4045
      %v4051 = vmul.f32 1.0, %v4050
      %v4052 = vrcp.pop %v3312
      %v4053 = vmul.f32 %v3312, %v4052
      %v4054 = vsub.f32 1.0, %v4053
      %v4055 = vmul.f32 %v4052, %v4054
      %v4056 = vadd.f32 %v4052, %v4055
      %vm4057 = vweird.f32 %v3312
      %vm4058 = vweird.f32 %v4052
      %vm4059 = vmor %vm4057, %vm4058
      %v4060 = vsel %vm4059, %v4052, %v4056
      %v4061 = vand.u32 2147483647, %v3312
      %vm4062 = vcmp.eq.f32.partialorder %v4061, 8.507059e+37
      %v4063 = vand.u32 %v3312, 2147483648
      %v4064 = vor.u32 1.1754944e-38, %v4063
      %v4065 = vsel %vm4062, %v4064, %v4060
      %v4066 = vmul.f32 1.0, %v4065
      %v4067 = vrcp.pop %v3313
      %v4068 = vmul.f32 %v3313, %v4067
      %v4069 = vsub.f32 1.0, %v4068
      %v4070 = vmul.f32 %v4067, %v4069
      %v4071 = vadd.f32 %v4067, %v4070
      %vm4072 = vweird.f32 %v3313
      %vm4073 = vweird.f32 %v4067
      %vm4074 = vmor %vm4072, %vm4073
      %v4075 = vsel %vm4074, %v4067, %v4071
      %v4076 = vand.u32 2147483647, %v3313
      %vm4077 = vcmp.eq.f32.partialorder %v4076, 8.507059e+37
      %v4078 = vand.u32 %v3313, 2147483648
      %v4079 = vor.u32 1.1754944e-38, %v4078
      %v4080 = vsel %vm4077, %v4079, %v4075
      %v4081 = vmul.f32 1.0, %v4080
      %v4082 = vrcp.pop %v3314
      %v4083 = vmul.f32 %v3314, %v4082
      %v4084 = vsub.f32 1.0, %v4083
      %v4085 = vmul.f32 %v4082, %v4084
      %v4086 = vadd.f32 %v4082, %v4085
      %vm4087 = vweird.f32 %v3314
      %vm4088 = vweird.f32 %v4082
      %vm4089 = vmor %vm4087, %vm4088
      %v4090 = vsel %vm4089, %v4082, %v4086
      %v4091 = vand.u32 2147483647, %v3314
      %vm4092 = vcmp.eq.f32.partialorder %v4091, 8.507059e+37
      %v4093 = vand.u32 %v3314, 2147483648
      %v4094 = vor.u32 1.1754944e-38, %v4093
      %v4095 = vsel %vm4092, %v4094, %v4090
      %v4096 = vmul.f32 1.0, %v4095
      %v4097 = vrcp.pop %v3315
      %v4098 = vmul.f32 %v3315, %v4097
      %v4099 = vsub.f32 1.0, %v4098
      %v4100 = vmul.f32 %v4097, %v4099
      %v4101 = vadd.f32 %v4097, %v4100
      %vm4102 = vweird.f32 %v3315
      %vm4103 = vweird.f32 %v4097
      %vm4104 = vmor %vm4102, %vm4103
      %v4105 = vsel %vm4104, %v4097, %v4101
      %v4106 = vand.u32 2147483647, %v3315
      %vm4107 = vcmp.eq.f32.partialorder %v4106, 8.507059e+37
      %v4108 = vand.u32 %v3315, 2147483648
      %v4109 = vor.u32 1.1754944e-38, %v4108
      %v4110 = vsel %vm4107, %v4109, %v4105
      %v4111 = vmul.f32 1.0, %v4110
      %v4112 = vrcp.pop %v3316
      %v4113 = vmul.f32 %v3316, %v4112
      %v4114 = vsub.f32 1.0, %v4113
      %v4115 = vmul.f32 %v4112, %v4114
      %v4116 = vadd.f32 %v4112, %v4115
      %vm4117 = vweird.f32 %v3316
      %vm4118 = vweird.f32 %v4112
      %vm4119 = vmor %vm4117, %vm4118
      %v4120 = vsel %vm4119, %v4112, %v4116
      %v4121 = vand.u32 2147483647, %v3316
      %vm4122 = vcmp.eq.f32.partialorder %v4121, 8.507059e+37
      %v4123 = vand.u32 %v3316, 2147483648
      %v4124 = vor.u32 1.1754944e-38, %v4123
      %v4125 = vsel %vm4122, %v4124, %v4120
      %v4126 = vmul.f32 1.0, %v4125
      %v4127 = vrcp.pop %v3317
      %v4128 = vmul.f32 %v3317, %v4127
      %v4129 = vsub.f32 1.0, %v4128
      %v4130 = vmul.f32 %v4127, %v4129
      %v4131 = vadd.f32 %v4127, %v4130
      %vm4132 = vweird.f32 %v3317
      %vm4133 = vweird.f32 %v4127
      %vm4134 = vmor %vm4132, %vm4133
      %v4135 = vsel %vm4134, %v4127, %v4131
      %v4136 = vand.u32 2147483647, %v3317
      %vm4137 = vcmp.eq.f32.partialorder %v4136, 8.507059e+37
      %v4138 = vand.u32 %v3317, 2147483648
      %v4139 = vor.u32 1.1754944e-38, %v4138
      %v4140 = vsel %vm4137, %v4139, %v4135
      %v4141 = vmul.f32 1.0, %v4140
      %v4142 = vrcp.pop %v3318
      %v4143 = vmul.f32 %v3318, %v4142
      %v4144 = vsub.f32 1.0, %v4143
      %v4145 = vmul.f32 %v4142, %v4144
      %v4146 = vadd.f32 %v4142, %v4145
      %vm4147 = vweird.f32 %v3318
      %vm4148 = vweird.f32 %v4142
      %vm4149 = vmor %vm4147, %vm4148
      %v4150 = vsel %vm4149, %v4142, %v4146
      %v4151 = vand.u32 2147483647, %v3318
      %vm4152 = vcmp.eq.f32.partialorder %v4151, 8.507059e+37
      %v4153 = vand.u32 %v3318, 2147483648
      %v4154 = vor.u32 1.1754944e-38, %v4153
      %v4155 = vsel %vm4152, %v4154, %v4150
      %v4156 = vmul.f32 1.0, %v4155
      %v4157 = vrcp.pop %v3319
      %v4158 = vmul.f32 %v3319, %v4157
      %v4159 = vsub.f32 1.0, %v4158
      %v4160 = vmul.f32 %v4157, %v4159
      %v4161 = vadd.f32 %v4157, %v4160
      %vm4162 = vweird.f32 %v3319
      %vm4163 = vweird.f32 %v4157
      %vm4164 = vmor %vm4162, %vm4163
      %v4165 = vsel %vm4164, %v4157, %v4161
      %v4166 = vand.u32 2147483647, %v3319
      %vm4167 = vcmp.eq.f32.partialorder %v4166, 8.507059e+37
      %v4168 = vand.u32 %v3319, 2147483648
      %v4169 = vor.u32 1.1754944e-38, %v4168
      %v4170 = vsel %vm4167, %v4169, %v4165
      %v4171 = vmul.f32 1.0, %v4170
      %v4172 = vrcp.pop %v3320
      %v4173 = vmul.f32 %v3320, %v4172
      %v4174 = vsub.f32 1.0, %v4173
      %v4175 = vmul.f32 %v4172, %v4174
      %v4176 = vadd.f32 %v4172, %v4175
      %vm4177 = vweird.f32 %v3320
      %vm4178 = vweird.f32 %v4172
      %vm4179 = vmor %vm4177, %vm4178
      %v4180 = vsel %vm4179, %v4172, %v4176
      %v4181 = vand.u32 2147483647, %v3320
      %vm4182 = vcmp.eq.f32.partialorder %v4181, 8.507059e+37
      %v4183 = vand.u32 %v3320, 2147483648
      %v4184 = vor.u32 1.1754944e-38, %v4183
      %v4185 = vsel %vm4182, %v4184, %v4180
      %v4186 = vmul.f32 1.0, %v4185
      %v4187 = vrcp.pop %v3321
      %v4188 = vmul.f32 %v3321, %v4187
      %v4189 = vsub.f32 1.0, %v4188
      %v4190 = vmul.f32 %v4187, %v4189
      %v4191 = vadd.f32 %v4187, %v4190
      %vm4192 = vweird.f32 %v3321
      %vm4193 = vweird.f32 %v4187
      %vm4194 = vmor %vm4192, %vm4193
      %v4195 = vsel %vm4194, %v4187, %v4191
      %v4196 = vand.u32 2147483647, %v3321
      %vm4197 = vcmp.eq.f32.partialorder %v4196, 8.507059e+37
      %v4198 = vand.u32 %v3321, 2147483648
      %v4199 = vor.u32 1.1754944e-38, %v4198
      %v4200 = vsel %vm4197, %v4199, %v4195
      %v4201 = vmul.f32 1.0, %v4200
      %v4202 = vrcp.pop %v3322
      %v4203 = vmul.f32 %v3322, %v4202
      %v4204 = vsub.f32 1.0, %v4203
      %v4205 = vmul.f32 %v4202, %v4204
      %v4206 = vadd.f32 %v4202, %v4205
      %vm4207 = vweird.f32 %v3322
      %vm4208 = vweird.f32 %v4202
      %vm4209 = vmor %vm4207, %vm4208
      %v4210 = vsel %vm4209, %v4202, %v4206
      %v4211 = vand.u32 2147483647, %v3322
      %vm4212 = vcmp.eq.f32.partialorder %v4211, 8.507059e+37
      %v4213 = vand.u32 %v3322, 2147483648
      %v4214 = vor.u32 1.1754944e-38, %v4213
      %v4215 = vsel %vm4212, %v4214, %v4210
      %v4216 = vmul.f32 1.0, %v4215
      %v4217 = vrcp.pop %v3323
      %v4218 = vmul.f32 %v3323, %v4217
      %v4219 = vsub.f32 1.0, %v4218
      %v4220 = vmul.f32 %v4217, %v4219
      %v4221 = vadd.f32 %v4217, %v4220
      %vm4222 = vweird.f32 %v3323
      %vm4223 = vweird.f32 %v4217
      %vm4224 = vmor %vm4222, %vm4223
      %v4225 = vsel %vm4224, %v4217, %v4221
      %v4226 = vand.u32 2147483647, %v3323
      %vm4227 = vcmp.eq.f32.partialorder %v4226, 8.507059e+37
      %v4228 = vand.u32 %v3323, 2147483648
      %v4229 = vor.u32 1.1754944e-38, %v4228
      %v4230 = vsel %vm4227, %v4229, %v4225
      %v4231 = vmul.f32 1.0, %v4230
      %v4232 = vrcp.pop %v3324
      %v4233 = vmul.f32 %v3324, %v4232
      %v4234 = vsub.f32 1.0, %v4233
      %v4235 = vmul.f32 %v4232, %v4234
      %v4236 = vadd.f32 %v4232, %v4235
      %vm4237 = vweird.f32 %v3324
      %vm4238 = vweird.f32 %v4232
      %vm4239 = vmor %vm4237, %vm4238
      %v4240 = vsel %vm4239, %v4232, %v4236
      %v4241 = vand.u32 2147483647, %v3324
      %vm4242 = vcmp.eq.f32.partialorder %v4241, 8.507059e+37
      %v4243 = vand.u32 %v3324, 2147483648
      %v4244 = vor.u32 1.1754944e-38, %v4243
      %v4245 = vsel %vm4242, %v4244, %v4240
      %v4246 = vmul.f32 1.0, %v4245
      %v4247 = vrcp.pop %v3325
      %v4248 = vmul.f32 %v3325, %v4247
      %v4249 = vsub.f32 1.0, %v4248
      %v4250 = vmul.f32 %v4247, %v4249
      %v4251 = vadd.f32 %v4247, %v4250
      %vm4252 = vweird.f32 %v3325
      %vm4253 = vweird.f32 %v4247
      %vm4254 = vmor %vm4252, %vm4253
      %v4255 = vsel %vm4254, %v4247, %v4251
      %v4256 = vand.u32 2147483647, %v3325
      %vm4257 = vcmp.eq.f32.partialorder %v4256, 8.507059e+37
      %v4258 = vand.u32 %v3325, 2147483648
      %v4259 = vor.u32 1.1754944e-38, %v4258
      %v4260 = vsel %vm4257, %v4259, %v4255
      %v4261 = vmul.f32 1.0, %v4260
      %v4262 = vrcp.pop %v3326
      %v4263 = vmul.f32 %v3326, %v4262
      %v4264 = vsub.f32 1.0, %v4263
      %v4265 = vmul.f32 %v4262, %v4264
      %v4266 = vadd.f32 %v4262, %v4265
      %vm4267 = vweird.f32 %v3326
      %vm4268 = vweird.f32 %v4262
      %vm4269 = vmor %vm4267, %vm4268
      %v4270 = vsel %vm4269, %v4262, %v4266
      %v4271 = vand.u32 2147483647, %v3326
      %vm4272 = vcmp.eq.f32.partialorder %v4271, 8.507059e+37
      %v4273 = vand.u32 %v3326, 2147483648
      %v4274 = vor.u32 1.1754944e-38, %v4273
      %v4275 = vsel %vm4272, %v4274, %v4270
      %v4276 = vmul.f32 1.0, %v4275
      %v4277 = vrcp.pop %v3327
      %v4278 = vmul.f32 %v3327, %v4277
      %v4279 = vsub.f32 1.0, %v4278
      %v4280 = vmul.f32 %v4277, %v4279
      %v4281 = vadd.f32 %v4277, %v4280
      %vm4282 = vweird.f32 %v3327
      %vm4283 = vweird.f32 %v4277
      %vm4284 = vmor %vm4282, %vm4283
      %v4285 = vsel %vm4284, %v4277, %v4281
      %v4286 = vand.u32 2147483647, %v3327
      %vm4287 = vcmp.eq.f32.partialorder %v4286, 8.507059e+37
      %v4288 = vand.u32 %v3327, 2147483648
      %v4289 = vor.u32 1.1754944e-38, %v4288
      %v4290 = vsel %vm4287, %v4289, %v4285
      %v4291 = vmul.f32 1.0, %v4290
      %v4292 = vrcp.pop %v3328
      %v4293 = vmul.f32 %v3328, %v4292
      %v4294 = vsub.f32 1.0, %v4293
      %v4295 = vmul.f32 %v4292, %v4294
      %v4296 = vadd.f32 %v4292, %v4295
      %vm4297 = vweird.f32 %v3328
      %vm4298 = vweird.f32 %v4292
      %vm4299 = vmor %vm4297, %vm4298
      %v4300 = vsel %vm4299, %v4292, %v4296
      %v4301 = vand.u32 2147483647, %v3328
      %vm4302 = vcmp.eq.f32.partialorder %v4301, 8.507059e+37
      %v4303 = vand.u32 %v3328, 2147483648
      %v4304 = vor.u32 1.1754944e-38, %v4303
      %v4305 = vsel %vm4302, %v4304, %v4300
      %v4306 = vmul.f32 1.0, %v4305
      %v4307 = vrcp.pop %v3329
      %v4308 = vmul.f32 %v3329, %v4307
      %v4309 = vsub.f32 1.0, %v4308
      %v4310 = vmul.f32 %v4307, %v4309
      %v4311 = vadd.f32 %v4307, %v4310
      %vm4312 = vweird.f32 %v3329
      %vm4313 = vweird.f32 %v4307
      %vm4314 = vmor %vm4312, %vm4313
      %v4315 = vsel %vm4314, %v4307, %v4311
      %v4316 = vand.u32 2147483647, %v3329
      %vm4317 = vcmp.eq.f32.partialorder %v4316, 8.507059e+37
      %v4318 = vand.u32 %v3329, 2147483648
      %v4319 = vor.u32 1.1754944e-38, %v4318
      %v4320 = vsel %vm4317, %v4319, %v4315
      %v4321 = vmul.f32 1.0, %v4320
      %v4322 = vrcp.pop %v3330
      %v4323 = vmul.f32 %v3330, %v4322
      %v4324 = vsub.f32 1.0, %v4323
      %v4325 = vmul.f32 %v4322, %v4324
      %v4326 = vadd.f32 %v4322, %v4325
      %vm4327 = vweird.f32 %v3330
      %vm4328 = vweird.f32 %v4322
      %vm4329 = vmor %vm4327, %vm4328
      %v4330 = vsel %vm4329, %v4322, %v4326
      %v4331 = vand.u32 2147483647, %v3330
      %vm4332 = vcmp.eq.f32.partialorder %v4331, 8.507059e+37
      %v4333 = vand.u32 %v3330, 2147483648
      %v4334 = vor.u32 1.1754944e-38, %v4333
      %v4335 = vsel %vm4332, %v4334, %v4330
      %v4336 = vmul.f32 1.0, %v4335
      %v4337 = vrcp.pop %v3331
      %v4338 = vmul.f32 %v3331, %v4337
      %v4339 = vsub.f32 1.0, %v4338
      %v4340 = vmul.f32 %v4337, %v4339
      %v4341 = vadd.f32 %v4337, %v4340
      %vm4342 = vweird.f32 %v3331
      %vm4343 = vweird.f32 %v4337
      %vm4344 = vmor %vm4342, %vm4343
      %v4345 = vsel %vm4344, %v4337, %v4341
      %v4346 = vand.u32 2147483647, %v3331
      %vm4347 = vcmp.eq.f32.partialorder %v4346, 8.507059e+37
      %v4348 = vand.u32 %v3331, 2147483648
      %v4349 = vor.u32 1.1754944e-38, %v4348
      %v4350 = vsel %vm4347, %v4349, %v4345
      %v4351 = vmul.f32 1.0, %v4350
      %v4352 = vrcp.pop %v3332
      %v4353 = vmul.f32 %v3332, %v4352
      %v4354 = vsub.f32 1.0, %v4353
      %v4355 = vmul.f32 %v4352, %v4354
      %v4356 = vadd.f32 %v4352, %v4355
      %vm4357 = vweird.f32 %v3332
      %vm4358 = vweird.f32 %v4352
      %vm4359 = vmor %vm4357, %vm4358
      %v4360 = vsel %vm4359, %v4352, %v4356
      %v4361 = vand.u32 2147483647, %v3332
      %vm4362 = vcmp.eq.f32.partialorder %v4361, 8.507059e+37
      %v4363 = vand.u32 %v3332, 2147483648
      %v4364 = vor.u32 1.1754944e-38, %v4363
      %v4365 = vsel %vm4362, %v4364, %v4360
      %v4366 = vmul.f32 1.0, %v4365
      %v4367 = vrcp.pop %v3333
      %v4368 = vmul.f32 %v3333, %v4367
      %v4369 = vsub.f32 1.0, %v4368
      %v4370 = vmul.f32 %v4367, %v4369
      %v4371 = vadd.f32 %v4367, %v4370
      %vm4372 = vweird.f32 %v3333
      %vm4373 = vweird.f32 %v4367
      %vm4374 = vmor %vm4372, %vm4373
      %v4375 = vsel %vm4374, %v4367, %v4371
      %v4376 = vand.u32 2147483647, %v3333
      %vm4377 = vcmp.eq.f32.partialorder %v4376, 8.507059e+37
      %v4378 = vand.u32 %v3333, 2147483648
      %v4379 = vor.u32 1.1754944e-38, %v4378
      %v4380 = vsel %vm4377, %v4379, %v4375
      %v4381 = vmul.f32 1.0, %v4380
      %v4382 = vrcp.pop %v3334
      %v4383 = vmul.f32 %v3334, %v4382
      %v4384 = vsub.f32 1.0, %v4383
      %v4385 = vmul.f32 %v4382, %v4384
      %v4386 = vadd.f32 %v4382, %v4385
      %vm4387 = vweird.f32 %v3334
      %vm4388 = vweird.f32 %v4382
      %vm4389 = vmor %vm4387, %vm4388
      %v4390 = vsel %vm4389, %v4382, %v4386
      %v4391 = vand.u32 2147483647, %v3334
      %vm4392 = vcmp.eq.f32.partialorder %v4391, 8.507059e+37
      %v4393 = vand.u32 %v3334, 2147483648
      %v4394 = vor.u32 1.1754944e-38, %v4393
      %v4395 = vsel %vm4392, %v4394, %v4390
      %v4396 = vmul.f32 1.0, %v4395
      %v4397 = vrcp.pop %v3335
      %v4398 = vmul.f32 %v3335, %v4397
      %v4399 = vsub.f32 1.0, %v4398
      %v4400 = vmul.f32 %v4397, %v4399
      %v4401 = vadd.f32 %v4397, %v4400
      %vm4402 = vweird.f32 %v3335
      %vm4403 = vweird.f32 %v4397
      %vm4404 = vmor %vm4402, %vm4403
      %v4405 = vsel %vm4404, %v4397, %v4401
      %v4406 = vand.u32 2147483647, %v3335
      %vm4407 = vcmp.eq.f32.partialorder %v4406, 8.507059e+37
      %v4408 = vand.u32 %v3335, 2147483648
      %v4409 = vor.u32 1.1754944e-38, %v4408
      %v4410 = vsel %vm4407, %v4409, %v4405
      %v4411 = vmul.f32 1.0, %v4410
      %v4412 = vrcp.pop %v3336
      %v4413 = vmul.f32 %v3336, %v4412
      %v4414 = vsub.f32 1.0, %v4413
      %v4415 = vmul.f32 %v4412, %v4414
      %v4416 = vadd.f32 %v4412, %v4415
      %vm4417 = vweird.f32 %v3336
      %vm4418 = vweird.f32 %v4412
      %vm4419 = vmor %vm4417, %vm4418
      %v4420 = vsel %vm4419, %v4412, %v4416
      %v4421 = vand.u32 2147483647, %v3336
      %vm4422 = vcmp.eq.f32.partialorder %v4421, 8.507059e+37
      %v4423 = vand.u32 %v3336, 2147483648
      %v4424 = vor.u32 1.1754944e-38, %v4423
      %v4425 = vsel %vm4422, %v4424, %v4420
      %v4426 = vmul.f32 1.0, %v4425
      %v4427 = vrcp.pop %v3337
      %v4428 = vmul.f32 %v3337, %v4427
      %v4429 = vsub.f32 1.0, %v4428
      %v4430 = vmul.f32 %v4427, %v4429
      %v4431 = vadd.f32 %v4427, %v4430
      %vm4432 = vweird.f32 %v3337
      %vm4433 = vweird.f32 %v4427
      %vm4434 = vmor %vm4432, %vm4433
      %v4435 = vsel %vm4434, %v4427, %v4431
      %v4436 = vand.u32 2147483647, %v3337
      %vm4437 = vcmp.eq.f32.partialorder %v4436, 8.507059e+37
      %v4438 = vand.u32 %v3337, 2147483648
      %v4439 = vor.u32 1.1754944e-38, %v4438
      %v4440 = vsel %vm4437, %v4439, %v4435
      %v4441 = vmul.f32 1.0, %v4440
      %v4442 = vrcp.pop %v3338
      %v4443 = vmul.f32 %v3338, %v4442
      %v4444 = vsub.f32 1.0, %v4443
      %v4445 = vmul.f32 %v4442, %v4444
      %v4446 = vadd.f32 %v4442, %v4445
      %vm4447 = vweird.f32 %v3338
      %vm4448 = vweird.f32 %v4442
      %vm4449 = vmor %vm4447, %vm4448
      %v4450 = vsel %vm4449, %v4442, %v4446
      %v4451 = vand.u32 2147483647, %v3338
      %vm4452 = vcmp.eq.f32.partialorder %v4451, 8.507059e+37
      %v4453 = vand.u32 %v3338, 2147483648
      %v4454 = vor.u32 1.1754944e-38, %v4453
      %v4455 = vsel %vm4452, %v4454, %v4450
      %v4456 = vmul.f32 1.0, %v4455
      %v4457 = vrcp.pop %v3339
      %v4458 = vmul.f32 %v3339, %v4457
      %v4459 = vsub.f32 1.0, %v4458
      %v4460 = vmul.f32 %v4457, %v4459
      %v4461 = vadd.f32 %v4457, %v4460
      %vm4462 = vweird.f32 %v3339
      %vm4463 = vweird.f32 %v4457
      %vm4464 = vmor %vm4462, %vm4463
      %v4465 = vsel %vm4464, %v4457, %v4461
      %v4466 = vand.u32 2147483647, %v3339
      %vm4467 = vcmp.eq.f32.partialorder %v4466, 8.507059e+37
      %v4468 = vand.u32 %v3339, 2147483648
      %v4469 = vor.u32 1.1754944e-38, %v4468
      %v4470 = vsel %vm4467, %v4469, %v4465
      %v4471 = vmul.f32 1.0, %v4470
      %v4472 = vrcp.pop %v3340
      %v4473 = vmul.f32 %v3340, %v4472
      %v4474 = vsub.f32 1.0, %v4473
      %v4475 = vmul.f32 %v4472, %v4474
      %v4476 = vadd.f32 %v4472, %v4475
      %vm4477 = vweird.f32 %v3340
      %vm4478 = vweird.f32 %v4472
      %vm4479 = vmor %vm4477, %vm4478
      %v4480 = vsel %vm4479, %v4472, %v4476
      %v4481 = vand.u32 2147483647, %v3340
      %vm4482 = vcmp.eq.f32.partialorder %v4481, 8.507059e+37
      %v4483 = vand.u32 %v3340, 2147483648
      %v4484 = vor.u32 1.1754944e-38, %v4483
      %v4485 = vsel %vm4482, %v4484, %v4480
      %v4486 = vmul.f32 1.0, %v4485
      %v4487 = vrcp.pop %v3341
      %v4488 = vmul.f32 %v3341, %v4487
      %v4489 = vsub.f32 1.0, %v4488
      %v4490 = vmul.f32 %v4487, %v4489
      %v4491 = vadd.f32 %v4487, %v4490
      %vm4492 = vweird.f32 %v3341
      %vm4493 = vweird.f32 %v4487
      %vm4494 = vmor %vm4492, %vm4493
      %v4495 = vsel %vm4494, %v4487, %v4491
      %v4496 = vand.u32 2147483647, %v3341
      %vm4497 = vcmp.eq.f32.partialorder %v4496, 8.507059e+37
      %v4498 = vand.u32 %v3341, 2147483648
      %v4499 = vor.u32 1.1754944e-38, %v4498
      %v4500 = vsel %vm4497, %v4499, %v4495
      %v4501 = vmul.f32 1.0, %v4500
      %v4502 = vrcp.pop %v3342
      %v4503 = vmul.f32 %v3342, %v4502
      %v4504 = vsub.f32 1.0, %v4503
      %v4505 = vmul.f32 %v4502, %v4504
      %v4506 = vadd.f32 %v4502, %v4505
      %vm4507 = vweird.f32 %v3342
      %vm4508 = vweird.f32 %v4502
      %vm4509 = vmor %vm4507, %vm4508
      %v4510 = vsel %vm4509, %v4502, %v4506
      %v4511 = vand.u32 2147483647, %v3342
      %vm4512 = vcmp.eq.f32.partialorder %v4511, 8.507059e+37
      %v4513 = vand.u32 %v3342, 2147483648
      %v4514 = vor.u32 1.1754944e-38, %v4513
      %v4515 = vsel %vm4512, %v4514, %v4510
      %v4516 = vmul.f32 1.0, %v4515
      %v4517 = vrcp.pop %v3343
      %v4518 = vmul.f32 %v3343, %v4517
      %v4519 = vsub.f32 1.0, %v4518
      %v4520 = vmul.f32 %v4517, %v4519
      %v4521 = vadd.f32 %v4517, %v4520
      %vm4522 = vweird.f32 %v3343
      %vm4523 = vweird.f32 %v4517
      %vm4524 = vmor %vm4522, %vm4523
      %v4525 = vsel %vm4524, %v4517, %v4521
      %v4526 = vand.u32 2147483647, %v3343
      %vm4527 = vcmp.eq.f32.partialorder %v4526, 8.507059e+37
      %v4528 = vand.u32 %v3343, 2147483648
      %v4529 = vor.u32 1.1754944e-38, %v4528
      %v4530 = vsel %vm4527, %v4529, %v4525
      %v4531 = vmul.f32 1.0, %v4530
      %v4532 = vrcp.pop %v3344
      %v4533 = vmul.f32 %v3344, %v4532
      %v4534 = vsub.f32 1.0, %v4533
      %v4535 = vmul.f32 %v4532, %v4534
      %v4536 = vadd.f32 %v4532, %v4535
      %vm4537 = vweird.f32 %v3344
      %vm4538 = vweird.f32 %v4532
      %vm4539 = vmor %vm4537, %vm4538
      %v4540 = vsel %vm4539, %v4532, %v4536
      %v4541 = vand.u32 2147483647, %v3344
      %vm4542 = vcmp.eq.f32.partialorder %v4541, 8.507059e+37
      %v4543 = vand.u32 %v3344, 2147483648
      %v4544 = vor.u32 1.1754944e-38, %v4543
      %v4545 = vsel %vm4542, %v4544, %v4540
      %v4546 = vmul.f32 1.0, %v4545
      %v4547 = vrcp.pop %v3345
      %v4548 = vmul.f32 %v3345, %v4547
      %v4549 = vsub.f32 1.0, %v4548
      %v4550 = vmul.f32 %v4547, %v4549
      %v4551 = vadd.f32 %v4547, %v4550
      %vm4552 = vweird.f32 %v3345
      %vm4553 = vweird.f32 %v4547
      %vm4554 = vmor %vm4552, %vm4553
      %v4555 = vsel %vm4554, %v4547, %v4551
      %v4556 = vand.u32 2147483647, %v3345
      %vm4557 = vcmp.eq.f32.partialorder %v4556, 8.507059e+37
      %v4558 = vand.u32 %v3345, 2147483648
      %v4559 = vor.u32 1.1754944e-38, %v4558
      %v4560 = vsel %vm4557, %v4559, %v4555
      %v4561 = vmul.f32 1.0, %v4560
      %v4562 = vrcp.pop %v3346
      %v4563 = vmul.f32 %v3346, %v4562
      %v4564 = vsub.f32 1.0, %v4563
      %v4565 = vmul.f32 %v4562, %v4564
      %v4566 = vadd.f32 %v4562, %v4565
      %vm4567 = vweird.f32 %v3346
      %vm4568 = vweird.f32 %v4562
      %vm4569 = vmor %vm4567, %vm4568
      %v4570 = vsel %vm4569, %v4562, %v4566
      %v4571 = vand.u32 2147483647, %v3346
      %vm4572 = vcmp.eq.f32.partialorder %v4571, 8.507059e+37
      %v4573 = vand.u32 %v3346, 2147483648
      %v4574 = vor.u32 1.1754944e-38, %v4573
      %v4575 = vsel %vm4572, %v4574, %v4570
      %v4576 = vmul.f32 1.0, %v4575
      %v4577 = vrcp.pop %v3347
      %v4578 = vmul.f32 %v3347, %v4577
      %v4579 = vsub.f32 1.0, %v4578
      %v4580 = vmul.f32 %v4577, %v4579
      %v4581 = vadd.f32 %v4577, %v4580
      %vm4582 = vweird.f32 %v3347
      %vm4583 = vweird.f32 %v4577
      %vm4584 = vmor %vm4582, %vm4583
      %v4585 = vsel %vm4584, %v4577, %v4581
      %v4586 = vand.u32 2147483647, %v3347
      %vm4587 = vcmp.eq.f32.partialorder %v4586, 8.507059e+37
      %v4588 = vand.u32 %v3347, 2147483648
      %v4589 = vor.u32 1.1754944e-38, %v4588
      %v4590 = vsel %vm4587, %v4589, %v4585
      %v4591 = vmul.f32 1.0, %v4590
      %v4592 = vrcp.pop %v3348
      %v4593 = vmul.f32 %v3348, %v4592
      %v4594 = vsub.f32 1.0, %v4593
      %v4595 = vmul.f32 %v4592, %v4594
      %v4596 = vadd.f32 %v4592, %v4595
      %vm4597 = vweird.f32 %v3348
      %vm4598 = vweird.f32 %v4592
      %vm4599 = vmor %vm4597, %vm4598
      %v4600 = vsel %vm4599, %v4592, %v4596
      %v4601 = vand.u32 2147483647, %v3348
      %vm4602 = vcmp.eq.f32.partialorder %v4601, 8.507059e+37
      %v4603 = vand.u32 %v3348, 2147483648
      %v4604 = vor.u32 1.1754944e-38, %v4603
      %v4605 = vsel %vm4602, %v4604, %v4600
      %v4606 = vmul.f32 1.0, %v4605
      %v4607 = vrcp.pop %v3349
      %v4608 = vmul.f32 %v3349, %v4607
      %v4609 = vsub.f32 1.0, %v4608
      %v4610 = vmul.f32 %v4607, %v4609
      %v4611 = vadd.f32 %v4607, %v4610
      %vm4612 = vweird.f32 %v3349
      %vm4613 = vweird.f32 %v4607
      %vm4614 = vmor %vm4612, %vm4613
      %v4615 = vsel %vm4614, %v4607, %v4611
      %v4616 = vand.u32 2147483647, %v3349
      %vm4617 = vcmp.eq.f32.partialorder %v4616, 8.507059e+37
      %v4618 = vand.u32 %v3349, 2147483648
      %v4619 = vor.u32 1.1754944e-38, %v4618
      %v4620 = vsel %vm4617, %v4619, %v4615
      %v4621 = vmul.f32 1.0, %v4620
      %v4622 = vrcp.pop %v3350
      %v4623 = vmul.f32 %v3350, %v4622
      %v4624 = vsub.f32 1.0, %v4623
      %v4625 = vmul.f32 %v4622, %v4624
      %v4626 = vadd.f32 %v4622, %v4625
      %vm4627 = vweird.f32 %v3350
      %vm4628 = vweird.f32 %v4622
      %vm4629 = vmor %vm4627, %vm4628
      %v4630 = vsel %vm4629, %v4622, %v4626
      %v4631 = vand.u32 2147483647, %v3350
      %vm4632 = vcmp.eq.f32.partialorder %v4631, 8.507059e+37
      %v4633 = vand.u32 %v3350, 2147483648
      %v4634 = vor.u32 1.1754944e-38, %v4633
      %v4635 = vsel %vm4632, %v4634, %v4630
      %v4636 = vmul.f32 1.0, %v4635
      %v4637 = vrcp.pop %v3351
      %v4638 = vmul.f32 %v3351, %v4637
      %v4639 = vsub.f32 1.0, %v4638
      %v4640 = vmul.f32 %v4637, %v4639
      %v4641 = vadd.f32 %v4637, %v4640
      %vm4642 = vweird.f32 %v3351
      %vm4643 = vweird.f32 %v4637
      %vm4644 = vmor %vm4642, %vm4643
      %v4645 = vsel %vm4644, %v4637, %v4641
      %v4646 = vand.u32 2147483647, %v3351
      %vm4647 = vcmp.eq.f32.partialorder %v4646, 8.507059e+37
      %v4648 = vand.u32 %v3351, 2147483648
      %v4649 = vor.u32 1.1754944e-38, %v4648
      %v4650 = vsel %vm4647, %v4649, %v4645
      %v4651 = vmul.f32 1.0, %v4650
      %v4652 = vrcp.pop %v3352
      %v4653 = vmul.f32 %v3352, %v4652
      %v4654 = vsub.f32 1.0, %v4653
      %v4655 = vmul.f32 %v4652, %v4654
      %v4656 = vadd.f32 %v4652, %v4655
      %vm4657 = vweird.f32 %v3352
      %vm4658 = vweird.f32 %v4652
      %vm4659 = vmor %vm4657, %vm4658
      %v4660 = vsel %vm4659, %v4652, %v4656
      %v4661 = vand.u32 2147483647, %v3352
      %vm4662 = vcmp.eq.f32.partialorder %v4661, 8.507059e+37
      %v4663 = vand.u32 %v3352, 2147483648
      %v4664 = vor.u32 1.1754944e-38, %v4663
      %v4665 = vsel %vm4662, %v4664, %v4660
      %v4666 = vmul.f32 1.0, %v4665
      %v4667 = vrcp.pop %v3353
      %v4668 = vmul.f32 %v3353, %v4667
      %v4669 = vsub.f32 1.0, %v4668
      %v4670 = vmul.f32 %v4667, %v4669
      %v4671 = vadd.f32 %v4667, %v4670
      %vm4672 = vweird.f32 %v3353
      %vm4673 = vweird.f32 %v4667
      %vm4674 = vmor %vm4672, %vm4673
      %v4675 = vsel %vm4674, %v4667, %v4671
      %v4676 = vand.u32 2147483647, %v3353
      %vm4677 = vcmp.eq.f32.partialorder %v4676, 8.507059e+37
      %v4678 = vand.u32 %v3353, 2147483648
      %v4679 = vor.u32 1.1754944e-38, %v4678
      %v4680 = vsel %vm4677, %v4679, %v4675
      %v4681 = vmul.f32 1.0, %v4680
      %v4682 = vrcp.pop %v3354
      %v4683 = vmul.f32 %v3354, %v4682
      %v4684 = vsub.f32 1.0, %v4683
      %v4685 = vmul.f32 %v4682, %v4684
      %v4686 = vadd.f32 %v4682, %v4685
      %vm4687 = vweird.f32 %v3354
      %vm4688 = vweird.f32 %v4682
      %vm4689 = vmor %vm4687, %vm4688
      %v4690 = vsel %vm4689, %v4682, %v4686
      %v4691 = vand.u32 2147483647, %v3354
      %vm4692 = vcmp.eq.f32.partialorder %v4691, 8.507059e+37
      %v4693 = vand.u32 %v3354, 2147483648
      %v4694 = vor.u32 1.1754944e-38, %v4693
      %v4695 = vsel %vm4692, %v4694, %v4690
      %v4696 = vmul.f32 1.0, %v4695
      %v4697 = vrcp.pop %v3355
      %v4698 = vmul.f32 %v3355, %v4697
      %v4699 = vsub.f32 1.0, %v4698
      %v4700 = vmul.f32 %v4697, %v4699
      %v4701 = vadd.f32 %v4697, %v4700
      %vm4702 = vweird.f32 %v3355
      %vm4703 = vweird.f32 %v4697
      %vm4704 = vmor %vm4702, %vm4703
      %v4705 = vsel %vm4704, %v4697, %v4701
      %v4706 = vand.u32 2147483647, %v3355
      %vm4707 = vcmp.eq.f32.partialorder %v4706, 8.507059e+37
      %v4708 = vand.u32 %v3355, 2147483648
      %v4709 = vor.u32 1.1754944e-38, %v4708
      %v4710 = vsel %vm4707, %v4709, %v4705
      %v4711 = vmul.f32 1.0, %v4710
      %v4712 = vrcp.pop %v3356
      %v4713 = vmul.f32 %v3356, %v4712
      %v4714 = vsub.f32 1.0, %v4713
      %v4715 = vmul.f32 %v4712, %v4714
      %v4716 = vadd.f32 %v4712, %v4715
      %vm4717 = vweird.f32 %v3356
      %vm4718 = vweird.f32 %v4712
      %vm4719 = vmor %vm4717, %vm4718
      %v4720 = vsel %vm4719, %v4712, %v4716
      %v4721 = vand.u32 2147483647, %v3356
      %vm4722 = vcmp.eq.f32.partialorder %v4721, 8.507059e+37
      %v4723 = vand.u32 %v3356, 2147483648
      %v4724 = vor.u32 1.1754944e-38, %v4723
      %v4725 = vsel %vm4722, %v4724, %v4720
      %v4726 = vmul.f32 1.0, %v4725
      %v4727 = vrcp.pop %v3357
      %v4728 = vmul.f32 %v3357, %v4727
      %v4729 = vsub.f32 1.0, %v4728
      %v4730 = vmul.f32 %v4727, %v4729
      %v4731 = vadd.f32 %v4727, %v4730
      %vm4732 = vweird.f32 %v3357
      %vm4733 = vweird.f32 %v4727
      %vm4734 = vmor %vm4732, %vm4733
      %v4735 = vsel %vm4734, %v4727, %v4731
      %v4736 = vand.u32 2147483647, %v3357
      %vm4737 = vcmp.eq.f32.partialorder %v4736, 8.507059e+37
      %v4738 = vand.u32 %v3357, 2147483648
      %v4739 = vor.u32 1.1754944e-38, %v4738
      %v4740 = vsel %vm4737, %v4739, %v4735
      %v4741 = vmul.f32 1.0, %v4740
      %v4742 = vrcp.pop %v3358
      %v4743 = vmul.f32 %v3358, %v4742
      %v4744 = vsub.f32 1.0, %v4743
      %v4745 = vmul.f32 %v4742, %v4744
      %v4746 = vadd.f32 %v4742, %v4745
      %vm4747 = vweird.f32 %v3358
      %vm4748 = vweird.f32 %v4742
      %vm4749 = vmor %vm4747, %vm4748
      %v4750 = vsel %vm4749, %v4742, %v4746
      %v4751 = vand.u32 2147483647, %v3358
      %vm4752 = vcmp.eq.f32.partialorder %v4751, 8.507059e+37
      %v4753 = vand.u32 %v3358, 2147483648
      %v4754 = vor.u32 1.1754944e-38, %v4753
      %v4755 = vsel %vm4752, %v4754, %v4750
      %v4756 = vmul.f32 1.0, %v4755
      %v4757 = vrcp.pop %v3359
      %v4758 = vmul.f32 %v3359, %v4757
      %v4759 = vsub.f32 1.0, %v4758
      %v4760 = vmul.f32 %v4757, %v4759
      %v4761 = vadd.f32 %v4757, %v4760
      %vm4762 = vweird.f32 %v3359
      %vm4763 = vweird.f32 %v4757
      %vm4764 = vmor %vm4762, %vm4763
      %v4765 = vsel %vm4764, %v4757, %v4761
      %v4766 = vand.u32 2147483647, %v3359
      %vm4767 = vcmp.eq.f32.partialorder %v4766, 8.507059e+37
      %v4768 = vand.u32 %v3359, 2147483648
      %v4769 = vor.u32 1.1754944e-38, %v4768
      %v4770 = vsel %vm4767, %v4769, %v4765
      %v4771 = vmul.f32 1.0, %v4770
      %v4772 = vrcp.pop %v3360
      %v4773 = vmul.f32 %v3360, %v4772
      %v4774 = vsub.f32 1.0, %v4773
      %v4775 = vmul.f32 %v4772, %v4774
      %v4776 = vadd.f32 %v4772, %v4775
      %vm4777 = vweird.f32 %v3360
      %vm4778 = vweird.f32 %v4772
      %vm4779 = vmor %vm4777, %vm4778
      %v4780 = vsel %vm4779, %v4772, %v4776
      %v4781 = vand.u32 2147483647, %v3360
      %vm4782 = vcmp.eq.f32.partialorder %v4781, 8.507059e+37
      %v4783 = vand.u32 %v3360, 2147483648
      %v4784 = vor.u32 1.1754944e-38, %v4783
      %v4785 = vsel %vm4782, %v4784, %v4780
      %v4786 = vmul.f32 1.0, %v4785
      %v4787 = vrcp.pop %v3361
      %v4788 = vmul.f32 %v3361, %v4787
      %v4789 = vsub.f32 1.0, %v4788
      %v4790 = vmul.f32 %v4787, %v4789
      %v4791 = vadd.f32 %v4787, %v4790
      %vm4792 = vweird.f32 %v3361
      %vm4793 = vweird.f32 %v4787
      %vm4794 = vmor %vm4792, %vm4793
      %v4795 = vsel %vm4794, %v4787, %v4791
      %v4796 = vand.u32 2147483647, %v3361
      %vm4797 = vcmp.eq.f32.partialorder %v4796, 8.507059e+37
      %v4798 = vand.u32 %v3361, 2147483648
      %v4799 = vor.u32 1.1754944e-38, %v4798
      %v4800 = vsel %vm4797, %v4799, %v4795
      %v4801 = vmul.f32 1.0, %v4800
      %v4802 = vrcp.pop %v3362
      %v4803 = vmul.f32 %v3362, %v4802
      %v4804 = vsub.f32 1.0, %v4803
      %v4805 = vmul.f32 %v4802, %v4804
      %v4806 = vadd.f32 %v4802, %v4805
      %vm4807 = vweird.f32 %v3362
      %vm4808 = vweird.f32 %v4802
      %vm4809 = vmor %vm4807, %vm4808
      %v4810 = vsel %vm4809, %v4802, %v4806
      %v4811 = vand.u32 2147483647, %v3362
      %vm4812 = vcmp.eq.f32.partialorder %v4811, 8.507059e+37
      %v4813 = vand.u32 %v3362, 2147483648
      %v4814 = vor.u32 1.1754944e-38, %v4813
      %v4815 = vsel %vm4812, %v4814, %v4810
      %v4816 = vmul.f32 1.0, %v4815
      %v4817 = vrcp.pop %v3363
      %v4818 = vmul.f32 %v3363, %v4817
      %v4819 = vsub.f32 1.0, %v4818
      %v4820 = vmul.f32 %v4817, %v4819
      %v4821 = vadd.f32 %v4817, %v4820
      %vm4822 = vweird.f32 %v3363
      %vm4823 = vweird.f32 %v4817
      %vm4824 = vmor %vm4822, %vm4823
      %v4825 = vsel %vm4824, %v4817, %v4821
      %v4826 = vand.u32 2147483647, %v3363
      %vm4827 = vcmp.eq.f32.partialorder %v4826, 8.507059e+37
      %v4828 = vand.u32 %v3363, 2147483648
      %v4829 = vor.u32 1.1754944e-38, %v4828
      %v4830 = vsel %vm4827, %v4829, %v4825
      %v4831 = vmul.f32 1.0, %v4830
      %v4832 = vrcp.pop %v3364
      %v4833 = vmul.f32 %v3364, %v4832
      %v4834 = vsub.f32 1.0, %v4833
      %v4835 = vmul.f32 %v4832, %v4834
      %v4836 = vadd.f32 %v4832, %v4835
      %vm4837 = vweird.f32 %v3364
      %vm4838 = vweird.f32 %v4832
      %vm4839 = vmor %vm4837, %vm4838
      %v4840 = vsel %vm4839, %v4832, %v4836
      %v4841 = vand.u32 2147483647, %v3364
      %vm4842 = vcmp.eq.f32.partialorder %v4841, 8.507059e+37
      %v4843 = vand.u32 %v3364, 2147483648
      %v4844 = vor.u32 1.1754944e-38, %v4843
      %v4845 = vsel %vm4842, %v4844, %v4840
      %v4846 = vmul.f32 1.0, %v4845
      %v4847 = vrcp.pop %v3365
      %v4848 = vmul.f32 %v3365, %v4847
      %v4849 = vsub.f32 1.0, %v4848
      %v4850 = vmul.f32 %v4847, %v4849
      %v4851 = vadd.f32 %v4847, %v4850
      %vm4852 = vweird.f32 %v3365
      %vm4853 = vweird.f32 %v4847
      %vm4854 = vmor %vm4852, %vm4853
      %v4855 = vsel %vm4854, %v4847, %v4851
      %v4856 = vand.u32 2147483647, %v3365
      %vm4857 = vcmp.eq.f32.partialorder %v4856, 8.507059e+37
      %v4858 = vand.u32 %v3365, 2147483648
      %v4859 = vor.u32 1.1754944e-38, %v4858
      %v4860 = vsel %vm4857, %v4859, %v4855
      %v4861 = vmul.f32 1.0, %v4860
      %v4862 = vrcp.pop %v3366
      %v4863 = vmul.f32 %v3366, %v4862
      %v4864 = vsub.f32 1.0, %v4863
      %v4865 = vmul.f32 %v4862, %v4864
      %v4866 = vadd.f32 %v4862, %v4865
      %vm4867 = vweird.f32 %v3366
      %vm4868 = vweird.f32 %v4862
      %vm4869 = vmor %vm4867, %vm4868
      %v4870 = vsel %vm4869, %v4862, %v4866
      %v4871 = vand.u32 2147483647, %v3366
      %vm4872 = vcmp.eq.f32.partialorder %v4871, 8.507059e+37
      %v4873 = vand.u32 %v3366, 2147483648
      %v4874 = vor.u32 1.1754944e-38, %v4873
      %v4875 = vsel %vm4872, %v4874, %v4870
      %v4876 = vmul.f32 1.0, %v4875
      %v4877 = vrcp.pop %v3367
      %v4878 = vmul.f32 %v3367, %v4877
      %v4879 = vsub.f32 1.0, %v4878
      %v4880 = vmul.f32 %v4877, %v4879
      %v4881 = vadd.f32 %v4877, %v4880
      %vm4882 = vweird.f32 %v3367
      %vm4883 = vweird.f32 %v4877
      %vm4884 = vmor %vm4882, %vm4883
      %v4885 = vsel %vm4884, %v4877, %v4881
      %v4886 = vand.u32 2147483647, %v3367
      %vm4887 = vcmp.eq.f32.partialorder %v4886, 8.507059e+37
      %v4888 = vand.u32 %v3367, 2147483648
      %v4889 = vor.u32 1.1754944e-38, %v4888
      %v4890 = vsel %vm4887, %v4889, %v4885
      %v4891 = vmul.f32 1.0, %v4890
      %v4892 = vrcp.pop %v3368
      %v4893 = vmul.f32 %v3368, %v4892
      %v4894 = vsub.f32 1.0, %v4893
      %v4895 = vmul.f32 %v4892, %v4894
      %v4896 = vadd.f32 %v4892, %v4895
      %vm4897 = vweird.f32 %v3368
      %vm4898 = vweird.f32 %v4892
      %vm4899 = vmor %vm4897, %vm4898
      %v4900 = vsel %vm4899, %v4892, %v4896
      %v4901 = vand.u32 2147483647, %v3368
      %vm4902 = vcmp.eq.f32.partialorder %v4901, 8.507059e+37
      %v4903 = vand.u32 %v3368, 2147483648
      %v4904 = vor.u32 1.1754944e-38, %v4903
      %v4905 = vsel %vm4902, %v4904, %v4900
      %v4906 = vmul.f32 1.0, %v4905
      %v4907 = vrcp.pop %v3369
      %v4908 = vmul.f32 %v3369, %v4907
      %v4909 = vsub.f32 1.0, %v4908
      %v4910 = vmul.f32 %v4907, %v4909
      %v4911 = vadd.f32 %v4907, %v4910
      %vm4912 = vweird.f32 %v3369
      %vm4913 = vweird.f32 %v4907
      %vm4914 = vmor %vm4912, %vm4913
      %v4915 = vsel %vm4914, %v4907, %v4911
      %v4916 = vand.u32 2147483647, %v3369
      %vm4917 = vcmp.eq.f32.partialorder %v4916, 8.507059e+37
      %v4918 = vand.u32 %v3369, 2147483648
      %v4919 = vor.u32 1.1754944e-38, %v4918
      %v4920 = vsel %vm4917, %v4919, %v4915
      %v4921 = vmul.f32 1.0, %v4920
      %v4922 = vrcp.pop %v3370
      %v4923 = vmul.f32 %v3370, %v4922
      %v4924 = vsub.f32 1.0, %v4923
      %v4925 = vmul.f32 %v4922, %v4924
      %v4926 = vadd.f32 %v4922, %v4925
      %vm4927 = vweird.f32 %v3370
      %vm4928 = vweird.f32 %v4922
      %vm4929 = vmor %vm4927, %vm4928
      %v4930 = vsel %vm4929, %v4922, %v4926
      %v4931 = vand.u32 2147483647, %v3370
      %vm4932 = vcmp.eq.f32.partialorder %v4931, 8.507059e+37
      %v4933 = vand.u32 %v3370, 2147483648
      %v4934 = vor.u32 1.1754944e-38, %v4933
      %v4935 = vsel %vm4932, %v4934, %v4930
      %v4936 = vmul.f32 1.0, %v4935
      %v4937 = vrcp.pop %v3371
      %v4938 = vmul.f32 %v3371, %v4937
      %v4939 = vsub.f32 1.0, %v4938
      %v4940 = vmul.f32 %v4937, %v4939
      %v4941 = vadd.f32 %v4937, %v4940
      %vm4942 = vweird.f32 %v3371
      %vm4943 = vweird.f32 %v4937
      %vm4944 = vmor %vm4942, %vm4943
      %v4945 = vsel %vm4944, %v4937, %v4941
      %v4946 = vand.u32 2147483647, %v3371
      %vm4947 = vcmp.eq.f32.partialorder %v4946, 8.507059e+37
      %v4948 = vand.u32 %v3371, 2147483648
      %v4949 = vor.u32 1.1754944e-38, %v4948
      %v4950 = vsel %vm4947, %v4949, %v4945
      %v4951 = vmul.f32 1.0, %v4950
      %v4952 = vrcp.pop %v3372
      %v4953 = vmul.f32 %v3372, %v4952
      %v4954 = vsub.f32 1.0, %v4953
      %v4955 = vmul.f32 %v4952, %v4954
      %v4956 = vadd.f32 %v4952, %v4955
      %vm4957 = vweird.f32 %v3372
      %vm4958 = vweird.f32 %v4952
      %vm4959 = vmor %vm4957, %vm4958
      %v4960 = vsel %vm4959, %v4952, %v4956
      %v4961 = vand.u32 2147483647, %v3372
      %vm4962 = vcmp.eq.f32.partialorder %v4961, 8.507059e+37
      %v4963 = vand.u32 %v3372, 2147483648
      %v4964 = vor.u32 1.1754944e-38, %v4963
      %v4965 = vsel %vm4962, %v4964, %v4960
      %v4966 = vmul.f32 1.0, %v4965
      %v4967 = vrcp.pop %v3373
      %v4968 = vmul.f32 %v3373, %v4967
      %v4969 = vsub.f32 1.0, %v4968
      %v4970 = vmul.f32 %v4967, %v4969
      %v4971 = vadd.f32 %v4967, %v4970
      %vm4972 = vweird.f32 %v3373
      %vm4973 = vweird.f32 %v4967
      %vm4974 = vmor %vm4972, %vm4973
      %v4975 = vsel %vm4974, %v4967, %v4971
      %v4976 = vand.u32 2147483647, %v3373
      %vm4977 = vcmp.eq.f32.partialorder %v4976, 8.507059e+37
      %v4978 = vand.u32 %v3373, 2147483648
      %v4979 = vor.u32 1.1754944e-38, %v4978
      %v4980 = vsel %vm4977, %v4979, %v4975
      %v4981 = vmul.f32 1.0, %v4980
      %v4982 = vrcp.pop %v3374
      %v4983 = vmul.f32 %v3374, %v4982
      %v4984 = vsub.f32 1.0, %v4983
      %v4985 = vmul.f32 %v4982, %v4984
      %v4986 = vadd.f32 %v4982, %v4985
      %vm4987 = vweird.f32 %v3374
      %vm4988 = vweird.f32 %v4982
      %vm4989 = vmor %vm4987, %vm4988
      %v4990 = vsel %vm4989, %v4982, %v4986
      %v4991 = vand.u32 2147483647, %v3374
      %vm4992 = vcmp.eq.f32.partialorder %v4991, 8.507059e+37
      %v4993 = vand.u32 %v3374, 2147483648
      %v4994 = vor.u32 1.1754944e-38, %v4993
      %v4995 = vsel %vm4992, %v4994, %v4990
      %v4996 = vmul.f32 1.0, %v4995
      %v4997 = vrcp.pop %v3375
      %v4998 = vmul.f32 %v3375, %v4997
      %v4999 = vsub.f32 1.0, %v4998
      %v5000 = vmul.f32 %v4997, %v4999
      %v5001 = vadd.f32 %v4997, %v5000
      %vm5002 = vweird.f32 %v3375
      %vm5003 = vweird.f32 %v4997
      %vm5004 = vmor %vm5002, %vm5003
      %v5005 = vsel %vm5004, %v4997, %v5001
      %v5006 = vand.u32 2147483647, %v3375
      %vm5007 = vcmp.eq.f32.partialorder %v5006, 8.507059e+37
      %v5008 = vand.u32 %v3375, 2147483648
      %v5009 = vor.u32 1.1754944e-38, %v5008
      %v5010 = vsel %vm5007, %v5009, %v5005
      %v5011 = vmul.f32 1.0, %v5010
      %v5012 = vrcp.pop %v3376
      %v5013 = vmul.f32 %v3376, %v5012
      %v5014 = vsub.f32 1.0, %v5013
      %v5015 = vmul.f32 %v5012, %v5014
      %v5016 = vadd.f32 %v5012, %v5015
      %vm5017 = vweird.f32 %v3376
      %vm5018 = vweird.f32 %v5012
      %vm5019 = vmor %vm5017, %vm5018
      %v5020 = vsel %vm5019, %v5012, %v5016
      %v5021 = vand.u32 2147483647, %v3376
      %vm5022 = vcmp.eq.f32.partialorder %v5021, 8.507059e+37
      %v5023 = vand.u32 %v3376, 2147483648
      %v5024 = vor.u32 1.1754944e-38, %v5023
      %v5025 = vsel %vm5022, %v5024, %v5020
      %v5026 = vmul.f32 1.0, %v5025
      %v5027 = vrcp.pop %v3377
      %v5028 = vmul.f32 %v3377, %v5027
      %v5029 = vsub.f32 1.0, %v5028
      %v5030 = vmul.f32 %v5027, %v5029
      %v5031 = vadd.f32 %v5027, %v5030
      %vm5032 = vweird.f32 %v3377
      %vm5033 = vweird.f32 %v5027
      %vm5034 = vmor %vm5032, %vm5033
      %v5035 = vsel %vm5034, %v5027, %v5031
      %v5036 = vand.u32 2147483647, %v3377
      %vm5037 = vcmp.eq.f32.partialorder %v5036, 8.507059e+37
      %v5038 = vand.u32 %v3377, 2147483648
      %v5039 = vor.u32 1.1754944e-38, %v5038
      %v5040 = vsel %vm5037, %v5039, %v5035
      %v5041 = vmul.f32 1.0, %v5040
      %v5042 = vrcp.pop %v3378
      %v5043 = vmul.f32 %v3378, %v5042
      %v5044 = vsub.f32 1.0, %v5043
      %v5045 = vmul.f32 %v5042, %v5044
      %v5046 = vadd.f32 %v5042, %v5045
      %vm5047 = vweird.f32 %v3378
      %vm5048 = vweird.f32 %v5042
      %vm5049 = vmor %vm5047, %vm5048
      %v5050 = vsel %vm5049, %v5042, %v5046
      %v5051 = vand.u32 2147483647, %v3378
      %vm5052 = vcmp.eq.f32.partialorder %v5051, 8.507059e+37
      %v5053 = vand.u32 %v3378, 2147483648
      %v5054 = vor.u32 1.1754944e-38, %v5053
      %v5055 = vsel %vm5052, %v5054, %v5050
      %v5056 = vmul.f32 1.0, %v5055
      %v5057 = vrcp.pop %v3379
      %v5058 = vmul.f32 %v3379, %v5057
      %v5059 = vsub.f32 1.0, %v5058
      %v5060 = vmul.f32 %v5057, %v5059
      %v5061 = vadd.f32 %v5057, %v5060
      %vm5062 = vweird.f32 %v3379
      %vm5063 = vweird.f32 %v5057
      %vm5064 = vmor %vm5062, %vm5063
      %v5065 = vsel %vm5064, %v5057, %v5061
      %v5066 = vand.u32 2147483647, %v3379
      %vm5067 = vcmp.eq.f32.partialorder %v5066, 8.507059e+37
      %v5068 = vand.u32 %v3379, 2147483648
      %v5069 = vor.u32 1.1754944e-38, %v5068
      %v5070 = vsel %vm5067, %v5069, %v5065
      %v5071 = vmul.f32 1.0, %v5070
      %v5072 = vrcp.pop %v3380
      %v5073 = vmul.f32 %v3380, %v5072
      %v5074 = vsub.f32 1.0, %v5073
      %v5075 = vmul.f32 %v5072, %v5074
      %v5076 = vadd.f32 %v5072, %v5075
      %vm5077 = vweird.f32 %v3380
      %vm5078 = vweird.f32 %v5072
      %vm5079 = vmor %vm5077, %vm5078
      %v5080 = vsel %vm5079, %v5072, %v5076
      %v5081 = vand.u32 2147483647, %v3380
      %vm5082 = vcmp.eq.f32.partialorder %v5081, 8.507059e+37
      %v5083 = vand.u32 %v3380, 2147483648
      %v5084 = vor.u32 1.1754944e-38, %v5083
      %v5085 = vsel %vm5082, %v5084, %v5080
      %v5086 = vmul.f32 1.0, %v5085
      %v5087 = vrcp.pop %v3381
      %v5088 = vmul.f32 %v3381, %v5087
      %v5089 = vsub.f32 1.0, %v5088
      %v5090 = vmul.f32 %v5087, %v5089
      %v5091 = vadd.f32 %v5087, %v5090
      %vm5092 = vweird.f32 %v3381
      %vm5093 = vweird.f32 %v5087
      %vm5094 = vmor %vm5092, %vm5093
      %v5095 = vsel %vm5094, %v5087, %v5091
      %v5096 = vand.u32 2147483647, %v3381
      %vm5097 = vcmp.eq.f32.partialorder %v5096, 8.507059e+37
      %v5098 = vand.u32 %v3381, 2147483648
      %v5099 = vor.u32 1.1754944e-38, %v5098
      %v5100 = vsel %vm5097, %v5099, %v5095
      %v5101 = vmul.f32 1.0, %v5100
      %v5102 = vrcp.pop %v3382
      %v5103 = vmul.f32 %v3382, %v5102
      %v5104 = vsub.f32 1.0, %v5103
      %v5105 = vmul.f32 %v5102, %v5104
      %v5106 = vadd.f32 %v5102, %v5105
      %vm5107 = vweird.f32 %v3382
      %vm5108 = vweird.f32 %v5102
      %vm5109 = vmor %vm5107, %vm5108
      %v5110 = vsel %vm5109, %v5102, %v5106
      %v5111 = vand.u32 2147483647, %v3382
      %vm5112 = vcmp.eq.f32.partialorder %v5111, 8.507059e+37
      %v5113 = vand.u32 %v3382, 2147483648
      %v5114 = vor.u32 1.1754944e-38, %v5113
      %v5115 = vsel %vm5112, %v5114, %v5110
      %v5116 = vmul.f32 1.0, %v5115
      %v5117 = vrcp.pop %v3383
      %v5118 = vmul.f32 %v3383, %v5117
      %v5119 = vsub.f32 1.0, %v5118
      %v5120 = vmul.f32 %v5117, %v5119
      %v5121 = vadd.f32 %v5117, %v5120
      %vm5122 = vweird.f32 %v3383
      %vm5123 = vweird.f32 %v5117
      %vm5124 = vmor %vm5122, %vm5123
      %v5125 = vsel %vm5124, %v5117, %v5121
      %v5126 = vand.u32 2147483647, %v3383
      %vm5127 = vcmp.eq.f32.partialorder %v5126, 8.507059e+37
      %v5128 = vand.u32 %v3383, 2147483648
      %v5129 = vor.u32 1.1754944e-38, %v5128
      %v5130 = vsel %vm5127, %v5129, %v5125
      %v5131 = vmul.f32 1.0, %v5130
      %v5132 = vrcp.pop %v3384
      %v5133 = vmul.f32 %v3384, %v5132
      %v5134 = vsub.f32 1.0, %v5133
      %v5135 = vmul.f32 %v5132, %v5134
      %v5136 = vadd.f32 %v5132, %v5135
      %vm5137 = vweird.f32 %v3384
      %vm5138 = vweird.f32 %v5132
      %vm5139 = vmor %vm5137, %vm5138
      %v5140 = vsel %vm5139, %v5132, %v5136
      %v5141 = vand.u32 2147483647, %v3384
      %vm5142 = vcmp.eq.f32.partialorder %v5141, 8.507059e+37
      %v5143 = vand.u32 %v3384, 2147483648
      %v5144 = vor.u32 1.1754944e-38, %v5143
      %v5145 = vsel %vm5142, %v5144, %v5140
      %v5146 = vmul.f32 1.0, %v5145
      %v5147 = vrcp.pop %v3385
      %v5148 = vmul.f32 %v3385, %v5147
      %v5149 = vsub.f32 1.0, %v5148
      %v5150 = vmul.f32 %v5147, %v5149
      %v5151 = vadd.f32 %v5147, %v5150
      %vm5152 = vweird.f32 %v3385
      %vm5153 = vweird.f32 %v5147
      %vm5154 = vmor %vm5152, %vm5153
      %v5155 = vsel %vm5154, %v5147, %v5151
      %v5156 = vand.u32 2147483647, %v3385
      %vm5157 = vcmp.eq.f32.partialorder %v5156, 8.507059e+37
      %v5158 = vand.u32 %v3385, 2147483648
      %v5159 = vor.u32 1.1754944e-38, %v5158
      %v5160 = vsel %vm5157, %v5159, %v5155
      %v5161 = vmul.f32 1.0, %v5160
      %v5162 = vrcp.pop %v3386
      %v5163 = vmul.f32 %v3386, %v5162
      %v5164 = vsub.f32 1.0, %v5163
      %v5165 = vmul.f32 %v5162, %v5164
      %v5166 = vadd.f32 %v5162, %v5165
      %vm5167 = vweird.f32 %v3386
      %vm5168 = vweird.f32 %v5162
      %vm5169 = vmor %vm5167, %vm5168
      %v5170 = vsel %vm5169, %v5162, %v5166
      %v5171 = vand.u32 2147483647, %v3386
      %vm5172 = vcmp.eq.f32.partialorder %v5171, 8.507059e+37
      %v5173 = vand.u32 %v3386, 2147483648
      %v5174 = vor.u32 1.1754944e-38, %v5173
      %v5175 = vsel %vm5172, %v5174, %v5170
      %v5176 = vmul.f32 1.0, %v5175
      %v5177 = vrcp.pop %v3387
      %v5178 = vmul.f32 %v3387, %v5177
      %v5179 = vsub.f32 1.0, %v5178
      %v5180 = vmul.f32 %v5177, %v5179
      %v5181 = vadd.f32 %v5177, %v5180
      %vm5182 = vweird.f32 %v3387
      %vm5183 = vweird.f32 %v5177
      %vm5184 = vmor %vm5182, %vm5183
      %v5185 = vsel %vm5184, %v5177, %v5181
      %v5186 = vand.u32 2147483647, %v3387
      %vm5187 = vcmp.eq.f32.partialorder %v5186, 8.507059e+37
      %v5188 = vand.u32 %v3387, 2147483648
      %v5189 = vor.u32 1.1754944e-38, %v5188
      %v5190 = vsel %vm5187, %v5189, %v5185
      %v5191 = vmul.f32 1.0, %v5190
      %v5192 = vrcp.pop %v3388
      %v5193 = vmul.f32 %v3388, %v5192
      %v5194 = vsub.f32 1.0, %v5193
      %v5195 = vmul.f32 %v5192, %v5194
      %v5196 = vadd.f32 %v5192, %v5195
      %vm5197 = vweird.f32 %v3388
      %vm5198 = vweird.f32 %v5192
      %vm5199 = vmor %vm5197, %vm5198
      %v5200 = vsel %vm5199, %v5192, %v5196
      %v5201 = vand.u32 2147483647, %v3388
      %vm5202 = vcmp.eq.f32.partialorder %v5201, 8.507059e+37
      %v5203 = vand.u32 %v3388, 2147483648
      %v5204 = vor.u32 1.1754944e-38, %v5203
      %v5205 = vsel %vm5202, %v5204, %v5200
      %v5206 = vmul.f32 1.0, %v5205
      %v5207 = vrcp.pop %v3389
      %v5208 = vmul.f32 %v3389, %v5207
      %v5209 = vsub.f32 1.0, %v5208
      %v5210 = vmul.f32 %v5207, %v5209
      %v5211 = vadd.f32 %v5207, %v5210
      %vm5212 = vweird.f32 %v3389
      %vm5213 = vweird.f32 %v5207
      %vm5214 = vmor %vm5212, %vm5213
      %v5215 = vsel %vm5214, %v5207, %v5211
      %v5216 = vand.u32 2147483647, %v3389
      %vm5217 = vcmp.eq.f32.partialorder %v5216, 8.507059e+37
      %v5218 = vand.u32 %v3389, 2147483648
      %v5219 = vor.u32 1.1754944e-38, %v5218
      %v5220 = vsel %vm5217, %v5219, %v5215
      %v5221 = vmul.f32 1.0, %v5220
      %v5222 = vrcp.pop %v3390
      %v5223 = vmul.f32 %v3390, %v5222
      %v5224 = vsub.f32 1.0, %v5223
      %v5225 = vmul.f32 %v5222, %v5224
      %v5226 = vadd.f32 %v5222, %v5225
      %vm5227 = vweird.f32 %v3390
      %vm5228 = vweird.f32 %v5222
      %vm5229 = vmor %vm5227, %vm5228
      %v5230 = vsel %vm5229, %v5222, %v5226
      %v5231 = vand.u32 2147483647, %v3390
      %vm5232 = vcmp.eq.f32.partialorder %v5231, 8.507059e+37
      %v5233 = vand.u32 %v3390, 2147483648
      %v5234 = vor.u32 1.1754944e-38, %v5233
      %v5235 = vsel %vm5232, %v5234, %v5230
      %v5236 = vmul.f32 1.0, %v5235
      %v5237 = vrcp.pop %v3391
      %v5238 = vmul.f32 %v3391, %v5237
      %v5239 = vsub.f32 1.0, %v5238
      %v5240 = vmul.f32 %v5237, %v5239
      %v5241 = vadd.f32 %v5237, %v5240
      %vm5242 = vweird.f32 %v3391
      %vm5243 = vweird.f32 %v5237
      %vm5244 = vmor %vm5242, %vm5243
      %v5245 = vsel %vm5244, %v5237, %v5241
      %v5246 = vand.u32 2147483647, %v3391
      %vm5247 = vcmp.eq.f32.partialorder %v5246, 8.507059e+37
      %v5248 = vand.u32 %v3391, 2147483648
      %v5249 = vor.u32 1.1754944e-38, %v5248
      %v5250 = vsel %vm5247, %v5249, %v5245
      %v5251 = vmul.f32 1.0, %v5250
      %v5252 = vrcp.pop %v3392
      %v5253 = vmul.f32 %v3392, %v5252
      %v5254 = vsub.f32 1.0, %v5253
      %v5255 = vmul.f32 %v5252, %v5254
      %v5256 = vadd.f32 %v5252, %v5255
      %vm5257 = vweird.f32 %v3392
      %vm5258 = vweird.f32 %v5252
      %vm5259 = vmor %vm5257, %vm5258
      %v5260 = vsel %vm5259, %v5252, %v5256
      %v5261 = vand.u32 2147483647, %v3392
      %vm5262 = vcmp.eq.f32.partialorder %v5261, 8.507059e+37
      %v5263 = vand.u32 %v3392, 2147483648
      %v5264 = vor.u32 1.1754944e-38, %v5263
      %v5265 = vsel %vm5262, %v5264, %v5260
      %v5266 = vmul.f32 1.0, %v5265
      %v5267 = vrcp.pop %v3393
      %v5268 = vmul.f32 %v3393, %v5267
      %v5269 = vsub.f32 1.0, %v5268
      %v5270 = vmul.f32 %v5267, %v5269
      %v5271 = vadd.f32 %v5267, %v5270
      %vm5272 = vweird.f32 %v3393
      %vm5273 = vweird.f32 %v5267
      %vm5274 = vmor %vm5272, %vm5273
      %v5275 = vsel %vm5274, %v5267, %v5271
      %v5276 = vand.u32 2147483647, %v3393
      %vm5277 = vcmp.eq.f32.partialorder %v5276, 8.507059e+37
      %v5278 = vand.u32 %v3393, 2147483648
      %v5279 = vor.u32 1.1754944e-38, %v5278
      %v5280 = vsel %vm5277, %v5279, %v5275
      %v5281 = vmul.f32 1.0, %v5280
      %v5282 = vrcp.pop %v3394
      %v5283 = vmul.f32 %v3394, %v5282
      %v5284 = vsub.f32 1.0, %v5283
      %v5285 = vmul.f32 %v5282, %v5284
      %v5286 = vadd.f32 %v5282, %v5285
      %vm5287 = vweird.f32 %v3394
      %vm5288 = vweird.f32 %v5282
      %vm5289 = vmor %vm5287, %vm5288
      %v5290 = vsel %vm5289, %v5282, %v5286
      %v5291 = vand.u32 2147483647, %v3394
      %vm5292 = vcmp.eq.f32.partialorder %v5291, 8.507059e+37
      %v5293 = vand.u32 %v3394, 2147483648
      %v5294 = vor.u32 1.1754944e-38, %v5293
      %v5295 = vsel %vm5292, %v5294, %v5290
      %v5296 = vmul.f32 1.0, %v5295
      %v5297 = vrcp.pop %v3395
      %v5298 = vmul.f32 %v3395, %v5297
      %v5299 = vsub.f32 1.0, %v5298
      %v5300 = vmul.f32 %v5297, %v5299
      %v5301 = vadd.f32 %v5297, %v5300
      %vm5302 = vweird.f32 %v3395
      %vm5303 = vweird.f32 %v5297
      %vm5304 = vmor %vm5302, %vm5303
      %v5305 = vsel %vm5304, %v5297, %v5301
      %v5306 = vand.u32 2147483647, %v3395
      %vm5307 = vcmp.eq.f32.partialorder %v5306, 8.507059e+37
      %v5308 = vand.u32 %v3395, 2147483648
      %v5309 = vor.u32 1.1754944e-38, %v5308
      %v5310 = vsel %vm5307, %v5309, %v5305
      %v5311 = vmul.f32 1.0, %v5310
      %v5312 = vrcp.pop %v3396
      %v5313 = vmul.f32 %v3396, %v5312
      %v5314 = vsub.f32 1.0, %v5313
      %v5315 = vmul.f32 %v5312, %v5314
      %v5316 = vadd.f32 %v5312, %v5315
      %vm5317 = vweird.f32 %v3396
      %vm5318 = vweird.f32 %v5312
      %vm5319 = vmor %vm5317, %vm5318
      %v5320 = vsel %vm5319, %v5312, %v5316
      %v5321 = vand.u32 2147483647, %v3396
      %vm5322 = vcmp.eq.f32.partialorder %v5321, 8.507059e+37
      %v5323 = vand.u32 %v3396, 2147483648
      %v5324 = vor.u32 1.1754944e-38, %v5323
      %v5325 = vsel %vm5322, %v5324, %v5320
      %v5326 = vmul.f32 1.0, %v5325
      %v5327 = vrcp.pop %v3397
      %v5328 = vmul.f32 %v3397, %v5327
      %v5329 = vsub.f32 1.0, %v5328
      %v5330 = vmul.f32 %v5327, %v5329
      %v5331 = vadd.f32 %v5327, %v5330
      %vm5332 = vweird.f32 %v3397
      %vm5333 = vweird.f32 %v5327
      %vm5334 = vmor %vm5332, %vm5333
      %v5335 = vsel %vm5334, %v5327, %v5331
      %v5336 = vand.u32 2147483647, %v3397
      %vm5337 = vcmp.eq.f32.partialorder %v5336, 8.507059e+37
      %v5338 = vand.u32 %v3397, 2147483648
      %v5339 = vor.u32 1.1754944e-38, %v5338
      %v5340 = vsel %vm5337, %v5339, %v5335
      %v5341 = vmul.f32 1.0, %v5340
      %v5342 = vrcp.pop %v3398
      %v5343 = vmul.f32 %v3398, %v5342
      %v5344 = vsub.f32 1.0, %v5343
      %v5345 = vmul.f32 %v5342, %v5344
      %v5346 = vadd.f32 %v5342, %v5345
      %vm5347 = vweird.f32 %v3398
      %vm5348 = vweird.f32 %v5342
      %vm5349 = vmor %vm5347, %vm5348
      %v5350 = vsel %vm5349, %v5342, %v5346
      %v5351 = vand.u32 2147483647, %v3398
      %vm5352 = vcmp.eq.f32.partialorder %v5351, 8.507059e+37
      %v5353 = vand.u32 %v3398, 2147483648
      %v5354 = vor.u32 1.1754944e-38, %v5353
      %v5355 = vsel %vm5352, %v5354, %v5350
      %v5356 = vmul.f32 1.0, %v5355
      %v5357 = vrcp.pop %v3399
      %v5358 = vmul.f32 %v3399, %v5357
      %v5359 = vsub.f32 1.0, %v5358
      %v5360 = vmul.f32 %v5357, %v5359
      %v5361 = vadd.f32 %v5357, %v5360
      %vm5362 = vweird.f32 %v3399
      %vm5363 = vweird.f32 %v5357
      %vm5364 = vmor %vm5362, %vm5363
      %v5365 = vsel %vm5364, %v5357, %v5361
      %v5366 = vand.u32 2147483647, %v3399
      %vm5367 = vcmp.eq.f32.partialorder %v5366, 8.507059e+37
      %v5368 = vand.u32 %v3399, 2147483648
      %v5369 = vor.u32 1.1754944e-38, %v5368
      %v5370 = vsel %vm5367, %v5369, %v5365
      %v5371 = vmul.f32 1.0, %v5370
      %v5372 = vrcp.pop %v3400
      %v5373 = vmul.f32 %v3400, %v5372
      %v5374 = vsub.f32 1.0, %v5373
      %v5375 = vmul.f32 %v5372, %v5374
      %v5376 = vadd.f32 %v5372, %v5375
      %vm5377 = vweird.f32 %v3400
      %vm5378 = vweird.f32 %v5372
      %vm5379 = vmor %vm5377, %vm5378
      %v5380 = vsel %vm5379, %v5372, %v5376
      %v5381 = vand.u32 2147483647, %v3400
      %vm5382 = vcmp.eq.f32.partialorder %v5381, 8.507059e+37
      %v5383 = vand.u32 %v3400, 2147483648
      %v5384 = vor.u32 1.1754944e-38, %v5383
      %v5385 = vsel %vm5382, %v5384, %v5380
      %v5386 = vmul.f32 1.0, %v5385
      %v5387 = vrcp.pop %v3401
      %v5388 = vmul.f32 %v3401, %v5387
      %v5389 = vsub.f32 1.0, %v5388
      %v5390 = vmul.f32 %v5387, %v5389
      %v5391 = vadd.f32 %v5387, %v5390
      %vm5392 = vweird.f32 %v3401
      %vm5393 = vweird.f32 %v5387
      %vm5394 = vmor %vm5392, %vm5393
      %v5395 = vsel %vm5394, %v5387, %v5391
      %v5396 = vand.u32 2147483647, %v3401
      %vm5397 = vcmp.eq.f32.partialorder %v5396, 8.507059e+37
      %v5398 = vand.u32 %v3401, 2147483648
      %v5399 = vor.u32 1.1754944e-38, %v5398
      %v5400 = vsel %vm5397, %v5399, %v5395
      %v5401 = vmul.f32 1.0, %v5400
      %v5402 = vrcp.pop %v3402
      %v5403 = vmul.f32 %v3402, %v5402
      %v5404 = vsub.f32 1.0, %v5403
      %v5405 = vmul.f32 %v5402, %v5404
      %v5406 = vadd.f32 %v5402, %v5405
      %vm5407 = vweird.f32 %v3402
      %vm5408 = vweird.f32 %v5402
      %vm5409 = vmor %vm5407, %vm5408
      %v5410 = vsel %vm5409, %v5402, %v5406
      %v5411 = vand.u32 2147483647, %v3402
      %vm5412 = vcmp.eq.f32.partialorder %v5411, 8.507059e+37
      %v5413 = vand.u32 %v3402, 2147483648
      %v5414 = vor.u32 1.1754944e-38, %v5413
      %v5415 = vsel %vm5412, %v5414, %v5410
      %v5416 = vmul.f32 1.0, %v5415
      %v5417 = vrcp.pop %v3403
      %v5418 = vmul.f32 %v3403, %v5417
      %v5419 = vsub.f32 1.0, %v5418
      %v5420 = vmul.f32 %v5417, %v5419
      %v5421 = vadd.f32 %v5417, %v5420
      %vm5422 = vweird.f32 %v3403
      %vm5423 = vweird.f32 %v5417
      %vm5424 = vmor %vm5422, %vm5423
      %v5425 = vsel %vm5424, %v5417, %v5421
      %v5426 = vand.u32 2147483647, %v3403
      %vm5427 = vcmp.eq.f32.partialorder %v5426, 8.507059e+37
      %v5428 = vand.u32 %v3403, 2147483648
      %v5429 = vor.u32 1.1754944e-38, %v5428
      %v5430 = vsel %vm5427, %v5429, %v5425
      %v5431 = vmul.f32 1.0, %v5430
      %v5432 = vrcp.pop %v3404
      %v5433 = vmul.f32 %v3404, %v5432
      %v5434 = vsub.f32 1.0, %v5433
      %v5435 = vmul.f32 %v5432, %v5434
      %v5436 = vadd.f32 %v5432, %v5435
      %vm5437 = vweird.f32 %v3404
      %vm5438 = vweird.f32 %v5432
      %vm5439 = vmor %vm5437, %vm5438
      %v5440 = vsel %vm5439, %v5432, %v5436
      %v5441 = vand.u32 2147483647, %v3404
      %vm5442 = vcmp.eq.f32.partialorder %v5441, 8.507059e+37
      %v5443 = vand.u32 %v3404, 2147483648
      %v5444 = vor.u32 1.1754944e-38, %v5443
      %v5445 = vsel %vm5442, %v5444, %v5440
      %v5446 = vmul.f32 1.0, %v5445
      %v5447 = vrcp.pop %v3405
      %v5448 = vmul.f32 %v3405, %v5447
      %v5449 = vsub.f32 1.0, %v5448
      %v5450 = vmul.f32 %v5447, %v5449
      %v5451 = vadd.f32 %v5447, %v5450
      %vm5452 = vweird.f32 %v3405
      %vm5453 = vweird.f32 %v5447
      %vm5454 = vmor %vm5452, %vm5453
      %v5455 = vsel %vm5454, %v5447, %v5451
      %v5456 = vand.u32 2147483647, %v3405
      %vm5457 = vcmp.eq.f32.partialorder %v5456, 8.507059e+37
      %v5458 = vand.u32 %v3405, 2147483648
      %v5459 = vor.u32 1.1754944e-38, %v5458
      %v5460 = vsel %vm5457, %v5459, %v5455
      %v5461 = vmul.f32 1.0, %v5460
      %v5462 = vrcp.pop %v3406
      %v5463 = vmul.f32 %v3406, %v5462
      %v5464 = vsub.f32 1.0, %v5463
      %v5465 = vmul.f32 %v5462, %v5464
      %v5466 = vadd.f32 %v5462, %v5465
      %vm5467 = vweird.f32 %v3406
      %vm5468 = vweird.f32 %v5462
      %vm5469 = vmor %vm5467, %vm5468
      %v5470 = vsel %vm5469, %v5462, %v5466
      %v5471 = vand.u32 2147483647, %v3406
      %vm5472 = vcmp.eq.f32.partialorder %v5471, 8.507059e+37
      %v5473 = vand.u32 %v3406, 2147483648
      %v5474 = vor.u32 1.1754944e-38, %v5473
      %v5475 = vsel %vm5472, %v5474, %v5470
      %v5476 = vmul.f32 1.0, %v5475
      %v5477 = vrcp.pop %v3407
      %v5478 = vmul.f32 %v3407, %v5477
      %v5479 = vsub.f32 1.0, %v5478
      %v5480 = vmul.f32 %v5477, %v5479
      %v5481 = vadd.f32 %v5477, %v5480
      %vm5482 = vweird.f32 %v3407
      %vm5483 = vweird.f32 %v5477
      %vm5484 = vmor %vm5482, %vm5483
      %v5485 = vsel %vm5484, %v5477, %v5481
      %v5486 = vand.u32 2147483647, %v3407
      %vm5487 = vcmp.eq.f32.partialorder %v5486, 8.507059e+37
      %v5488 = vand.u32 %v3407, 2147483648
      %v5489 = vor.u32 1.1754944e-38, %v5488
      %v5490 = vsel %vm5487, %v5489, %v5485
      %v5491 = vmul.f32 1.0, %v5490
      %v5492 = vrcp.pop %v3408
      %v5493 = vmul.f32 %v3408, %v5492
      %v5494 = vsub.f32 1.0, %v5493
      %v5495 = vmul.f32 %v5492, %v5494
      %v5496 = vadd.f32 %v5492, %v5495
      %vm5497 = vweird.f32 %v3408
      %vm5498 = vweird.f32 %v5492
      %vm5499 = vmor %vm5497, %vm5498
      %v5500 = vsel %vm5499, %v5492, %v5496
      %v5501 = vand.u32 2147483647, %v3408
      %vm5502 = vcmp.eq.f32.partialorder %v5501, 8.507059e+37
      %v5503 = vand.u32 %v3408, 2147483648
      %v5504 = vor.u32 1.1754944e-38, %v5503
      %v5505 = vsel %vm5502, %v5504, %v5500
      %v5506 = vmul.f32 1.0, %v5505
      %v5507 = vrcp.pop %v3409
      %v5508 = vmul.f32 %v3409, %v5507
      %v5509 = vsub.f32 1.0, %v5508
      %v5510 = vmul.f32 %v5507, %v5509
      %v5511 = vadd.f32 %v5507, %v5510
      %vm5512 = vweird.f32 %v3409
      %vm5513 = vweird.f32 %v5507
      %vm5514 = vmor %vm5512, %vm5513
      %v5515 = vsel %vm5514, %v5507, %v5511
      %v5516 = vand.u32 2147483647, %v3409
      %vm5517 = vcmp.eq.f32.partialorder %v5516, 8.507059e+37
      %v5518 = vand.u32 %v3409, 2147483648
      %v5519 = vor.u32 1.1754944e-38, %v5518
      %v5520 = vsel %vm5517, %v5519, %v5515
      %v5521 = vmul.f32 1.0, %v5520
      %v5522 = vrcp.pop %v3410
      %v5523 = vmul.f32 %v3410, %v5522
      %v5524 = vsub.f32 1.0, %v5523
      %v5525 = vmul.f32 %v5522, %v5524
      %v5526 = vadd.f32 %v5522, %v5525
      %vm5527 = vweird.f32 %v3410
      %vm5528 = vweird.f32 %v5522
      %vm5529 = vmor %vm5527, %vm5528
      %v5530 = vsel %vm5529, %v5522, %v5526
      %v5531 = vand.u32 2147483647, %v3410
      %vm5532 = vcmp.eq.f32.partialorder %v5531, 8.507059e+37
      %v5533 = vand.u32 %v3410, 2147483648
      %v5534 = vor.u32 1.1754944e-38, %v5533
      %v5535 = vsel %vm5532, %v5534, %v5530
      %v5536 = vmul.f32 1.0, %v5535
      %v5537 = vrcp.pop %v3411
      %v5538 = vmul.f32 %v3411, %v5537
      %v5539 = vsub.f32 1.0, %v5538
      %v5540 = vmul.f32 %v5537, %v5539
      %v5541 = vadd.f32 %v5537, %v5540
      %vm5542 = vweird.f32 %v3411
      %vm5543 = vweird.f32 %v5537
      %vm5544 = vmor %vm5542, %vm5543
      %v5545 = vsel %vm5544, %v5537, %v5541
      %v5546 = vand.u32 2147483647, %v3411
      %vm5547 = vcmp.eq.f32.partialorder %v5546, 8.507059e+37
      %v5548 = vand.u32 %v3411, 2147483648
      %v5549 = vor.u32 1.1754944e-38, %v5548
      %v5550 = vsel %vm5547, %v5549, %v5545
      %v5551 = vmul.f32 1.0, %v5550
      %v5552 = vrcp.pop %v3412
      %v5553 = vmul.f32 %v3412, %v5552
      %v5554 = vsub.f32 1.0, %v5553
      %v5555 = vmul.f32 %v5552, %v5554
      %v5556 = vadd.f32 %v5552, %v5555
      %vm5557 = vweird.f32 %v3412
      %vm5558 = vweird.f32 %v5552
      %vm5559 = vmor %vm5557, %vm5558
      %v5560 = vsel %vm5559, %v5552, %v5556
      %v5561 = vand.u32 2147483647, %v3412
      %vm5562 = vcmp.eq.f32.partialorder %v5561, 8.507059e+37
      %v5563 = vand.u32 %v3412, 2147483648
      %v5564 = vor.u32 1.1754944e-38, %v5563
      %v5565 = vsel %vm5562, %v5564, %v5560
      %v5566 = vmul.f32 1.0, %v5565
      %v5567 = vrcp.pop %v3413
      %v5568 = vmul.f32 %v3413, %v5567
      %v5569 = vsub.f32 1.0, %v5568
      %v5570 = vmul.f32 %v5567, %v5569
      %v5571 = vadd.f32 %v5567, %v5570
      %vm5572 = vweird.f32 %v3413
      %vm5573 = vweird.f32 %v5567
      %vm5574 = vmor %vm5572, %vm5573
      %v5575 = vsel %vm5574, %v5567, %v5571
      %v5576 = vand.u32 2147483647, %v3413
      %vm5577 = vcmp.eq.f32.partialorder %v5576, 8.507059e+37
      %v5578 = vand.u32 %v3413, 2147483648
      %v5579 = vor.u32 1.1754944e-38, %v5578
      %v5580 = vsel %vm5577, %v5579, %v5575
      %v5581 = vmul.f32 1.0, %v5580
      %v5582 = vrcp.pop %v3414
      %v5583 = vmul.f32 %v3414, %v5582
      %v5584 = vsub.f32 1.0, %v5583
      %v5585 = vmul.f32 %v5582, %v5584
      %v5586 = vadd.f32 %v5582, %v5585
      %vm5587 = vweird.f32 %v3414
      %vm5588 = vweird.f32 %v5582
      %vm5589 = vmor %vm5587, %vm5588
      %v5590 = vsel %vm5589, %v5582, %v5586
      %v5591 = vand.u32 2147483647, %v3414
      %vm5592 = vcmp.eq.f32.partialorder %v5591, 8.507059e+37
      %v5593 = vand.u32 %v3414, 2147483648
      %v5594 = vor.u32 1.1754944e-38, %v5593
      %v5595 = vsel %vm5592, %v5594, %v5590
      %v5596 = vmul.f32 1.0, %v5595
      %v5597 = vrcp.pop %v3415
      %v5598 = vmul.f32 %v3415, %v5597
      %v5599 = vsub.f32 1.0, %v5598
      %v5600 = vmul.f32 %v5597, %v5599
      %v5601 = vadd.f32 %v5597, %v5600
      %vm5602 = vweird.f32 %v3415
      %vm5603 = vweird.f32 %v5597
      %vm5604 = vmor %vm5602, %vm5603
      %v5605 = vsel %vm5604, %v5597, %v5601
      %v5606 = vand.u32 2147483647, %v3415
      %vm5607 = vcmp.eq.f32.partialorder %v5606, 8.507059e+37
      %v5608 = vand.u32 %v3415, 2147483648
      %v5609 = vor.u32 1.1754944e-38, %v5608
      %v5610 = vsel %vm5607, %v5609, %v5605
      %v5611 = vmul.f32 1.0, %v5610
      %v5612 = vrcp.pop %v3416
      %v5613 = vmul.f32 %v3416, %v5612
      %v5614 = vsub.f32 1.0, %v5613
      %v5615 = vmul.f32 %v5612, %v5614
      %v5616 = vadd.f32 %v5612, %v5615
      %vm5617 = vweird.f32 %v3416
      %vm5618 = vweird.f32 %v5612
      %vm5619 = vmor %vm5617, %vm5618
      %v5620 = vsel %vm5619, %v5612, %v5616
      %v5621 = vand.u32 2147483647, %v3416
      %vm5622 = vcmp.eq.f32.partialorder %v5621, 8.507059e+37
      %v5623 = vand.u32 %v3416, 2147483648
      %v5624 = vor.u32 1.1754944e-38, %v5623
      %v5625 = vsel %vm5622, %v5624, %v5620
      %v5626 = vmul.f32 1.0, %v5625
      %v5627 = vrcp.pop %v3417
      %v5628 = vmul.f32 %v3417, %v5627
      %v5629 = vsub.f32 1.0, %v5628
      %v5630 = vmul.f32 %v5627, %v5629
      %v5631 = vadd.f32 %v5627, %v5630
      %vm5632 = vweird.f32 %v3417
      %vm5633 = vweird.f32 %v5627
      %vm5634 = vmor %vm5632, %vm5633
      %v5635 = vsel %vm5634, %v5627, %v5631
      %v5636 = vand.u32 2147483647, %v3417
      %vm5637 = vcmp.eq.f32.partialorder %v5636, 8.507059e+37
      %v5638 = vand.u32 %v3417, 2147483648
      %v5639 = vor.u32 1.1754944e-38, %v5638
      %v5640 = vsel %vm5637, %v5639, %v5635
      %v5641 = vmul.f32 1.0, %v5640
      %v5642 = vrcp.pop %v3418
      %v5643 = vmul.f32 %v3418, %v5642
      %v5644 = vsub.f32 1.0, %v5643
      %v5645 = vmul.f32 %v5642, %v5644
      %v5646 = vadd.f32 %v5642, %v5645
      %vm5647 = vweird.f32 %v3418
      %vm5648 = vweird.f32 %v5642
      %vm5649 = vmor %vm5647, %vm5648
      %v5650 = vsel %vm5649, %v5642, %v5646
      %v5651 = vand.u32 2147483647, %v3418
      %vm5652 = vcmp.eq.f32.partialorder %v5651, 8.507059e+37
      %v5653 = vand.u32 %v3418, 2147483648
      %v5654 = vor.u32 1.1754944e-38, %v5653
      %v5655 = vsel %vm5652, %v5654, %v5650
      %v5656 = vmul.f32 1.0, %v5655
      %v5657 = vrcp.pop %v3419
      %v5658 = vmul.f32 %v3419, %v5657
      %v5659 = vsub.f32 1.0, %v5658
      %v5660 = vmul.f32 %v5657, %v5659
      %v5661 = vadd.f32 %v5657, %v5660
      %vm5662 = vweird.f32 %v3419
      %vm5663 = vweird.f32 %v5657
      %vm5664 = vmor %vm5662, %vm5663
      %v5665 = vsel %vm5664, %v5657, %v5661
      %v5666 = vand.u32 2147483647, %v3419
      %vm5667 = vcmp.eq.f32.partialorder %v5666, 8.507059e+37
      %v5668 = vand.u32 %v3419, 2147483648
      %v5669 = vor.u32 1.1754944e-38, %v5668
      %v5670 = vsel %vm5667, %v5669, %v5665
      %v5671 = vmul.f32 1.0, %v5670
      %v5672 = vrcp.pop %v3420
      %v5673 = vmul.f32 %v3420, %v5672
      %v5674 = vsub.f32 1.0, %v5673
      %v5675 = vmul.f32 %v5672, %v5674
      %v5676 = vadd.f32 %v5672, %v5675
      %vm5677 = vweird.f32 %v3420
      %vm5678 = vweird.f32 %v5672
      %vm5679 = vmor %vm5677, %vm5678
      %v5680 = vsel %vm5679, %v5672, %v5676
      %v5681 = vand.u32 2147483647, %v3420
      %vm5682 = vcmp.eq.f32.partialorder %v5681, 8.507059e+37
      %v5683 = vand.u32 %v3420, 2147483648
      %v5684 = vor.u32 1.1754944e-38, %v5683
      %v5685 = vsel %vm5682, %v5684, %v5680
      %v5686 = vmul.f32 1.0, %v5685
      %v5687 = vrcp.pop %v3421
      %v5688 = vmul.f32 %v3421, %v5687
      %v5689 = vsub.f32 1.0, %v5688
      %v5690 = vmul.f32 %v5687, %v5689
      %v5691 = vadd.f32 %v5687, %v5690
      %vm5692 = vweird.f32 %v3421
      %vm5693 = vweird.f32 %v5687
      %vm5694 = vmor %vm5692, %vm5693
      %v5695 = vsel %vm5694, %v5687, %v5691
      %v5696 = vand.u32 2147483647, %v3421
      %vm5697 = vcmp.eq.f32.partialorder %v5696, 8.507059e+37
      %v5698 = vand.u32 %v3421, 2147483648
      %v5699 = vor.u32 1.1754944e-38, %v5698
      %v5700 = vsel %vm5697, %v5699, %v5695
      %v5701 = vmul.f32 1.0, %v5700
      %v5702 = vrcp.pop %v3422
      %v5703 = vmul.f32 %v3422, %v5702
      %v5704 = vsub.f32 1.0, %v5703
      %v5705 = vmul.f32 %v5702, %v5704
      %v5706 = vadd.f32 %v5702, %v5705
      %vm5707 = vweird.f32 %v3422
      %vm5708 = vweird.f32 %v5702
      %vm5709 = vmor %vm5707, %vm5708
      %v5710 = vsel %vm5709, %v5702, %v5706
      %v5711 = vand.u32 2147483647, %v3422
      %vm5712 = vcmp.eq.f32.partialorder %v5711, 8.507059e+37
      %v5713 = vand.u32 %v3422, 2147483648
      %v5714 = vor.u32 1.1754944e-38, %v5713
      %v5715 = vsel %vm5712, %v5714, %v5710
      %v5716 = vmul.f32 1.0, %v5715
      %v5717 = vrcp.pop %v3423
      %v5718 = vmul.f32 %v3423, %v5717
      %v5719 = vsub.f32 1.0, %v5718
      %v5720 = vmul.f32 %v5717, %v5719
      %v5721 = vadd.f32 %v5717, %v5720
      %vm5722 = vweird.f32 %v3423
      %vm5723 = vweird.f32 %v5717
      %vm5724 = vmor %vm5722, %vm5723
      %v5725 = vsel %vm5724, %v5717, %v5721
      %v5726 = vand.u32 2147483647, %v3423
      %vm5727 = vcmp.eq.f32.partialorder %v5726, 8.507059e+37
      %v5728 = vand.u32 %v3423, 2147483648
      %v5729 = vor.u32 1.1754944e-38, %v5728
      %v5730 = vsel %vm5727, %v5729, %v5725
      %v5731 = vmul.f32 1.0, %v5730
      %v5732 = vrcp.pop %v3424
      %v5733 = vmul.f32 %v3424, %v5732
      %v5734 = vsub.f32 1.0, %v5733
      %v5735 = vmul.f32 %v5732, %v5734
      %v5736 = vadd.f32 %v5732, %v5735
      %vm5737 = vweird.f32 %v3424
      %vm5738 = vweird.f32 %v5732
      %vm5739 = vmor %vm5737, %vm5738
      %v5740 = vsel %vm5739, %v5732, %v5736
      %v5741 = vand.u32 2147483647, %v3424
      %vm5742 = vcmp.eq.f32.partialorder %v5741, 8.507059e+37
      %v5743 = vand.u32 %v3424, 2147483648
      %v5744 = vor.u32 1.1754944e-38, %v5743
      %v5745 = vsel %vm5742, %v5744, %v5740
      %v5746 = vmul.f32 1.0, %v5745
      %v5747 = vrcp.pop %v3425
      %v5748 = vmul.f32 %v3425, %v5747
      %v5749 = vsub.f32 1.0, %v5748
      %v5750 = vmul.f32 %v5747, %v5749
      %v5751 = vadd.f32 %v5747, %v5750
      %vm5752 = vweird.f32 %v3425
      %vm5753 = vweird.f32 %v5747
      %vm5754 = vmor %vm5752, %vm5753
      %v5755 = vsel %vm5754, %v5747, %v5751
      %v5756 = vand.u32 2147483647, %v3425
      %vm5757 = vcmp.eq.f32.partialorder %v5756, 8.507059e+37
      %v5758 = vand.u32 %v3425, 2147483648
      %v5759 = vor.u32 1.1754944e-38, %v5758
      %v5760 = vsel %vm5757, %v5759, %v5755
      %v5761 = vmul.f32 1.0, %v5760
      %v5762 = vrcp.pop %v3426
      %v5763 = vmul.f32 %v3426, %v5762
      %v5764 = vsub.f32 1.0, %v5763
      %v5765 = vmul.f32 %v5762, %v5764
      %v5766 = vadd.f32 %v5762, %v5765
      %vm5767 = vweird.f32 %v3426
      %vm5768 = vweird.f32 %v5762
      %vm5769 = vmor %vm5767, %vm5768
      %v5770 = vsel %vm5769, %v5762, %v5766
      %v5771 = vand.u32 2147483647, %v3426
      %vm5772 = vcmp.eq.f32.partialorder %v5771, 8.507059e+37
      %v5773 = vand.u32 %v3426, 2147483648
      %v5774 = vor.u32 1.1754944e-38, %v5773
      %v5775 = vsel %vm5772, %v5774, %v5770
      %v5776 = vmul.f32 1.0, %v5775
      %v5777 = vrcp.pop %v3427
      %v5778 = vmul.f32 %v3427, %v5777
      %v5779 = vsub.f32 1.0, %v5778
      %v5780 = vmul.f32 %v5777, %v5779
      %v5781 = vadd.f32 %v5777, %v5780
      %vm5782 = vweird.f32 %v3427
      %vm5783 = vweird.f32 %v5777
      %vm5784 = vmor %vm5782, %vm5783
      %v5785 = vsel %vm5784, %v5777, %v5781
      %v5786 = vand.u32 2147483647, %v3427
      %vm5787 = vcmp.eq.f32.partialorder %v5786, 8.507059e+37
      %v5788 = vand.u32 %v3427, 2147483648
      %v5789 = vor.u32 1.1754944e-38, %v5788
      %v5790 = vsel %vm5787, %v5789, %v5785
      %v5791 = vmul.f32 1.0, %v5790
      %v5792 = vrcp.pop %v3428
      %v5793 = vmul.f32 %v3428, %v5792
      %v5794 = vsub.f32 1.0, %v5793
      %v5795 = vmul.f32 %v5792, %v5794
      %v5796 = vadd.f32 %v5792, %v5795
      %vm5797 = vweird.f32 %v3428
      %vm5798 = vweird.f32 %v5792
      %vm5799 = vmor %vm5797, %vm5798
      %v5800 = vsel %vm5799, %v5792, %v5796
      %v5801 = vand.u32 2147483647, %v3428
      %vm5802 = vcmp.eq.f32.partialorder %v5801, 8.507059e+37
      %v5803 = vand.u32 %v3428, 2147483648
      %v5804 = vor.u32 1.1754944e-38, %v5803
      %v5805 = vsel %vm5802, %v5804, %v5800
      %v5806 = vmul.f32 1.0, %v5805
      %v5807 = vrcp.pop %v3429
      %v5808 = vmul.f32 %v3429, %v5807
      %v5809 = vsub.f32 1.0, %v5808
      %v5810 = vmul.f32 %v5807, %v5809
      %v5811 = vadd.f32 %v5807, %v5810
      %vm5812 = vweird.f32 %v3429
      %vm5813 = vweird.f32 %v5807
      %vm5814 = vmor %vm5812, %vm5813
      %v5815 = vsel %vm5814, %v5807, %v5811
      %v5816 = vand.u32 2147483647, %v3429
      %vm5817 = vcmp.eq.f32.partialorder %v5816, 8.507059e+37
      %v5818 = vand.u32 %v3429, 2147483648
      %v5819 = vor.u32 1.1754944e-38, %v5818
      %v5820 = vsel %vm5817, %v5819, %v5815
      %v5821 = vmul.f32 1.0, %v5820
      %v5822 = vrcp.pop %v3430
      %v5823 = vmul.f32 %v3430, %v5822
      %v5824 = vsub.f32 1.0, %v5823
      %v5825 = vmul.f32 %v5822, %v5824
      %v5826 = vadd.f32 %v5822, %v5825
      %vm5827 = vweird.f32 %v3430
      %vm5828 = vweird.f32 %v5822
      %vm5829 = vmor %vm5827, %vm5828
      %v5830 = vsel %vm5829, %v5822, %v5826
      %v5831 = vand.u32 2147483647, %v3430
      %vm5832 = vcmp.eq.f32.partialorder %v5831, 8.507059e+37
      %v5833 = vand.u32 %v3430, 2147483648
      %v5834 = vor.u32 1.1754944e-38, %v5833
      %v5835 = vsel %vm5832, %v5834, %v5830
      %v5836 = vmul.f32 1.0, %v5835
      %v5837 = vrcp.pop %v3431
      %v5838 = vmul.f32 %v3431, %v5837
      %v5839 = vsub.f32 1.0, %v5838
      %v5840 = vmul.f32 %v5837, %v5839
      %v5841 = vadd.f32 %v5837, %v5840
      %vm5842 = vweird.f32 %v3431
      %vm5843 = vweird.f32 %v5837
      %vm5844 = vmor %vm5842, %vm5843
      %v5845 = vsel %vm5844, %v5837, %v5841
      %v5846 = vand.u32 2147483647, %v3431
      %vm5847 = vcmp.eq.f32.partialorder %v5846, 8.507059e+37
      %v5848 = vand.u32 %v3431, 2147483648
      %v5849 = vor.u32 1.1754944e-38, %v5848
      %v5850 = vsel %vm5847, %v5849, %v5845
      %v5851 = vmul.f32 1.0, %v5850
      %v5852 = vrcp.pop %v3432
      %v5853 = vmul.f32 %v3432, %v5852
      %v5854 = vsub.f32 1.0, %v5853
      %v5855 = vmul.f32 %v5852, %v5854
      %v5856 = vadd.f32 %v5852, %v5855
      %vm5857 = vweird.f32 %v3432
      %vm5858 = vweird.f32 %v5852
      %vm5859 = vmor %vm5857, %vm5858
      %v5860 = vsel %vm5859, %v5852, %v5856
      %v5861 = vand.u32 2147483647, %v3432
      %vm5862 = vcmp.eq.f32.partialorder %v5861, 8.507059e+37
      %v5863 = vand.u32 %v3432, 2147483648
      %v5864 = vor.u32 1.1754944e-38, %v5863
      %v5865 = vsel %vm5862, %v5864, %v5860
      %v5866 = vmul.f32 1.0, %v5865
      %v5867 = vrcp.pop %v3433
      %v5868 = vmul.f32 %v3433, %v5867
      %v5869 = vsub.f32 1.0, %v5868
      %v5870 = vmul.f32 %v5867, %v5869
      %v5871 = vadd.f32 %v5867, %v5870
      %vm5872 = vweird.f32 %v3433
      %vm5873 = vweird.f32 %v5867
      %vm5874 = vmor %vm5872, %vm5873
      %v5875 = vsel %vm5874, %v5867, %v5871
      %v5876 = vand.u32 2147483647, %v3433
      %vm5877 = vcmp.eq.f32.partialorder %v5876, 8.507059e+37
      %v5878 = vand.u32 %v3433, 2147483648
      %v5879 = vor.u32 1.1754944e-38, %v5878
      %v5880 = vsel %vm5877, %v5879, %v5875
      %v5881 = vmul.f32 1.0, %v5880
      %v5882 = vrcp.pop %v3434
      %v5883 = vmul.f32 %v3434, %v5882
      %v5884 = vsub.f32 1.0, %v5883
      %v5885 = vmul.f32 %v5882, %v5884
      %v5886 = vadd.f32 %v5882, %v5885
      %vm5887 = vweird.f32 %v3434
      %vm5888 = vweird.f32 %v5882
      %vm5889 = vmor %vm5887, %vm5888
      %v5890 = vsel %vm5889, %v5882, %v5886
      %v5891 = vand.u32 2147483647, %v3434
      %vm5892 = vcmp.eq.f32.partialorder %v5891, 8.507059e+37
      %v5893 = vand.u32 %v3434, 2147483648
      %v5894 = vor.u32 1.1754944e-38, %v5893
      %v5895 = vsel %vm5892, %v5894, %v5890
      %v5896 = vmul.f32 1.0, %v5895
      %v5897 = vrcp.pop %v3435
      %v5898 = vmul.f32 %v3435, %v5897
      %v5899 = vsub.f32 1.0, %v5898
      %v5900 = vmul.f32 %v5897, %v5899
      %v5901 = vadd.f32 %v5897, %v5900
      %vm5902 = vweird.f32 %v3435
      %vm5903 = vweird.f32 %v5897
      %vm5904 = vmor %vm5902, %vm5903
      %v5905 = vsel %vm5904, %v5897, %v5901
      %v5906 = vand.u32 2147483647, %v3435
      %vm5907 = vcmp.eq.f32.partialorder %v5906, 8.507059e+37
      %v5908 = vand.u32 %v3435, 2147483648
      %v5909 = vor.u32 1.1754944e-38, %v5908
      %v5910 = vsel %vm5907, %v5909, %v5905
      %v5911 = vmul.f32 1.0, %v5910
      %v5912 = vrcp.pop %v3436
      %v5913 = vmul.f32 %v3436, %v5912
      %v5914 = vsub.f32 1.0, %v5913
      %v5915 = vmul.f32 %v5912, %v5914
      %v5916 = vadd.f32 %v5912, %v5915
      %vm5917 = vweird.f32 %v3436
      %vm5918 = vweird.f32 %v5912
      %vm5919 = vmor %vm5917, %vm5918
      %v5920 = vsel %vm5919, %v5912, %v5916
      %v5921 = vand.u32 2147483647, %v3436
      %vm5922 = vcmp.eq.f32.partialorder %v5921, 8.507059e+37
      %v5923 = vand.u32 %v3436, 2147483648
      %v5924 = vor.u32 1.1754944e-38, %v5923
      %v5925 = vsel %vm5922, %v5924, %v5920
      %v5926 = vmul.f32 1.0, %v5925
      %v5927 = vrcp.pop %v3437
      %v5928 = vmul.f32 %v3437, %v5927
      %v5929 = vsub.f32 1.0, %v5928
      %v5930 = vmul.f32 %v5927, %v5929
      %v5931 = vadd.f32 %v5927, %v5930
      %vm5932 = vweird.f32 %v3437
      %vm5933 = vweird.f32 %v5927
      %vm5934 = vmor %vm5932, %vm5933
      %v5935 = vsel %vm5934, %v5927, %v5931
      %v5936 = vand.u32 2147483647, %v3437
      %vm5937 = vcmp.eq.f32.partialorder %v5936, 8.507059e+37
      %v5938 = vand.u32 %v3437, 2147483648
      %v5939 = vor.u32 1.1754944e-38, %v5938
      %v5940 = vsel %vm5937, %v5939, %v5935
      %v5941 = vmul.f32 1.0, %v5940
      %v5942 = vrcp.pop %v3438
      %v5943 = vmul.f32 %v3438, %v5942
      %v5944 = vsub.f32 1.0, %v5943
      %v5945 = vmul.f32 %v5942, %v5944
      %v5946 = vadd.f32 %v5942, %v5945
      %vm5947 = vweird.f32 %v3438
      %vm5948 = vweird.f32 %v5942
      %vm5949 = vmor %vm5947, %vm5948
      %v5950 = vsel %vm5949, %v5942, %v5946
      %v5951 = vand.u32 2147483647, %v3438
      %vm5952 = vcmp.eq.f32.partialorder %v5951, 8.507059e+37
      %v5953 = vand.u32 %v3438, 2147483648
      %v5954 = vor.u32 1.1754944e-38, %v5953
      %v5955 = vsel %vm5952, %v5954, %v5950
      %v5956 = vmul.f32 1.0, %v5955
      %v5957 = vrcp.pop %v3439
      %v5958 = vmul.f32 %v3439, %v5957
      %v5959 = vsub.f32 1.0, %v5958
      %v5960 = vmul.f32 %v5957, %v5959
      %v5961 = vadd.f32 %v5957, %v5960
      %vm5962 = vweird.f32 %v3439
      %vm5963 = vweird.f32 %v5957
      %vm5964 = vmor %vm5962, %vm5963
      %v5965 = vsel %vm5964, %v5957, %v5961
      %v5966 = vand.u32 2147483647, %v3439
      %vm5967 = vcmp.eq.f32.partialorder %v5966, 8.507059e+37
      %v5968 = vand.u32 %v3439, 2147483648
      %v5969 = vor.u32 1.1754944e-38, %v5968
      %v5970 = vsel %vm5967, %v5969, %v5965
      %v5971 = vmul.f32 1.0, %v5970
      %v5972 = vrcp.pop %v3440
      %v5973 = vmul.f32 %v3440, %v5972
      %v5974 = vsub.f32 1.0, %v5973
      %v5975 = vmul.f32 %v5972, %v5974
      %v5976 = vadd.f32 %v5972, %v5975
      %vm5977 = vweird.f32 %v3440
      %vm5978 = vweird.f32 %v5972
      %vm5979 = vmor %vm5977, %vm5978
      %v5980 = vsel %vm5979, %v5972, %v5976
      %v5981 = vand.u32 2147483647, %v3440
      %vm5982 = vcmp.eq.f32.partialorder %v5981, 8.507059e+37
      %v5983 = vand.u32 %v3440, 2147483648
      %v5984 = vor.u32 1.1754944e-38, %v5983
      %v5985 = vsel %vm5982, %v5984, %v5980
      %v5986 = vmul.f32 1.0, %v5985
      %v5987 = vrcp.pop %v3441
      %v5988 = vmul.f32 %v3441, %v5987
      %v5989 = vsub.f32 1.0, %v5988
      %v5990 = vmul.f32 %v5987, %v5989
      %v5991 = vadd.f32 %v5987, %v5990
      %vm5992 = vweird.f32 %v3441
      %vm5993 = vweird.f32 %v5987
      %vm5994 = vmor %vm5992, %vm5993
      %v5995 = vsel %vm5994, %v5987, %v5991
      %v5996 = vand.u32 2147483647, %v3441
      %vm5997 = vcmp.eq.f32.partialorder %v5996, 8.507059e+37
      %v5998 = vand.u32 %v3441, 2147483648
      %v5999 = vor.u32 1.1754944e-38, %v5998
      %v6000 = vsel %vm5997, %v5999, %v5995
      %v6001 = vmul.f32 1.0, %v6000
      %v6002 = vrcp.pop %v3442
      %v6003 = vmul.f32 %v3442, %v6002
      %v6004 = vsub.f32 1.0, %v6003
      %v6005 = vmul.f32 %v6002, %v6004
      %v6006 = vadd.f32 %v6002, %v6005
      %vm6007 = vweird.f32 %v3442
      %vm6008 = vweird.f32 %v6002
      %vm6009 = vmor %vm6007, %vm6008
      %v6010 = vsel %vm6009, %v6002, %v6006
      %v6011 = vand.u32 2147483647, %v3442
      %vm6012 = vcmp.eq.f32.partialorder %v6011, 8.507059e+37
      %v6013 = vand.u32 %v3442, 2147483648
      %v6014 = vor.u32 1.1754944e-38, %v6013
      %v6015 = vsel %vm6012, %v6014, %v6010
      %v6016 = vmul.f32 1.0, %v6015
      %v6017 = vrcp.pop %v3443
      %v6018 = vmul.f32 %v3443, %v6017
      %v6019 = vsub.f32 1.0, %v6018
      %v6020 = vmul.f32 %v6017, %v6019
      %v6021 = vadd.f32 %v6017, %v6020
      %vm6022 = vweird.f32 %v3443
      %vm6023 = vweird.f32 %v6017
      %vm6024 = vmor %vm6022, %vm6023
      %v6025 = vsel %vm6024, %v6017, %v6021
      %v6026 = vand.u32 2147483647, %v3443
      %vm6027 = vcmp.eq.f32.partialorder %v6026, 8.507059e+37
      %v6028 = vand.u32 %v3443, 2147483648
      %v6029 = vor.u32 1.1754944e-38, %v6028
      %v6030 = vsel %vm6027, %v6029, %v6025
      %v6031 = vmul.f32 1.0, %v6030
      %v6032 = vrcp.pop %v3444
      %v6033 = vmul.f32 %v3444, %v6032
      %v6034 = vsub.f32 1.0, %v6033
      %v6035 = vmul.f32 %v6032, %v6034
      %v6036 = vadd.f32 %v6032, %v6035
      %vm6037 = vweird.f32 %v3444
      %vm6038 = vweird.f32 %v6032
      %vm6039 = vmor %vm6037, %vm6038
      %v6040 = vsel %vm6039, %v6032, %v6036
      %v6041 = vand.u32 2147483647, %v3444
      %vm6042 = vcmp.eq.f32.partialorder %v6041, 8.507059e+37
      %v6043 = vand.u32 %v3444, 2147483648
      %v6044 = vor.u32 1.1754944e-38, %v6043
      %v6045 = vsel %vm6042, %v6044, %v6040
      %v6046 = vmul.f32 1.0, %v6045
      %v6047 = vrcp.pop %v3445
      %v6048 = vmul.f32 %v3445, %v6047
      %v6049 = vsub.f32 1.0, %v6048
      %v6050 = vmul.f32 %v6047, %v6049
      %v6051 = vadd.f32 %v6047, %v6050
      %vm6052 = vweird.f32 %v3445
      %vm6053 = vweird.f32 %v6047
      %vm6054 = vmor %vm6052, %vm6053
      %v6055 = vsel %vm6054, %v6047, %v6051
      %v6056 = vand.u32 2147483647, %v3445
      %vm6057 = vcmp.eq.f32.partialorder %v6056, 8.507059e+37
      %v6058 = vand.u32 %v3445, 2147483648
      %v6059 = vor.u32 1.1754944e-38, %v6058
      %v6060 = vsel %vm6057, %v6059, %v6055
      %v6061 = vmul.f32 1.0, %v6060
      %v6062 = vrcp.pop %v3446
      %v6063 = vmul.f32 %v3446, %v6062
      %v6064 = vsub.f32 1.0, %v6063
      %v6065 = vmul.f32 %v6062, %v6064
      %v6066 = vadd.f32 %v6062, %v6065
      %vm6067 = vweird.f32 %v3446
      %vm6068 = vweird.f32 %v6062
      %vm6069 = vmor %vm6067, %vm6068
      %v6070 = vsel %vm6069, %v6062, %v6066
      %v6071 = vand.u32 2147483647, %v3446
      %vm6072 = vcmp.eq.f32.partialorder %v6071, 8.507059e+37
      %v6073 = vand.u32 %v3446, 2147483648
      %v6074 = vor.u32 1.1754944e-38, %v6073
      %v6075 = vsel %vm6072, %v6074, %v6070
      %v6076 = vmul.f32 1.0, %v6075
      %v6077 = vrcp.pop %v3447
      %v6078 = vmul.f32 %v3447, %v6077
      %v6079 = vsub.f32 1.0, %v6078
      %v6080 = vmul.f32 %v6077, %v6079
      %v6081 = vadd.f32 %v6077, %v6080
      %vm6082 = vweird.f32 %v3447
      %vm6083 = vweird.f32 %v6077
      %vm6084 = vmor %vm6082, %vm6083
      %v6085 = vsel %vm6084, %v6077, %v6081
      %v6086 = vand.u32 2147483647, %v3447
      %vm6087 = vcmp.eq.f32.partialorder %v6086, 8.507059e+37
      %v6088 = vand.u32 %v3447, 2147483648
      %v6089 = vor.u32 1.1754944e-38, %v6088
      %v6090 = vsel %vm6087, %v6089, %v6085
      %v6091 = vmul.f32 1.0, %v6090
      %v6092 = vrcp.pop %v3448
      %v6093 = vmul.f32 %v3448, %v6092
      %v6094 = vsub.f32 1.0, %v6093
      %v6095 = vmul.f32 %v6092, %v6094
      %v6096 = vadd.f32 %v6092, %v6095
      %vm6097 = vweird.f32 %v3448
      %vm6098 = vweird.f32 %v6092
      %vm6099 = vmor %vm6097, %vm6098
      %v6100 = vsel %vm6099, %v6092, %v6096
      %v6101 = vand.u32 2147483647, %v3448
      %vm6102 = vcmp.eq.f32.partialorder %v6101, 8.507059e+37
      %v6103 = vand.u32 %v3448, 2147483648
      %v6104 = vor.u32 1.1754944e-38, %v6103
      %v6105 = vsel %vm6102, %v6104, %v6100
      %v6106 = vmul.f32 1.0, %v6105
      %v6107 = vrcp.pop %v3449
      %v6108 = vmul.f32 %v3449, %v6107
      %v6109 = vsub.f32 1.0, %v6108
      %v6110 = vmul.f32 %v6107, %v6109
      %v6111 = vadd.f32 %v6107, %v6110
      %vm6112 = vweird.f32 %v3449
      %vm6113 = vweird.f32 %v6107
      %vm6114 = vmor %vm6112, %vm6113
      %v6115 = vsel %vm6114, %v6107, %v6111
      %v6116 = vand.u32 2147483647, %v3449
      %vm6117 = vcmp.eq.f32.partialorder %v6116, 8.507059e+37
      %v6118 = vand.u32 %v3449, 2147483648
      %v6119 = vor.u32 1.1754944e-38, %v6118
      %v6120 = vsel %vm6117, %v6119, %v6115
      %v6121 = vmul.f32 1.0, %v6120
      %v6122 = vrcp.pop %v3450
      %v6123 = vmul.f32 %v3450, %v6122
      %v6124 = vsub.f32 1.0, %v6123
      %v6125 = vmul.f32 %v6122, %v6124
      %v6126 = vadd.f32 %v6122, %v6125
      %vm6127 = vweird.f32 %v3450
      %vm6128 = vweird.f32 %v6122
      %vm6129 = vmor %vm6127, %vm6128
      %v6130 = vsel %vm6129, %v6122, %v6126
      %v6131 = vand.u32 2147483647, %v3450
      %vm6132 = vcmp.eq.f32.partialorder %v6131, 8.507059e+37
      %v6133 = vand.u32 %v3450, 2147483648
      %v6134 = vor.u32 1.1754944e-38, %v6133
      %v6135 = vsel %vm6132, %v6134, %v6130
      %v6136 = vmul.f32 1.0, %v6135
      %v6137 = vrcp.pop %v3451
      %v6138 = vmul.f32 %v3451, %v6137
      %v6139 = vsub.f32 1.0, %v6138
      %v6140 = vmul.f32 %v6137, %v6139
      %v6141 = vadd.f32 %v6137, %v6140
      %vm6142 = vweird.f32 %v3451
      %vm6143 = vweird.f32 %v6137
      %vm6144 = vmor %vm6142, %vm6143
      %v6145 = vsel %vm6144, %v6137, %v6141
      %v6146 = vand.u32 2147483647, %v3451
      %vm6147 = vcmp.eq.f32.partialorder %v6146, 8.507059e+37
      %v6148 = vand.u32 %v3451, 2147483648
      %v6149 = vor.u32 1.1754944e-38, %v6148
      %v6150 = vsel %vm6147, %v6149, %v6145
      %v6151 = vmul.f32 1.0, %v6150
      %v6152 = vrcp.pop %v3452
      %v6153 = vmul.f32 %v3452, %v6152
      %v6154 = vsub.f32 1.0, %v6153
      %v6155 = vmul.f32 %v6152, %v6154
      %v6156 = vadd.f32 %v6152, %v6155
      %vm6157 = vweird.f32 %v3452
      %vm6158 = vweird.f32 %v6152
      %vm6159 = vmor %vm6157, %vm6158
      %v6160 = vsel %vm6159, %v6152, %v6156
      %v6161 = vand.u32 2147483647, %v3452
      %vm6162 = vcmp.eq.f32.partialorder %v6161, 8.507059e+37
      %v6163 = vand.u32 %v3452, 2147483648
      %v6164 = vor.u32 1.1754944e-38, %v6163
      %v6165 = vsel %vm6162, %v6164, %v6160
      %v6166 = vmul.f32 1.0, %v6165
      %v6167 = vrcp.pop %v3453
      %v6168 = vmul.f32 %v3453, %v6167
      %v6169 = vsub.f32 1.0, %v6168
      %v6170 = vmul.f32 %v6167, %v6169
      %v6171 = vadd.f32 %v6167, %v6170
      %vm6172 = vweird.f32 %v3453
      %vm6173 = vweird.f32 %v6167
      %vm6174 = vmor %vm6172, %vm6173
      %v6175 = vsel %vm6174, %v6167, %v6171
      %v6176 = vand.u32 2147483647, %v3453
      %vm6177 = vcmp.eq.f32.partialorder %v6176, 8.507059e+37
      %v6178 = vand.u32 %v3453, 2147483648
      %v6179 = vor.u32 1.1754944e-38, %v6178
      %v6180 = vsel %vm6177, %v6179, %v6175
      %v6181 = vmul.f32 1.0, %v6180
      %v6182 = vrcp.pop %v3454
      %v6183 = vmul.f32 %v3454, %v6182
      %v6184 = vsub.f32 1.0, %v6183
      %v6185 = vmul.f32 %v6182, %v6184
      %v6186 = vadd.f32 %v6182, %v6185
      %vm6187 = vweird.f32 %v3454
      %vm6188 = vweird.f32 %v6182
      %vm6189 = vmor %vm6187, %vm6188
      %v6190 = vsel %vm6189, %v6182, %v6186
      %v6191 = vand.u32 2147483647, %v3454
      %vm6192 = vcmp.eq.f32.partialorder %v6191, 8.507059e+37
      %v6193 = vand.u32 %v3454, 2147483648
      %v6194 = vor.u32 1.1754944e-38, %v6193
      %v6195 = vsel %vm6192, %v6194, %v6190
      %v6196 = vmul.f32 1.0, %v6195
      %v6197 = vrcp.pop %v3455
      %v6198 = vmul.f32 %v3455, %v6197
      %v6199 = vsub.f32 1.0, %v6198
      %v6200 = vmul.f32 %v6197, %v6199
      %v6201 = vadd.f32 %v6197, %v6200
      %vm6202 = vweird.f32 %v3455
      %vm6203 = vweird.f32 %v6197
      %vm6204 = vmor %vm6202, %vm6203
      %v6205 = vsel %vm6204, %v6197, %v6201
      %v6206 = vand.u32 2147483647, %v3455
      %vm6207 = vcmp.eq.f32.partialorder %v6206, 8.507059e+37
      %v6208 = vand.u32 %v3455, 2147483648
      %v6209 = vor.u32 1.1754944e-38, %v6208
      %v6210 = vsel %vm6207, %v6209, %v6205
      %v6211 = vmul.f32 1.0, %v6210
      %v6212 = vrcp.pop %v3456
      %v6213 = vmul.f32 %v3456, %v6212
      %v6214 = vsub.f32 1.0, %v6213
      %v6215 = vmul.f32 %v6212, %v6214
      %v6216 = vadd.f32 %v6212, %v6215
      %vm6217 = vweird.f32 %v3456
      %vm6218 = vweird.f32 %v6212
      %vm6219 = vmor %vm6217, %vm6218
      %v6220 = vsel %vm6219, %v6212, %v6216
      %v6221 = vand.u32 2147483647, %v3456
      %vm6222 = vcmp.eq.f32.partialorder %v6221, 8.507059e+37
      %v6223 = vand.u32 %v3456, 2147483648
      %v6224 = vor.u32 1.1754944e-38, %v6223
      %v6225 = vsel %vm6222, %v6224, %v6220
      %v6226 = vmul.f32 1.0, %v6225
      %v6227 = vrcp.pop %v3457
      %v6228 = vmul.f32 %v3457, %v6227
      %v6229 = vsub.f32 1.0, %v6228
      %v6230 = vmul.f32 %v6227, %v6229
      %v6231 = vadd.f32 %v6227, %v6230
      %vm6232 = vweird.f32 %v3457
      %vm6233 = vweird.f32 %v6227
      %vm6234 = vmor %vm6232, %vm6233
      %v6235 = vsel %vm6234, %v6227, %v6231
      %v6236 = vand.u32 2147483647, %v3457
      %vm6237 = vcmp.eq.f32.partialorder %v6236, 8.507059e+37
      %v6238 = vand.u32 %v3457, 2147483648
      %v6239 = vor.u32 1.1754944e-38, %v6238
      %v6240 = vsel %vm6237, %v6239, %v6235
      %v6241 = vmul.f32 1.0, %v6240
      %v6242 = vrcp.pop %v3458
      %v6243 = vmul.f32 %v3458, %v6242
      %v6244 = vsub.f32 1.0, %v6243
      %v6245 = vmul.f32 %v6242, %v6244
      %v6246 = vadd.f32 %v6242, %v6245
      %vm6247 = vweird.f32 %v3458
      %vm6248 = vweird.f32 %v6242
      %vm6249 = vmor %vm6247, %vm6248
      %v6250 = vsel %vm6249, %v6242, %v6246
      %v6251 = vand.u32 2147483647, %v3458
      %vm6252 = vcmp.eq.f32.partialorder %v6251, 8.507059e+37
      %v6253 = vand.u32 %v3458, 2147483648
      %v6254 = vor.u32 1.1754944e-38, %v6253
      %v6255 = vsel %vm6252, %v6254, %v6250
      %v6256 = vmul.f32 1.0, %v6255
      %v6257 = vrcp.pop %v3459
      %v6258 = vmul.f32 %v3459, %v6257
      %v6259 = vsub.f32 1.0, %v6258
      %v6260 = vmul.f32 %v6257, %v6259
      %v6261 = vadd.f32 %v6257, %v6260
      %vm6262 = vweird.f32 %v3459
      %vm6263 = vweird.f32 %v6257
      %vm6264 = vmor %vm6262, %vm6263
      %v6265 = vsel %vm6264, %v6257, %v6261
      %v6266 = vand.u32 2147483647, %v3459
      %vm6267 = vcmp.eq.f32.partialorder %v6266, 8.507059e+37
      %v6268 = vand.u32 %v3459, 2147483648
      %v6269 = vor.u32 1.1754944e-38, %v6268
      %v6270 = vsel %vm6267, %v6269, %v6265
      %v6271 = vmul.f32 1.0, %v6270
      %v6272 = vrcp.pop %v3460
      %v6273 = vmul.f32 %v3460, %v6272
      %v6274 = vsub.f32 1.0, %v6273
      %v6275 = vmul.f32 %v6272, %v6274
      %v6276 = vadd.f32 %v6272, %v6275
      %vm6277 = vweird.f32 %v3460
      %vm6278 = vweird.f32 %v6272
      %vm6279 = vmor %vm6277, %vm6278
      %v6280 = vsel %vm6279, %v6272, %v6276
      %v6281 = vand.u32 2147483647, %v3460
      %vm6282 = vcmp.eq.f32.partialorder %v6281, 8.507059e+37
      %v6283 = vand.u32 %v3460, 2147483648
      %v6284 = vor.u32 1.1754944e-38, %v6283
      %v6285 = vsel %vm6282, %v6284, %v6280
      %v6286 = vmul.f32 1.0, %v6285
      %v6287 = vrcp.pop %v3461
      %v6288 = vmul.f32 %v3461, %v6287
      %v6289 = vsub.f32 1.0, %v6288
      %v6290 = vmul.f32 %v6287, %v6289
      %v6291 = vadd.f32 %v6287, %v6290
      %vm6292 = vweird.f32 %v3461
      %vm6293 = vweird.f32 %v6287
      %vm6294 = vmor %vm6292, %vm6293
      %v6295 = vsel %vm6294, %v6287, %v6291
      %v6296 = vand.u32 2147483647, %v3461
      %vm6297 = vcmp.eq.f32.partialorder %v6296, 8.507059e+37
      %v6298 = vand.u32 %v3461, 2147483648
      %v6299 = vor.u32 1.1754944e-38, %v6298
      %v6300 = vsel %vm6297, %v6299, %v6295
      %v6301 = vmul.f32 1.0, %v6300
      %v6302 = vrcp.pop %v3462
      %v6303 = vmul.f32 %v3462, %v6302
      %v6304 = vsub.f32 1.0, %v6303
      %v6305 = vmul.f32 %v6302, %v6304
      %v6306 = vadd.f32 %v6302, %v6305
      %vm6307 = vweird.f32 %v3462
      %vm6308 = vweird.f32 %v6302
      %vm6309 = vmor %vm6307, %vm6308
      %v6310 = vsel %vm6309, %v6302, %v6306
      %v6311 = vand.u32 2147483647, %v3462
      %vm6312 = vcmp.eq.f32.partialorder %v6311, 8.507059e+37
      %v6313 = vand.u32 %v3462, 2147483648
      %v6314 = vor.u32 1.1754944e-38, %v6313
      %v6315 = vsel %vm6312, %v6314, %v6310
      %v6316 = vmul.f32 1.0, %v6315
      %v6317 = vrcp.pop %v3463
      %v6318 = vmul.f32 %v3463, %v6317
      %v6319 = vsub.f32 1.0, %v6318
      %v6320 = vmul.f32 %v6317, %v6319
      %v6321 = vadd.f32 %v6317, %v6320
      %vm6322 = vweird.f32 %v3463
      %vm6323 = vweird.f32 %v6317
      %vm6324 = vmor %vm6322, %vm6323
      %v6325 = vsel %vm6324, %v6317, %v6321
      %v6326 = vand.u32 2147483647, %v3463
      %vm6327 = vcmp.eq.f32.partialorder %v6326, 8.507059e+37
      %v6328 = vand.u32 %v3463, 2147483648
      %v6329 = vor.u32 1.1754944e-38, %v6328
      %v6330 = vsel %vm6327, %v6329, %v6325
      %v6331 = vmul.f32 1.0, %v6330
      %v6332 = vrcp.pop %v3464
      %v6333 = vmul.f32 %v3464, %v6332
      %v6334 = vsub.f32 1.0, %v6333
      %v6335 = vmul.f32 %v6332, %v6334
      %v6336 = vadd.f32 %v6332, %v6335
      %vm6337 = vweird.f32 %v3464
      %vm6338 = vweird.f32 %v6332
      %vm6339 = vmor %vm6337, %vm6338
      %v6340 = vsel %vm6339, %v6332, %v6336
      %v6341 = vand.u32 2147483647, %v3464
      %vm6342 = vcmp.eq.f32.partialorder %v6341, 8.507059e+37
      %v6343 = vand.u32 %v3464, 2147483648
      %v6344 = vor.u32 1.1754944e-38, %v6343
      %v6345 = vsel %vm6342, %v6344, %v6340
      %v6346 = vmul.f32 1.0, %v6345
      %v6347 = vrcp.pop %v3465
      %v6348 = vmul.f32 %v3465, %v6347
      %v6349 = vsub.f32 1.0, %v6348
      %v6350 = vmul.f32 %v6347, %v6349
      %v6351 = vadd.f32 %v6347, %v6350
      %vm6352 = vweird.f32 %v3465
      %vm6353 = vweird.f32 %v6347
      %vm6354 = vmor %vm6352, %vm6353
      %v6355 = vsel %vm6354, %v6347, %v6351
      %v6356 = vand.u32 2147483647, %v3465
      %vm6357 = vcmp.eq.f32.partialorder %v6356, 8.507059e+37
      %v6358 = vand.u32 %v3465, 2147483648
      %v6359 = vor.u32 1.1754944e-38, %v6358
      %v6360 = vsel %vm6357, %v6359, %v6355
      %v6361 = vmul.f32 1.0, %v6360
      %v6362 = vrcp.pop %v3466
      %v6363 = vmul.f32 %v3466, %v6362
      %v6364 = vsub.f32 1.0, %v6363
      %v6365 = vmul.f32 %v6362, %v6364
      %v6366 = vadd.f32 %v6362, %v6365
      %vm6367 = vweird.f32 %v3466
      %vm6368 = vweird.f32 %v6362
      %vm6369 = vmor %vm6367, %vm6368
      %v6370 = vsel %vm6369, %v6362, %v6366
      %v6371 = vand.u32 2147483647, %v3466
      %vm6372 = vcmp.eq.f32.partialorder %v6371, 8.507059e+37
      %v6373 = vand.u32 %v3466, 2147483648
      %v6374 = vor.u32 1.1754944e-38, %v6373
      %v6375 = vsel %vm6372, %v6374, %v6370
      %v6376 = vmul.f32 1.0, %v6375
      %v6377 = vrcp.pop %v3467
      %v6378 = vmul.f32 %v3467, %v6377
      %v6379 = vsub.f32 1.0, %v6378
      %v6380 = vmul.f32 %v6377, %v6379
      %v6381 = vadd.f32 %v6377, %v6380
      %vm6382 = vweird.f32 %v3467
      %vm6383 = vweird.f32 %v6377
      %vm6384 = vmor %vm6382, %vm6383
      %v6385 = vsel %vm6384, %v6377, %v6381
      %v6386 = vand.u32 2147483647, %v3467
      %vm6387 = vcmp.eq.f32.partialorder %v6386, 8.507059e+37
      %v6388 = vand.u32 %v3467, 2147483648
      %v6389 = vor.u32 1.1754944e-38, %v6388
      %v6390 = vsel %vm6387, %v6389, %v6385
      %v6391 = vmul.f32 1.0, %v6390
      %v6392 = vrcp.pop %v3468
      %v6393 = vmul.f32 %v3468, %v6392
      %v6394 = vsub.f32 1.0, %v6393
      %v6395 = vmul.f32 %v6392, %v6394
      %v6396 = vadd.f32 %v6392, %v6395
      %vm6397 = vweird.f32 %v3468
      %vm6398 = vweird.f32 %v6392
      %vm6399 = vmor %vm6397, %vm6398
      %v6400 = vsel %vm6399, %v6392, %v6396
      %v6401 = vand.u32 2147483647, %v3468
      %vm6402 = vcmp.eq.f32.partialorder %v6401, 8.507059e+37
      %v6403 = vand.u32 %v3468, 2147483648
      %v6404 = vor.u32 1.1754944e-38, %v6403
      %v6405 = vsel %vm6402, %v6404, %v6400
      %v6406 = vmul.f32 1.0, %v6405
      %v6407 = vrcp.pop %v3469
      %v6408 = vmul.f32 %v3469, %v6407
      %v6409 = vsub.f32 1.0, %v6408
      %v6410 = vmul.f32 %v6407, %v6409
      %v6411 = vadd.f32 %v6407, %v6410
      %vm6412 = vweird.f32 %v3469
      %vm6413 = vweird.f32 %v6407
      %vm6414 = vmor %vm6412, %vm6413
      %v6415 = vsel %vm6414, %v6407, %v6411
      %v6416 = vand.u32 2147483647, %v3469
      %vm6417 = vcmp.eq.f32.partialorder %v6416, 8.507059e+37
      %v6418 = vand.u32 %v3469, 2147483648
      %v6419 = vor.u32 1.1754944e-38, %v6418
      %v6420 = vsel %vm6417, %v6419, %v6415
      %v6421 = vmul.f32 1.0, %v6420
      %v6422 = vrcp.pop %v3470
      %v6423 = vmul.f32 %v3470, %v6422
      %v6424 = vsub.f32 1.0, %v6423
      %v6425 = vmul.f32 %v6422, %v6424
      %v6426 = vadd.f32 %v6422, %v6425
      %vm6427 = vweird.f32 %v3470
      %vm6428 = vweird.f32 %v6422
      %vm6429 = vmor %vm6427, %vm6428
      %v6430 = vsel %vm6429, %v6422, %v6426
      %v6431 = vand.u32 2147483647, %v3470
      %vm6432 = vcmp.eq.f32.partialorder %v6431, 8.507059e+37
      %v6433 = vand.u32 %v3470, 2147483648
      %v6434 = vor.u32 1.1754944e-38, %v6433
      %v6435 = vsel %vm6432, %v6434, %v6430
      %v6436 = vmul.f32 1.0, %v6435
      %v6437 = vrcp.pop %v3471
      %v6438 = vmul.f32 %v3471, %v6437
      %v6439 = vsub.f32 1.0, %v6438
      %v6440 = vmul.f32 %v6437, %v6439
      %v6441 = vadd.f32 %v6437, %v6440
      %vm6442 = vweird.f32 %v3471
      %vm6443 = vweird.f32 %v6437
      %vm6444 = vmor %vm6442, %vm6443
      %v6445 = vsel %vm6444, %v6437, %v6441
      %v6446 = vand.u32 2147483647, %v3471
      %vm6447 = vcmp.eq.f32.partialorder %v6446, 8.507059e+37
      %v6448 = vand.u32 %v3471, 2147483648
      %v6449 = vor.u32 1.1754944e-38, %v6448
      %v6450 = vsel %vm6447, %v6449, %v6445
      %v6451 = vmul.f32 1.0, %v6450
      %v6452 = vrcp.pop %v3472
      %v6453 = vmul.f32 %v3472, %v6452
      %v6454 = vsub.f32 1.0, %v6453
      %v6455 = vmul.f32 %v6452, %v6454
      %v6456 = vadd.f32 %v6452, %v6455
      %vm6457 = vweird.f32 %v3472
      %vm6458 = vweird.f32 %v6452
      %vm6459 = vmor %vm6457, %vm6458
      %v6460 = vsel %vm6459, %v6452, %v6456
      %v6461 = vand.u32 2147483647, %v3472
      %vm6462 = vcmp.eq.f32.partialorder %v6461, 8.507059e+37
      %v6463 = vand.u32 %v3472, 2147483648
      %v6464 = vor.u32 1.1754944e-38, %v6463
      %v6465 = vsel %vm6462, %v6464, %v6460
      %v6466 = vmul.f32 1.0, %v6465
      %v6467 = vrcp.pop %v3473
      %v6468 = vmul.f32 %v3473, %v6467
      %v6469 = vsub.f32 1.0, %v6468
      %v6470 = vmul.f32 %v6467, %v6469
      %v6471 = vadd.f32 %v6467, %v6470
      %vm6472 = vweird.f32 %v3473
      %vm6473 = vweird.f32 %v6467
      %vm6474 = vmor %vm6472, %vm6473
      %v6475 = vsel %vm6474, %v6467, %v6471
      %v6476 = vand.u32 2147483647, %v3473
      %vm6477 = vcmp.eq.f32.partialorder %v6476, 8.507059e+37
      %v6478 = vand.u32 %v3473, 2147483648
      %v6479 = vor.u32 1.1754944e-38, %v6478
      %v6480 = vsel %vm6477, %v6479, %v6475
      %v6481 = vmul.f32 1.0, %v6480
      %v6482 = vrcp.pop %v3474
      %v6483 = vmul.f32 %v3474, %v6482
      %v6484 = vsub.f32 1.0, %v6483
      %v6485 = vmul.f32 %v6482, %v6484
      %v6486 = vadd.f32 %v6482, %v6485
      %vm6487 = vweird.f32 %v3474
      %vm6488 = vweird.f32 %v6482
      %vm6489 = vmor %vm6487, %vm6488
      %v6490 = vsel %vm6489, %v6482, %v6486
      %v6491 = vand.u32 2147483647, %v3474
      %vm6492 = vcmp.eq.f32.partialorder %v6491, 8.507059e+37
      %v6493 = vand.u32 %v3474, 2147483648
      %v6494 = vor.u32 1.1754944e-38, %v6493
      %v6495 = vsel %vm6492, %v6494, %v6490
      %v6496 = vmul.f32 1.0, %v6495
      %v6497 = vrcp.pop %v3475
      %v6498 = vmul.f32 %v3475, %v6497
      %v6499 = vsub.f32 1.0, %v6498
      %v6500 = vmul.f32 %v6497, %v6499
      %v6501 = vadd.f32 %v6497, %v6500
      %vm6502 = vweird.f32 %v3475
      %vm6503 = vweird.f32 %v6497
      %vm6504 = vmor %vm6502, %vm6503
      %v6505 = vsel %vm6504, %v6497, %v6501
      %v6506 = vand.u32 2147483647, %v3475
      %vm6507 = vcmp.eq.f32.partialorder %v6506, 8.507059e+37
      %v6508 = vand.u32 %v3475, 2147483648
      %v6509 = vor.u32 1.1754944e-38, %v6508
      %v6510 = vsel %vm6507, %v6509, %v6505
      %v6511 = vmul.f32 1.0, %v6510
      %v6512 = vrcp.pop %v3476
      %v6513 = vmul.f32 %v3476, %v6512
      %v6514 = vsub.f32 1.0, %v6513
      %v6515 = vmul.f32 %v6512, %v6514
      %v6516 = vadd.f32 %v6512, %v6515
      %vm6517 = vweird.f32 %v3476
      %vm6518 = vweird.f32 %v6512
      %vm6519 = vmor %vm6517, %vm6518
      %v6520 = vsel %vm6519, %v6512, %v6516
      %v6521 = vand.u32 2147483647, %v3476
      %vm6522 = vcmp.eq.f32.partialorder %v6521, 8.507059e+37
      %v6523 = vand.u32 %v3476, 2147483648
      %v6524 = vor.u32 1.1754944e-38, %v6523
      %v6525 = vsel %vm6522, %v6524, %v6520
      %v6526 = vmul.f32 1.0, %v6525
      %v6527 = vrcp.pop %v3477
      %v6528 = vmul.f32 %v3477, %v6527
      %v6529 = vsub.f32 1.0, %v6528
      %v6530 = vmul.f32 %v6527, %v6529
      %v6531 = vadd.f32 %v6527, %v6530
      %vm6532 = vweird.f32 %v3477
      %vm6533 = vweird.f32 %v6527
      %vm6534 = vmor %vm6532, %vm6533
      %v6535 = vsel %vm6534, %v6527, %v6531
      %v6536 = vand.u32 2147483647, %v3477
      %vm6537 = vcmp.eq.f32.partialorder %v6536, 8.507059e+37
      %v6538 = vand.u32 %v3477, 2147483648
      %v6539 = vor.u32 1.1754944e-38, %v6538
      %v6540 = vsel %vm6537, %v6539, %v6535
      %v6541 = vmul.f32 1.0, %v6540
      %v6542 = vrcp.pop %v3478
      %v6543 = vmul.f32 %v3478, %v6542
      %v6544 = vsub.f32 1.0, %v6543
      %v6545 = vmul.f32 %v6542, %v6544
      %v6546 = vadd.f32 %v6542, %v6545
      %vm6547 = vweird.f32 %v3478
      %vm6548 = vweird.f32 %v6542
      %vm6549 = vmor %vm6547, %vm6548
      %v6550 = vsel %vm6549, %v6542, %v6546
      %v6551 = vand.u32 2147483647, %v3478
      %vm6552 = vcmp.eq.f32.partialorder %v6551, 8.507059e+37
      %v6553 = vand.u32 %v3478, 2147483648
      %v6554 = vor.u32 1.1754944e-38, %v6553
      %v6555 = vsel %vm6552, %v6554, %v6550
      %v6556 = vmul.f32 1.0, %v6555
      %v6557 = vrcp.pop %v3479
      %v6558 = vmul.f32 %v3479, %v6557
      %v6559 = vsub.f32 1.0, %v6558
      %v6560 = vmul.f32 %v6557, %v6559
      %v6561 = vadd.f32 %v6557, %v6560
      %vm6562 = vweird.f32 %v3479
      %vm6563 = vweird.f32 %v6557
      %vm6564 = vmor %vm6562, %vm6563
      %v6565 = vsel %vm6564, %v6557, %v6561
      %v6566 = vand.u32 2147483647, %v3479
      %vm6567 = vcmp.eq.f32.partialorder %v6566, 8.507059e+37
      %v6568 = vand.u32 %v3479, 2147483648
      %v6569 = vor.u32 1.1754944e-38, %v6568
      %v6570 = vsel %vm6567, %v6569, %v6565
      %v6571 = vmul.f32 1.0, %v6570
      %v6572 = vrcp.pop %v3480
      %v6573 = vmul.f32 %v3480, %v6572
      %v6574 = vsub.f32 1.0, %v6573
      %v6575 = vmul.f32 %v6572, %v6574
      %v6576 = vadd.f32 %v6572, %v6575
      %vm6577 = vweird.f32 %v3480
      %vm6578 = vweird.f32 %v6572
      %vm6579 = vmor %vm6577, %vm6578
      %v6580 = vsel %vm6579, %v6572, %v6576
      %v6581 = vand.u32 2147483647, %v3480
      %vm6582 = vcmp.eq.f32.partialorder %v6581, 8.507059e+37
      %v6583 = vand.u32 %v3480, 2147483648
      %v6584 = vor.u32 1.1754944e-38, %v6583
      %v6585 = vsel %vm6582, %v6584, %v6580
      %v6586 = vmul.f32 1.0, %v6585
      %v6587 = vrcp.pop %v3481
      %v6588 = vmul.f32 %v3481, %v6587
      %v6589 = vsub.f32 1.0, %v6588
      %v6590 = vmul.f32 %v6587, %v6589
      %v6591 = vadd.f32 %v6587, %v6590
      %vm6592 = vweird.f32 %v3481
      %vm6593 = vweird.f32 %v6587
      %vm6594 = vmor %vm6592, %vm6593
      %v6595 = vsel %vm6594, %v6587, %v6591
      %v6596 = vand.u32 2147483647, %v3481
      %vm6597 = vcmp.eq.f32.partialorder %v6596, 8.507059e+37
      %v6598 = vand.u32 %v3481, 2147483648
      %v6599 = vor.u32 1.1754944e-38, %v6598
      %v6600 = vsel %vm6597, %v6599, %v6595
      %v6601 = vmul.f32 1.0, %v6600
      %v6602 = vrcp.pop %v3482
      %v6603 = vmul.f32 %v3482, %v6602
      %v6604 = vsub.f32 1.0, %v6603
      %v6605 = vmul.f32 %v6602, %v6604
      %v6606 = vadd.f32 %v6602, %v6605
      %vm6607 = vweird.f32 %v3482
      %vm6608 = vweird.f32 %v6602
      %vm6609 = vmor %vm6607, %vm6608
      %v6610 = vsel %vm6609, %v6602, %v6606
      %v6611 = vand.u32 2147483647, %v3482
      %vm6612 = vcmp.eq.f32.partialorder %v6611, 8.507059e+37
      %v6613 = vand.u32 %v3482, 2147483648
      %v6614 = vor.u32 1.1754944e-38, %v6613
      %v6615 = vsel %vm6612, %v6614, %v6610
      %v6616 = vmul.f32 1.0, %v6615
      %v6617 = vrcp.pop %v3483
      %v6618 = vmul.f32 %v3483, %v6617
      %v6619 = vsub.f32 1.0, %v6618
      %v6620 = vmul.f32 %v6617, %v6619
      %v6621 = vadd.f32 %v6617, %v6620
      %vm6622 = vweird.f32 %v3483
      %vm6623 = vweird.f32 %v6617
      %vm6624 = vmor %vm6622, %vm6623
      %v6625 = vsel %vm6624, %v6617, %v6621
      %v6626 = vand.u32 2147483647, %v3483
      %vm6627 = vcmp.eq.f32.partialorder %v6626, 8.507059e+37
      %v6628 = vand.u32 %v3483, 2147483648
      %v6629 = vor.u32 1.1754944e-38, %v6628
      %v6630 = vsel %vm6627, %v6629, %v6625
      %v6631 = vmul.f32 1.0, %v6630
      %v6632 = vrcp.pop %v3484
      %v6633 = vmul.f32 %v3484, %v6632
      %v6634 = vsub.f32 1.0, %v6633
      %v6635 = vmul.f32 %v6632, %v6634
      %v6636 = vadd.f32 %v6632, %v6635
      %vm6637 = vweird.f32 %v3484
      %vm6638 = vweird.f32 %v6632
      %vm6639 = vmor %vm6637, %vm6638
      %v6640 = vsel %vm6639, %v6632, %v6636
      %v6641 = vand.u32 2147483647, %v3484
      %vm6642 = vcmp.eq.f32.partialorder %v6641, 8.507059e+37
      %v6643 = vand.u32 %v3484, 2147483648
      %v6644 = vor.u32 1.1754944e-38, %v6643
      %v6645 = vsel %vm6642, %v6644, %v6640
      %v6646 = vmul.f32 1.0, %v6645
      %v6647 = vrcp.pop %v3485
      %v6648 = vmul.f32 %v3485, %v6647
      %v6649 = vsub.f32 1.0, %v6648
      %v6650 = vmul.f32 %v6647, %v6649
      %v6651 = vadd.f32 %v6647, %v6650
      %vm6652 = vweird.f32 %v3485
      %vm6653 = vweird.f32 %v6647
      %vm6654 = vmor %vm6652, %vm6653
      %v6655 = vsel %vm6654, %v6647, %v6651
      %v6656 = vand.u32 2147483647, %v3485
      %vm6657 = vcmp.eq.f32.partialorder %v6656, 8.507059e+37
      %v6658 = vand.u32 %v3485, 2147483648
      %v6659 = vor.u32 1.1754944e-38, %v6658
      %v6660 = vsel %vm6657, %v6659, %v6655
      %v6661 = vmul.f32 1.0, %v6660
      %v6662 = vrcp.pop %v3486
      %v6663 = vmul.f32 %v3486, %v6662
      %v6664 = vsub.f32 1.0, %v6663
      %v6665 = vmul.f32 %v6662, %v6664
      %v6666 = vadd.f32 %v6662, %v6665
      %vm6667 = vweird.f32 %v3486
      %vm6668 = vweird.f32 %v6662
      %vm6669 = vmor %vm6667, %vm6668
      %v6670 = vsel %vm6669, %v6662, %v6666
      %v6671 = vand.u32 2147483647, %v3486
      %vm6672 = vcmp.eq.f32.partialorder %v6671, 8.507059e+37
      %v6673 = vand.u32 %v3486, 2147483648
      %v6674 = vor.u32 1.1754944e-38, %v6673
      %v6675 = vsel %vm6672, %v6674, %v6670
      %v6676 = vmul.f32 1.0, %v6675
      %v6677 = vrcp.pop %v3487
      %v6678 = vmul.f32 %v3487, %v6677
      %v6679 = vsub.f32 1.0, %v6678
      %v6680 = vmul.f32 %v6677, %v6679
      %v6681 = vadd.f32 %v6677, %v6680
      %vm6682 = vweird.f32 %v3487
      %vm6683 = vweird.f32 %v6677
      %vm6684 = vmor %vm6682, %vm6683
      %v6685 = vsel %vm6684, %v6677, %v6681
      %v6686 = vand.u32 2147483647, %v3487
      %vm6687 = vcmp.eq.f32.partialorder %v6686, 8.507059e+37
      %v6688 = vand.u32 %v3487, 2147483648
      %v6689 = vor.u32 1.1754944e-38, %v6688
      %v6690 = vsel %vm6687, %v6689, %v6685
      %v6691 = vmul.f32 1.0, %v6690
      %v6692 = vrcp.pop %v3488
      %v6693 = vmul.f32 %v3488, %v6692
      %v6694 = vsub.f32 1.0, %v6693
      %v6695 = vmul.f32 %v6692, %v6694
      %v6696 = vadd.f32 %v6692, %v6695
      %vm6697 = vweird.f32 %v3488
      %vm6698 = vweird.f32 %v6692
      %vm6699 = vmor %vm6697, %vm6698
      %v6700 = vsel %vm6699, %v6692, %v6696
      %v6701 = vand.u32 2147483647, %v3488
      %vm6702 = vcmp.eq.f32.partialorder %v6701, 8.507059e+37
      %v6703 = vand.u32 %v3488, 2147483648
      %v6704 = vor.u32 1.1754944e-38, %v6703
      %v6705 = vsel %vm6702, %v6704, %v6700
      %v6706 = vmul.f32 1.0, %v6705
      %v6707 = vrcp.pop %v3489
      %v6708 = vmul.f32 %v3489, %v6707
      %v6709 = vsub.f32 1.0, %v6708
      %v6710 = vmul.f32 %v6707, %v6709
      %v6711 = vadd.f32 %v6707, %v6710
      %vm6712 = vweird.f32 %v3489
      %vm6713 = vweird.f32 %v6707
      %vm6714 = vmor %vm6712, %vm6713
      %v6715 = vsel %vm6714, %v6707, %v6711
      %v6716 = vand.u32 2147483647, %v3489
      %vm6717 = vcmp.eq.f32.partialorder %v6716, 8.507059e+37
      %v6718 = vand.u32 %v3489, 2147483648
      %v6719 = vor.u32 1.1754944e-38, %v6718
      %v6720 = vsel %vm6717, %v6719, %v6715
      %v6721 = vmul.f32 1.0, %v6720
      %v6722 = vrcp.pop %v3490
      %v6723 = vmul.f32 %v3490, %v6722
      %v6724 = vsub.f32 1.0, %v6723
      %v6725 = vmul.f32 %v6722, %v6724
      %v6726 = vadd.f32 %v6722, %v6725
      %vm6727 = vweird.f32 %v3490
      %vm6728 = vweird.f32 %v6722
      %vm6729 = vmor %vm6727, %vm6728
      %v6730 = vsel %vm6729, %v6722, %v6726
      %v6731 = vand.u32 2147483647, %v3490
      %vm6732 = vcmp.eq.f32.partialorder %v6731, 8.507059e+37
      %v6733 = vand.u32 %v3490, 2147483648
      %v6734 = vor.u32 1.1754944e-38, %v6733
      %v6735 = vsel %vm6732, %v6734, %v6730
      %v6736 = vmul.f32 1.0, %v6735
      %v6737 = vrcp.pop %v3491
      %v6738 = vmul.f32 %v3491, %v6737
      %v6739 = vsub.f32 1.0, %v6738
      %v6740 = vmul.f32 %v6737, %v6739
      %v6741 = vadd.f32 %v6737, %v6740
      %vm6742 = vweird.f32 %v3491
      %vm6743 = vweird.f32 %v6737
      %vm6744 = vmor %vm6742, %vm6743
      %v6745 = vsel %vm6744, %v6737, %v6741
      %v6746 = vand.u32 2147483647, %v3491
      %vm6747 = vcmp.eq.f32.partialorder %v6746, 8.507059e+37
      %v6748 = vand.u32 %v3491, 2147483648
      %v6749 = vor.u32 1.1754944e-38, %v6748
      %v6750 = vsel %vm6747, %v6749, %v6745
      %v6751 = vmul.f32 1.0, %v6750
      %v6752 = vrcp.pop %v3492
      %v6753 = vmul.f32 %v3492, %v6752
      %v6754 = vsub.f32 1.0, %v6753
      %v6755 = vmul.f32 %v6752, %v6754
      %v6756 = vadd.f32 %v6752, %v6755
      %vm6757 = vweird.f32 %v3492
      %vm6758 = vweird.f32 %v6752
      %vm6759 = vmor %vm6757, %vm6758
      %v6760 = vsel %vm6759, %v6752, %v6756
      %v6761 = vand.u32 2147483647, %v3492
      %vm6762 = vcmp.eq.f32.partialorder %v6761, 8.507059e+37
      %v6763 = vand.u32 %v3492, 2147483648
      %v6764 = vor.u32 1.1754944e-38, %v6763
      %v6765 = vsel %vm6762, %v6764, %v6760
      %v6766 = vmul.f32 1.0, %v6765
      %v6767 = vrcp.pop %v3493
      %v6768 = vmul.f32 %v3493, %v6767
      %v6769 = vsub.f32 1.0, %v6768
      %v6770 = vmul.f32 %v6767, %v6769
      %v6771 = vadd.f32 %v6767, %v6770
      %vm6772 = vweird.f32 %v3493
      %vm6773 = vweird.f32 %v6767
      %vm6774 = vmor %vm6772, %vm6773
      %v6775 = vsel %vm6774, %v6767, %v6771
      %v6776 = vand.u32 2147483647, %v3493
      %vm6777 = vcmp.eq.f32.partialorder %v6776, 8.507059e+37
      %v6778 = vand.u32 %v3493, 2147483648
      %v6779 = vor.u32 1.1754944e-38, %v6778
      %v6780 = vsel %vm6777, %v6779, %v6775
      %v6781 = vmul.f32 1.0, %v6780
      %v6782 = vrcp.pop %v3494
      %v6783 = vmul.f32 %v3494, %v6782
      %v6784 = vsub.f32 1.0, %v6783
      %v6785 = vmul.f32 %v6782, %v6784
      %v6786 = vadd.f32 %v6782, %v6785
      %vm6787 = vweird.f32 %v3494
      %vm6788 = vweird.f32 %v6782
      %vm6789 = vmor %vm6787, %vm6788
      %v6790 = vsel %vm6789, %v6782, %v6786
      %v6791 = vand.u32 2147483647, %v3494
      %vm6792 = vcmp.eq.f32.partialorder %v6791, 8.507059e+37
      %v6793 = vand.u32 %v3494, 2147483648
      %v6794 = vor.u32 1.1754944e-38, %v6793
      %v6795 = vsel %vm6792, %v6794, %v6790
      %v6796 = vmul.f32 1.0, %v6795
      %v6797 = vrcp.pop %v3495
      %v6798 = vmul.f32 %v3495, %v6797
      %v6799 = vsub.f32 1.0, %v6798
      %v6800 = vmul.f32 %v6797, %v6799
      %v6801 = vadd.f32 %v6797, %v6800
      %vm6802 = vweird.f32 %v3495
      %vm6803 = vweird.f32 %v6797
      %vm6804 = vmor %vm6802, %vm6803
      %v6805 = vsel %vm6804, %v6797, %v6801
      %v6806 = vand.u32 2147483647, %v3495
      %vm6807 = vcmp.eq.f32.partialorder %v6806, 8.507059e+37
      %v6808 = vand.u32 %v3495, 2147483648
      %v6809 = vor.u32 1.1754944e-38, %v6808
      %v6810 = vsel %vm6807, %v6809, %v6805
      %v6811 = vmul.f32 1.0, %v6810
      %v6812 = vrcp.pop %v3496
      %v6813 = vmul.f32 %v3496, %v6812
      %v6814 = vsub.f32 1.0, %v6813
      %v6815 = vmul.f32 %v6812, %v6814
      %v6816 = vadd.f32 %v6812, %v6815
      %vm6817 = vweird.f32 %v3496
      %vm6818 = vweird.f32 %v6812
      %vm6819 = vmor %vm6817, %vm6818
      %v6820 = vsel %vm6819, %v6812, %v6816
      %v6821 = vand.u32 2147483647, %v3496
      %vm6822 = vcmp.eq.f32.partialorder %v6821, 8.507059e+37
      %v6823 = vand.u32 %v3496, 2147483648
      %v6824 = vor.u32 1.1754944e-38, %v6823
      %v6825 = vsel %vm6822, %v6824, %v6820
      %v6826 = vmul.f32 1.0, %v6825
      %v6827 = vrcp.pop %v3497
      %v6828 = vmul.f32 %v3497, %v6827
      %v6829 = vsub.f32 1.0, %v6828
      %v6830 = vmul.f32 %v6827, %v6829
      %v6831 = vadd.f32 %v6827, %v6830
      %vm6832 = vweird.f32 %v3497
      %vm6833 = vweird.f32 %v6827
      %vm6834 = vmor %vm6832, %vm6833
      %v6835 = vsel %vm6834, %v6827, %v6831
      %v6836 = vand.u32 2147483647, %v3497
      %vm6837 = vcmp.eq.f32.partialorder %v6836, 8.507059e+37
      %v6838 = vand.u32 %v3497, 2147483648
      %v6839 = vor.u32 1.1754944e-38, %v6838
      %v6840 = vsel %vm6837, %v6839, %v6835
      %v6841 = vmul.f32 1.0, %v6840
      %v6842 = vrcp.pop %v3498
      %v6843 = vmul.f32 %v3498, %v6842
      %v6844 = vsub.f32 1.0, %v6843
      %v6845 = vmul.f32 %v6842, %v6844
      %v6846 = vadd.f32 %v6842, %v6845
      %vm6847 = vweird.f32 %v3498
      %vm6848 = vweird.f32 %v6842
      %vm6849 = vmor %vm6847, %vm6848
      %v6850 = vsel %vm6849, %v6842, %v6846
      %v6851 = vand.u32 2147483647, %v3498
      %vm6852 = vcmp.eq.f32.partialorder %v6851, 8.507059e+37
      %v6853 = vand.u32 %v3498, 2147483648
      %v6854 = vor.u32 1.1754944e-38, %v6853
      %v6855 = vsel %vm6852, %v6854, %v6850
      %v6856 = vmul.f32 1.0, %v6855
      %v6857 = vrcp.pop %v3499
      %v6858 = vmul.f32 %v3499, %v6857
      %v6859 = vsub.f32 1.0, %v6858
      %v6860 = vmul.f32 %v6857, %v6859
      %v6861 = vadd.f32 %v6857, %v6860
      %vm6862 = vweird.f32 %v3499
      %vm6863 = vweird.f32 %v6857
      %vm6864 = vmor %vm6862, %vm6863
      %v6865 = vsel %vm6864, %v6857, %v6861
      %v6866 = vand.u32 2147483647, %v3499
      %vm6867 = vcmp.eq.f32.partialorder %v6866, 8.507059e+37
      %v6868 = vand.u32 %v3499, 2147483648
      %v6869 = vor.u32 1.1754944e-38, %v6868
      %v6870 = vsel %vm6867, %v6869, %v6865
      %v6871 = vmul.f32 1.0, %v6870
      %v6872 = vrcp.pop %v3500
      %v6873 = vmul.f32 %v3500, %v6872
      %v6874 = vsub.f32 1.0, %v6873
      %v6875 = vmul.f32 %v6872, %v6874
      %v6876 = vadd.f32 %v6872, %v6875
      %vm6877 = vweird.f32 %v3500
      %vm6878 = vweird.f32 %v6872
      %vm6879 = vmor %vm6877, %vm6878
      %v6880 = vsel %vm6879, %v6872, %v6876
      %v6881 = vand.u32 2147483647, %v3500
      %vm6882 = vcmp.eq.f32.partialorder %v6881, 8.507059e+37
      %v6883 = vand.u32 %v3500, 2147483648
      %v6884 = vor.u32 1.1754944e-38, %v6883
      %v6885 = vsel %vm6882, %v6884, %v6880
      %v6886 = vmul.f32 1.0, %v6885
      %v6887 = vrcp.pop %v3501
      %v6888 = vmul.f32 %v3501, %v6887
      %v6889 = vsub.f32 1.0, %v6888
      %v6890 = vmul.f32 %v6887, %v6889
      %v6891 = vadd.f32 %v6887, %v6890
      %vm6892 = vweird.f32 %v3501
      %vm6893 = vweird.f32 %v6887
      %vm6894 = vmor %vm6892, %vm6893
      %v6895 = vsel %vm6894, %v6887, %v6891
      %v6896 = vand.u32 2147483647, %v3501
      %vm6897 = vcmp.eq.f32.partialorder %v6896, 8.507059e+37
      %v6898 = vand.u32 %v3501, 2147483648
      %v6899 = vor.u32 1.1754944e-38, %v6898
      %v6900 = vsel %vm6897, %v6899, %v6895
      %v6901 = vmul.f32 1.0, %v6900
      %v6902 = vrcp.pop %v3502
      %v6903 = vmul.f32 %v3502, %v6902
      %v6904 = vsub.f32 1.0, %v6903
      %v6905 = vmul.f32 %v6902, %v6904
      %v6906 = vadd.f32 %v6902, %v6905
      %vm6907 = vweird.f32 %v3502
      %vm6908 = vweird.f32 %v6902
      %vm6909 = vmor %vm6907, %vm6908
      %v6910 = vsel %vm6909, %v6902, %v6906
      %v6911 = vand.u32 2147483647, %v3502
      %vm6912 = vcmp.eq.f32.partialorder %v6911, 8.507059e+37
      %v6913 = vand.u32 %v3502, 2147483648
      %v6914 = vor.u32 1.1754944e-38, %v6913
      %v6915 = vsel %vm6912, %v6914, %v6910
      %v6916 = vmul.f32 1.0, %v6915
      %v6917 = vrcp.pop %v3503
      %v6918 = vmul.f32 %v3503, %v6917
      %v6919 = vsub.f32 1.0, %v6918
      %v6920 = vmul.f32 %v6917, %v6919
      %v6921 = vadd.f32 %v6917, %v6920
      %vm6922 = vweird.f32 %v3503
      %vm6923 = vweird.f32 %v6917
      %vm6924 = vmor %vm6922, %vm6923
      %v6925 = vsel %vm6924, %v6917, %v6921
      %v6926 = vand.u32 2147483647, %v3503
      %vm6927 = vcmp.eq.f32.partialorder %v6926, 8.507059e+37
      %v6928 = vand.u32 %v3503, 2147483648
      %v6929 = vor.u32 1.1754944e-38, %v6928
      %v6930 = vsel %vm6927, %v6929, %v6925
      %v6931 = vmul.f32 1.0, %v6930
      %v6932 = vrcp.pop %v3504
      %v6933 = vmul.f32 %v3504, %v6932
      %v6934 = vsub.f32 1.0, %v6933
      %v6935 = vmul.f32 %v6932, %v6934
      %v6936 = vadd.f32 %v6932, %v6935
      %vm6937 = vweird.f32 %v3504
      %vm6938 = vweird.f32 %v6932
      %vm6939 = vmor %vm6937, %vm6938
      %v6940 = vsel %vm6939, %v6932, %v6936
      %v6941 = vand.u32 2147483647, %v3504
      %vm6942 = vcmp.eq.f32.partialorder %v6941, 8.507059e+37
      %v6943 = vand.u32 %v3504, 2147483648
      %v6944 = vor.u32 1.1754944e-38, %v6943
      %v6945 = vsel %vm6942, %v6944, %v6940
      %v6946 = vmul.f32 1.0, %v6945
      %v6947 = vrcp.pop %v3505
      %v6948 = vmul.f32 %v3505, %v6947
      %v6949 = vsub.f32 1.0, %v6948
      %v6950 = vmul.f32 %v6947, %v6949
      %v6951 = vadd.f32 %v6947, %v6950
      %vm6952 = vweird.f32 %v3505
      %vm6953 = vweird.f32 %v6947
      %vm6954 = vmor %vm6952, %vm6953
      %v6955 = vsel %vm6954, %v6947, %v6951
      %v6956 = vand.u32 2147483647, %v3505
      %vm6957 = vcmp.eq.f32.partialorder %v6956, 8.507059e+37
      %v6958 = vand.u32 %v3505, 2147483648
      %v6959 = vor.u32 1.1754944e-38, %v6958
      %v6960 = vsel %vm6957, %v6959, %v6955
      %v6961 = vmul.f32 1.0, %v6960
      %v6962 = vrcp.pop %v3506
      %v6963 = vmul.f32 %v3506, %v6962
      %v6964 = vsub.f32 1.0, %v6963
      %v6965 = vmul.f32 %v6962, %v6964
      %v6966 = vadd.f32 %v6962, %v6965
      %vm6967 = vweird.f32 %v3506
      %vm6968 = vweird.f32 %v6962
      %vm6969 = vmor %vm6967, %vm6968
      %v6970 = vsel %vm6969, %v6962, %v6966
      %v6971 = vand.u32 2147483647, %v3506
      %vm6972 = vcmp.eq.f32.partialorder %v6971, 8.507059e+37
      %v6973 = vand.u32 %v3506, 2147483648
      %v6974 = vor.u32 1.1754944e-38, %v6973
      %v6975 = vsel %vm6972, %v6974, %v6970
      %v6976 = vmul.f32 1.0, %v6975
      %v6977 = vrcp.pop %v3507
      %v6978 = vmul.f32 %v3507, %v6977
      %v6979 = vsub.f32 1.0, %v6978
      %v6980 = vmul.f32 %v6977, %v6979
      %v6981 = vadd.f32 %v6977, %v6980
      %vm6982 = vweird.f32 %v3507
      %vm6983 = vweird.f32 %v6977
      %vm6984 = vmor %vm6982, %vm6983
      %v6985 = vsel %vm6984, %v6977, %v6981
      %v6986 = vand.u32 2147483647, %v3507
      %vm6987 = vcmp.eq.f32.partialorder %v6986, 8.507059e+37
      %v6988 = vand.u32 %v3507, 2147483648
      %v6989 = vor.u32 1.1754944e-38, %v6988
      %v6990 = vsel %vm6987, %v6989, %v6985
      %v6991 = vmul.f32 1.0, %v6990
      %v6992 = vrcp.pop %v3508
      %v6993 = vmul.f32 %v3508, %v6992
      %v6994 = vsub.f32 1.0, %v6993
      %v6995 = vmul.f32 %v6992, %v6994
      %v6996 = vadd.f32 %v6992, %v6995
      %vm6997 = vweird.f32 %v3508
      %vm6998 = vweird.f32 %v6992
      %vm6999 = vmor %vm6997, %vm6998
      %v7000 = vsel %vm6999, %v6992, %v6996
      %v7001 = vand.u32 2147483647, %v3508
      %vm7002 = vcmp.eq.f32.partialorder %v7001, 8.507059e+37
      %v7003 = vand.u32 %v3508, 2147483648
      %v7004 = vor.u32 1.1754944e-38, %v7003
      %v7005 = vsel %vm7002, %v7004, %v7000
      %v7006 = vmul.f32 1.0, %v7005
      %v7007 = vrcp.pop %v3509
      %v7008 = vmul.f32 %v3509, %v7007
      %v7009 = vsub.f32 1.0, %v7008
      %v7010 = vmul.f32 %v7007, %v7009
      %v7011 = vadd.f32 %v7007, %v7010
      %vm7012 = vweird.f32 %v3509
      %vm7013 = vweird.f32 %v7007
      %vm7014 = vmor %vm7012, %vm7013
      %v7015 = vsel %vm7014, %v7007, %v7011
      %v7016 = vand.u32 2147483647, %v3509
      %vm7017 = vcmp.eq.f32.partialorder %v7016, 8.507059e+37
      %v7018 = vand.u32 %v3509, 2147483648
      %v7019 = vor.u32 1.1754944e-38, %v7018
      %v7020 = vsel %vm7017, %v7019, %v7015
      %v7021 = vmul.f32 1.0, %v7020
      %v7022 = vrcp.pop %v3510
      %v7023 = vmul.f32 %v3510, %v7022
      %v7024 = vsub.f32 1.0, %v7023
      %v7025 = vmul.f32 %v7022, %v7024
      %v7026 = vadd.f32 %v7022, %v7025
      %vm7027 = vweird.f32 %v3510
      %vm7028 = vweird.f32 %v7022
      %vm7029 = vmor %vm7027, %vm7028
      %v7030 = vsel %vm7029, %v7022, %v7026
      %v7031 = vand.u32 2147483647, %v3510
      %vm7032 = vcmp.eq.f32.partialorder %v7031, 8.507059e+37
      %v7033 = vand.u32 %v3510, 2147483648
      %v7034 = vor.u32 1.1754944e-38, %v7033
      %v7035 = vsel %vm7032, %v7034, %v7030
      %v7036 = vmul.f32 1.0, %v7035
      %v7037 = vrcp.pop %v3511
      %v7038 = vmul.f32 %v3511, %v7037
      %v7039 = vsub.f32 1.0, %v7038
      %v7040 = vmul.f32 %v7037, %v7039
      %v7041 = vadd.f32 %v7037, %v7040
      %vm7042 = vweird.f32 %v3511
      %vm7043 = vweird.f32 %v7037
      %vm7044 = vmor %vm7042, %vm7043
      %v7045 = vsel %vm7044, %v7037, %v7041
      %v7046 = vand.u32 2147483647, %v3511
      %vm7047 = vcmp.eq.f32.partialorder %v7046, 8.507059e+37
      %v7048 = vand.u32 %v3511, 2147483648
      %v7049 = vor.u32 1.1754944e-38, %v7048
      %v7050 = vsel %vm7047, %v7049, %v7045
      %v7051 = vmul.f32 1.0, %v7050
      %v7052 = vrcp.pop %v3512
      %v7053 = vmul.f32 %v3512, %v7052
      %v7054 = vsub.f32 1.0, %v7053
      %v7055 = vmul.f32 %v7052, %v7054
      %v7056 = vadd.f32 %v7052, %v7055
      %vm7057 = vweird.f32 %v3512
      %vm7058 = vweird.f32 %v7052
      %vm7059 = vmor %vm7057, %vm7058
      %v7060 = vsel %vm7059, %v7052, %v7056
      %v7061 = vand.u32 2147483647, %v3512
      %vm7062 = vcmp.eq.f32.partialorder %v7061, 8.507059e+37
      %v7063 = vand.u32 %v3512, 2147483648
      %v7064 = vor.u32 1.1754944e-38, %v7063
      %v7065 = vsel %vm7062, %v7064, %v7060
      %v7066 = vmul.f32 1.0, %v7065
      %v7067 = vrcp.pop %v3513
      %v7068 = vmul.f32 %v3513, %v7067
      %v7069 = vsub.f32 1.0, %v7068
      %v7070 = vmul.f32 %v7067, %v7069
      %v7071 = vadd.f32 %v7067, %v7070
      %vm7072 = vweird.f32 %v3513
      %vm7073 = vweird.f32 %v7067
      %vm7074 = vmor %vm7072, %vm7073
      %v7075 = vsel %vm7074, %v7067, %v7071
      %v7076 = vand.u32 2147483647, %v3513
      %vm7077 = vcmp.eq.f32.partialorder %v7076, 8.507059e+37
      %v7078 = vand.u32 %v3513, 2147483648
      %v7079 = vor.u32 1.1754944e-38, %v7078
      %v7080 = vsel %vm7077, %v7079, %v7075
      %v7081 = vmul.f32 1.0, %v7080
      %v7082 = vrcp.pop %v3514
      %v7083 = vmul.f32 %v3514, %v7082
      %v7084 = vsub.f32 1.0, %v7083
      %v7085 = vmul.f32 %v7082, %v7084
      %v7086 = vadd.f32 %v7082, %v7085
      %vm7087 = vweird.f32 %v3514
      %vm7088 = vweird.f32 %v7082
      %vm7089 = vmor %vm7087, %vm7088
      %v7090 = vsel %vm7089, %v7082, %v7086
      %v7091 = vand.u32 2147483647, %v3514
      %vm7092 = vcmp.eq.f32.partialorder %v7091, 8.507059e+37
      %v7093 = vand.u32 %v3514, 2147483648
      %v7094 = vor.u32 1.1754944e-38, %v7093
      %v7095 = vsel %vm7092, %v7094, %v7090
      %v7096 = vmul.f32 1.0, %v7095
      %v7097 = vrcp.pop %v3515
      %v7098 = vmul.f32 %v3515, %v7097
      %v7099 = vsub.f32 1.0, %v7098
      %v7100 = vmul.f32 %v7097, %v7099
      %v7101 = vadd.f32 %v7097, %v7100
      %vm7102 = vweird.f32 %v3515
      %vm7103 = vweird.f32 %v7097
      %vm7104 = vmor %vm7102, %vm7103
      %v7105 = vsel %vm7104, %v7097, %v7101
      %v7106 = vand.u32 2147483647, %v3515
      %vm7107 = vcmp.eq.f32.partialorder %v7106, 8.507059e+37
      %v7108 = vand.u32 %v3515, 2147483648
      %v7109 = vor.u32 1.1754944e-38, %v7108
      %v7110 = vsel %vm7107, %v7109, %v7105
      %v7111 = vmul.f32 1.0, %v7110
      %v7112 = vrcp.pop %v3516
      %v7113 = vmul.f32 %v3516, %v7112
      %v7114 = vsub.f32 1.0, %v7113
      %v7115 = vmul.f32 %v7112, %v7114
      %v7116 = vadd.f32 %v7112, %v7115
      %vm7117 = vweird.f32 %v3516
      %vm7118 = vweird.f32 %v7112
      %vm7119 = vmor %vm7117, %vm7118
      %v7120 = vsel %vm7119, %v7112, %v7116
      %v7121 = vand.u32 2147483647, %v3516
      %vm7122 = vcmp.eq.f32.partialorder %v7121, 8.507059e+37
      %v7123 = vand.u32 %v3516, 2147483648
      %v7124 = vor.u32 1.1754944e-38, %v7123
      %v7125 = vsel %vm7122, %v7124, %v7120
      %v7126 = vmul.f32 1.0, %v7125
      %v7127 = vrcp.pop %v3517
      %v7128 = vmul.f32 %v3517, %v7127
      %v7129 = vsub.f32 1.0, %v7128
      %v7130 = vmul.f32 %v7127, %v7129
      %v7131 = vadd.f32 %v7127, %v7130
      %vm7132 = vweird.f32 %v3517
      %vm7133 = vweird.f32 %v7127
      %vm7134 = vmor %vm7132, %vm7133
      %v7135 = vsel %vm7134, %v7127, %v7131
      %v7136 = vand.u32 2147483647, %v3517
      %vm7137 = vcmp.eq.f32.partialorder %v7136, 8.507059e+37
      %v7138 = vand.u32 %v3517, 2147483648
      %v7139 = vor.u32 1.1754944e-38, %v7138
      %v7140 = vsel %vm7137, %v7139, %v7135
      %v7141 = vmul.f32 1.0, %v7140
      %v7142 = vrcp.pop %v3518
      %v7143 = vmul.f32 %v3518, %v7142
      %v7144 = vsub.f32 1.0, %v7143
      %v7145 = vmul.f32 %v7142, %v7144
      %v7146 = vadd.f32 %v7142, %v7145
      %vm7147 = vweird.f32 %v3518
      %vm7148 = vweird.f32 %v7142
      %vm7149 = vmor %vm7147, %vm7148
      %v7150 = vsel %vm7149, %v7142, %v7146
      %v7151 = vand.u32 2147483647, %v3518
      %vm7152 = vcmp.eq.f32.partialorder %v7151, 8.507059e+37
      %v7153 = vand.u32 %v3518, 2147483648
      %v7154 = vor.u32 1.1754944e-38, %v7153
      %v7155 = vsel %vm7152, %v7154, %v7150
      %v7156 = vmul.f32 1.0, %v7155
      %v7157 = vrcp.pop %v3519
      %v7158 = vmul.f32 %v3519, %v7157
      %v7159 = vsub.f32 1.0, %v7158
      %v7160 = vmul.f32 %v7157, %v7159
      %v7161 = vadd.f32 %v7157, %v7160
      %vm7162 = vweird.f32 %v3519
      %vm7163 = vweird.f32 %v7157
      %vm7164 = vmor %vm7162, %vm7163
      %v7165 = vsel %vm7164, %v7157, %v7161
      %v7166 = vand.u32 2147483647, %v3519
      %vm7167 = vcmp.eq.f32.partialorder %v7166, 8.507059e+37
      %v7168 = vand.u32 %v3519, 2147483648
      %v7169 = vor.u32 1.1754944e-38, %v7168
      %v7170 = vsel %vm7167, %v7169, %v7165
      %v7171 = vmul.f32 1.0, %v7170
      %v7172 = vrcp.pop %v3520
      %v7173 = vmul.f32 %v3520, %v7172
      %v7174 = vsub.f32 1.0, %v7173
      %v7175 = vmul.f32 %v7172, %v7174
      %v7176 = vadd.f32 %v7172, %v7175
      %vm7177 = vweird.f32 %v3520
      %vm7178 = vweird.f32 %v7172
      %vm7179 = vmor %vm7177, %vm7178
      %v7180 = vsel %vm7179, %v7172, %v7176
      %v7181 = vand.u32 2147483647, %v3520
      %vm7182 = vcmp.eq.f32.partialorder %v7181, 8.507059e+37
      %v7183 = vand.u32 %v3520, 2147483648
      %v7184 = vor.u32 1.1754944e-38, %v7183
      %v7185 = vsel %vm7182, %v7184, %v7180
      %v7186 = vmul.f32 1.0, %v7185
      %v7187 = vrcp.pop %v3521
      %v7188 = vmul.f32 %v3521, %v7187
      %v7189 = vsub.f32 1.0, %v7188
      %v7190 = vmul.f32 %v7187, %v7189
      %v7191 = vadd.f32 %v7187, %v7190
      %vm7192 = vweird.f32 %v3521
      %vm7193 = vweird.f32 %v7187
      %vm7194 = vmor %vm7192, %vm7193
      %v7195 = vsel %vm7194, %v7187, %v7191
      %v7196 = vand.u32 2147483647, %v3521
      %vm7197 = vcmp.eq.f32.partialorder %v7196, 8.507059e+37
      %v7198 = vand.u32 %v3521, 2147483648
      %v7199 = vor.u32 1.1754944e-38, %v7198
      %v7200 = vsel %vm7197, %v7199, %v7195
      %v7201 = vmul.f32 1.0, %v7200
      %v7202 = vrcp.pop %v3522
      %v7203 = vmul.f32 %v3522, %v7202
      %v7204 = vsub.f32 1.0, %v7203
      %v7205 = vmul.f32 %v7202, %v7204
      %v7206 = vadd.f32 %v7202, %v7205
      %vm7207 = vweird.f32 %v3522
      %vm7208 = vweird.f32 %v7202
      %vm7209 = vmor %vm7207, %vm7208
      %v7210 = vsel %vm7209, %v7202, %v7206
      %v7211 = vand.u32 2147483647, %v3522
      %vm7212 = vcmp.eq.f32.partialorder %v7211, 8.507059e+37
      %v7213 = vand.u32 %v3522, 2147483648
      %v7214 = vor.u32 1.1754944e-38, %v7213
      %v7215 = vsel %vm7212, %v7214, %v7210
      %v7216 = vmul.f32 1.0, %v7215
      %v7217 = vrcp.pop %v3523
      %v7218 = vmul.f32 %v3523, %v7217
      %v7219 = vsub.f32 1.0, %v7218
      %v7220 = vmul.f32 %v7217, %v7219
      %v7221 = vadd.f32 %v7217, %v7220
      %vm7222 = vweird.f32 %v3523
      %vm7223 = vweird.f32 %v7217
      %vm7224 = vmor %vm7222, %vm7223
      %v7225 = vsel %vm7224, %v7217, %v7221
      %v7226 = vand.u32 2147483647, %v3523
      %vm7227 = vcmp.eq.f32.partialorder %v7226, 8.507059e+37
      %v7228 = vand.u32 %v3523, 2147483648
      %v7229 = vor.u32 1.1754944e-38, %v7228
      %v7230 = vsel %vm7227, %v7229, %v7225
      %v7231 = vmul.f32 1.0, %v7230
      %v7232 = vrcp.pop %v3524
      %v7233 = vmul.f32 %v3524, %v7232
      %v7234 = vsub.f32 1.0, %v7233
      %v7235 = vmul.f32 %v7232, %v7234
      %v7236 = vadd.f32 %v7232, %v7235
      %vm7237 = vweird.f32 %v3524
      %vm7238 = vweird.f32 %v7232
      %vm7239 = vmor %vm7237, %vm7238
      %v7240 = vsel %vm7239, %v7232, %v7236
      %v7241 = vand.u32 2147483647, %v3524
      %vm7242 = vcmp.eq.f32.partialorder %v7241, 8.507059e+37
      %v7243 = vand.u32 %v3524, 2147483648
      %v7244 = vor.u32 1.1754944e-38, %v7243
      %v7245 = vsel %vm7242, %v7244, %v7240
      %v7246 = vmul.f32 1.0, %v7245
      %v7247 = vrcp.pop %v3525
      %v7248 = vmul.f32 %v3525, %v7247
      %v7249 = vsub.f32 1.0, %v7248
      %v7250 = vmul.f32 %v7247, %v7249
      %v7251 = vadd.f32 %v7247, %v7250
      %vm7252 = vweird.f32 %v3525
      %vm7253 = vweird.f32 %v7247
      %vm7254 = vmor %vm7252, %vm7253
      %v7255 = vsel %vm7254, %v7247, %v7251
      %v7256 = vand.u32 2147483647, %v3525
      %vm7257 = vcmp.eq.f32.partialorder %v7256, 8.507059e+37
      %v7258 = vand.u32 %v3525, 2147483648
      %v7259 = vor.u32 1.1754944e-38, %v7258
      %v7260 = vsel %vm7257, %v7259, %v7255
      %v7261 = vmul.f32 1.0, %v7260
      %v7262 = vrcp.pop %v3526
      %v7263 = vmul.f32 %v3526, %v7262
      %v7264 = vsub.f32 1.0, %v7263
      %v7265 = vmul.f32 %v7262, %v7264
      %v7266 = vadd.f32 %v7262, %v7265
      %vm7267 = vweird.f32 %v3526
      %vm7268 = vweird.f32 %v7262
      %vm7269 = vmor %vm7267, %vm7268
      %v7270 = vsel %vm7269, %v7262, %v7266
      %v7271 = vand.u32 2147483647, %v3526
      %vm7272 = vcmp.eq.f32.partialorder %v7271, 8.507059e+37
      %v7273 = vand.u32 %v3526, 2147483648
      %v7274 = vor.u32 1.1754944e-38, %v7273
      %v7275 = vsel %vm7272, %v7274, %v7270
      %v7276 = vmul.f32 1.0, %v7275
      %v7277 = vrcp.pop %v3527
      %v7278 = vmul.f32 %v3527, %v7277
      %v7279 = vsub.f32 1.0, %v7278
      %v7280 = vmul.f32 %v7277, %v7279
      %v7281 = vadd.f32 %v7277, %v7280
      %vm7282 = vweird.f32 %v3527
      %vm7283 = vweird.f32 %v7277
      %vm7284 = vmor %vm7282, %vm7283
      %v7285 = vsel %vm7284, %v7277, %v7281
      %v7286 = vand.u32 2147483647, %v3527
      %vm7287 = vcmp.eq.f32.partialorder %v7286, 8.507059e+37
      %v7288 = vand.u32 %v3527, 2147483648
      %v7289 = vor.u32 1.1754944e-38, %v7288
      %v7290 = vsel %vm7287, %v7289, %v7285
      %v7291 = vmul.f32 1.0, %v7290
      %v7292 = vrcp.pop %v3528
      %v7293 = vmul.f32 %v3528, %v7292
      %v7294 = vsub.f32 1.0, %v7293
      %v7295 = vmul.f32 %v7292, %v7294
      %v7296 = vadd.f32 %v7292, %v7295
      %vm7297 = vweird.f32 %v3528
      %vm7298 = vweird.f32 %v7292
      %vm7299 = vmor %vm7297, %vm7298
      %v7300 = vsel %vm7299, %v7292, %v7296
      %v7301 = vand.u32 2147483647, %v3528
      %vm7302 = vcmp.eq.f32.partialorder %v7301, 8.507059e+37
      %v7303 = vand.u32 %v3528, 2147483648
      %v7304 = vor.u32 1.1754944e-38, %v7303
      %v7305 = vsel %vm7302, %v7304, %v7300
      %v7306 = vmul.f32 1.0, %v7305
      %v7307 = vrcp.pop %v3529
      %v7308 = vmul.f32 %v3529, %v7307
      %v7309 = vsub.f32 1.0, %v7308
      %v7310 = vmul.f32 %v7307, %v7309
      %v7311 = vadd.f32 %v7307, %v7310
      %vm7312 = vweird.f32 %v3529
      %vm7313 = vweird.f32 %v7307
      %vm7314 = vmor %vm7312, %vm7313
      %v7315 = vsel %vm7314, %v7307, %v7311
      %v7316 = vand.u32 2147483647, %v3529
      %vm7317 = vcmp.eq.f32.partialorder %v7316, 8.507059e+37
      %v7318 = vand.u32 %v3529, 2147483648
      %v7319 = vor.u32 1.1754944e-38, %v7318
      %v7320 = vsel %vm7317, %v7319, %v7315
      %v7321 = vmul.f32 1.0, %v7320
      %v7322 = vrcp.pop %v3530
      %v7323 = vmul.f32 %v3530, %v7322
      %v7324 = vsub.f32 1.0, %v7323
      %v7325 = vmul.f32 %v7322, %v7324
      %v7326 = vadd.f32 %v7322, %v7325
      %vm7327 = vweird.f32 %v3530
      %vm7328 = vweird.f32 %v7322
      %vm7329 = vmor %vm7327, %vm7328
      %v7330 = vsel %vm7329, %v7322, %v7326
      %v7331 = vand.u32 2147483647, %v3530
      %vm7332 = vcmp.eq.f32.partialorder %v7331, 8.507059e+37
      %v7333 = vand.u32 %v3530, 2147483648
      %v7334 = vor.u32 1.1754944e-38, %v7333
      %v7335 = vsel %vm7332, %v7334, %v7330
      %v7336 = vmul.f32 1.0, %v7335
      %v7337 = vrcp.pop %v3531
      %v7338 = vmul.f32 %v3531, %v7337
      %v7339 = vsub.f32 1.0, %v7338
      %v7340 = vmul.f32 %v7337, %v7339
      %v7341 = vadd.f32 %v7337, %v7340
      %vm7342 = vweird.f32 %v3531
      %vm7343 = vweird.f32 %v7337
      %vm7344 = vmor %vm7342, %vm7343
      %v7345 = vsel %vm7344, %v7337, %v7341
      %v7346 = vand.u32 2147483647, %v3531
      %vm7347 = vcmp.eq.f32.partialorder %v7346, 8.507059e+37
      %v7348 = vand.u32 %v3531, 2147483648
      %v7349 = vor.u32 1.1754944e-38, %v7348
      %v7350 = vsel %vm7347, %v7349, %v7345
      %v7351 = vmul.f32 1.0, %v7350
      %v7352 = vrcp.pop %v3532
      %v7353 = vmul.f32 %v3532, %v7352
      %v7354 = vsub.f32 1.0, %v7353
      %v7355 = vmul.f32 %v7352, %v7354
      %v7356 = vadd.f32 %v7352, %v7355
      %vm7357 = vweird.f32 %v3532
      %vm7358 = vweird.f32 %v7352
      %vm7359 = vmor %vm7357, %vm7358
      %v7360 = vsel %vm7359, %v7352, %v7356
      %v7361 = vand.u32 2147483647, %v3532
      %vm7362 = vcmp.eq.f32.partialorder %v7361, 8.507059e+37
      %v7363 = vand.u32 %v3532, 2147483648
      %v7364 = vor.u32 1.1754944e-38, %v7363
      %v7365 = vsel %vm7362, %v7364, %v7360
      %v7366 = vmul.f32 1.0, %v7365
      %v7367 = vrcp.pop %v3533
      %v7368 = vmul.f32 %v3533, %v7367
      %v7369 = vsub.f32 1.0, %v7368
      %v7370 = vmul.f32 %v7367, %v7369
      %v7371 = vadd.f32 %v7367, %v7370
      %vm7372 = vweird.f32 %v3533
      %vm7373 = vweird.f32 %v7367
      %vm7374 = vmor %vm7372, %vm7373
      %v7375 = vsel %vm7374, %v7367, %v7371
      %v7376 = vand.u32 2147483647, %v3533
      %vm7377 = vcmp.eq.f32.partialorder %v7376, 8.507059e+37
      %v7378 = vand.u32 %v3533, 2147483648
      %v7379 = vor.u32 1.1754944e-38, %v7378
      %v7380 = vsel %vm7377, %v7379, %v7375
      %v7381 = vmul.f32 1.0, %v7380
      %v7382 = vrcp.pop %v3534
      %v7383 = vmul.f32 %v3534, %v7382
      %v7384 = vsub.f32 1.0, %v7383
      %v7385 = vmul.f32 %v7382, %v7384
      %v7386 = vadd.f32 %v7382, %v7385
      %vm7387 = vweird.f32 %v3534
      %vm7388 = vweird.f32 %v7382
      %vm7389 = vmor %vm7387, %vm7388
      %v7390 = vsel %vm7389, %v7382, %v7386
      %v7391 = vand.u32 2147483647, %v3534
      %vm7392 = vcmp.eq.f32.partialorder %v7391, 8.507059e+37
      %v7393 = vand.u32 %v3534, 2147483648
      %v7394 = vor.u32 1.1754944e-38, %v7393
      %v7395 = vsel %vm7392, %v7394, %v7390
      %v7396 = vmul.f32 1.0, %v7395
      %v7397 = vrcp.pop %v3535
      %v7398 = vmul.f32 %v3535, %v7397
      %v7399 = vsub.f32 1.0, %v7398
      %v7400 = vmul.f32 %v7397, %v7399
      %v7401 = vadd.f32 %v7397, %v7400
      %vm7402 = vweird.f32 %v3535
      %vm7403 = vweird.f32 %v7397
      %vm7404 = vmor %vm7402, %vm7403
      %v7405 = vsel %vm7404, %v7397, %v7401
      %v7406 = vand.u32 2147483647, %v3535
      %vm7407 = vcmp.eq.f32.partialorder %v7406, 8.507059e+37
      %v7408 = vand.u32 %v3535, 2147483648
      %v7409 = vor.u32 1.1754944e-38, %v7408
      %v7410 = vsel %vm7407, %v7409, %v7405
      %v7411 = vmul.f32 1.0, %v7410
      %v7412 = vrcp.pop %v3536
      %v7413 = vmul.f32 %v3536, %v7412
      %v7414 = vsub.f32 1.0, %v7413
      %v7415 = vmul.f32 %v7412, %v7414
      %v7416 = vadd.f32 %v7412, %v7415
      %vm7417 = vweird.f32 %v3536
      %vm7418 = vweird.f32 %v7412
      %vm7419 = vmor %vm7417, %vm7418
      %v7420 = vsel %vm7419, %v7412, %v7416
      %v7421 = vand.u32 2147483647, %v3536
      %vm7422 = vcmp.eq.f32.partialorder %v7421, 8.507059e+37
      %v7423 = vand.u32 %v3536, 2147483648
      %v7424 = vor.u32 1.1754944e-38, %v7423
      %v7425 = vsel %vm7422, %v7424, %v7420
      %v7426 = vmul.f32 1.0, %v7425
      %v7427 = vrcp.pop %v3537
      %v7428 = vmul.f32 %v3537, %v7427
      %v7429 = vsub.f32 1.0, %v7428
      %v7430 = vmul.f32 %v7427, %v7429
      %v7431 = vadd.f32 %v7427, %v7430
      %vm7432 = vweird.f32 %v3537
      %vm7433 = vweird.f32 %v7427
      %vm7434 = vmor %vm7432, %vm7433
      %v7435 = vsel %vm7434, %v7427, %v7431
      %v7436 = vand.u32 2147483647, %v3537
      %vm7437 = vcmp.eq.f32.partialorder %v7436, 8.507059e+37
      %v7438 = vand.u32 %v3537, 2147483648
      %v7439 = vor.u32 1.1754944e-38, %v7438
      %v7440 = vsel %vm7437, %v7439, %v7435
      %v7441 = vmul.f32 1.0, %v7440
      %v7442 = vrcp.pop %v3538
      %v7443 = vmul.f32 %v3538, %v7442
      %v7444 = vsub.f32 1.0, %v7443
      %v7445 = vmul.f32 %v7442, %v7444
      %v7446 = vadd.f32 %v7442, %v7445
      %vm7447 = vweird.f32 %v3538
      %vm7448 = vweird.f32 %v7442
      %vm7449 = vmor %vm7447, %vm7448
      %v7450 = vsel %vm7449, %v7442, %v7446
      %v7451 = vand.u32 2147483647, %v3538
      %vm7452 = vcmp.eq.f32.partialorder %v7451, 8.507059e+37
      %v7453 = vand.u32 %v3538, 2147483648
      %v7454 = vor.u32 1.1754944e-38, %v7453
      %v7455 = vsel %vm7452, %v7454, %v7450
      %v7456 = vmul.f32 1.0, %v7455
      %v7457 = vrcp.pop %v3539
      %v7458 = vmul.f32 %v3539, %v7457
      %v7459 = vsub.f32 1.0, %v7458
      %v7460 = vmul.f32 %v7457, %v7459
      %v7461 = vadd.f32 %v7457, %v7460
      %vm7462 = vweird.f32 %v3539
      %vm7463 = vweird.f32 %v7457
      %vm7464 = vmor %vm7462, %vm7463
      %v7465 = vsel %vm7464, %v7457, %v7461
      %v7466 = vand.u32 2147483647, %v3539
      %vm7467 = vcmp.eq.f32.partialorder %v7466, 8.507059e+37
      %v7468 = vand.u32 %v3539, 2147483648
      %v7469 = vor.u32 1.1754944e-38, %v7468
      %v7470 = vsel %vm7467, %v7469, %v7465
      %v7471 = vmul.f32 1.0, %v7470
      %v7472 = vrcp.pop %v3540
      %v7473 = vmul.f32 %v3540, %v7472
      %v7474 = vsub.f32 1.0, %v7473
      %v7475 = vmul.f32 %v7472, %v7474
      %v7476 = vadd.f32 %v7472, %v7475
      %vm7477 = vweird.f32 %v3540
      %vm7478 = vweird.f32 %v7472
      %vm7479 = vmor %vm7477, %vm7478
      %v7480 = vsel %vm7479, %v7472, %v7476
      %v7481 = vand.u32 2147483647, %v3540
      %vm7482 = vcmp.eq.f32.partialorder %v7481, 8.507059e+37
      %v7483 = vand.u32 %v3540, 2147483648
      %v7484 = vor.u32 1.1754944e-38, %v7483
      %v7485 = vsel %vm7482, %v7484, %v7480
      %v7486 = vmul.f32 1.0, %v7485
      %v7487 = vrcp.pop %v3541
      %v7488 = vmul.f32 %v3541, %v7487
      %v7489 = vsub.f32 1.0, %v7488
      %v7490 = vmul.f32 %v7487, %v7489
      %v7491 = vadd.f32 %v7487, %v7490
      %vm7492 = vweird.f32 %v3541
      %vm7493 = vweird.f32 %v7487
      %vm7494 = vmor %vm7492, %vm7493
      %v7495 = vsel %vm7494, %v7487, %v7491
      %v7496 = vand.u32 2147483647, %v3541
      %vm7497 = vcmp.eq.f32.partialorder %v7496, 8.507059e+37
      %v7498 = vand.u32 %v3541, 2147483648
      %v7499 = vor.u32 1.1754944e-38, %v7498
      %v7500 = vsel %vm7497, %v7499, %v7495
      %v7501 = vmul.f32 1.0, %v7500
      %v7502 = vrcp.pop %v3542
      %v7503 = vmul.f32 %v3542, %v7502
      %v7504 = vsub.f32 1.0, %v7503
      %v7505 = vmul.f32 %v7502, %v7504
      %v7506 = vadd.f32 %v7502, %v7505
      %vm7507 = vweird.f32 %v3542
      %vm7508 = vweird.f32 %v7502
      %vm7509 = vmor %vm7507, %vm7508
      %v7510 = vsel %vm7509, %v7502, %v7506
      %v7511 = vand.u32 2147483647, %v3542
      %vm7512 = vcmp.eq.f32.partialorder %v7511, 8.507059e+37
      %v7513 = vand.u32 %v3542, 2147483648
      %v7514 = vor.u32 1.1754944e-38, %v7513
      %v7515 = vsel %vm7512, %v7514, %v7510
      %v7516 = vmul.f32 1.0, %v7515
      %v7517 = vrcp.pop %v3543
      %v7518 = vmul.f32 %v3543, %v7517
      %v7519 = vsub.f32 1.0, %v7518
      %v7520 = vmul.f32 %v7517, %v7519
      %v7521 = vadd.f32 %v7517, %v7520
      %vm7522 = vweird.f32 %v3543
      %vm7523 = vweird.f32 %v7517
      %vm7524 = vmor %vm7522, %vm7523
      %v7525 = vsel %vm7524, %v7517, %v7521
      %v7526 = vand.u32 2147483647, %v3543
      %vm7527 = vcmp.eq.f32.partialorder %v7526, 8.507059e+37
      %v7528 = vand.u32 %v3543, 2147483648
      %v7529 = vor.u32 1.1754944e-38, %v7528
      %v7530 = vsel %vm7527, %v7529, %v7525
      %v7531 = vmul.f32 1.0, %v7530
      %v7532 = vrcp.pop %v3544
      %v7533 = vmul.f32 %v3544, %v7532
      %v7534 = vsub.f32 1.0, %v7533
      %v7535 = vmul.f32 %v7532, %v7534
      %v7536 = vadd.f32 %v7532, %v7535
      %vm7537 = vweird.f32 %v3544
      %vm7538 = vweird.f32 %v7532
      %vm7539 = vmor %vm7537, %vm7538
      %v7540 = vsel %vm7539, %v7532, %v7536
      %v7541 = vand.u32 2147483647, %v3544
      %vm7542 = vcmp.eq.f32.partialorder %v7541, 8.507059e+37
      %v7543 = vand.u32 %v3544, 2147483648
      %v7544 = vor.u32 1.1754944e-38, %v7543
      %v7545 = vsel %vm7542, %v7544, %v7540
      %v7546 = vmul.f32 1.0, %v7545
      %v7547 = vrcp.pop %v3545
      %v7548 = vmul.f32 %v3545, %v7547
      %v7549 = vsub.f32 1.0, %v7548
      %v7550 = vmul.f32 %v7547, %v7549
      %v7551 = vadd.f32 %v7547, %v7550
      %vm7552 = vweird.f32 %v3545
      %vm7553 = vweird.f32 %v7547
      %vm7554 = vmor %vm7552, %vm7553
      %v7555 = vsel %vm7554, %v7547, %v7551
      %v7556 = vand.u32 2147483647, %v3545
      %vm7557 = vcmp.eq.f32.partialorder %v7556, 8.507059e+37
      %v7558 = vand.u32 %v3545, 2147483648
      %v7559 = vor.u32 1.1754944e-38, %v7558
      %v7560 = vsel %vm7557, %v7559, %v7555
      %v7561 = vmul.f32 1.0, %v7560
      %v7562 = vrcp.pop %v3546
      %v7563 = vmul.f32 %v3546, %v7562
      %v7564 = vsub.f32 1.0, %v7563
      %v7565 = vmul.f32 %v7562, %v7564
      %v7566 = vadd.f32 %v7562, %v7565
      %vm7567 = vweird.f32 %v3546
      %vm7568 = vweird.f32 %v7562
      %vm7569 = vmor %vm7567, %vm7568
      %v7570 = vsel %vm7569, %v7562, %v7566
      %v7571 = vand.u32 2147483647, %v3546
      %vm7572 = vcmp.eq.f32.partialorder %v7571, 8.507059e+37
      %v7573 = vand.u32 %v3546, 2147483648
      %v7574 = vor.u32 1.1754944e-38, %v7573
      %v7575 = vsel %vm7572, %v7574, %v7570
      %v7576 = vmul.f32 1.0, %v7575
      %v7577 = vrcp.pop %v3547
      %v7578 = vmul.f32 %v3547, %v7577
      %v7579 = vsub.f32 1.0, %v7578
      %v7580 = vmul.f32 %v7577, %v7579
      %v7581 = vadd.f32 %v7577, %v7580
      %vm7582 = vweird.f32 %v3547
      %vm7583 = vweird.f32 %v7577
      %vm7584 = vmor %vm7582, %vm7583
      %v7585 = vsel %vm7584, %v7577, %v7581
      %v7586 = vand.u32 2147483647, %v3547
      %vm7587 = vcmp.eq.f32.partialorder %v7586, 8.507059e+37
      %v7588 = vand.u32 %v3547, 2147483648
      %v7589 = vor.u32 1.1754944e-38, %v7588
      %v7590 = vsel %vm7587, %v7589, %v7585
      %v7591 = vmul.f32 1.0, %v7590
      %v7592 = vrcp.pop %v3548
      %v7593 = vmul.f32 %v3548, %v7592
      %v7594 = vsub.f32 1.0, %v7593
      %v7595 = vmul.f32 %v7592, %v7594
      %v7596 = vadd.f32 %v7592, %v7595
      %vm7597 = vweird.f32 %v3548
      %vm7598 = vweird.f32 %v7592
      %vm7599 = vmor %vm7597, %vm7598
      %v7600 = vsel %vm7599, %v7592, %v7596
      %v7601 = vand.u32 2147483647, %v3548
      %vm7602 = vcmp.eq.f32.partialorder %v7601, 8.507059e+37
      %v7603 = vand.u32 %v3548, 2147483648
      %v7604 = vor.u32 1.1754944e-38, %v7603
      %v7605 = vsel %vm7602, %v7604, %v7600
      %v7606 = vmul.f32 1.0, %v7605
      %v7607 = vrcp.pop %v3549
      %v7608 = vmul.f32 %v3549, %v7607
      %v7609 = vsub.f32 1.0, %v7608
      %v7610 = vmul.f32 %v7607, %v7609
      %v7611 = vadd.f32 %v7607, %v7610
      %vm7612 = vweird.f32 %v3549
      %vm7613 = vweird.f32 %v7607
      %vm7614 = vmor %vm7612, %vm7613
      %v7615 = vsel %vm7614, %v7607, %v7611
      %v7616 = vand.u32 2147483647, %v3549
      %vm7617 = vcmp.eq.f32.partialorder %v7616, 8.507059e+37
      %v7618 = vand.u32 %v3549, 2147483648
      %v7619 = vor.u32 1.1754944e-38, %v7618
      %v7620 = vsel %vm7617, %v7619, %v7615
      %v7621 = vmul.f32 1.0, %v7620
      %v7622 = vrcp.pop %v3550
      %v7623 = vmul.f32 %v3550, %v7622
      %v7624 = vsub.f32 1.0, %v7623
      %v7625 = vmul.f32 %v7622, %v7624
      %v7626 = vadd.f32 %v7622, %v7625
      %vm7627 = vweird.f32 %v3550
      %vm7628 = vweird.f32 %v7622
      %vm7629 = vmor %vm7627, %vm7628
      %v7630 = vsel %vm7629, %v7622, %v7626
      %v7631 = vand.u32 2147483647, %v3550
      %vm7632 = vcmp.eq.f32.partialorder %v7631, 8.507059e+37
      %v7633 = vand.u32 %v3550, 2147483648
      %v7634 = vor.u32 1.1754944e-38, %v7633
      %v7635 = vsel %vm7632, %v7634, %v7630
      %v7636 = vmul.f32 1.0, %v7635
      %v7637 = vrcp.pop %v3551
      %v7638 = vmul.f32 %v3551, %v7637
      %v7639 = vsub.f32 1.0, %v7638
      %v7640 = vmul.f32 %v7637, %v7639
      %v7641 = vadd.f32 %v7637, %v7640
      %vm7642 = vweird.f32 %v3551
      %vm7643 = vweird.f32 %v7637
      %vm7644 = vmor %vm7642, %vm7643
      %v7645 = vsel %vm7644, %v7637, %v7641
      %v7646 = vand.u32 2147483647, %v3551
      %vm7647 = vcmp.eq.f32.partialorder %v7646, 8.507059e+37
      %v7648 = vand.u32 %v3551, 2147483648
      %v7649 = vor.u32 1.1754944e-38, %v7648
      %v7650 = vsel %vm7647, %v7649, %v7645
      %v7651 = vmul.f32 1.0, %v7650
      %v7652 = vrcp.pop %v3552
      %v7653 = vmul.f32 %v3552, %v7652
      %v7654 = vsub.f32 1.0, %v7653
      %v7655 = vmul.f32 %v7652, %v7654
      %v7656 = vadd.f32 %v7652, %v7655
      %vm7657 = vweird.f32 %v3552
      %vm7658 = vweird.f32 %v7652
      %vm7659 = vmor %vm7657, %vm7658
      %v7660 = vsel %vm7659, %v7652, %v7656
      %v7661 = vand.u32 2147483647, %v3552
      %vm7662 = vcmp.eq.f32.partialorder %v7661, 8.507059e+37
      %v7663 = vand.u32 %v3552, 2147483648
      %v7664 = vor.u32 1.1754944e-38, %v7663
      %v7665 = vsel %vm7662, %v7664, %v7660
      %v7666 = vmul.f32 1.0, %v7665
      %v7667 = vrcp.pop %v3553
      %v7668 = vmul.f32 %v3553, %v7667
      %v7669 = vsub.f32 1.0, %v7668
      %v7670 = vmul.f32 %v7667, %v7669
      %v7671 = vadd.f32 %v7667, %v7670
      %vm7672 = vweird.f32 %v3553
      %vm7673 = vweird.f32 %v7667
      %vm7674 = vmor %vm7672, %vm7673
      %v7675 = vsel %vm7674, %v7667, %v7671
      %v7676 = vand.u32 2147483647, %v3553
      %vm7677 = vcmp.eq.f32.partialorder %v7676, 8.507059e+37
      %v7678 = vand.u32 %v3553, 2147483648
      %v7679 = vor.u32 1.1754944e-38, %v7678
      %v7680 = vsel %vm7677, %v7679, %v7675
      %v7681 = vmul.f32 1.0, %v7680
      %v7682 = vrcp.pop %v3554
      %v7683 = vmul.f32 %v3554, %v7682
      %v7684 = vsub.f32 1.0, %v7683
      %v7685 = vmul.f32 %v7682, %v7684
      %v7686 = vadd.f32 %v7682, %v7685
      %vm7687 = vweird.f32 %v3554
      %vm7688 = vweird.f32 %v7682
      %vm7689 = vmor %vm7687, %vm7688
      %v7690 = vsel %vm7689, %v7682, %v7686
      %v7691 = vand.u32 2147483647, %v3554
      %vm7692 = vcmp.eq.f32.partialorder %v7691, 8.507059e+37
      %v7693 = vand.u32 %v3554, 2147483648
      %v7694 = vor.u32 1.1754944e-38, %v7693
      %v7695 = vsel %vm7692, %v7694, %v7690
      %v7696 = vmul.f32 1.0, %v7695
      %v7697 = vrcp.pop %v3555
      %v7698 = vmul.f32 %v3555, %v7697
      %v7699 = vsub.f32 1.0, %v7698
      %v7700 = vmul.f32 %v7697, %v7699
      %v7701 = vadd.f32 %v7697, %v7700
      %vm7702 = vweird.f32 %v3555
      %vm7703 = vweird.f32 %v7697
      %vm7704 = vmor %vm7702, %vm7703
      %v7705 = vsel %vm7704, %v7697, %v7701
      %v7706 = vand.u32 2147483647, %v3555
      %vm7707 = vcmp.eq.f32.partialorder %v7706, 8.507059e+37
      %v7708 = vand.u32 %v3555, 2147483648
      %v7709 = vor.u32 1.1754944e-38, %v7708
      %v7710 = vsel %vm7707, %v7709, %v7705
      %v7711 = vmul.f32 1.0, %v7710
      %v7712 = vrcp.pop %v3556
      %v7713 = vmul.f32 %v3556, %v7712
      %v7714 = vsub.f32 1.0, %v7713
      %v7715 = vmul.f32 %v7712, %v7714
      %v7716 = vadd.f32 %v7712, %v7715
      %vm7717 = vweird.f32 %v3556
      %vm7718 = vweird.f32 %v7712
      %vm7719 = vmor %vm7717, %vm7718
      %v7720 = vsel %vm7719, %v7712, %v7716
      %v7721 = vand.u32 2147483647, %v3556
      %vm7722 = vcmp.eq.f32.partialorder %v7721, 8.507059e+37
      %v7723 = vand.u32 %v3556, 2147483648
      %v7724 = vor.u32 1.1754944e-38, %v7723
      %v7725 = vsel %vm7722, %v7724, %v7720
      %v7726 = vmul.f32 1.0, %v7725
      %v7727 = vrcp.pop %v3557
      %v7728 = vmul.f32 %v3557, %v7727
      %v7729 = vsub.f32 1.0, %v7728
      %v7730 = vmul.f32 %v7727, %v7729
      %v7731 = vadd.f32 %v7727, %v7730
      %vm7732 = vweird.f32 %v3557
      %vm7733 = vweird.f32 %v7727
      %vm7734 = vmor %vm7732, %vm7733
      %v7735 = vsel %vm7734, %v7727, %v7731
      %v7736 = vand.u32 2147483647, %v3557
      %vm7737 = vcmp.eq.f32.partialorder %v7736, 8.507059e+37
      %v7738 = vand.u32 %v3557, 2147483648
      %v7739 = vor.u32 1.1754944e-38, %v7738
      %v7740 = vsel %vm7737, %v7739, %v7735
      %v7741 = vmul.f32 1.0, %v7740
      %v7742 = vrcp.pop %v3558
      %v7743 = vmul.f32 %v3558, %v7742
      %v7744 = vsub.f32 1.0, %v7743
      %v7745 = vmul.f32 %v7742, %v7744
      %v7746 = vadd.f32 %v7742, %v7745
      %vm7747 = vweird.f32 %v3558
      %vm7748 = vweird.f32 %v7742
      %vm7749 = vmor %vm7747, %vm7748
      %v7750 = vsel %vm7749, %v7742, %v7746
      %v7751 = vand.u32 2147483647, %v3558
      %vm7752 = vcmp.eq.f32.partialorder %v7751, 8.507059e+37
      %v7753 = vand.u32 %v3558, 2147483648
      %v7754 = vor.u32 1.1754944e-38, %v7753
      %v7755 = vsel %vm7752, %v7754, %v7750
      %v7756 = vmul.f32 1.0, %v7755
      %v7757 = vrcp.pop %v3559
      %v7758 = vmul.f32 %v3559, %v7757
      %v7759 = vsub.f32 1.0, %v7758
      %v7760 = vmul.f32 %v7757, %v7759
      %v7761 = vadd.f32 %v7757, %v7760
      %vm7762 = vweird.f32 %v3559
      %vm7763 = vweird.f32 %v7757
      %vm7764 = vmor %vm7762, %vm7763
      %v7765 = vsel %vm7764, %v7757, %v7761
      %v7766 = vand.u32 2147483647, %v3559
      %vm7767 = vcmp.eq.f32.partialorder %v7766, 8.507059e+37
      %v7768 = vand.u32 %v3559, 2147483648
      %v7769 = vor.u32 1.1754944e-38, %v7768
      %v7770 = vsel %vm7767, %v7769, %v7765
      %v7771 = vmul.f32 1.0, %v7770
      %v7772 = vrcp.pop %v3560
      %v7773 = vmul.f32 %v3560, %v7772
      %v7774 = vsub.f32 1.0, %v7773
      %v7775 = vmul.f32 %v7772, %v7774
      %v7776 = vadd.f32 %v7772, %v7775
      %vm7777 = vweird.f32 %v3560
      %vm7778 = vweird.f32 %v7772
      %vm7779 = vmor %vm7777, %vm7778
      %v7780 = vsel %vm7779, %v7772, %v7776
      %v7781 = vand.u32 2147483647, %v3560
      %vm7782 = vcmp.eq.f32.partialorder %v7781, 8.507059e+37
      %v7783 = vand.u32 %v3560, 2147483648
      %v7784 = vor.u32 1.1754944e-38, %v7783
      %v7785 = vsel %vm7782, %v7784, %v7780
      %v7786 = vmul.f32 1.0, %v7785
      %v7787 = vrcp.pop %v3561
      %v7788 = vmul.f32 %v3561, %v7787
      %v7789 = vsub.f32 1.0, %v7788
      %v7790 = vmul.f32 %v7787, %v7789
      %v7791 = vadd.f32 %v7787, %v7790
      %vm7792 = vweird.f32 %v3561
      %vm7793 = vweird.f32 %v7787
      %vm7794 = vmor %vm7792, %vm7793
      %v7795 = vsel %vm7794, %v7787, %v7791
      %v7796 = vand.u32 2147483647, %v3561
      %vm7797 = vcmp.eq.f32.partialorder %v7796, 8.507059e+37
      %v7798 = vand.u32 %v3561, 2147483648
      %v7799 = vor.u32 1.1754944e-38, %v7798
      %v7800 = vsel %vm7797, %v7799, %v7795
      %v7801 = vmul.f32 1.0, %v7800
      %v7802 = vrcp.pop %v3562
      %v7803 = vmul.f32 %v3562, %v7802
      %v7804 = vsub.f32 1.0, %v7803
      %v7805 = vmul.f32 %v7802, %v7804
      %v7806 = vadd.f32 %v7802, %v7805
      %vm7807 = vweird.f32 %v3562
      %vm7808 = vweird.f32 %v7802
      %vm7809 = vmor %vm7807, %vm7808
      %v7810 = vsel %vm7809, %v7802, %v7806
      %v7811 = vand.u32 2147483647, %v3562
      %vm7812 = vcmp.eq.f32.partialorder %v7811, 8.507059e+37
      %v7813 = vand.u32 %v3562, 2147483648
      %v7814 = vor.u32 1.1754944e-38, %v7813
      %v7815 = vsel %vm7812, %v7814, %v7810
      %v7816 = vmul.f32 1.0, %v7815
      %v7817 = vrcp.pop %v3563
      %v7818 = vmul.f32 %v3563, %v7817
      %v7819 = vsub.f32 1.0, %v7818
      %v7820 = vmul.f32 %v7817, %v7819
      %v7821 = vadd.f32 %v7817, %v7820
      %vm7822 = vweird.f32 %v3563
      %vm7823 = vweird.f32 %v7817
      %vm7824 = vmor %vm7822, %vm7823
      %v7825 = vsel %vm7824, %v7817, %v7821
      %v7826 = vand.u32 2147483647, %v3563
      %vm7827 = vcmp.eq.f32.partialorder %v7826, 8.507059e+37
      %v7828 = vand.u32 %v3563, 2147483648
      %v7829 = vor.u32 1.1754944e-38, %v7828
      %v7830 = vsel %vm7827, %v7829, %v7825
      %v7831 = vmul.f32 1.0, %v7830
      %v7832 = vrcp.pop %v3564
      %v7833 = vmul.f32 %v3564, %v7832
      %v7834 = vsub.f32 1.0, %v7833
      %v7835 = vmul.f32 %v7832, %v7834
      %v7836 = vadd.f32 %v7832, %v7835
      %vm7837 = vweird.f32 %v3564
      %vm7838 = vweird.f32 %v7832
      %vm7839 = vmor %vm7837, %vm7838
      %v7840 = vsel %vm7839, %v7832, %v7836
      %v7841 = vand.u32 2147483647, %v3564
      %vm7842 = vcmp.eq.f32.partialorder %v7841, 8.507059e+37
      %v7843 = vand.u32 %v3564, 2147483648
      %v7844 = vor.u32 1.1754944e-38, %v7843
      %v7845 = vsel %vm7842, %v7844, %v7840
      %v7846 = vmul.f32 1.0, %v7845
      %v7847 = vrcp.pop %v3565
      %v7848 = vmul.f32 %v3565, %v7847
      %v7849 = vsub.f32 1.0, %v7848
      %v7850 = vmul.f32 %v7847, %v7849
      %v7851 = vadd.f32 %v7847, %v7850
      %vm7852 = vweird.f32 %v3565
      %vm7853 = vweird.f32 %v7847
      %vm7854 = vmor %vm7852, %vm7853
      %v7855 = vsel %vm7854, %v7847, %v7851
      %v7856 = vand.u32 2147483647, %v3565
      %vm7857 = vcmp.eq.f32.partialorder %v7856, 8.507059e+37
      %v7858 = vand.u32 %v3565, 2147483648
      %v7859 = vor.u32 1.1754944e-38, %v7858
      %v7860 = vsel %vm7857, %v7859, %v7855
      %v7861 = vmul.f32 1.0, %v7860
      %v7862 = vrcp.pop %v3566
      %v7863 = vmul.f32 %v3566, %v7862
      %v7864 = vsub.f32 1.0, %v7863
      %v7865 = vmul.f32 %v7862, %v7864
      %v7866 = vadd.f32 %v7862, %v7865
      %vm7867 = vweird.f32 %v3566
      %vm7868 = vweird.f32 %v7862
      %vm7869 = vmor %vm7867, %vm7868
      %v7870 = vsel %vm7869, %v7862, %v7866
      %v7871 = vand.u32 2147483647, %v3566
      %vm7872 = vcmp.eq.f32.partialorder %v7871, 8.507059e+37
      %v7873 = vand.u32 %v3566, 2147483648
      %v7874 = vor.u32 1.1754944e-38, %v7873
      %v7875 = vsel %vm7872, %v7874, %v7870
      %v7876 = vmul.f32 1.0, %v7875
      %v7877 = vrcp.pop %v3567
      %v7878 = vmul.f32 %v3567, %v7877
      %v7879 = vsub.f32 1.0, %v7878
      %v7880 = vmul.f32 %v7877, %v7879
      %v7881 = vadd.f32 %v7877, %v7880
      %vm7882 = vweird.f32 %v3567
      %vm7883 = vweird.f32 %v7877
      %vm7884 = vmor %vm7882, %vm7883
      %v7885 = vsel %vm7884, %v7877, %v7881
      %v7886 = vand.u32 2147483647, %v3567
      %vm7887 = vcmp.eq.f32.partialorder %v7886, 8.507059e+37
      %v7888 = vand.u32 %v3567, 2147483648
      %v7889 = vor.u32 1.1754944e-38, %v7888
      %v7890 = vsel %vm7887, %v7889, %v7885
      %v7891 = vmul.f32 1.0, %v7890
      %v7892 = vrcp.pop %v3568
      %v7893 = vmul.f32 %v3568, %v7892
      %v7894 = vsub.f32 1.0, %v7893
      %v7895 = vmul.f32 %v7892, %v7894
      %v7896 = vadd.f32 %v7892, %v7895
      %vm7897 = vweird.f32 %v3568
      %vm7898 = vweird.f32 %v7892
      %vm7899 = vmor %vm7897, %vm7898
      %v7900 = vsel %vm7899, %v7892, %v7896
      %v7901 = vand.u32 2147483647, %v3568
      %vm7902 = vcmp.eq.f32.partialorder %v7901, 8.507059e+37
      %v7903 = vand.u32 %v3568, 2147483648
      %v7904 = vor.u32 1.1754944e-38, %v7903
      %v7905 = vsel %vm7902, %v7904, %v7900
      %v7906 = vmul.f32 1.0, %v7905
      %v7907 = vrcp.pop %v3569
      %v7908 = vmul.f32 %v3569, %v7907
      %v7909 = vsub.f32 1.0, %v7908
      %v7910 = vmul.f32 %v7907, %v7909
      %v7911 = vadd.f32 %v7907, %v7910
      %vm7912 = vweird.f32 %v3569
      %vm7913 = vweird.f32 %v7907
      %vm7914 = vmor %vm7912, %vm7913
      %v7915 = vsel %vm7914, %v7907, %v7911
      %v7916 = vand.u32 2147483647, %v3569
      %vm7917 = vcmp.eq.f32.partialorder %v7916, 8.507059e+37
      %v7918 = vand.u32 %v3569, 2147483648
      %v7919 = vor.u32 1.1754944e-38, %v7918
      %v7920 = vsel %vm7917, %v7919, %v7915
      %v7921 = vmul.f32 1.0, %v7920
      %v7922 = vrcp.pop %v3570
      %v7923 = vmul.f32 %v3570, %v7922
      %v7924 = vsub.f32 1.0, %v7923
      %v7925 = vmul.f32 %v7922, %v7924
      %v7926 = vadd.f32 %v7922, %v7925
      %vm7927 = vweird.f32 %v3570
      %vm7928 = vweird.f32 %v7922
      %vm7929 = vmor %vm7927, %vm7928
      %v7930 = vsel %vm7929, %v7922, %v7926
      %v7931 = vand.u32 2147483647, %v3570
      %vm7932 = vcmp.eq.f32.partialorder %v7931, 8.507059e+37
      %v7933 = vand.u32 %v3570, 2147483648
      %v7934 = vor.u32 1.1754944e-38, %v7933
      %v7935 = vsel %vm7932, %v7934, %v7930
      %v7936 = vmul.f32 1.0, %v7935
      %v7937 = vrcp.pop %v3571
      %v7938 = vmul.f32 %v3571, %v7937
      %v7939 = vsub.f32 1.0, %v7938
      %v7940 = vmul.f32 %v7937, %v7939
      %v7941 = vadd.f32 %v7937, %v7940
      %vm7942 = vweird.f32 %v3571
      %vm7943 = vweird.f32 %v7937
      %vm7944 = vmor %vm7942, %vm7943
      %v7945 = vsel %vm7944, %v7937, %v7941
      %v7946 = vand.u32 2147483647, %v3571
      %vm7947 = vcmp.eq.f32.partialorder %v7946, 8.507059e+37
      %v7948 = vand.u32 %v3571, 2147483648
      %v7949 = vor.u32 1.1754944e-38, %v7948
      %v7950 = vsel %vm7947, %v7949, %v7945
      %v7951 = vmul.f32 1.0, %v7950
      %v7952 = vrcp.pop %v3572
      %v7953 = vmul.f32 %v3572, %v7952
      %v7954 = vsub.f32 1.0, %v7953
      %v7955 = vmul.f32 %v7952, %v7954
      %v7956 = vadd.f32 %v7952, %v7955
      %vm7957 = vweird.f32 %v3572
      %vm7958 = vweird.f32 %v7952
      %vm7959 = vmor %vm7957, %vm7958
      %v7960 = vsel %vm7959, %v7952, %v7956
      %v7961 = vand.u32 2147483647, %v3572
      %vm7962 = vcmp.eq.f32.partialorder %v7961, 8.507059e+37
      %v7963 = vand.u32 %v3572, 2147483648
      %v7964 = vor.u32 1.1754944e-38, %v7963
      %v7965 = vsel %vm7962, %v7964, %v7960
      %v7966 = vmul.f32 1.0, %v7965
      %v7967 = vrcp.pop %v3573
      %v7968 = vmul.f32 %v3573, %v7967
      %v7969 = vsub.f32 1.0, %v7968
      %v7970 = vmul.f32 %v7967, %v7969
      %v7971 = vadd.f32 %v7967, %v7970
      %vm7972 = vweird.f32 %v3573
      %vm7973 = vweird.f32 %v7967
      %vm7974 = vmor %vm7972, %vm7973
      %v7975 = vsel %vm7974, %v7967, %v7971
      %v7976 = vand.u32 2147483647, %v3573
      %vm7977 = vcmp.eq.f32.partialorder %v7976, 8.507059e+37
      %v7978 = vand.u32 %v3573, 2147483648
      %v7979 = vor.u32 1.1754944e-38, %v7978
      %v7980 = vsel %vm7977, %v7979, %v7975
      %v7981 = vmul.f32 1.0, %v7980
      %v7982 = vrcp.pop %v3574
      %v7983 = vmul.f32 %v3574, %v7982
      %v7984 = vsub.f32 1.0, %v7983
      %v7985 = vmul.f32 %v7982, %v7984
      %v7986 = vadd.f32 %v7982, %v7985
      %vm7987 = vweird.f32 %v3574
      %vm7988 = vweird.f32 %v7982
      %vm7989 = vmor %vm7987, %vm7988
      %v7990 = vsel %vm7989, %v7982, %v7986
      %v7991 = vand.u32 2147483647, %v3574
      %vm7992 = vcmp.eq.f32.partialorder %v7991, 8.507059e+37
      %v7993 = vand.u32 %v3574, 2147483648
      %v7994 = vor.u32 1.1754944e-38, %v7993
      %v7995 = vsel %vm7992, %v7994, %v7990
      %v7996 = vmul.f32 1.0, %v7995
      %v7997 = vrcp.pop %v3575
      %v7998 = vmul.f32 %v3575, %v7997
      %v7999 = vsub.f32 1.0, %v7998
      %v8000 = vmul.f32 %v7997, %v7999
      %v8001 = vadd.f32 %v7997, %v8000
      %vm8002 = vweird.f32 %v3575
      %vm8003 = vweird.f32 %v7997
      %vm8004 = vmor %vm8002, %vm8003
      %v8005 = vsel %vm8004, %v7997, %v8001
      %v8006 = vand.u32 2147483647, %v3575
      %vm8007 = vcmp.eq.f32.partialorder %v8006, 8.507059e+37
      %v8008 = vand.u32 %v3575, 2147483648
      %v8009 = vor.u32 1.1754944e-38, %v8008
      %v8010 = vsel %vm8007, %v8009, %v8005
      %v8011 = vmul.f32 1.0, %v8010
      %v8012 = vrcp.pop %v3576
      %v8013 = vmul.f32 %v3576, %v8012
      %v8014 = vsub.f32 1.0, %v8013
      %v8015 = vmul.f32 %v8012, %v8014
      %v8016 = vadd.f32 %v8012, %v8015
      %vm8017 = vweird.f32 %v3576
      %vm8018 = vweird.f32 %v8012
      %vm8019 = vmor %vm8017, %vm8018
      %v8020 = vsel %vm8019, %v8012, %v8016
      %v8021 = vand.u32 2147483647, %v3576
      %vm8022 = vcmp.eq.f32.partialorder %v8021, 8.507059e+37
      %v8023 = vand.u32 %v3576, 2147483648
      %v8024 = vor.u32 1.1754944e-38, %v8023
      %v8025 = vsel %vm8022, %v8024, %v8020
      %v8026 = vmul.f32 1.0, %v8025
      %v8027 = vrcp.pop %v3577
      %v8028 = vmul.f32 %v3577, %v8027
      %v8029 = vsub.f32 1.0, %v8028
      %v8030 = vmul.f32 %v8027, %v8029
      %v8031 = vadd.f32 %v8027, %v8030
      %vm8032 = vweird.f32 %v3577
      %vm8033 = vweird.f32 %v8027
      %vm8034 = vmor %vm8032, %vm8033
      %v8035 = vsel %vm8034, %v8027, %v8031
      %v8036 = vand.u32 2147483647, %v3577
      %vm8037 = vcmp.eq.f32.partialorder %v8036, 8.507059e+37
      %v8038 = vand.u32 %v3577, 2147483648
      %v8039 = vor.u32 1.1754944e-38, %v8038
      %v8040 = vsel %vm8037, %v8039, %v8035
      %v8041 = vmul.f32 1.0, %v8040
      %v8042 = vrcp.pop %v3578
      %v8043 = vmul.f32 %v3578, %v8042
      %v8044 = vsub.f32 1.0, %v8043
      %v8045 = vmul.f32 %v8042, %v8044
      %v8046 = vadd.f32 %v8042, %v8045
      %vm8047 = vweird.f32 %v3578
      %vm8048 = vweird.f32 %v8042
      %vm8049 = vmor %vm8047, %vm8048
      %v8050 = vsel %vm8049, %v8042, %v8046
      %v8051 = vand.u32 2147483647, %v3578
      %vm8052 = vcmp.eq.f32.partialorder %v8051, 8.507059e+37
      %v8053 = vand.u32 %v3578, 2147483648
      %v8054 = vor.u32 1.1754944e-38, %v8053
      %v8055 = vsel %vm8052, %v8054, %v8050
      %v8056 = vmul.f32 1.0, %v8055
      %v8057 = vrcp.pop %v3579
      %v8058 = vmul.f32 %v3579, %v8057
      %v8059 = vsub.f32 1.0, %v8058
      %v8060 = vmul.f32 %v8057, %v8059
      %v8061 = vadd.f32 %v8057, %v8060
      %vm8062 = vweird.f32 %v3579
      %vm8063 = vweird.f32 %v8057
      %vm8064 = vmor %vm8062, %vm8063
      %v8065 = vsel %vm8064, %v8057, %v8061
      %v8066 = vand.u32 2147483647, %v3579
      %vm8067 = vcmp.eq.f32.partialorder %v8066, 8.507059e+37
      %v8068 = vand.u32 %v3579, 2147483648
      %v8069 = vor.u32 1.1754944e-38, %v8068
      %v8070 = vsel %vm8067, %v8069, %v8065
      %v8071 = vmul.f32 1.0, %v8070
      %v8072 = vrcp.pop %v3580
      %v8073 = vmul.f32 %v3580, %v8072
      %v8074 = vsub.f32 1.0, %v8073
      %v8075 = vmul.f32 %v8072, %v8074
      %v8076 = vadd.f32 %v8072, %v8075
      %vm8077 = vweird.f32 %v3580
      %vm8078 = vweird.f32 %v8072
      %vm8079 = vmor %vm8077, %vm8078
      %v8080 = vsel %vm8079, %v8072, %v8076
      %v8081 = vand.u32 2147483647, %v3580
      %vm8082 = vcmp.eq.f32.partialorder %v8081, 8.507059e+37
      %v8083 = vand.u32 %v3580, 2147483648
      %v8084 = vor.u32 1.1754944e-38, %v8083
      %v8085 = vsel %vm8082, %v8084, %v8080
      %v8086 = vmul.f32 1.0, %v8085
      %v8087 = vrcp.pop %v3581
      %v8088 = vmul.f32 %v3581, %v8087
      %v8089 = vsub.f32 1.0, %v8088
      %v8090 = vmul.f32 %v8087, %v8089
      %v8091 = vadd.f32 %v8087, %v8090
      %vm8092 = vweird.f32 %v3581
      %vm8093 = vweird.f32 %v8087
      %vm8094 = vmor %vm8092, %vm8093
      %v8095 = vsel %vm8094, %v8087, %v8091
      %v8096 = vand.u32 2147483647, %v3581
      %vm8097 = vcmp.eq.f32.partialorder %v8096, 8.507059e+37
      %v8098 = vand.u32 %v3581, 2147483648
      %v8099 = vor.u32 1.1754944e-38, %v8098
      %v8100 = vsel %vm8097, %v8099, %v8095
      %v8101 = vmul.f32 1.0, %v8100
      %v8102 = vrcp.pop %v3582
      %v8103 = vmul.f32 %v3582, %v8102
      %v8104 = vsub.f32 1.0, %v8103
      %v8105 = vmul.f32 %v8102, %v8104
      %v8106 = vadd.f32 %v8102, %v8105
      %vm8107 = vweird.f32 %v3582
      %vm8108 = vweird.f32 %v8102
      %vm8109 = vmor %vm8107, %vm8108
      %v8110 = vsel %vm8109, %v8102, %v8106
      %v8111 = vand.u32 2147483647, %v3582
      %vm8112 = vcmp.eq.f32.partialorder %v8111, 8.507059e+37
      %v8113 = vand.u32 %v3582, 2147483648
      %v8114 = vor.u32 1.1754944e-38, %v8113
      %v8115 = vsel %vm8112, %v8114, %v8110
      %v8116 = vmul.f32 1.0, %v8115
      %v8117 = vrcp.pop %v3583
      %v8118 = vmul.f32 %v3583, %v8117
      %v8119 = vsub.f32 1.0, %v8118
      %v8120 = vmul.f32 %v8117, %v8119
      %v8121 = vadd.f32 %v8117, %v8120
      %vm8122 = vweird.f32 %v3583
      %vm8123 = vweird.f32 %v8117
      %vm8124 = vmor %vm8122, %vm8123
      %v8125 = vsel %vm8124, %v8117, %v8121
      %v8126 = vand.u32 2147483647, %v3583
      %vm8127 = vcmp.eq.f32.partialorder %v8126, 8.507059e+37
      %v8128 = vand.u32 %v3583, 2147483648
      %v8129 = vor.u32 1.1754944e-38, %v8128
      %v8130 = vsel %vm8127, %v8129, %v8125
      %v8131 = vmul.f32 1.0, %v8130
      %v8132 = vrcp.pop %v3584
      %v8133 = vmul.f32 %v3584, %v8132
      %v8134 = vsub.f32 1.0, %v8133
      %v8135 = vmul.f32 %v8132, %v8134
      %v8136 = vadd.f32 %v8132, %v8135
      %vm8137 = vweird.f32 %v3584
      %vm8138 = vweird.f32 %v8132
      %vm8139 = vmor %vm8137, %vm8138
      %v8140 = vsel %vm8139, %v8132, %v8136
      %v8141 = vand.u32 2147483647, %v3584
      %vm8142 = vcmp.eq.f32.partialorder %v8141, 8.507059e+37
      %v8143 = vand.u32 %v3584, 2147483648
      %v8144 = vor.u32 1.1754944e-38, %v8143
      %v8145 = vsel %vm8142, %v8144, %v8140
      %v8146 = vmul.f32 1.0, %v8145
      %v8147 = vrcp.pop %v3585
      %v8148 = vmul.f32 %v3585, %v8147
      %v8149 = vsub.f32 1.0, %v8148
      %v8150 = vmul.f32 %v8147, %v8149
      %v8151 = vadd.f32 %v8147, %v8150
      %vm8152 = vweird.f32 %v3585
      %vm8153 = vweird.f32 %v8147
      %vm8154 = vmor %vm8152, %vm8153
      %v8155 = vsel %vm8154, %v8147, %v8151
      %v8156 = vand.u32 2147483647, %v3585
      %vm8157 = vcmp.eq.f32.partialorder %v8156, 8.507059e+37
      %v8158 = vand.u32 %v3585, 2147483648
      %v8159 = vor.u32 1.1754944e-38, %v8158
      %v8160 = vsel %vm8157, %v8159, %v8155
      %v8161 = vmul.f32 1.0, %v8160
      %v8162 = vrcp.pop %v3586
      %v8163 = vmul.f32 %v3586, %v8162
      %v8164 = vsub.f32 1.0, %v8163
      %v8165 = vmul.f32 %v8162, %v8164
      %v8166 = vadd.f32 %v8162, %v8165
      %vm8167 = vweird.f32 %v3586
      %vm8168 = vweird.f32 %v8162
      %vm8169 = vmor %vm8167, %vm8168
      %v8170 = vsel %vm8169, %v8162, %v8166
      %v8171 = vand.u32 2147483647, %v3586
      %vm8172 = vcmp.eq.f32.partialorder %v8171, 8.507059e+37
      %v8173 = vand.u32 %v3586, 2147483648
      %v8174 = vor.u32 1.1754944e-38, %v8173
      %v8175 = vsel %vm8172, %v8174, %v8170
      %v8176 = vmul.f32 1.0, %v8175
      %v8177 = vrcp.pop %v3587
      %v8178 = vmul.f32 %v3587, %v8177
      %v8179 = vsub.f32 1.0, %v8178
      %v8180 = vmul.f32 %v8177, %v8179
      %v8181 = vadd.f32 %v8177, %v8180
      %vm8182 = vweird.f32 %v3587
      %vm8183 = vweird.f32 %v8177
      %vm8184 = vmor %vm8182, %vm8183
      %v8185 = vsel %vm8184, %v8177, %v8181
      %v8186 = vand.u32 2147483647, %v3587
      %vm8187 = vcmp.eq.f32.partialorder %v8186, 8.507059e+37
      %v8188 = vand.u32 %v3587, 2147483648
      %v8189 = vor.u32 1.1754944e-38, %v8188
      %v8190 = vsel %vm8187, %v8189, %v8185
      %v8191 = vmul.f32 1.0, %v8190
      %v8192 = vrcp.pop %v3588
      %v8193 = vmul.f32 %v3588, %v8192
      %v8194 = vsub.f32 1.0, %v8193
      %v8195 = vmul.f32 %v8192, %v8194
      %v8196 = vadd.f32 %v8192, %v8195
      %vm8197 = vweird.f32 %v3588
      %vm8198 = vweird.f32 %v8192
      %vm8199 = vmor %vm8197, %vm8198
      %v8200 = vsel %vm8199, %v8192, %v8196
      %v8201 = vand.u32 2147483647, %v3588
      %vm8202 = vcmp.eq.f32.partialorder %v8201, 8.507059e+37
      %v8203 = vand.u32 %v3588, 2147483648
      %v8204 = vor.u32 1.1754944e-38, %v8203
      %v8205 = vsel %vm8202, %v8204, %v8200
      %v8206 = vmul.f32 1.0, %v8205
      %v8207 = vrcp.pop %v3589
      %v8208 = vmul.f32 %v3589, %v8207
      %v8209 = vsub.f32 1.0, %v8208
      %v8210 = vmul.f32 %v8207, %v8209
      %v8211 = vadd.f32 %v8207, %v8210
      %vm8212 = vweird.f32 %v3589
      %vm8213 = vweird.f32 %v8207
      %vm8214 = vmor %vm8212, %vm8213
      %v8215 = vsel %vm8214, %v8207, %v8211
      %v8216 = vand.u32 2147483647, %v3589
      %vm8217 = vcmp.eq.f32.partialorder %v8216, 8.507059e+37
      %v8218 = vand.u32 %v3589, 2147483648
      %v8219 = vor.u32 1.1754944e-38, %v8218
      %v8220 = vsel %vm8217, %v8219, %v8215
      %v8221 = vmul.f32 1.0, %v8220
      %v8222 = vrcp.pop %v3590
      %v8223 = vmul.f32 %v3590, %v8222
      %v8224 = vsub.f32 1.0, %v8223
      %v8225 = vmul.f32 %v8222, %v8224
      %v8226 = vadd.f32 %v8222, %v8225
      %vm8227 = vweird.f32 %v3590
      %vm8228 = vweird.f32 %v8222
      %vm8229 = vmor %vm8227, %vm8228
      %v8230 = vsel %vm8229, %v8222, %v8226
      %v8231 = vand.u32 2147483647, %v3590
      %vm8232 = vcmp.eq.f32.partialorder %v8231, 8.507059e+37
      %v8233 = vand.u32 %v3590, 2147483648
      %v8234 = vor.u32 1.1754944e-38, %v8233
      %v8235 = vsel %vm8232, %v8234, %v8230
      %v8236 = vmul.f32 1.0, %v8235
      %v8237 = vrcp.pop %v3591
      %v8238 = vmul.f32 %v3591, %v8237
      %v8239 = vsub.f32 1.0, %v8238
      %v8240 = vmul.f32 %v8237, %v8239
      %v8241 = vadd.f32 %v8237, %v8240
      %vm8242 = vweird.f32 %v3591
      %vm8243 = vweird.f32 %v8237
      %vm8244 = vmor %vm8242, %vm8243
      %v8245 = vsel %vm8244, %v8237, %v8241
      %v8246 = vand.u32 2147483647, %v3591
      %vm8247 = vcmp.eq.f32.partialorder %v8246, 8.507059e+37
      %v8248 = vand.u32 %v3591, 2147483648
      %v8249 = vor.u32 1.1754944e-38, %v8248
      %v8250 = vsel %vm8247, %v8249, %v8245
      %v8251 = vmul.f32 1.0, %v8250
      %v8252 = vrcp.pop %v3592
      %v8253 = vmul.f32 %v3592, %v8252
      %v8254 = vsub.f32 1.0, %v8253
      %v8255 = vmul.f32 %v8252, %v8254
      %v8256 = vadd.f32 %v8252, %v8255
      %vm8257 = vweird.f32 %v3592
      %vm8258 = vweird.f32 %v8252
      %vm8259 = vmor %vm8257, %vm8258
      %v8260 = vsel %vm8259, %v8252, %v8256
      %v8261 = vand.u32 2147483647, %v3592
      %vm8262 = vcmp.eq.f32.partialorder %v8261, 8.507059e+37
      %v8263 = vand.u32 %v3592, 2147483648
      %v8264 = vor.u32 1.1754944e-38, %v8263
      %v8265 = vsel %vm8262, %v8264, %v8260
      %v8266 = vmul.f32 1.0, %v8265
      %v8267 = vrcp.pop %v3593
      %v8268 = vmul.f32 %v3593, %v8267
      %v8269 = vsub.f32 1.0, %v8268
      %v8270 = vmul.f32 %v8267, %v8269
      %v8271 = vadd.f32 %v8267, %v8270
      %vm8272 = vweird.f32 %v3593
      %vm8273 = vweird.f32 %v8267
      %vm8274 = vmor %vm8272, %vm8273
      %v8275 = vsel %vm8274, %v8267, %v8271
      %v8276 = vand.u32 2147483647, %v3593
      %vm8277 = vcmp.eq.f32.partialorder %v8276, 8.507059e+37
      %v8278 = vand.u32 %v3593, 2147483648
      %v8279 = vor.u32 1.1754944e-38, %v8278
      %v8280 = vsel %vm8277, %v8279, %v8275
      %v8281 = vmul.f32 1.0, %v8280
      %v8282 = vrcp.pop %v3594
      %v8283 = vmul.f32 %v3594, %v8282
      %v8284 = vsub.f32 1.0, %v8283
      %v8285 = vmul.f32 %v8282, %v8284
      %v8286 = vadd.f32 %v8282, %v8285
      %vm8287 = vweird.f32 %v3594
      %vm8288 = vweird.f32 %v8282
      %vm8289 = vmor %vm8287, %vm8288
      %v8290 = vsel %vm8289, %v8282, %v8286
      %v8291 = vand.u32 2147483647, %v3594
      %vm8292 = vcmp.eq.f32.partialorder %v8291, 8.507059e+37
      %v8293 = vand.u32 %v3594, 2147483648
      %v8294 = vor.u32 1.1754944e-38, %v8293
      %v8295 = vsel %vm8292, %v8294, %v8290
      %v8296 = vmul.f32 1.0, %v8295
      %v8297 = vrcp.pop %v3595
      %v8298 = vmul.f32 %v3595, %v8297
      %v8299 = vsub.f32 1.0, %v8298
      %v8300 = vmul.f32 %v8297, %v8299
      %v8301 = vadd.f32 %v8297, %v8300
      %vm8302 = vweird.f32 %v3595
      %vm8303 = vweird.f32 %v8297
      %vm8304 = vmor %vm8302, %vm8303
      %v8305 = vsel %vm8304, %v8297, %v8301
      %v8306 = vand.u32 2147483647, %v3595
      %vm8307 = vcmp.eq.f32.partialorder %v8306, 8.507059e+37
      %v8308 = vand.u32 %v3595, 2147483648
      %v8309 = vor.u32 1.1754944e-38, %v8308
      %v8310 = vsel %vm8307, %v8309, %v8305
      %v8311 = vmul.f32 1.0, %v8310
      %v8312 = vrcp.pop %v3596
      %v8313 = vmul.f32 %v3596, %v8312
      %v8314 = vsub.f32 1.0, %v8313
      %v8315 = vmul.f32 %v8312, %v8314
      %v8316 = vadd.f32 %v8312, %v8315
      %vm8317 = vweird.f32 %v3596
      %vm8318 = vweird.f32 %v8312
      %vm8319 = vmor %vm8317, %vm8318
      %v8320 = vsel %vm8319, %v8312, %v8316
      %v8321 = vand.u32 2147483647, %v3596
      %vm8322 = vcmp.eq.f32.partialorder %v8321, 8.507059e+37
      %v8323 = vand.u32 %v3596, 2147483648
      %v8324 = vor.u32 1.1754944e-38, %v8323
      %v8325 = vsel %vm8322, %v8324, %v8320
      %v8326 = vmul.f32 1.0, %v8325
      %v8327 = vrcp.pop %v3597
      %v8328 = vmul.f32 %v3597, %v8327
      %v8329 = vsub.f32 1.0, %v8328
      %v8330 = vmul.f32 %v8327, %v8329
      %v8331 = vadd.f32 %v8327, %v8330
      %vm8332 = vweird.f32 %v3597
      %vm8333 = vweird.f32 %v8327
      %vm8334 = vmor %vm8332, %vm8333
      %v8335 = vsel %vm8334, %v8327, %v8331
      %v8336 = vand.u32 2147483647, %v3597
      %vm8337 = vcmp.eq.f32.partialorder %v8336, 8.507059e+37
      %v8338 = vand.u32 %v3597, 2147483648
      %v8339 = vor.u32 1.1754944e-38, %v8338
      %v8340 = vsel %vm8337, %v8339, %v8335
      %v8341 = vmul.f32 1.0, %v8340
      %v8342 = vrcp.pop %v3598
      %v8343 = vmul.f32 %v3598, %v8342
      %v8344 = vsub.f32 1.0, %v8343
      %v8345 = vmul.f32 %v8342, %v8344
      %v8346 = vadd.f32 %v8342, %v8345
      %vm8347 = vweird.f32 %v3598
      %vm8348 = vweird.f32 %v8342
      %vm8349 = vmor %vm8347, %vm8348
      %v8350 = vsel %vm8349, %v8342, %v8346
      %v8351 = vand.u32 2147483647, %v3598
      %vm8352 = vcmp.eq.f32.partialorder %v8351, 8.507059e+37
      %v8353 = vand.u32 %v3598, 2147483648
      %v8354 = vor.u32 1.1754944e-38, %v8353
      %v8355 = vsel %vm8352, %v8354, %v8350
      %v8356 = vmul.f32 1.0, %v8355
      %v8357 = vrcp.pop %v3599
      %v8358 = vmul.f32 %v3599, %v8357
      %v8359 = vsub.f32 1.0, %v8358
      %v8360 = vmul.f32 %v8357, %v8359
      %v8361 = vadd.f32 %v8357, %v8360
      %vm8362 = vweird.f32 %v3599
      %vm8363 = vweird.f32 %v8357
      %vm8364 = vmor %vm8362, %vm8363
      %v8365 = vsel %vm8364, %v8357, %v8361
      %v8366 = vand.u32 2147483647, %v3599
      %vm8367 = vcmp.eq.f32.partialorder %v8366, 8.507059e+37
      %v8368 = vand.u32 %v3599, 2147483648
      %v8369 = vor.u32 1.1754944e-38, %v8368
      %v8370 = vsel %vm8367, %v8369, %v8365
      %v8371 = vmul.f32 1.0, %v8370
      %v8372 = vrcp.pop %v3600
      %v8373 = vmul.f32 %v3600, %v8372
      %v8374 = vsub.f32 1.0, %v8373
      %v8375 = vmul.f32 %v8372, %v8374
      %v8376 = vadd.f32 %v8372, %v8375
      %vm8377 = vweird.f32 %v3600
      %vm8378 = vweird.f32 %v8372
      %vm8379 = vmor %vm8377, %vm8378
      %v8380 = vsel %vm8379, %v8372, %v8376
      %v8381 = vand.u32 2147483647, %v3600
      %vm8382 = vcmp.eq.f32.partialorder %v8381, 8.507059e+37
      %v8383 = vand.u32 %v3600, 2147483648
      %v8384 = vor.u32 1.1754944e-38, %v8383
      %v8385 = vsel %vm8382, %v8384, %v8380
      %v8386 = vmul.f32 1.0, %v8385
      %v8387 = vrcp.pop %v3601
      %v8388 = vmul.f32 %v3601, %v8387
      %v8389 = vsub.f32 1.0, %v8388
      %v8390 = vmul.f32 %v8387, %v8389
      %v8391 = vadd.f32 %v8387, %v8390
      %vm8392 = vweird.f32 %v3601
      %vm8393 = vweird.f32 %v8387
      %vm8394 = vmor %vm8392, %vm8393
      %v8395 = vsel %vm8394, %v8387, %v8391
      %v8396 = vand.u32 2147483647, %v3601
      %vm8397 = vcmp.eq.f32.partialorder %v8396, 8.507059e+37
      %v8398 = vand.u32 %v3601, 2147483648
      %v8399 = vor.u32 1.1754944e-38, %v8398
      %v8400 = vsel %vm8397, %v8399, %v8395
      %v8401 = vmul.f32 1.0, %v8400
      %v8402 = vmul.f32 %v1442, %v3616
      %v8403 = vmul.f32 %v1531, %v3631
      %v8404 = vmul.f32 %v1620, %v3646
      %v8405 = vmul.f32 %v1709, %v3661
      %v8406 = vmul.f32 %v1798, %v3676
      %v8407 = vmul.f32 %v1887, %v3691
      %v8408 = vmul.f32 %v1976, %v3706
      %v8409 = vmul.f32 %v2065, %v3721
      %v8410 = vmul.f32 %v2154, %v3736
      %v8411 = vmul.f32 %v2243, %v3751
      %v8412 = vmul.f32 %v1444, %v3766
      %v8413 = vmul.f32 %v1533, %v3781
      %v8414 = vmul.f32 %v1622, %v3796
      %v8415 = vmul.f32 %v1711, %v3811
      %v8416 = vmul.f32 %v1800, %v3826
      %v8417 = vmul.f32 %v1889, %v3841
      %v8418 = vmul.f32 %v1978, %v3856
      %v8419 = vmul.f32 %v2067, %v3871
      %v8420 = vmul.f32 %v2156, %v3886
      %v8421 = vmul.f32 %v2245, %v3901
      %v8422 = vmul.f32 %v1447, %v3916
      %v8423 = vmul.f32 %v1536, %v3931
      %v8424 = vmul.f32 %v1625, %v3946
      %v8425 = vmul.f32 %v1714, %v3961
      %v8426 = vmul.f32 %v1803, %v3976
      %v8427 = vmul.f32 %v1892, %v3991
      %v8428 = vmul.f32 %v1981, %v4006
      %v8429 = vmul.f32 %v2070, %v4021
      %v8430 = vmul.f32 %v2159, %v4036
      %v8431 = vmul.f32 %v2248, %v4051
      %v8432 = vmul.f32 %v1449, %v4066
      %v8433 = vmul.f32 %v1538, %v4081
      %v8434 = vmul.f32 %v1627, %v4096
      %v8435 = vmul.f32 %v1716, %v4111
      %v8436 = vmul.f32 %v1805, %v4126
      %v8437 = vmul.f32 %v1894, %v4141
      %v8438 = vmul.f32 %v1983, %v4156
      %v8439 = vmul.f32 %v2072, %v4171
      %v8440 = vmul.f32 %v2161, %v4186
      %v8441 = vmul.f32 %v2250, %v4201
      %v8442 = vmul.f32 %v1452, %v4216
      %v8443 = vmul.f32 %v1541, %v4231
      %v8444 = vmul.f32 %v1630, %v4246
      %v8445 = vmul.f32 %v1719, %v4261
      %v8446 = vmul.f32 %v1808, %v4276
      %v8447 = vmul.f32 %v1897, %v4291
      %v8448 = vmul.f32 %v1986, %v4306
      %v8449 = vmul.f32 %v2075, %v4321
      %v8450 = vmul.f32 %v2164, %v4336
      %v8451 = vmul.f32 %v2253, %v4351
      %v8452 = vmul.f32 %v1454, %v4366
      %v8453 = vmul.f32 %v1543, %v4381
      %v8454 = vmul.f32 %v1632, %v4396
      %v8455 = vmul.f32 %v1721, %v4411
      %v8456 = vmul.f32 %v1810, %v4426
      %v8457 = vmul.f32 %v1899, %v4441
      %v8458 = vmul.f32 %v1988, %v4456
      %v8459 = vmul.f32 %v2077, %v4471
      %v8460 = vmul.f32 %v2166, %v4486
      %v8461 = vmul.f32 %v2255, %v4501
      %v8462 = vmul.f32 %v1457, %v4516
      %v8463 = vmul.f32 %v1546, %v4531
      %v8464 = vmul.f32 %v1635, %v4546
      %v8465 = vmul.f32 %v1724, %v4561
      %v8466 = vmul.f32 %v1813, %v4576
      %v8467 = vmul.f32 %v1902, %v4591
      %v8468 = vmul.f32 %v1991, %v4606
      %v8469 = vmul.f32 %v2080, %v4621
      %v8470 = vmul.f32 %v2169, %v4636
      %v8471 = vmul.f32 %v2258, %v4651
      %v8472 = vmul.f32 %v1459, %v4666
      %v8473 = vmul.f32 %v1548, %v4681
      %v8474 = vmul.f32 %v1637, %v4696
      %v8475 = vmul.f32 %v1726, %v4711
      %v8476 = vmul.f32 %v1815, %v4726
      %v8477 = vmul.f32 %v1904, %v4741
      %v8478 = vmul.f32 %v1993, %v4756
      %v8479 = vmul.f32 %v2082, %v4771
      %v8480 = vmul.f32 %v2171, %v4786
      %v8481 = vmul.f32 %v2260, %v4801
      %v8482 = vmul.f32 %v1462, %v4816
      %v8483 = vmul.f32 %v1551, %v4831
      %v8484 = vmul.f32 %v1640, %v4846
      %v8485 = vmul.f32 %v1729, %v4861
      %v8486 = vmul.f32 %v1818, %v4876
      %v8487 = vmul.f32 %v1907, %v4891
      %v8488 = vmul.f32 %v1996, %v4906
      %v8489 = vmul.f32 %v2085, %v4921
      %v8490 = vmul.f32 %v2174, %v4936
      %v8491 = vmul.f32 %v2263, %v4951
      %v8492 = vmul.f32 %v1464, %v4966
      %v8493 = vmul.f32 %v1553, %v4981
      %v8494 = vmul.f32 %v1642, %v4996
      %v8495 = vmul.f32 %v1731, %v5011
      %v8496 = vmul.f32 %v1820, %v5026
      %v8497 = vmul.f32 %v1909, %v5041
      %v8498 = vmul.f32 %v1998, %v5056
      %v8499 = vmul.f32 %v2087, %v5071
      %v8500 = vmul.f32 %v2176, %v5086
      %v8501 = vmul.f32 %v2265, %v5101
      %v8502 = vmul.f32 %v1467, %v5116
      %v8503 = vmul.f32 %v1556, %v5131
      %v8504 = vmul.f32 %v1645, %v5146
      %v8505 = vmul.f32 %v1734, %v5161
      %v8506 = vmul.f32 %v1823, %v5176
      %v8507 = vmul.f32 %v1912, %v5191
      %v8508 = vmul.f32 %v2001, %v5206
      %v8509 = vmul.f32 %v2090, %v5221
      %v8510 = vmul.f32 %v2179, %v5236
      %v8511 = vmul.f32 %v2268, %v5251
      %v8512 = vmul.f32 %v1469, %v5266
      %v8513 = vmul.f32 %v1558, %v5281
      %v8514 = vmul.f32 %v1647, %v5296
      %v8515 = vmul.f32 %v1736, %v5311
      %v8516 = vmul.f32 %v1825, %v5326
      %v8517 = vmul.f32 %v1914, %v5341
      %v8518 = vmul.f32 %v2003, %v5356
      %v8519 = vmul.f32 %v2092, %v5371
      %v8520 = vmul.f32 %v2181, %v5386
      %v8521 = vmul.f32 %v2270, %v5401
      %v8522 = vmul.f32 %v1472, %v5416
      %v8523 = vmul.f32 %v1561, %v5431
      %v8524 = vmul.f32 %v1650, %v5446
      %v8525 = vmul.f32 %v1739, %v5461
      %v8526 = vmul.f32 %v1828, %v5476
      %v8527 = vmul.f32 %v1917, %v5491
      %v8528 = vmul.f32 %v2006, %v5506
      %v8529 = vmul.f32 %v2095, %v5521
      %v8530 = vmul.f32 %v2184, %v5536
      %v8531 = vmul.f32 %v2273, %v5551
      %v8532 = vmul.f32 %v1474, %v5566
      %v8533 = vmul.f32 %v1563, %v5581
      %v8534 = vmul.f32 %v1652, %v5596
      %v8535 = vmul.f32 %v1741, %v5611
      %v8536 = vmul.f32 %v1830, %v5626
      %v8537 = vmul.f32 %v1919, %v5641
      %v8538 = vmul.f32 %v2008, %v5656
      %v8539 = vmul.f32 %v2097, %v5671
      %v8540 = vmul.f32 %v2186, %v5686
      %v8541 = vmul.f32 %v2275, %v5701
      %v8542 = vmul.f32 %v1477, %v5716
      %v8543 = vmul.f32 %v1566, %v5731
      %v8544 = vmul.f32 %v1655, %v5746
      %v8545 = vmul.f32 %v1744, %v5761
      %v8546 = vmul.f32 %v1833, %v5776
      %v8547 = vmul.f32 %v1922, %v5791
      %v8548 = vmul.f32 %v2011, %v5806
      %v8549 = vmul.f32 %v2100, %v5821
      %v8550 = vmul.f32 %v2189, %v5836
      %v8551 = vmul.f32 %v2278, %v5851
      %v8552 = vmul.f32 %v1479, %v5866
      %v8553 = vmul.f32 %v1568, %v5881
      %v8554 = vmul.f32 %v1657, %v5896
      %v8555 = vmul.f32 %v1746, %v5911
      %v8556 = vmul.f32 %v1835, %v5926
      %v8557 = vmul.f32 %v1924, %v5941
      %v8558 = vmul.f32 %v2013, %v5956
      %v8559 = vmul.f32 %v2102, %v5971
      %v8560 = vmul.f32 %v2191, %v5986
      %v8561 = vmul.f32 %v2280, %v6001
      %v8562 = vmul.f32 %v1482, %v6016
      %v8563 = vmul.f32 %v1571, %v6031
      %v8564 = vmul.f32 %v1660, %v6046
      %v8565 = vmul.f32 %v1749, %v6061
      %v8566 = vmul.f32 %v1838, %v6076
      %v8567 = vmul.f32 %v1927, %v6091
      %v8568 = vmul.f32 %v2016, %v6106
      %v8569 = vmul.f32 %v2105, %v6121
      %v8570 = vmul.f32 %v2194, %v6136
      %v8571 = vmul.f32 %v2283, %v6151
      %v8572 = vmul.f32 %v1484, %v6166
      %v8573 = vmul.f32 %v1573, %v6181
      %v8574 = vmul.f32 %v1662, %v6196
      %v8575 = vmul.f32 %v1751, %v6211
      %v8576 = vmul.f32 %v1840, %v6226
      %v8577 = vmul.f32 %v1929, %v6241
      %v8578 = vmul.f32 %v2018, %v6256
      %v8579 = vmul.f32 %v2107, %v6271
      %v8580 = vmul.f32 %v2196, %v6286
      %v8581 = vmul.f32 %v2285, %v6301
      %v8582 = vmul.f32 %v1487, %v6316
      %v8583 = vmul.f32 %v1576, %v6331
      %v8584 = vmul.f32 %v1665, %v6346
      %v8585 = vmul.f32 %v1754, %v6361
      %v8586 = vmul.f32 %v1843, %v6376
      %v8587 = vmul.f32 %v1932, %v6391
      %v8588 = vmul.f32 %v2021, %v6406
      %v8589 = vmul.f32 %v2110, %v6421
      %v8590 = vmul.f32 %v2199, %v6436
      %v8591 = vmul.f32 %v2288, %v6451
      %v8592 = vmul.f32 %v1489, %v6466
      %v8593 = vmul.f32 %v1578, %v6481
      %v8594 = vmul.f32 %v1667, %v6496
      %v8595 = vmul.f32 %v1756, %v6511
      %v8596 = vmul.f32 %v1845, %v6526
      %v8597 = vmul.f32 %v1934, %v6541
      %v8598 = vmul.f32 %v2023, %v6556
      %v8599 = vmul.f32 %v2112, %v6571
      %v8600 = vmul.f32 %v2201, %v6586
      %v8601 = vmul.f32 %v2290, %v6601
      %v8602 = vmul.f32 %v1492, %v6616
      %v8603 = vmul.f32 %v1581, %v6631
      %v8604 = vmul.f32 %v1670, %v6646
      %v8605 = vmul.f32 %v1759, %v6661
      %v8606 = vmul.f32 %v1848, %v6676
      %v8607 = vmul.f32 %v1937, %v6691
      %v8608 = vmul.f32 %v2026, %v6706
      %v8609 = vmul.f32 %v2115, %v6721
      %v8610 = vmul.f32 %v2204, %v6736
      %v8611 = vmul.f32 %v2293, %v6751
      %v8612 = vmul.f32 %v1494, %v6766
      %v8613 = vmul.f32 %v1583, %v6781
      %v8614 = vmul.f32 %v1672, %v6796
      %v8615 = vmul.f32 %v1761, %v6811
      %v8616 = vmul.f32 %v1850, %v6826
      %v8617 = vmul.f32 %v1939, %v6841
      %v8618 = vmul.f32 %v2028, %v6856
      %v8619 = vmul.f32 %v2117, %v6871
      %v8620 = vmul.f32 %v2206, %v6886
      %v8621 = vmul.f32 %v2295, %v6901
      %v8622 = vmul.f32 %v1497, %v6916
      %v8623 = vmul.f32 %v1586, %v6931
      %v8624 = vmul.f32 %v1675, %v6946
      %v8625 = vmul.f32 %v1764, %v6961
      %v8626 = vmul.f32 %v1853, %v6976
      %v8627 = vmul.f32 %v1942, %v6991
      %v8628 = vmul.f32 %v2031, %v7006
      %v8629 = vmul.f32 %v2120, %v7021
      %v8630 = vmul.f32 %v2209, %v7036
      %v8631 = vmul.f32 %v2298, %v7051
      %v8632 = vmul.f32 %v1499, %v7066
      %v8633 = vmul.f32 %v1588, %v7081
      %v8634 = vmul.f32 %v1677, %v7096
      %v8635 = vmul.f32 %v1766, %v7111
      %v8636 = vmul.f32 %v1855, %v7126
      %v8637 = vmul.f32 %v1944, %v7141
      %v8638 = vmul.f32 %v2033, %v7156
      %v8639 = vmul.f32 %v2122, %v7171
      %v8640 = vmul.f32 %v2211, %v7186
      %v8641 = vmul.f32 %v2300, %v7201
      %v8642 = vmul.f32 %v1502, %v7216
      %v8643 = vmul.f32 %v1591, %v7231
      %v8644 = vmul.f32 %v1680, %v7246
      %v8645 = vmul.f32 %v1769, %v7261
      %v8646 = vmul.f32 %v1858, %v7276
      %v8647 = vmul.f32 %v1947, %v7291
      %v8648 = vmul.f32 %v2036, %v7306
      %v8649 = vmul.f32 %v2125, %v7321
      %v8650 = vmul.f32 %v2214, %v7336
      %v8651 = vmul.f32 %v2303, %v7351
      %v8652 = vmul.f32 %v1504, %v7366
      %v8653 = vmul.f32 %v1593, %v7381
      %v8654 = vmul.f32 %v1682, %v7396
      %v8655 = vmul.f32 %v1771, %v7411
      %v8656 = vmul.f32 %v1860, %v7426
      %v8657 = vmul.f32 %v1949, %v7441
      %v8658 = vmul.f32 %v2038, %v7456
      %v8659 = vmul.f32 %v2127, %v7471
      %v8660 = vmul.f32 %v2216, %v7486
      %v8661 = vmul.f32 %v2305, %v7501
      %v8662 = vmul.f32 %v1507, %v7516
      %v8663 = vmul.f32 %v1596, %v7531
      %v8664 = vmul.f32 %v1685, %v7546
      %v8665 = vmul.f32 %v1774, %v7561
      %v8666 = vmul.f32 %v1863, %v7576
      %v8667 = vmul.f32 %v1952, %v7591
      %v8668 = vmul.f32 %v2041, %v7606
      %v8669 = vmul.f32 %v2130, %v7621
      %v8670 = vmul.f32 %v2219, %v7636
      %v8671 = vmul.f32 %v2308, %v7651
      %v8672 = vmul.f32 %v1509, %v7666
      %v8673 = vmul.f32 %v1598, %v7681
      %v8674 = vmul.f32 %v1687, %v7696
      %v8675 = vmul.f32 %v1776, %v7711
      %v8676 = vmul.f32 %v1865, %v7726
      %v8677 = vmul.f32 %v1954, %v7741
      %v8678 = vmul.f32 %v2043, %v7756
      %v8679 = vmul.f32 %v2132, %v7771
      %v8680 = vmul.f32 %v2221, %v7786
      %v8681 = vmul.f32 %v2310, %v7801
      %v8682 = vmul.f32 %v1512, %v7816
      %v8683 = vmul.f32 %v1601, %v7831
      %v8684 = vmul.f32 %v1690, %v7846
      %v8685 = vmul.f32 %v1779, %v7861
      %v8686 = vmul.f32 %v1868, %v7876
      %v8687 = vmul.f32 %v1957, %v7891
      %v8688 = vmul.f32 %v2046, %v7906
      %v8689 = vmul.f32 %v2135, %v7921
      %v8690 = vmul.f32 %v2224, %v7936
      %v8691 = vmul.f32 %v2313, %v7951
      %v8692 = vmul.f32 %v1514, %v7966
      %v8693 = vmul.f32 %v1603, %v7981
      %v8694 = vmul.f32 %v1692, %v7996
      %v8695 = vmul.f32 %v1781, %v8011
      %v8696 = vmul.f32 %v1870, %v8026
      %v8697 = vmul.f32 %v1959, %v8041
      %v8698 = vmul.f32 %v2048, %v8056
      %v8699 = vmul.f32 %v2137, %v8071
      %v8700 = vmul.f32 %v2226, %v8086
      %v8701 = vmul.f32 %v2315, %v8101
      %v8702 = vmul.f32 %v1517, %v8116
      %v8703 = vmul.f32 %v1606, %v8131
      %v8704 = vmul.f32 %v1695, %v8146
      %v8705 = vmul.f32 %v1784, %v8161
      %v8706 = vmul.f32 %v1873, %v8176
      %v8707 = vmul.f32 %v1962, %v8191
      %v8708 = vmul.f32 %v2051, %v8206
      %v8709 = vmul.f32 %v2140, %v8221
      %v8710 = vmul.f32 %v2229, %v8236
      %v8711 = vmul.f32 %v2318, %v8251
      %v8712 = vmul.f32 %v1519, %v8266
      %v8713 = vmul.f32 %v1608, %v8281
      %v8714 = vmul.f32 %v1697, %v8296
      %v8715 = vmul.f32 %v1786, %v8311
      %v8716 = vmul.f32 %v1875, %v8326
      %v8717 = vmul.f32 %v1964, %v8341
      %v8718 = vmul.f32 %v2053, %v8356
      %v8719 = vmul.f32 %v2142, %v8371
      %v8720 = vmul.f32 %v2231, %v8386
      %v8721 = vmul.f32 %v2320, %v8401
      %v8722 = vld [vmem:[#allocation2] sm:$0xff]
      %v8723 = vld [vmem:[#allocation2 + $0x8] sm:$0x3]
      %v8724 = vadd.f32 %v8402, %v8412
      %v8725 = vadd.f32 %v8724, %v8422
      %v8726 = vadd.f32 %v8725, %v8432
      %v8727 = vadd.f32 %v8726, %v8442
      %v8728 = vadd.f32 %v8727, %v8452
      %v8729 = vadd.f32 %v8728, %v8462
      %v8730 = vadd.f32 %v8729, %v8472
      %v8731 = vadd.f32 %v8730, %v8482
      %v8732 = vadd.f32 %v8731, %v8492
      %v8733 = vadd.f32 %v8732, %v8502
      %v8734 = vadd.f32 %v8733, %v8512
      %v8735 = vadd.f32 %v8734, %v8522
      %v8736 = vadd.f32 %v8735, %v8532
      %v8737 = vadd.f32 %v8736, %v8542
      %v8738 = vadd.f32 %v8737, %v8552
      %v8739 = vadd.f32 %v8738, %v8562
      %v8740 = vadd.f32 %v8739, %v8572
      %v8741 = vadd.f32 %v8740, %v8582
      %v8742 = vadd.f32 %v8741, %v8592
      %v8743 = vadd.f32 %v8742, %v8602
      %v8744 = vadd.f32 %v8743, %v8612
      %v8745 = vadd.f32 %v8744, %v8622
      %v8746 = vadd.f32 %v8745, %v8632
      %v8747 = vadd.f32 %v8746, %v8642
      %v8748 = vadd.f32 %v8747, %v8652
      %v8749 = vadd.f32 %v8748, %v8662
      %v8750 = vadd.f32 %v8749, %v8672
      %v8751 = vadd.f32 %v8750, %v8682
      %v8752 = vadd.f32 %v8751, %v8692
      %v8753 = vadd.f32 %v8752, %v8702
      %v8754 = vadd.f32 %v8753, %v8712
      %v8755 = vrot.slane %v8754, 4
      %v8756 = vadd.f32 %v8754, %v8755
      %v8757 = vrot.slane %v8756, 2
      %v8758 = vadd.f32 %v8756, %v8757
      %v8759 = vrot.slane %v8758, 1
      %v8760 = vadd.f32 %v8758, %v8759
      %v8761 = vadd.f32 %v8403, %v8413
      %v8762 = vadd.f32 %v8761, %v8423
      %v8763 = vadd.f32 %v8762, %v8433
      %v8764 = vadd.f32 %v8763, %v8443
      %v8765 = vadd.f32 %v8764, %v8453
      %v8766 = vadd.f32 %v8765, %v8463
      %v8767 = vadd.f32 %v8766, %v8473
      %v8768 = vadd.f32 %v8767, %v8483
      %v8769 = vadd.f32 %v8768, %v8493
      %v8770 = vadd.f32 %v8769, %v8503
      %v8771 = vadd.f32 %v8770, %v8513
      %v8772 = vadd.f32 %v8771, %v8523
      %v8773 = vadd.f32 %v8772, %v8533
      %v8774 = vadd.f32 %v8773, %v8543
      %v8775 = vadd.f32 %v8774, %v8553
      %v8776 = vadd.f32 %v8775, %v8563
      %v8777 = vadd.f32 %v8776, %v8573
      %v8778 = vadd.f32 %v8777, %v8583
      %v8779 = vadd.f32 %v8778, %v8593
      %v8780 = vadd.f32 %v8779, %v8603
      %v8781 = vadd.f32 %v8780, %v8613
      %v8782 = vadd.f32 %v8781, %v8623
      %v8783 = vadd.f32 %v8782, %v8633
      %v8784 = vadd.f32 %v8783, %v8643
      %v8785 = vadd.f32 %v8784, %v8653
      %v8786 = vadd.f32 %v8785, %v8663
      %v8787 = vadd.f32 %v8786, %v8673
      %v8788 = vadd.f32 %v8787, %v8683
      %v8789 = vadd.f32 %v8788, %v8693
      %v8790 = vadd.f32 %v8789, %v8703
      %v8791 = vadd.f32 %v8790, %v8713
      %v8792 = vrot.slane %v8791, 4
      %v8793 = vadd.f32 %v8791, %v8792
      %v8794 = vrot.slane %v8793, 2
      %v8795 = vadd.f32 %v8793, %v8794
      %v8796 = vrot.slane %v8795, 1
      %v8797 = vadd.f32 %v8795, %v8796
      %v8798 = vadd.f32 %v8404, %v8414
      %v8799 = vadd.f32 %v8798, %v8424
      %v8800 = vadd.f32 %v8799, %v8434
      %v8801 = vadd.f32 %v8800, %v8444
      %v8802 = vadd.f32 %v8801, %v8454
      %v8803 = vadd.f32 %v8802, %v8464
      %v8804 = vadd.f32 %v8803, %v8474
      %v8805 = vadd.f32 %v8804, %v8484
      %v8806 = vadd.f32 %v8805, %v8494
      %v8807 = vadd.f32 %v8806, %v8504
      %v8808 = vadd.f32 %v8807, %v8514
      %v8809 = vadd.f32 %v8808, %v8524
      %v8810 = vadd.f32 %v8809, %v8534
      %v8811 = vadd.f32 %v8810, %v8544
      %v8812 = vadd.f32 %v8811, %v8554
      %v8813 = vadd.f32 %v8812, %v8564
      %v8814 = vadd.f32 %v8813, %v8574
      %v8815 = vadd.f32 %v8814, %v8584
      %v8816 = vadd.f32 %v8815, %v8594
      %v8817 = vadd.f32 %v8816, %v8604
      %v8818 = vadd.f32 %v8817, %v8614
      %v8819 = vadd.f32 %v8818, %v8624
      %v8820 = vadd.f32 %v8819, %v8634
      %v8821 = vadd.f32 %v8820, %v8644
      %v8822 = vadd.f32 %v8821, %v8654
      %v8823 = vadd.f32 %v8822, %v8664
      %v8824 = vadd.f32 %v8823, %v8674
      %v8825 = vadd.f32 %v8824, %v8684
      %v8826 = vadd.f32 %v8825, %v8694
      %v8827 = vadd.f32 %v8826, %v8704
      %v8828 = vadd.f32 %v8827, %v8714
      %v8829 = vrot.slane %v8828, 4
      %v8830 = vadd.f32 %v8828, %v8829
      %v8831 = vrot.slane %v8830, 2
      %v8832 = vadd.f32 %v8830, %v8831
      %v8833 = vrot.slane %v8832, 1
      %v8834 = vadd.f32 %v8832, %v8833
      %v8835 = vadd.f32 %v8405, %v8415
      %v8836 = vadd.f32 %v8835, %v8425
      %v8837 = vadd.f32 %v8836, %v8435
      %v8838 = vadd.f32 %v8837, %v8445
      %v8839 = vadd.f32 %v8838, %v8455
      %v8840 = vadd.f32 %v8839, %v8465
      %v8841 = vadd.f32 %v8840, %v8475
      %v8842 = vadd.f32 %v8841, %v8485
      %v8843 = vadd.f32 %v8842, %v8495
      %v8844 = vadd.f32 %v8843, %v8505
      %v8845 = vadd.f32 %v8844, %v8515
      %v8846 = vadd.f32 %v8845, %v8525
      %v8847 = vadd.f32 %v8846, %v8535
      %v8848 = vadd.f32 %v8847, %v8545
      %v8849 = vadd.f32 %v8848, %v8555
      %v8850 = vadd.f32 %v8849, %v8565
      %v8851 = vadd.f32 %v8850, %v8575
      %v8852 = vadd.f32 %v8851, %v8585
      %v8853 = vadd.f32 %v8852, %v8595
      %v8854 = vadd.f32 %v8853, %v8605
      %v8855 = vadd.f32 %v8854, %v8615
      %v8856 = vadd.f32 %v8855, %v8625
      %v8857 = vadd.f32 %v8856, %v8635
      %v8858 = vadd.f32 %v8857, %v8645
      %v8859 = vadd.f32 %v8858, %v8655
      %v8860 = vadd.f32 %v8859, %v8665
      %v8861 = vadd.f32 %v8860, %v8675
      %v8862 = vadd.f32 %v8861, %v8685
      %v8863 = vadd.f32 %v8862, %v8695
      %v8864 = vadd.f32 %v8863, %v8705
      %v8865 = vadd.f32 %v8864, %v8715
      %v8866 = vrot.slane %v8865, 4
      %v8867 = vadd.f32 %v8865, %v8866
      %v8868 = vrot.slane %v8867, 2
      %v8869 = vadd.f32 %v8867, %v8868
      %v8870 = vrot.slane %v8869, 1
      %v8871 = vadd.f32 %v8869, %v8870
      %v8872 = vadd.f32 %v8406, %v8416
      %v8873 = vadd.f32 %v8872, %v8426
      %v8874 = vadd.f32 %v8873, %v8436
      %v8875 = vadd.f32 %v8874, %v8446
      %v8876 = vadd.f32 %v8875, %v8456
      %v8877 = vadd.f32 %v8876, %v8466
      %v8878 = vadd.f32 %v8877, %v8476
      %v8879 = vadd.f32 %v8878, %v8486
      %v8880 = vadd.f32 %v8879, %v8496
      %v8881 = vadd.f32 %v8880, %v8506
      %v8882 = vadd.f32 %v8881, %v8516
      %v8883 = vadd.f32 %v8882, %v8526
      %v8884 = vadd.f32 %v8883, %v8536
      %v8885 = vadd.f32 %v8884, %v8546
      %v8886 = vadd.f32 %v8885, %v8556
      %v8887 = vadd.f32 %v8886, %v8566
      %v8888 = vadd.f32 %v8887, %v8576
      %v8889 = vadd.f32 %v8888, %v8586
      %v8890 = vadd.f32 %v8889, %v8596
      %v8891 = vadd.f32 %v8890, %v8606
      %v8892 = vadd.f32 %v8891, %v8616
      %v8893 = vadd.f32 %v8892, %v8626
      %v8894 = vadd.f32 %v8893, %v8636
      %v8895 = vadd.f32 %v8894, %v8646
      %v8896 = vadd.f32 %v8895, %v8656
      %v8897 = vadd.f32 %v8896, %v8666
      %v8898 = vadd.f32 %v8897, %v8676
      %v8899 = vadd.f32 %v8898, %v8686
      %v8900 = vadd.f32 %v8899, %v8696
      %v8901 = vadd.f32 %v8900, %v8706
      %v8902 = vadd.f32 %v8901, %v8716
      %v8903 = vrot.slane %v8902, 4
      %v8904 = vadd.f32 %v8902, %v8903
      %v8905 = vrot.slane %v8904, 2
      %v8906 = vadd.f32 %v8904, %v8905
      %v8907 = vrot.slane %v8906, 1
      %v8908 = vadd.f32 %v8906, %v8907
      %v8909 = vadd.f32 %v8407, %v8417
      %v8910 = vadd.f32 %v8909, %v8427
      %v8911 = vadd.f32 %v8910, %v8437
      %v8912 = vadd.f32 %v8911, %v8447
      %v8913 = vadd.f32 %v8912, %v8457
      %v8914 = vadd.f32 %v8913, %v8467
      %v8915 = vadd.f32 %v8914, %v8477
      %v8916 = vadd.f32 %v8915, %v8487
      %v8917 = vadd.f32 %v8916, %v8497
      %v8918 = vadd.f32 %v8917, %v8507
      %v8919 = vadd.f32 %v8918, %v8517
      %v8920 = vadd.f32 %v8919, %v8527
      %v8921 = vadd.f32 %v8920, %v8537
      %v8922 = vadd.f32 %v8921, %v8547
      %v8923 = vadd.f32 %v8922, %v8557
      %v8924 = vadd.f32 %v8923, %v8567
      %v8925 = vadd.f32 %v8924, %v8577
      %v8926 = vadd.f32 %v8925, %v8587
      %v8927 = vadd.f32 %v8926, %v8597
      %v8928 = vadd.f32 %v8927, %v8607
      %v8929 = vadd.f32 %v8928, %v8617
      %v8930 = vadd.f32 %v8929, %v8627
      %v8931 = vadd.f32 %v8930, %v8637
      %v8932 = vadd.f32 %v8931, %v8647
      %v8933 = vadd.f32 %v8932, %v8657
      %v8934 = vadd.f32 %v8933, %v8667
      %v8935 = vadd.f32 %v8934, %v8677
      %v8936 = vadd.f32 %v8935, %v8687
      %v8937 = vadd.f32 %v8936, %v8697
      %v8938 = vadd.f32 %v8937, %v8707
      %v8939 = vadd.f32 %v8938, %v8717
      %v8940 = vrot.slane %v8939, 4
      %v8941 = vadd.f32 %v8939, %v8940
      %v8942 = vrot.slane %v8941, 2
      %v8943 = vadd.f32 %v8941, %v8942
      %v8944 = vrot.slane %v8943, 1
      %v8945 = vadd.f32 %v8943, %v8944
      %v8946 = vadd.f32 %v8408, %v8418
      %v8947 = vadd.f32 %v8946, %v8428
      %v8948 = vadd.f32 %v8947, %v8438
      %v8949 = vadd.f32 %v8948, %v8448
      %v8950 = vadd.f32 %v8949, %v8458
      %v8951 = vadd.f32 %v8950, %v8468
      %v8952 = vadd.f32 %v8951, %v8478
      %v8953 = vadd.f32 %v8952, %v8488
      %v8954 = vadd.f32 %v8953, %v8498
      %v8955 = vadd.f32 %v8954, %v8508
      %v8956 = vadd.f32 %v8955, %v8518
      %v8957 = vadd.f32 %v8956, %v8528
      %v8958 = vadd.f32 %v8957, %v8538
      %v8959 = vadd.f32 %v8958, %v8548
      %v8960 = vadd.f32 %v8959, %v8558
      %v8961 = vadd.f32 %v8960, %v8568
      %v8962 = vadd.f32 %v8961, %v8578
      %v8963 = vadd.f32 %v8962, %v8588
      %v8964 = vadd.f32 %v8963, %v8598
      %v8965 = vadd.f32 %v8964, %v8608
      %v8966 = vadd.f32 %v8965, %v8618
      %v8967 = vadd.f32 %v8966, %v8628
      %v8968 = vadd.f32 %v8967, %v8638
      %v8969 = vadd.f32 %v8968, %v8648
      %v8970 = vadd.f32 %v8969, %v8658
      %v8971 = vadd.f32 %v8970, %v8668
      %v8972 = vadd.f32 %v8971, %v8678
      %v8973 = vadd.f32 %v8972, %v8688
      %v8974 = vadd.f32 %v8973, %v8698
      %v8975 = vadd.f32 %v8974, %v8708
      %v8976 = vadd.f32 %v8975, %v8718
      %v8977 = vrot.slane %v8976, 4
      %v8978 = vadd.f32 %v8976, %v8977
      %v8979 = vrot.slane %v8978, 2
      %v8980 = vadd.f32 %v8978, %v8979
      %v8981 = vrot.slane %v8980, 1
      %v8982 = vadd.f32 %v8980, %v8981
      %v8983 = vadd.f32 %v8409, %v8419
      %v8984 = vadd.f32 %v8983, %v8429
      %v8985 = vadd.f32 %v8984, %v8439
      %v8986 = vadd.f32 %v8985, %v8449
      %v8987 = vadd.f32 %v8986, %v8459
      %v8988 = vadd.f32 %v8987, %v8469
      %v8989 = vadd.f32 %v8988, %v8479
      %v8990 = vadd.f32 %v8989, %v8489
      %v8991 = vadd.f32 %v8990, %v8499
      %v8992 = vadd.f32 %v8991, %v8509
      %v8993 = vadd.f32 %v8992, %v8519
      %v8994 = vadd.f32 %v8993, %v8529
      %v8995 = vadd.f32 %v8994, %v8539
      %v8996 = vadd.f32 %v8995, %v8549
      %v8997 = vadd.f32 %v8996, %v8559
      %v8998 = vadd.f32 %v8997, %v8569
      %v8999 = vadd.f32 %v8998, %v8579
      %v9000 = vadd.f32 %v8999, %v8589
      %v9001 = vadd.f32 %v9000, %v8599
      %v9002 = vadd.f32 %v9001, %v8609
      %v9003 = vadd.f32 %v9002, %v8619
      %v9004 = vadd.f32 %v9003, %v8629
      %v9005 = vadd.f32 %v9004, %v8639
      %v9006 = vadd.f32 %v9005, %v8649
      %v9007 = vadd.f32 %v9006, %v8659
      %v9008 = vadd.f32 %v9007, %v8669
      %v9009 = vadd.f32 %v9008, %v8679
      %v9010 = vadd.f32 %v9009, %v8689
      %v9011 = vadd.f32 %v9010, %v8699
      %v9012 = vadd.f32 %v9011, %v8709
      %v9013 = vadd.f32 %v9012, %v8719
      %v9014 = vrot.slane %v9013, 4
      %v9015 = vadd.f32 %v9013, %v9014
      %v9016 = vrot.slane %v9015, 2
      %v9017 = vadd.f32 %v9015, %v9016
      %v9018 = vrot.slane %v9017, 1
      %v9019 = vadd.f32 %v9017, %v9018
      %v9020 = vadd.f32 %v8410, %v8420
      %v9021 = vadd.f32 %v9020, %v8430
      %v9022 = vadd.f32 %v9021, %v8440
      %v9023 = vadd.f32 %v9022, %v8450
      %v9024 = vadd.f32 %v9023, %v8460
      %v9025 = vadd.f32 %v9024, %v8470
      %v9026 = vadd.f32 %v9025, %v8480
      %v9027 = vadd.f32 %v9026, %v8490
      %v9028 = vadd.f32 %v9027, %v8500
      %v9029 = vadd.f32 %v9028, %v8510
      %v9030 = vadd.f32 %v9029, %v8520
      %v9031 = vadd.f32 %v9030, %v8530
      %v9032 = vadd.f32 %v9031, %v8540
      %v9033 = vadd.f32 %v9032, %v8550
      %v9034 = vadd.f32 %v9033, %v8560
      %v9035 = vadd.f32 %v9034, %v8570
      %v9036 = vadd.f32 %v9035, %v8580
      %v9037 = vadd.f32 %v9036, %v8590
      %v9038 = vadd.f32 %v9037, %v8600
      %v9039 = vadd.f32 %v9038, %v8610
      %v9040 = vadd.f32 %v9039, %v8620
      %v9041 = vadd.f32 %v9040, %v8630
      %v9042 = vadd.f32 %v9041, %v8640
      %v9043 = vadd.f32 %v9042, %v8650
      %v9044 = vadd.f32 %v9043, %v8660
      %v9045 = vadd.f32 %v9044, %v8670
      %v9046 = vadd.f32 %v9045, %v8680
      %v9047 = vadd.f32 %v9046, %v8690
      %v9048 = vadd.f32 %v9047, %v8700
      %v9049 = vadd.f32 %v9048, %v8710
      %v9050 = vadd.f32 %v9049, %v8720
      %v9051 = vrot.slane %v9050, 4
      %v9052 = vadd.f32 %v9050, %v9051
      %v9053 = vrot.slane %v9052, 2
      %v9054 = vadd.f32 %v9052, %v9053
      %v9055 = vrot.slane %v9054, 1
      %v9056 = vadd.f32 %v9054, %v9055
      %v9057 = vadd.f32 %v8411, %v8421
      %v9058 = vadd.f32 %v9057, %v8431
      %v9059 = vadd.f32 %v9058, %v8441
      %v9060 = vadd.f32 %v9059, %v8451
      %v9061 = vadd.f32 %v9060, %v8461
      %v9062 = vadd.f32 %v9061, %v8471
      %v9063 = vadd.f32 %v9062, %v8481
      %v9064 = vadd.f32 %v9063, %v8491
      %v9065 = vadd.f32 %v9064, %v8501
      %v9066 = vadd.f32 %v9065, %v8511
      %v9067 = vadd.f32 %v9066, %v8521
      %v9068 = vadd.f32 %v9067, %v8531
      %v9069 = vadd.f32 %v9068, %v8541
      %v9070 = vadd.f32 %v9069, %v8551
      %v9071 = vadd.f32 %v9070, %v8561
      %v9072 = vadd.f32 %v9071, %v8571
      %v9073 = vadd.f32 %v9072, %v8581
      %v9074 = vadd.f32 %v9073, %v8591
      %v9075 = vadd.f32 %v9074, %v8601
      %v9076 = vadd.f32 %v9075, %v8611
      %v9077 = vadd.f32 %v9076, %v8621
      %v9078 = vadd.f32 %v9077, %v8631
      %v9079 = vadd.f32 %v9078, %v8641
      %v9080 = vadd.f32 %v9079, %v8651
      %v9081 = vadd.f32 %v9080, %v8661
      %v9082 = vadd.f32 %v9081, %v8671
      %v9083 = vadd.f32 %v9082, %v8681
      %v9084 = vadd.f32 %v9083, %v8691
      %v9085 = vadd.f32 %v9084, %v8701
      %v9086 = vadd.f32 %v9085, %v8711
      %v9087 = vadd.f32 %v9086, %v8721
      %v9088 = vrot.slane %v9087, 4
      %v9089 = vadd.f32 %v9087, %v9088
      %v9090 = vrot.slane %v9089, 2
      %v9091 = vadd.f32 %v9089, %v9090
      %v9092 = vrot.slane %v9091, 1
      %v9093 = vadd.f32 %v9091, %v9092
      %v9104 = vrot.slane %v8797, 7
      %v9105 = vrot.slane %v8834, 6
      %v9106 = vrot.slane %v8871, 5
      %v9107 = vrot.slane %v8908, 4
      %v9108 = vrot.slane %v8945, 3
      %v9109 = vrot.slane %v8982, 2
      %v9110 = vrot.slane %v9019, 1
      %v9111 = vrot.slane %v9093, 7
      %vm9112 = vcmask 1040384
      %v9113 = vsel %vm9112, %v8760, %v9104
      %vm9114 = vcmask 1042434
      %v9115 = vsel %vm9114, %v9105, %v9106
      %vm9116 = vcmask 1041408
      %v9117 = vsel %vm9116, %v9113, %v9115
      %vm9118 = vcmask 1044484
      %v9119 = vsel %vm9118, %v9107, %v9108
      %vm9120 = vcmask 1046534
      %v9121 = vsel %vm9120, %v9109, %v9110
      %vm9122 = vcmask 1045508
      %v9123 = vsel %vm9122, %v9119, %v9121
      %vm9124 = vcmask 1043456
      %v9125 = vsel %vm9124, %v9117, %v9123
      %v9126 = vsel %vm9112, %v9056, %v9111
      %v9129 = vadd.f32 %v8722, %v9125
      %v9130 = vadd.f32 %v8723, %v9126
      %9131 = vst [vmem:[#allocation2] sm:$0xff] %v9129
      %v9132 = vlaneseq
      %vm9133 = vcmp.ge.s32.totalorder %v9132, 0
      %vm9134 = vcmp.lt.s32.totalorder %v9132, 256
      %vm9135 = vmand %vm9133, %vm9134
      %9136 = vst.msk [vmem:[#allocation2 + $0x8] sm:$0x3] %vm9135, %v9130
      // Predicated region
      $region53: #{convnet_forward.1} parent=47 // pred_check
        %p9137 = pneg %p304
      $region54: #{convnet_forward.1} parent=47 // pred_check_branch
        %9139 = sbr.rel (%p9137) target = $region56
      $region55: #{convnet_forward.1} parent=47 // pred_region
        %v9140 = vld [vmem:[#allocation2] sm:$0xff]
        %v9141 = vld [vmem:[#allocation2 + $0x8] sm:$0x3]
        %v9142 = vmul.f32 %v9140, 0.00390625
        %v9143 = vmul.f32 %v9141, 0.00390625
        %v9146 = vperm.slane %v9142, 0
        %v9147 = vperm.slane %v9142, 1
        %v9148 = vperm.slane %v9142, 2
        %v9149 = vperm.slane %v9142, 3
        %v9150 = vperm.slane %v9142, 4
        %v9151 = vperm.slane %v9142, 5
        %v9152 = vperm.slane %v9142, 6
        %v9153 = vperm.slane %v9142, 7
        %v9154 = vperm.slane %v9143, 0
        %v9155 = vperm.slane %v9143, 1
        %v9166 = vpack.c.bf16 %v9146, %v9146
        %v9167 = vpack.c.bf16 %v9147, %v9147
        %v9168 = vpack.c.bf16 %v9148, %v9148
        %v9169 = vpack.c.bf16 %v9149, %v9149
        %v9170 = vpack.c.bf16 %v9150, %v9150
        %v9171 = vpack.c.bf16 %v9151, %v9151
        %v9172 = vpack.c.bf16 %v9152, %v9152
        %v9173 = vpack.c.bf16 %v9153, %v9153
        %v9174 = vpack.c.bf16 %v9154, %v9154
        %v9175 = vpack.c.bf16 %v9155, %v9155
        %v9176 = vld [vmem:[%s5] sm:$0xf]
        %v9177 = vld [vmem:[%s5 + $0x4] sm:$0xf]
        %v9178 = vld [vmem:[%s5 + $0x8] sm:$0xf]
        %v9179 = vld [vmem:[%s5 + $0xc] sm:$0xf]
        %v9180 = vld [vmem:[%s5 + $0x10] sm:$0xf]
        %v9181 = vld [vmem:[%s5 + $0x14] sm:$0xf]
        %v9182 = vld [vmem:[%s5 + $0x18] sm:$0xf]
        %v9183 = vld [vmem:[%s5 + $0x1c] sm:$0xf]
        %v9184 = vld [vmem:[%s5 + $0x20] sm:$0xf]
        %v9185 = vld [vmem:[%s5 + $0x24] sm:$0xf]
        %v9186 = vld [vmem:[%s5 + $0x28] sm:$0xf]
        %v9187 = vld [vmem:[%s5 + $0x2c] sm:$0xf]
        %v9188 = vld [vmem:[%s5 + $0x30] sm:$0xf]
        %v9189 = vld [vmem:[%s5 + $0x34] sm:$0xf]
        %v9190 = vld [vmem:[%s5 + $0x38] sm:$0xf]
        %v9191 = vld [vmem:[%s5 + $0x3c] sm:$0xf]
        %v9192 = vld [vmem:[%s5 + $0x40] sm:$0xf]
        %v9193 = vld [vmem:[%s5 + $0x44] sm:$0xf]
        %v9194 = vld [vmem:[%s5 + $0x48] sm:$0xf]
        %v9195 = vld [vmem:[%s5 + $0x4c] sm:$0xf]
        %v9196 = vld [vmem:[%s5 + $0x50] sm:$0xf]
        %v9197 = vld [vmem:[%s5 + $0x54] sm:$0xf]
        %v9198 = vld [vmem:[%s5 + $0x58] sm:$0xf]
        %v9199 = vld [vmem:[%s5 + $0x5c] sm:$0xf]
        %v9200 = vld [vmem:[%s5 + $0x60] sm:$0xf]
        %v9201 = vld [vmem:[%s5 + $0x64] sm:$0xf]
        %v9202 = vld [vmem:[%s5 + $0x68] sm:$0xf]
        %v9203 = vld [vmem:[%s5 + $0x6c] sm:$0xf]
        %v9204 = vld [vmem:[%s5 + $0x70] sm:$0xf]
        %v9205 = vld [vmem:[%s5 + $0x74] sm:$0xf]
        %v9206 = vld [vmem:[%s5 + $0x78] sm:$0xf]
        %v9207 = vld [vmem:[%s5 + $0x7c] sm:$0xf]
        %v9208 = vld [vmem:[%s5 + $0x80] sm:$0xf]
        %v9209 = vld [vmem:[%s5 + $0x84] sm:$0xf]
        %v9210 = vld [vmem:[%s5 + $0x88] sm:$0xf]
        %v9211 = vld [vmem:[%s5 + $0x8c] sm:$0xf]
        %v9212 = vld [vmem:[%s5 + $0x90] sm:$0xf]
        %v9213 = vld [vmem:[%s5 + $0x94] sm:$0xf]
        %v9214 = vld [vmem:[%s5 + $0x98] sm:$0xf]
        %v9215 = vld [vmem:[%s5 + $0x9c] sm:$0xf]
        %v9216 = vld [vmem:[%s5 + $0xa0] sm:$0xf]
        %v9217 = vld [vmem:[%s5 + $0xa4] sm:$0xf]
        %v9218 = vld [vmem:[%s5 + $0xa8] sm:$0xf]
        %v9219 = vld [vmem:[%s5 + $0xac] sm:$0xf]
        %v9220 = vld [vmem:[%s5 + $0xb0] sm:$0xf]
        %v9221 = vld [vmem:[%s5 + $0xb4] sm:$0xf]
        %v9222 = vld [vmem:[%s5 + $0xb8] sm:$0xf]
        %v9223 = vld [vmem:[%s5 + $0xbc] sm:$0xf]
        %v9224 = vld [vmem:[%s5 + $0xc0] sm:$0xf]
        %v9225 = vld [vmem:[%s5 + $0xc4] sm:$0xf]
        %v9226 = vld [vmem:[%s5 + $0xc8] sm:$0xf]
        %v9227 = vld [vmem:[%s5 + $0xcc] sm:$0xf]
        %v9228 = vld [vmem:[%s5 + $0xd0] sm:$0xf]
        %v9229 = vld [vmem:[%s5 + $0xd4] sm:$0xf]
        %v9230 = vld [vmem:[%s5 + $0xd8] sm:$0xf]
        %v9231 = vld [vmem:[%s5 + $0xdc] sm:$0xf]
        %v9232 = vld [vmem:[%s5 + $0xe0] sm:$0xf]
        %v9233 = vld [vmem:[%s5 + $0xe4] sm:$0xf]
        %v9234 = vld [vmem:[%s5 + $0xe8] sm:$0xf]
        %v9235 = vld [vmem:[%s5 + $0xec] sm:$0xf]
        %v9236 = vld [vmem:[%s5 + $0xf0] sm:$0xf]
        %v9237 = vld [vmem:[%s5 + $0xf4] sm:$0xf]
        %v9238 = vld [vmem:[%s5 + $0xf8] sm:$0xf]
        %v9239 = vld [vmem:[%s5 + $0xfc] sm:$0xf]
        %v9240 = vld [vmem:[%s5 + $0x100] sm:$0xf]
        %v9241 = vld [vmem:[%s5 + $0x104] sm:$0xf]
        %v9242 = vld [vmem:[%s5 + $0x108] sm:$0xf]
        %v9243 = vld [vmem:[%s5 + $0x10c] sm:$0xf]
        %v9244 = vld [vmem:[%s5 + $0x110] sm:$0xf]
        %v9245 = vld [vmem:[%s5 + $0x114] sm:$0xf]
        %v9246 = vld [vmem:[%s5 + $0x118] sm:$0xf]
        %v9247 = vld [vmem:[%s5 + $0x11c] sm:$0xf]
        %v9248 = vld [vmem:[%s5 + $0x120] sm:$0xf]
        %v9249 = vld [vmem:[%s5 + $0x124] sm:$0xf]
        %v9250 = vld [vmem:[%s5 + $0x128] sm:$0xf]
        %v9251 = vld [vmem:[%s5 + $0x12c] sm:$0xf]
        %v9252 = vld [vmem:[%s5 + $0x130] sm:$0xf]
        %v9253 = vld [vmem:[%s5 + $0x134] sm:$0xf]
        %v9254 = vld [vmem:[%s5 + $0x138] sm:$0xf]
        %v9255 = vld [vmem:[%s5 + $0x13c] sm:$0xf]
        %v9256 = vld [vmem:[%s5 + $0x140] sm:$0xf]
        %v9257 = vld [vmem:[%s5 + $0x144] sm:$0xf]
        %v9258 = vld [vmem:[%s5 + $0x148] sm:$0xf]
        %v9259 = vld [vmem:[%s5 + $0x14c] sm:$0xf]
        %v9260 = vld [vmem:[%s5 + $0x150] sm:$0xf]
        %v9261 = vld [vmem:[%s5 + $0x154] sm:$0xf]
        %v9262 = vld [vmem:[%s5 + $0x158] sm:$0xf]
        %v9263 = vld [vmem:[%s5 + $0x15c] sm:$0xf]
        %v9264 = vld [vmem:[%s5 + $0x160] sm:$0xf]
        %v9265 = vld [vmem:[%s5 + $0x164] sm:$0xf]
        %v9266 = vld [vmem:[%s5 + $0x168] sm:$0xf]
        %v9267 = vld [vmem:[%s5 + $0x16c] sm:$0xf]
        %v9268 = vld [vmem:[%s5 + $0x170] sm:$0xf]
        %v9269 = vld [vmem:[%s5 + $0x174] sm:$0xf]
        %v9270 = vld [vmem:[%s5 + $0x178] sm:$0xf]
        %v9271 = vld [vmem:[%s5 + $0x17c] sm:$0xf]
        %v9272 = vld [vmem:[%s5 + $0x180] sm:$0xf]
        %v9273 = vld [vmem:[%s5 + $0x184] sm:$0xf]
        %v9274 = vld [vmem:[%s5 + $0x188] sm:$0xf]
        %v9275 = vld [vmem:[%s5 + $0x18c] sm:$0xf]
        %v9276 = vld [vmem:[%s5 + $0x190] sm:$0xf]
        %v9277 = vld [vmem:[%s5 + $0x194] sm:$0xf]
        %v9278 = vld [vmem:[%s5 + $0x198] sm:$0xf]
        %v9279 = vld [vmem:[%s5 + $0x19c] sm:$0xf]
        %v9280 = vld [vmem:[%s5 + $0x1a0] sm:$0xf]
        %v9281 = vld [vmem:[%s5 + $0x1a4] sm:$0xf]
        %v9282 = vld [vmem:[%s5 + $0x1a8] sm:$0xf]
        %v9283 = vld [vmem:[%s5 + $0x1ac] sm:$0xf]
        %v9284 = vld [vmem:[%s5 + $0x1b0] sm:$0xf]
        %v9285 = vld [vmem:[%s5 + $0x1b4] sm:$0xf]
        %v9286 = vld [vmem:[%s5 + $0x1b8] sm:$0xf]
        %v9287 = vld [vmem:[%s5 + $0x1bc] sm:$0xf]
        %v9288 = vld [vmem:[%s5 + $0x1c0] sm:$0xf]
        %v9289 = vld [vmem:[%s5 + $0x1c4] sm:$0xf]
        %v9290 = vld [vmem:[%s5 + $0x1c8] sm:$0xf]
        %v9291 = vld [vmem:[%s5 + $0x1cc] sm:$0xf]
        %v9292 = vld [vmem:[%s5 + $0x1d0] sm:$0xf]
        %v9293 = vld [vmem:[%s5 + $0x1d4] sm:$0xf]
        %v9294 = vld [vmem:[%s5 + $0x1d8] sm:$0xf]
        %v9295 = vld [vmem:[%s5 + $0x1dc] sm:$0xf]
        %v9296 = vld [vmem:[%s5 + $0x1e0] sm:$0xf]
        %v9297 = vld [vmem:[%s5 + $0x1e4] sm:$0xf]
        %v9298 = vld [vmem:[%s5 + $0x1e8] sm:$0xf]
        %v9299 = vld [vmem:[%s5 + $0x1ec] sm:$0xf]
        %v9300 = vld [vmem:[%s5 + $0x1f0] sm:$0xf]
        %v9301 = vld [vmem:[%s5 + $0x1f4] sm:$0xf]
        %v9302 = vld [vmem:[%s5 + $0x1f8] sm:$0xf]
        %v9303 = vld [vmem:[%s5 + $0x1fc] sm:$0xf]
        %v9304 = vld [vmem:[%s5 + $0x200] sm:$0xf]
        %v9305 = vld [vmem:[%s5 + $0x204] sm:$0xf]
        %v9306 = vld [vmem:[%s5 + $0x208] sm:$0xf]
        %v9307 = vld [vmem:[%s5 + $0x20c] sm:$0xf]
        %v9308 = vld [vmem:[%s5 + $0x210] sm:$0xf]
        %v9309 = vld [vmem:[%s5 + $0x214] sm:$0xf]
        %v9310 = vld [vmem:[%s5 + $0x218] sm:$0xf]
        %v9311 = vld [vmem:[%s5 + $0x21c] sm:$0xf]
        %v9312 = vld [vmem:[%s5 + $0x220] sm:$0xf]
        %v9313 = vld [vmem:[%s5 + $0x224] sm:$0xf]
        %v9314 = vld [vmem:[%s5 + $0x228] sm:$0xf]
        %v9315 = vld [vmem:[%s5 + $0x22c] sm:$0xf]
        %v9316 = vld [vmem:[%s5 + $0x230] sm:$0xf]
        %v9317 = vld [vmem:[%s5 + $0x234] sm:$0xf]
        %v9318 = vld [vmem:[%s5 + $0x238] sm:$0xf]
        %v9319 = vld [vmem:[%s5 + $0x23c] sm:$0xf]
        %v9320 = vld [vmem:[%s5 + $0x240] sm:$0xf]
        %v9321 = vld [vmem:[%s5 + $0x244] sm:$0xf]
        %v9322 = vld [vmem:[%s5 + $0x248] sm:$0xf]
        %v9323 = vld [vmem:[%s5 + $0x24c] sm:$0xf]
        %v9324 = vld [vmem:[%s5 + $0x250] sm:$0xf]
        %v9325 = vld [vmem:[%s5 + $0x254] sm:$0xf]
        %v9326 = vld [vmem:[%s5 + $0x258] sm:$0xf]
        %v9327 = vld [vmem:[%s5 + $0x25c] sm:$0xf]
        %v9328 = vld [vmem:[%s5 + $0x260] sm:$0xf]
        %v9329 = vld [vmem:[%s5 + $0x264] sm:$0xf]
        %v9330 = vld [vmem:[%s5 + $0x268] sm:$0xf]
        %v9331 = vld [vmem:[%s5 + $0x26c] sm:$0xf]
        %v9332 = vld [vmem:[%s5 + $0x270] sm:$0xf]
        %v9333 = vld [vmem:[%s5 + $0x274] sm:$0xf]
        %v9334 = vld [vmem:[%s5 + $0x278] sm:$0xf]
        %v9335 = vld [vmem:[%s5 + $0x27c] sm:$0xf]
        %v9336 = vld [vmem:[%s6] sm:$0x1]
        %v9497 = vunpack.c.l.b16 %v9176
        %v9498 = vunpack.c.l.b16 %v9177
        %v9499 = vunpack.c.l.b16 %v9178
        %v9500 = vunpack.c.l.b16 %v9179
        %v9501 = vunpack.c.l.b16 %v9180
        %v9502 = vunpack.c.l.b16 %v9181
        %v9503 = vunpack.c.l.b16 %v9182
        %v9504 = vunpack.c.l.b16 %v9183
        %v9505 = vunpack.c.l.b16 %v9184
        %v9506 = vunpack.c.l.b16 %v9185
        %v9507 = vunpack.c.l.b16 %v9186
        %v9508 = vunpack.c.l.b16 %v9187
        %v9509 = vunpack.c.l.b16 %v9188
        %v9510 = vunpack.c.l.b16 %v9189
        %v9511 = vunpack.c.l.b16 %v9190
        %v9512 = vunpack.c.l.b16 %v9191
        %v9513 = vunpack.c.l.b16 %v9192
        %v9514 = vunpack.c.l.b16 %v9193
        %v9515 = vunpack.c.l.b16 %v9194
        %v9516 = vunpack.c.l.b16 %v9195
        %v9517 = vunpack.c.l.b16 %v9196
        %v9518 = vunpack.c.l.b16 %v9197
        %v9519 = vunpack.c.l.b16 %v9198
        %v9520 = vunpack.c.l.b16 %v9199
        %v9521 = vunpack.c.l.b16 %v9200
        %v9522 = vunpack.c.l.b16 %v9201
        %v9523 = vunpack.c.l.b16 %v9202
        %v9524 = vunpack.c.l.b16 %v9203
        %v9525 = vunpack.c.l.b16 %v9204
        %v9526 = vunpack.c.l.b16 %v9205
        %v9527 = vunpack.c.l.b16 %v9206
        %v9528 = vunpack.c.l.b16 %v9207
        %v9529 = vunpack.c.l.b16 %v9208
        %v9530 = vunpack.c.l.b16 %v9209
        %v9531 = vunpack.c.l.b16 %v9210
        %v9532 = vunpack.c.l.b16 %v9211
        %v9533 = vunpack.c.l.b16 %v9212
        %v9534 = vunpack.c.l.b16 %v9213
        %v9535 = vunpack.c.l.b16 %v9214
        %v9536 = vunpack.c.l.b16 %v9215
        %v9537 = vunpack.c.l.b16 %v9216
        %v9538 = vunpack.c.l.b16 %v9217
        %v9539 = vunpack.c.l.b16 %v9218
        %v9540 = vunpack.c.l.b16 %v9219
        %v9541 = vunpack.c.l.b16 %v9220
        %v9542 = vunpack.c.l.b16 %v9221
        %v9543 = vunpack.c.l.b16 %v9222
        %v9544 = vunpack.c.l.b16 %v9223
        %v9545 = vunpack.c.l.b16 %v9224
        %v9546 = vunpack.c.l.b16 %v9225
        %v9547 = vunpack.c.l.b16 %v9226
        %v9548 = vunpack.c.l.b16 %v9227
        %v9549 = vunpack.c.l.b16 %v9228
        %v9550 = vunpack.c.l.b16 %v9229
        %v9551 = vunpack.c.l.b16 %v9230
        %v9552 = vunpack.c.l.b16 %v9231
        %v9553 = vunpack.c.l.b16 %v9232
        %v9554 = vunpack.c.l.b16 %v9233
        %v9555 = vunpack.c.l.b16 %v9234
        %v9556 = vunpack.c.l.b16 %v9235
        %v9557 = vunpack.c.l.b16 %v9236
        %v9558 = vunpack.c.l.b16 %v9237
        %v9559 = vunpack.c.l.b16 %v9238
        %v9560 = vunpack.c.l.b16 %v9239
        %v9561 = vunpack.c.l.b16 %v9240
        %v9562 = vunpack.c.l.b16 %v9241
        %v9563 = vunpack.c.l.b16 %v9242
        %v9564 = vunpack.c.l.b16 %v9243
        %v9565 = vunpack.c.l.b16 %v9244
        %v9566 = vunpack.c.l.b16 %v9245
        %v9567 = vunpack.c.l.b16 %v9246
        %v9568 = vunpack.c.l.b16 %v9247
        %v9569 = vunpack.c.l.b16 %v9248
        %v9570 = vunpack.c.l.b16 %v9249
        %v9571 = vunpack.c.l.b16 %v9250
        %v9572 = vunpack.c.l.b16 %v9251
        %v9573 = vunpack.c.l.b16 %v9252
        %v9574 = vunpack.c.l.b16 %v9253
        %v9575 = vunpack.c.l.b16 %v9254
        %v9576 = vunpack.c.l.b16 %v9255
        %v9577 = vunpack.c.l.b16 %v9256
        %v9578 = vunpack.c.l.b16 %v9257
        %v9579 = vunpack.c.l.b16 %v9258
        %v9580 = vunpack.c.l.b16 %v9259
        %v9581 = vunpack.c.l.b16 %v9260
        %v9582 = vunpack.c.l.b16 %v9261
        %v9583 = vunpack.c.l.b16 %v9262
        %v9584 = vunpack.c.l.b16 %v9263
        %v9585 = vunpack.c.l.b16 %v9264
        %v9586 = vunpack.c.l.b16 %v9265
        %v9587 = vunpack.c.l.b16 %v9266
        %v9588 = vunpack.c.l.b16 %v9267
        %v9589 = vunpack.c.l.b16 %v9268
        %v9590 = vunpack.c.l.b16 %v9269
        %v9591 = vunpack.c.l.b16 %v9270
        %v9592 = vunpack.c.l.b16 %v9271
        %v9593 = vunpack.c.l.b16 %v9272
        %v9594 = vunpack.c.l.b16 %v9273
        %v9595 = vunpack.c.l.b16 %v9274
        %v9596 = vunpack.c.l.b16 %v9275
        %v9597 = vunpack.c.l.b16 %v9276
        %v9598 = vunpack.c.l.b16 %v9277
        %v9599 = vunpack.c.l.b16 %v9278
        %v9600 = vunpack.c.l.b16 %v9279
        %v9601 = vunpack.c.l.b16 %v9280
        %v9602 = vunpack.c.l.b16 %v9281
        %v9603 = vunpack.c.l.b16 %v9282
        %v9604 = vunpack.c.l.b16 %v9283
        %v9605 = vunpack.c.l.b16 %v9284
        %v9606 = vunpack.c.l.b16 %v9285
        %v9607 = vunpack.c.l.b16 %v9286
        %v9608 = vunpack.c.l.b16 %v9287
        %v9609 = vunpack.c.l.b16 %v9288
        %v9610 = vunpack.c.l.b16 %v9289
        %v9611 = vunpack.c.l.b16 %v9290
        %v9612 = vunpack.c.l.b16 %v9291
        %v9613 = vunpack.c.l.b16 %v9292
        %v9614 = vunpack.c.l.b16 %v9293
        %v9615 = vunpack.c.l.b16 %v9294
        %v9616 = vunpack.c.l.b16 %v9295
        %v9617 = vunpack.c.l.b16 %v9296
        %v9618 = vunpack.c.l.b16 %v9297
        %v9619 = vunpack.c.l.b16 %v9298
        %v9620 = vunpack.c.l.b16 %v9299
        %v9621 = vunpack.c.l.b16 %v9300
        %v9622 = vunpack.c.l.b16 %v9301
        %v9623 = vunpack.c.l.b16 %v9302
        %v9624 = vunpack.c.l.b16 %v9303
        %v9625 = vunpack.c.l.b16 %v9304
        %v9626 = vunpack.c.l.b16 %v9305
        %v9627 = vunpack.c.l.b16 %v9306
        %v9628 = vunpack.c.l.b16 %v9307
        %v9629 = vunpack.c.l.b16 %v9308
        %v9630 = vunpack.c.l.b16 %v9309
        %v9631 = vunpack.c.l.b16 %v9310
        %v9632 = vunpack.c.l.b16 %v9311
        %v9633 = vunpack.c.l.b16 %v9312
        %v9634 = vunpack.c.l.b16 %v9313
        %v9635 = vunpack.c.l.b16 %v9314
        %v9636 = vunpack.c.l.b16 %v9315
        %v9637 = vunpack.c.l.b16 %v9316
        %v9638 = vunpack.c.l.b16 %v9317
        %v9639 = vunpack.c.l.b16 %v9318
        %v9640 = vunpack.c.l.b16 %v9319
        %v9641 = vunpack.c.l.b16 %v9320
        %v9642 = vunpack.c.l.b16 %v9321
        %v9643 = vunpack.c.l.b16 %v9322
        %v9644 = vunpack.c.l.b16 %v9323
        %v9645 = vunpack.c.l.b16 %v9324
        %v9646 = vunpack.c.l.b16 %v9325
        %v9647 = vunpack.c.l.b16 %v9326
        %v9648 = vunpack.c.l.b16 %v9327
        %v9649 = vunpack.c.l.b16 %v9328
        %v9650 = vunpack.c.l.b16 %v9329
        %v9651 = vunpack.c.l.b16 %v9330
        %v9652 = vunpack.c.l.b16 %v9331
        %v9653 = vunpack.c.l.b16 %v9332
        %v9654 = vunpack.c.l.b16 %v9333
        %v9655 = vunpack.c.l.b16 %v9334
        %v9656 = vunpack.c.l.b16 %v9335
        %v9657 = vpack.c.b16 %v9498, %v9497
        %v9658 = vpack.c.b16 %v9500, %v9499
        %v9659 = vpack.c.b16 %v9502, %v9501
        %v9660 = vpack.c.b16 %v9504, %v9503
        %v9661 = vpack.c.b16 %v9506, %v9505
        %v9662 = vpack.c.b16 %v9508, %v9507
        %v9663 = vpack.c.b16 %v9510, %v9509
        %v9664 = vpack.c.b16 %v9512, %v9511
        %v9665 = vpack.c.b16 %v9514, %v9513
        %v9666 = vpack.c.b16 %v9516, %v9515
        %v9667 = vpack.c.b16 %v9518, %v9517
        %v9668 = vpack.c.b16 %v9520, %v9519
        %v9669 = vpack.c.b16 %v9522, %v9521
        %v9670 = vpack.c.b16 %v9524, %v9523
        %v9671 = vpack.c.b16 %v9526, %v9525
        %v9672 = vpack.c.b16 %v9528, %v9527
        %v9673 = vpack.c.b16 %v9530, %v9529
        %v9674 = vpack.c.b16 %v9532, %v9531
        %v9675 = vpack.c.b16 %v9534, %v9533
        %v9676 = vpack.c.b16 %v9536, %v9535
        %v9677 = vpack.c.b16 %v9538, %v9537
        %v9678 = vpack.c.b16 %v9540, %v9539
        %v9679 = vpack.c.b16 %v9542, %v9541
        %v9680 = vpack.c.b16 %v9544, %v9543
        %v9681 = vpack.c.b16 %v9546, %v9545
        %v9682 = vpack.c.b16 %v9548, %v9547
        %v9683 = vpack.c.b16 %v9550, %v9549
        %v9684 = vpack.c.b16 %v9552, %v9551
        %v9685 = vpack.c.b16 %v9554, %v9553
        %v9686 = vpack.c.b16 %v9556, %v9555
        %v9687 = vpack.c.b16 %v9558, %v9557
        %v9688 = vpack.c.b16 %v9560, %v9559
        %v9689 = vpack.c.b16 %v9562, %v9561
        %v9690 = vpack.c.b16 %v9564, %v9563
        %v9691 = vpack.c.b16 %v9566, %v9565
        %v9692 = vpack.c.b16 %v9568, %v9567
        %v9693 = vpack.c.b16 %v9570, %v9569
        %v9694 = vpack.c.b16 %v9572, %v9571
        %v9695 = vpack.c.b16 %v9574, %v9573
        %v9696 = vpack.c.b16 %v9576, %v9575
        %v9697 = vpack.c.b16 %v9578, %v9577
        %v9698 = vpack.c.b16 %v9580, %v9579
        %v9699 = vpack.c.b16 %v9582, %v9581
        %v9700 = vpack.c.b16 %v9584, %v9583
        %v9701 = vpack.c.b16 %v9586, %v9585
        %v9702 = vpack.c.b16 %v9588, %v9587
        %v9703 = vpack.c.b16 %v9590, %v9589
        %v9704 = vpack.c.b16 %v9592, %v9591
        %v9705 = vpack.c.b16 %v9594, %v9593
        %v9706 = vpack.c.b16 %v9596, %v9595
        %v9707 = vpack.c.b16 %v9598, %v9597
        %v9708 = vpack.c.b16 %v9600, %v9599
        %v9709 = vpack.c.b16 %v9602, %v9601
        %v9710 = vpack.c.b16 %v9604, %v9603
        %v9711 = vpack.c.b16 %v9606, %v9605
        %v9712 = vpack.c.b16 %v9608, %v9607
        %v9713 = vpack.c.b16 %v9610, %v9609
        %v9714 = vpack.c.b16 %v9612, %v9611
        %v9715 = vpack.c.b16 %v9614, %v9613
        %v9716 = vpack.c.b16 %v9616, %v9615
        %v9717 = vpack.c.b16 %v9618, %v9617
        %v9718 = vpack.c.b16 %v9620, %v9619
        %v9719 = vpack.c.b16 %v9622, %v9621
        %v9720 = vpack.c.b16 %v9624, %v9623
        %v9721 = vpack.c.b16 %v9626, %v9625
        %v9722 = vpack.c.b16 %v9628, %v9627
        %v9723 = vpack.c.b16 %v9630, %v9629
        %v9724 = vpack.c.b16 %v9632, %v9631
        %v9725 = vpack.c.b16 %v9634, %v9633
        %v9726 = vpack.c.b16 %v9636, %v9635
        %v9727 = vpack.c.b16 %v9638, %v9637
        %v9728 = vpack.c.b16 %v9640, %v9639
        %v9729 = vpack.c.b16 %v9642, %v9641
        %v9730 = vpack.c.b16 %v9644, %v9643
        %v9731 = vpack.c.b16 %v9646, %v9645
        %v9732 = vpack.c.b16 %v9648, %v9647
        %v9733 = vpack.c.b16 %v9650, %v9649
        %v9734 = vpack.c.b16 %v9652, %v9651
        %v9735 = vpack.c.b16 %v9654, %v9653
        %v9736 = vpack.c.b16 %v9656, %v9655
        %9817 = vmatpush.bf16.msra.mxu0 %v9664
        %9818 = vmatpush.bf16.msra.mxu0 %v9663
        %9819 = vmatpush.bf16.msra.mxu0 %v9662
        %9820 = vmatpush.bf16.msra.mxu0 %v9661
        %9821 = vmatpush.bf16.msra.mxu0 %v9660
        %9822 = vmatpush.bf16.msra.mxu0 %v9659
        %9823 = vmatpush.bf16.msra.mxu0 %v9658
        %9824 = vmatpush.bf16.msra.mxu0 %v9657
        %9825 = vmatmul.bf16.gmra.mxu0 %v9166
        %v9826 = vpop.f32.mrf.mxu0
        %v9827 = vadd.f32 %v9336, %v9826
        %v9828 = vpop.f32.mrf.mxu0
        %9829 = vdwg.mxu0
        %9830 = vmatpush.bf16.msra.mxu0 %v9672
        %9831 = vmatpush.bf16.msra.mxu0 %v9671
        %9832 = vmatpush.bf16.msra.mxu0 %v9670
        %9833 = vmatpush.bf16.msra.mxu0 %v9669
        %9834 = vmatpush.bf16.msra.mxu0 %v9668
        %9835 = vmatpush.bf16.msra.mxu0 %v9667
        %9836 = vmatpush.bf16.msra.mxu0 %v9666
        %9837 = vmatpush.bf16.msra.mxu0 %v9665
        %9838 = vmatmul.bf16.gmra.mxu0 %v9167
        %v9839 = vpop.f32.mrf.mxu0
        %v9840 = vadd.f32 %v9827, %v9839
        %v9841 = vpop.f32.mrf.mxu0
        %9842 = vdwg.mxu0
        %9843 = vmatpush.bf16.msra.mxu0 %v9680
        %9844 = vmatpush.bf16.msra.mxu0 %v9679
        %9845 = vmatpush.bf16.msra.mxu0 %v9678
        %9846 = vmatpush.bf16.msra.mxu0 %v9677
        %9847 = vmatpush.bf16.msra.mxu0 %v9676
        %9848 = vmatpush.bf16.msra.mxu0 %v9675
        %9849 = vmatpush.bf16.msra.mxu0 %v9674
        %9850 = vmatpush.bf16.msra.mxu0 %v9673
        %9851 = vmatmul.bf16.gmra.mxu0 %v9168
        %v9852 = vpop.f32.mrf.mxu0
        %v9853 = vadd.f32 %v9840, %v9852
        %v9854 = vpop.f32.mrf.mxu0
        %9855 = vdwg.mxu0
        %9856 = vmatpush.bf16.msra.mxu0 %v9688
        %9857 = vmatpush.bf16.msra.mxu0 %v9687
        %9858 = vmatpush.bf16.msra.mxu0 %v9686
        %9859 = vmatpush.bf16.msra.mxu0 %v9685
        %9860 = vmatpush.bf16.msra.mxu0 %v9684
        %9861 = vmatpush.bf16.msra.mxu0 %v9683
        %9862 = vmatpush.bf16.msra.mxu0 %v9682
        %9863 = vmatpush.bf16.msra.mxu0 %v9681
        %9864 = vmatmul.bf16.gmra.mxu0 %v9169
        %v9865 = vpop.f32.mrf.mxu0
        %v9866 = vadd.f32 %v9853, %v9865
        %v9867 = vpop.f32.mrf.mxu0
        %9868 = vdwg.mxu0
        %9869 = vmatpush.bf16.msra.mxu0 %v9696
        %9870 = vmatpush.bf16.msra.mxu0 %v9695
        %9871 = vmatpush.bf16.msra.mxu0 %v9694
        %9872 = vmatpush.bf16.msra.mxu0 %v9693
        %9873 = vmatpush.bf16.msra.mxu0 %v9692
        %9874 = vmatpush.bf16.msra.mxu0 %v9691
        %9875 = vmatpush.bf16.msra.mxu0 %v9690
        %9876 = vmatpush.bf16.msra.mxu0 %v9689
        %9877 = vmatmul.bf16.gmra.mxu0 %v9170
        %v9878 = vpop.f32.mrf.mxu0
        %v9879 = vadd.f32 %v9866, %v9878
        %v9880 = vpop.f32.mrf.mxu0
        %9881 = vdwg.mxu0
        %9882 = vmatpush.bf16.msra.mxu0 %v9704
        %9883 = vmatpush.bf16.msra.mxu0 %v9703
        %9884 = vmatpush.bf16.msra.mxu0 %v9702
        %9885 = vmatpush.bf16.msra.mxu0 %v9701
        %9886 = vmatpush.bf16.msra.mxu0 %v9700
        %9887 = vmatpush.bf16.msra.mxu0 %v9699
        %9888 = vmatpush.bf16.msra.mxu0 %v9698
        %9889 = vmatpush.bf16.msra.mxu0 %v9697
        %9890 = vmatmul.bf16.gmra.mxu0 %v9171
        %v9891 = vpop.f32.mrf.mxu0
        %v9892 = vadd.f32 %v9879, %v9891
        %v9893 = vpop.f32.mrf.mxu0
        %9894 = vdwg.mxu0
        %9895 = vmatpush.bf16.msra.mxu0 %v9712
        %9896 = vmatpush.bf16.msra.mxu0 %v9711
        %9897 = vmatpush.bf16.msra.mxu0 %v9710
        %9898 = vmatpush.bf16.msra.mxu0 %v9709
        %9899 = vmatpush.bf16.msra.mxu0 %v9708
        %9900 = vmatpush.bf16.msra.mxu0 %v9707
        %9901 = vmatpush.bf16.msra.mxu0 %v9706
        %9902 = vmatpush.bf16.msra.mxu0 %v9705
        %9903 = vmatmul.bf16.gmra.mxu0 %v9172
        %v9904 = vpop.f32.mrf.mxu0
        %v9905 = vadd.f32 %v9892, %v9904
        %v9906 = vpop.f32.mrf.mxu0
        %9907 = vdwg.mxu0
        %9908 = vmatpush.bf16.msra.mxu0 %v9720
        %9909 = vmatpush.bf16.msra.mxu0 %v9719
        %9910 = vmatpush.bf16.msra.mxu0 %v9718
        %9911 = vmatpush.bf16.msra.mxu0 %v9717
        %9912 = vmatpush.bf16.msra.mxu0 %v9716
        %9913 = vmatpush.bf16.msra.mxu0 %v9715
        %9914 = vmatpush.bf16.msra.mxu0 %v9714
        %9915 = vmatpush.bf16.msra.mxu0 %v9713
        %9916 = vmatmul.bf16.gmra.mxu0 %v9173
        %v9917 = vpop.f32.mrf.mxu0
        %v9918 = vadd.f32 %v9905, %v9917
        %v9919 = vpop.f32.mrf.mxu0
        %9920 = vdwg.mxu0
        %9921 = vmatpush.bf16.msra.mxu0 %v9728
        %9922 = vmatpush.bf16.msra.mxu0 %v9727
        %9923 = vmatpush.bf16.msra.mxu0 %v9726
        %9924 = vmatpush.bf16.msra.mxu0 %v9725
        %9925 = vmatpush.bf16.msra.mxu0 %v9724
        %9926 = vmatpush.bf16.msra.mxu0 %v9723
        %9927 = vmatpush.bf16.msra.mxu0 %v9722
        %9928 = vmatpush.bf16.msra.mxu0 %v9721
        %9929 = vmatmul.bf16.gmra.mxu0 %v9174
        %v9930 = vpop.f32.mrf.mxu0
        %v9931 = vadd.f32 %v9918, %v9930
        %v9932 = vpop.f32.mrf.mxu0
        %9933 = vdwg.mxu0
        %9934 = vmatpush.bf16.msra.mxu0 %v9736
        %9935 = vmatpush.bf16.msra.mxu0 %v9735
        %9936 = vmatpush.bf16.msra.mxu0 %v9734
        %9937 = vmatpush.bf16.msra.mxu0 %v9733
        %9938 = vmatpush.bf16.msra.mxu0 %v9732
        %9939 = vmatpush.bf16.msra.mxu0 %v9731
        %9940 = vmatpush.bf16.msra.mxu0 %v9730
        %9941 = vmatpush.bf16.msra.mxu0 %v9729
        %9942 = vmatmul.bf16.gmra.mxu0 %v9175
        %v9943 = vpop.f32.mrf.mxu0
        %v9944 = vadd.f32 %v9931, %v9943
        %v9945 = vpop.f32.mrf.mxu0
        %9946 = vdwg.mxu0
        %9947 = vst [vmem:[%s302] sm:$0x1] %v9944
      $region56: #{convnet_forward.1} parent=47 // pred_fallthru
        _
      %p9948 = scmp.lt.s32.totalorder %s22, 1
      %s9949 = scalar_select %p9948, %s22, 1
      %s9950 = scalar_lea.vmem %s7, %s9949
      // Predicated region
      $region57: #{convnet_forward.1} parent=47 // pred_check
        %p9951 = pneg %p202
      $region58: #{convnet_forward.1} parent=47 // pred_check_branch
        %9953 = sbr.rel (%p9951) target = $region60
      $region59: #{convnet_forward.1} parent=47 // pred_region
        _
      $region60: #{convnet_forward.1} parent=47 // pred_fallthru
        _
    $region48: #{convnet_forward.1} parent=5 // pred_fallthru
      _
    %p9954 = scmp.le.s32.totalorder 2, %s13
    // Predicated region
    $region61: #{convnet_forward.1} parent=5 // pred_check
      %p9955 = pneg %p9954
    $region62: #{convnet_forward.1} parent=5 // pred_check_branch
      %9957 = sbr.rel (%p9955) target = $region64
    $region63: #{convnet_forward.1} parent=5 // pred_region
      %s9958 = ssub.s32 %s13, 2
      // Predicated region
      $region65: #{convnet_forward.1} parent=63 // pred_check
        %p9959 = pneg %p208
      $region66: #{convnet_forward.1} parent=63 // pred_check_branch
        %9961 = sbr.rel (%p9959) target = $region68
      $region67: #{convnet_forward.1} parent=63 // pred_region
        %p9962 = scmp.lt.s32.totalorder %s24, 1
        %s9963 = scalar_select %p9962, %s24, 1
        %s9964 = scalar_lea.vmem %s7, %s9963
      $region68: #{convnet_forward.1} parent=63 // pred_fallthru
        _
    $region64: #{convnet_forward.1} parent=5 // pred_fallthru
      _
  $region6: #{convnet_forward.1} parent=0 // loop_footer
    %s17 = sadd.s32 1, %s13
  $region7: #{convnet_forward.1} parent=0 // loop_footer_branch
    %12 = sbr.rel target = $region3
  $region8: #{convnet_forward.1} parent=0 // loop_exit
    _

</llo_original>
